<compile_context>
chip_gen: v5e
topology: v5e:2x2
jax: 0.10.0
libtpu: 0.0.40
codegen_flags: <defaults>
</compile_context>

<pallas_src>
import functools

import jax
import jax.numpy as jnp
from jax import lax
from jax.experimental import pallas as pl
from jax.experimental.pallas import tpu as pltpu


# ----------------------------------------------------------------------------
# In-kernel helpers (2-D values, the batched length axis W = B*P on lanes)
# ----------------------------------------------------------------------------
def _shift_lanes(a, m):
    """t[:, l] = a[:, l + m] where in range, zero-filled at the edges (static m)."""
    rows, width = a.shape
    if m == 0:
        return a
    z = jnp.zeros((rows, abs(m)), a.dtype)
    if m > 0:
        return jnp.concatenate([a[:, m:], z], axis=1)
    return jnp.concatenate([z, a[:, :width + m]], axis=1)


def _conv_layer_dilated(a, w_ref, cb_ref, K, d):
    """'same' Conv1d + bias + ReLU + MaxPool(2,2) on a dilation-d, guard-padded batch.

    a:      (Cin_pad, W) f32; logical sample b, position j lives at lane b*P + G + j*d,
            guard lanes are zero.
    w_ref:  (Cout_pad, K*Cin_pad) folded taps (tap-major, input-channel-minor).
    cb_ref: (Cout_pad, 1) bias.
    Returns (Cout_pad, W) f32 with dilation 2*d (guard lanes carry garbage until masked).
    """
    # K lane-shifted copies stacked on the contraction axis -> ONE MXU matmul per layer.
    taps = [_shift_lanes(a, (kk - K // 2) * d) for kk in range(K)]
    xall = taps[0] if K == 1 else jnp.concatenate(taps, axis=0)     # (K*Cin_pad, W)
    c = jnp.dot(w_ref[...], xall, preferred_element_type=jnp.float32)
    c = jnp.maximum(c + cb_ref[...], 0.0)                           # bias + ReLU
    # MaxPool(2,2): the pooling partner of a valid lane l is lane l + d.
    return jnp.maximum(c, _shift_lanes(c, d))


# ----------------------------------------------------------------------------
# The fused kernel
# ----------------------------------------------------------------------------
def cnn_encoder_kernel(x_ref, mask_ref,
                       wc1_ref, bc1_ref, wc2_ref, bc2_ref,
                       wc3_ref, bc3_ref, wc4_ref, bc4_ref,
                       w1_ref, b1_ref, w2_ref, b2_ref, w3_ref, b3_ref,
                       o_ref,
                       feat_ref, acc_ref,
                       *, batch, guard, sample_p, feat_per_ch, ks, tile_c, n_tiles):
    k = pl.program_id(0)

    # ---- grid step 0: whole conv stack (all batches at once), features -> VMEM ----
    @pl.when(k == 0)
    def _conv_path():
        acc_ref[...] = jnp.zeros_like(acc_ref)
        mask = mask_ref[...]                       # (1, W): 1 on data lanes, 0 on guards
        a = x_ref[...]                             # (8, W) f32, guards already zero
        layers = ((wc1_ref, bc1_ref, ks[0], 1),
                  (wc2_ref, bc2_ref, ks[1], 2),
                  (wc3_ref, bc3_ref, ks[2], 4),
                  (wc4_ref, bc4_ref, ks[3], 8))
        for li_, (w_ref, cb_ref, K, d) in enumerate(layers):
            a = _conv_layer_dilated(a, w_ref, cb_ref, K, d)
            if li_ < 3:
                a = a * mask                       # re-zero guards = per-sample 'same' pad
        # TODO(synk): Dropout(p=0.5) layers are identity (inference semantics).
        # Compact the dilation-16 result to (32, F) per sample with a 0/1 bf16 selection
        # matmul (exact); row-major (channel, position) == torch's NCW flatten order.
        P, F, G = sample_p, feat_per_ch, guard
        li = lax.broadcasted_iota(jnp.int32, (P, F), 0)
        fi = lax.broadcasted_iota(jnp.int32, (P, F), 1)
        sel = (li == G + 16 * fi).astype(jnp.bfloat16)
        a16 = a.astype(jnp.bfloat16)
        for b in range(batch):
            feat_ref[:, b, :] = jnp.dot(a16[:, b * P:(b + 1) * P], sel,
                                        preferred_element_type=jnp.float32)

    # ---- every grid step: fc1 partials for channels [k*tile_c, (k+1)*tile_c) ----
    # Per-channel (B,F)x(F,N1) matmuls keep every operand lane-aligned (no concat).
    for j in range(tile_c):
        acc_ref[...] += jnp.dot(
            feat_ref[k * tile_c + j].astype(w1_ref.dtype), w1_ref[j],
            preferred_element_type=jnp.float32)

    # ---- last grid step: bias/ReLU + fc2 + fc3 + sigmoid ----
    @pl.when(k == n_tiles - 1)
    def _mlp_head():
        h1 = jnp.maximum(acc_ref[...] + b1_ref[...], 0.0)
        h2 = jnp.maximum(
            jnp.dot(h1, w2_ref[...], preferred_element_type=jnp.float32) + b2_ref[...],
            0.0)
        # fc3 has a single output column: VPU multiply + lane reduce (no N=1 MXU pass).
        h3 = jnp.sum(h2 * w3_ref[...], axis=1, keepdims=True) + b3_ref[...]
        p = 1.0 / (1.0 + jnp.exp(-jnp.abs(h3)))              # numerically-stable sigmoid
        o_ref[...] = jnp.where(h3 >= 0.0, p, 1.0 - p)


# ----------------------------------------------------------------------------
# Wrapper: host-side layout prep (tiny, one-off) + a single pallas_call
# ----------------------------------------------------------------------------
def _full_spec(a):
    nd = a.ndim
    return pl.BlockSpec(a.shape, lambda *_: (0,) * nd)


def _streamed_spec(block_shape, index_map, depth):
    """BlockSpec with deeper multi-buffering when the API supports it."""
    buffered = getattr(pl, "Buffered", None)
    if buffered is not None:
        try:
            return pl.BlockSpec(block_shape, index_map, pipeline_mode=buffered(depth))
        except TypeError:
            pass
    return pl.BlockSpec(block_shape, index_map)


def cnn_encoder_forward(x_ncw, params, *, kernel_size, data_size,
                        w1_dtype=jnp.bfloat16):
    B, c0, L = x_ncw.shape
    assert c0 == 3 and L == data_size and data_size % 16 == 0
    ks = (kernel_size, kernel_size - 2, kernel_size - 4, kernel_size - 6)
    assert all(kk >= 1 and kk % 2 == 1 for kk in ks), "'same' conv needs odd kernels"
    dils = (1, 2, 4, 8)
    F = L // 16
    n_ch = params["w_conv4"].shape[0]                    # 32
    N1 = params["w_fc1"].shape[0]                        # 1500
    N2 = params["w_fc2"].shape[0]                        # 100
    N3 = params["w_fc3"].shape[0]                        # 1
    assert params["w_fc1"].shape[1] == n_ch * F

    # Guard width G: >= the largest tap/pool lane shift, and (when L is even, always true
    # here) chosen so the per-sample window P = L + 2G is a multiple of 128 -> the
    # per-sample compaction slice is lane-aligned.
    max_shift = max(max((kk // 2) * d, d) for kk, d in zip(ks, dils))
    r = (-L) % 128
    if r % 2 == 0:
        G = r // 2
        while G < max_shift:
            G += 64
    else:  # unreachable given L % 16 == 0; kept for safety
        G = ((max_shift + 7) // 8) * 8
    P = L + 2 * G
    W = B * P

    # Batched, channel-padded (3->8), zero-guarded input: (8, B*P), lane = b*P + t.
    xw = jnp.zeros((B, 8, P), jnp.float32)
    xw = xw.at[:, :3, G:G + L].set(x_ncw.astype(jnp.float32))
    x_wide = jnp.transpose(xw, (1, 0, 2)).reshape(8, W)
    mask = jnp.zeros((B, 1, P), jnp.float32).at[:, :, G:G + L].set(1.0)
    mask = jnp.transpose(mask, (1, 0, 2)).reshape(1, W)

    # Conv weights folded to (Cout_pad, K*Cin_pad), tap-major / channel-minor, with
    # channels zero-padded to multiples of 8 (sublane-aligned tap stacks, exact math).
    chain = [3, 4, 8, 16, 32]
    padded = [-(-c // 8) * 8 for c in chain]             # [8, 8, 8, 16, 32]
    conv_args = []
    for i, K in enumerate(ks, start=1):
        w = params[f"w_conv{i}"].astype(jnp.float32)     # (Cout, Cin, K)
        b = params[f"b_conv{i}"].astype(jnp.float32)
        cout, cin, _ = w.shape
        cin_p, cout_p = padded[i - 1], padded[i]
        wf = jnp.zeros((cout_p, K, cin_p), jnp.float32)
        wf = wf.at[:cout, :, :cin].set(jnp.transpose(w, (0, 2, 1)))
        conv_args.append(wf.reshape(cout_p, K * cin_p))
        bf = jnp.zeros((cout_p, 1), jnp.float32).at[:cout, 0].set(b)
        conv_args.append(bf)

    # fc weights. fc1 stored as (n_ch, F, N1) in bf16 (memory-bound stream), fc3 as a row.
    w1_3d = params["w_fc1"].T.reshape(n_ch, F, N1).astype(w1_dtype)  # [c, pos, out]
    b1 = params["b_fc1"].reshape(1, N1).astype(jnp.float32)
    w2t = params["w_fc2"].T.astype(jnp.float32)          # (N1, N2)
    b2 = params["b_fc2"].reshape(1, N2).astype(jnp.float32)
    w3row = params["w_fc3"].reshape(1, N2).astype(jnp.float32)
    b3 = params["b_fc3"].reshape(1, 1).astype(jnp.float32)

    # Generation-aware VMEM budget: bigger fc1 tiles + deeper buffering on 128-MiB parts
    # (v5e/v6e); leave headroom below the 64-MiB per-TC capacity on v7x.
    try:
        vmem_cap = int(pltpu.get_tpu_info().vmem_capacity_bytes)
    except Exception:  # conservative fallback (v7x-sized)
        vmem_cap = 64 * 1024 * 1024
    big_vmem = vmem_cap >= 100 * 1024 * 1024
    budget = (18 if big_vmem else 9) * 1024 * 1024
    itemsize = jnp.dtype(w1_dtype).itemsize
    tile_c, cand = 1, n_ch
    while cand >= 1:
        if n_ch % cand == 0 and cand * F * N1 * itemsize <= budget:
            tile_c = cand
            break
        cand //= 2
    n_tiles = n_ch // tile_c
    w1_depth = max(2, min(n_tiles, 4 if big_vmem else 3))
    vmem_limit = max(32 * 1024 * 1024,
                     min(int(vmem_cap * 0.85), 110 * 1024 * 1024))

    args = [x_wide, mask] + conv_args + [w1_3d, b1, w2t, b2, w3row, b3]
    in_specs = (
        [_full_spec(x_wide), _full_spec(mask)]
        + [_full_spec(a) for a in conv_args]
        + [_streamed_spec((tile_c, F, N1), lambda kk: (kk, 0, 0), w1_depth),
           _full_spec(b1), _full_spec(w2t), _full_spec(b2),
           _full_spec(w3row), _full_spec(b3)]
    )

    kern = functools.partial(cnn_encoder_kernel, batch=B, guard=G, sample_p=P,
                             feat_per_ch=F, ks=ks, tile_c=tile_c, n_tiles=n_tiles)

    return pl.pallas_call(
        kern,
        out_shape=jax.ShapeDtypeStruct((B, N3), jnp.float32),
        grid=(n_tiles,),
        in_specs=in_specs,
        out_specs=pl.BlockSpec((B, N3), lambda kk: (0, 0)),
        scratch_shapes=[pltpu.VMEM((n_ch, B, F), jnp.float32),   # compact features
                        pltpu.VMEM((B, N1), jnp.float32)],       # fc1 f32 accumulator
        compiler_params=pltpu.CompilerParams(
            dimension_semantics=("arbitrary",),
            vmem_limit_bytes=vmem_limit),
    )(*args)


# ----------------------------------------------------------------------------
# Parameter construction (deterministic, PyTorch-default-style uniform init)
# ----------------------------------------------------------------------------
def _uniform(key, shape, fan_in):
    bound = 1.0 / float(fan_in) ** 0.5
    return jax.random.uniform(key, shape, jnp.float32, -bound, bound)


def init_params(key, kernel_size, data_size):
    ks = [kernel_size, kernel_size - 2, kernel_size - 4, kernel_size - 6]
    chans = [(3, 4), (4, 8), (8, 16), (16, 32)]
    fc_dims = [(32 * (data_size // 16), 1500), (1500, 100), (100, 1)]

    keys = jax.random.split(key, 2 * (len(ks) + len(fc_dims)))
    p = {}
    ki = 0
    for idx, ((cin, cout), k) in enumerate(zip(chans, ks), start=1):
        fan_in = cin * k
        p[f"w_conv{idx}"] = _uniform(keys[ki], (cout, cin, k), fan_in); ki += 1
        p[f"b_conv{idx}"] = _uniform(keys[ki], (cout,), fan_in); ki += 1
    for idx, (fin, fout) in enumerate(fc_dims, start=1):
        p[f"w_fc{idx}"] = _uniform(keys[ki], (fout, fin), fin); ki += 1
        p[f"b_fc{idx}"] = _uniform(keys[ki], (fout,), fin); ki += 1
    return p


# ----------------------------------------------------------------------------
# Pure-JAX reference (mirrors PyTorch forward; plain XLA, no Pallas)
# ----------------------------------------------------------------------------
def _ref_conv1d_same(x, w, b):
    K = w.shape[2]
    pad = K // 2
    L = x.shape[2]
    xp = jnp.pad(x, ((0, 0), (0, 0), (pad, pad)))
    out = b.reshape(1, -1, 1)
    for kk in range(K):  # cross-correlation, like torch Conv1d
        out = out + jnp.einsum("bcl,oc->bol", xp[:, :, kk:kk + L], w[:, :, kk])
    return out


def reference_forward(x, p, kernel_size, data_size, w1_dtype=jnp.bfloat16):
    out = x.astype(jnp.float32)
    for i in range(1, 5):
        out = _ref_conv1d_same(out, p[f"w_conv{i}"].astype(jnp.float32),
                               p[f"b_conv{i}"].astype(jnp.float32))
        out = jnp.maximum(out, 0.0)
        bb, cc, ll = out.shape
        out = jnp.max(out.reshape(bb, cc, ll // 2, 2), axis=3)       # MaxPool1d(2, 2)
    feat = out.reshape(out.shape[0], -1)                             # torch .view order
    feat = feat.astype(jnp.bfloat16).astype(jnp.float32)             # mirror bf16 features
    w1 = p["w_fc1"].astype(w1_dtype).astype(jnp.float32)             # mirror bf16 storage
    h1 = jnp.maximum(feat @ w1.T + p["b_fc1"], 0.0)
    h2 = jnp.maximum(h1 @ p["w_fc2"].T + p["b_fc2"], 0.0)
    h3 = h2 @ p["w_fc3"].T + p["b_fc3"]
    return jax.nn.sigmoid(h3)


if __name__ == "__main__":
    KERNEL_SIZE = 9      # odd -> all four convs are exact 'same' convs
    DATA_SIZE = 96       # stands in for the real 6000; must be divisible by 16
    BATCH = 2

    key = jax.random.PRNGKey(0)
    k_params, k_input = jax.random.split(key)
    params = init_params(k_params, KERNEL_SIZE, DATA_SIZE)
    x = jax.random.normal(k_input, (BATCH, 3, DATA_SIZE), jnp.float32)   # NCW, like torch

    out = cnn_encoder_forward(x, params, kernel_size=KERNEL_SIZE, data_size=DATA_SIZE)
    out = jax.block_until_ready(out)

    ref = reference_forward(x, params, KERNEL_SIZE, DATA_SIZE)
    assert out.shape == (BATCH, 1)
    assert bool(jnp.all((out >= 0.0) & (out <= 1.0)))
    assert bool(jnp.allclose(out, ref, rtol=2e-2, atol=2e-2)), (out, ref)
    print("KERNEL_OK")
</pallas_src>

<mosaic_0001>
module attributes {stable_mosaic.version = 11 : i64} {
  func.func @cnn_encoder_kernel(%arg0: i32, %arg1: memref<8x256xf32, #tpu.memory_space<vmem>>, %arg2: memref<1x256xf32, #tpu.memory_space<vmem>>, %arg3: memref<8x72xf32, #tpu.memory_space<vmem>>, %arg4: memref<8x1xf32, #tpu.memory_space<vmem>>, %arg5: memref<8x56xf32, #tpu.memory_space<vmem>>, %arg6: memref<8x1xf32, #tpu.memory_space<vmem>>, %arg7: memref<16x40xf32, #tpu.memory_space<vmem>>, %arg8: memref<16x1xf32, #tpu.memory_space<vmem>>, %arg9: memref<32x48xf32, #tpu.memory_space<vmem>>, %arg10: memref<32x1xf32, #tpu.memory_space<vmem>>, %arg11: memref<32x6x1500xbf16, #tpu.memory_space<vmem>>, %arg12: memref<1x1500xf32, #tpu.memory_space<vmem>>, %arg13: memref<1500x100xf32, #tpu.memory_space<vmem>>, %arg14: memref<1x100xf32, #tpu.memory_space<vmem>>, %arg15: memref<1x100xf32, #tpu.memory_space<vmem>>, %arg16: memref<1x1xf32, #tpu.memory_space<vmem>>, %arg17: memref<2x1xf32, #tpu.memory_space<vmem>>, %arg18: memref<32x2x6xf32, #tpu.memory_space<vmem>>, %arg19: memref<2x1500xf32, #tpu.memory_space<vmem>>) attributes {dimension_semantics = [#tpu.dimension_semantics<arbitrary>], iteration_bounds = array<i64: 1>, scalar_prefetch = 0 : i64, scratch_operands = 2 : i64, tpu.core_type = #tpu.core_type<tc>, window_params = [{pipeline_mode = #tpu.pipeline_mode<synchronous>, transform_indices = @transform_0, window_bounds = array<i64: 8, 256>}, {pipeline_mode = #tpu.pipeline_mode<synchronous>, transform_indices = @transform_1, window_bounds = array<i64: 1, 256>}, {pipeline_mode = #tpu.pipeline_mode<synchronous>, transform_indices = @transform_2, window_bounds = array<i64: 8, 72>}, {pipeline_mode = #tpu.pipeline_mode<synchronous>, transform_indices = @transform_3, window_bounds = array<i64: 8, 1>}, {pipeline_mode = #tpu.pipeline_mode<synchronous>, transform_indices = @transform_4, window_bounds = array<i64: 8, 56>}, {pipeline_mode = #tpu.pipeline_mode<synchronous>, transform_indices = @transform_5, window_bounds = array<i64: 8, 1>}, {pipeline_mode = #tpu.pipeline_mode<synchronous>, transform_indices = @transform_6, window_bounds = array<i64: 16, 40>}, {pipeline_mode = #tpu.pipeline_mode<synchronous>, transform_indices = @transform_7, window_bounds = array<i64: 16, 1>}, {pipeline_mode = #tpu.pipeline_mode<synchronous>, transform_indices = @transform_8, window_bounds = array<i64: 32, 48>}, {pipeline_mode = #tpu.pipeline_mode<synchronous>, transform_indices = @transform_9, window_bounds = array<i64: 32, 1>}, {pipeline_mode = #tpu.pipeline_mode<double_buffered>, transform_indices = @transform_10, window_bounds = array<i64: 32, 6, 1500>}, {pipeline_mode = #tpu.pipeline_mode<synchronous>, transform_indices = @transform_11, window_bounds = array<i64: 1, 1500>}, {pipeline_mode = #tpu.pipeline_mode<synchronous>, transform_indices = @transform_12, window_bounds = array<i64: 1500, 100>}, {pipeline_mode = #tpu.pipeline_mode<synchronous>, transform_indices = @transform_13, window_bounds = array<i64: 1, 100>}, {pipeline_mode = #tpu.pipeline_mode<synchronous>, transform_indices = @transform_14, window_bounds = array<i64: 1, 100>}, {pipeline_mode = #tpu.pipeline_mode<synchronous>, transform_indices = @transform_15, window_bounds = array<i64: 1, 1>}, {pipeline_mode = #tpu.pipeline_mode<synchronous>, transform_indices = @transform_16, window_bounds = array<i64: 2, 1>}]} {
    %c0_i32 = arith.constant 0 : i32
    %0 = arith.cmpi eq, %arg0, %c0_i32 : i32
    %1 = arith.extui %0 : i1 to i32
    %c0_i32_0 = arith.constant 0 : i32
    %2 = arith.cmpi ne, %1, %c0_i32_0 : i32
    scf.if %2 {
      %cst_322 = arith.constant 0.000000e+00 : f32
      %390 = vector.broadcast %cst_322 : f32 to vector<2x1500xf32>
      %c0_323 = arith.constant 0 : index
      %c0_324 = arith.constant 0 : index
      %391 = vector.load %arg19[%c0_323, %c0_324] : memref<2x1500xf32, #tpu.memory_space<vmem>>, vector<2x1500xf32>
      tpu.vector_store %arg19[%c0_323, %c0_324], %390 {strides = array<i32>} : memref<2x1500xf32, #tpu.memory_space<vmem>>, vector<2x1500xf32>,
      %c0_325 = arith.constant 0 : index
      %c0_326 = arith.constant 0 : index
      %392 = vector.load %arg2[%c0_325, %c0_326] : memref<1x256xf32, #tpu.memory_space<vmem>>, vector<1x256xf32>
      %c0_327 = arith.constant 0 : index
      %c0_328 = arith.constant 0 : index
      %393 = vector.load %arg1[%c0_327, %c0_328] : memref<8x256xf32, #tpu.memory_space<vmem>>, vector<8x256xf32>
      %cst_329 = arith.constant 0.000000e+00 : f32
      %394 = vector.broadcast %cst_329 : f32 to vector<8x4xf32>
      %395 = vector.extract_strided_slice %393 {offsets = [0, 0], sizes = [8, 252], strides = [1, 1]} : vector<8x256xf32> to vector<8x252xf32>
      %396 = tpu.concatenate %394, %395 in 1 : vector<8x4xf32>, vector<8x252xf32> -> vector<8x256xf32>
      %cst_330 = arith.constant 0.000000e+00 : f32
      %397 = vector.broadcast %cst_330 : f32 to vector<8x3xf32>
      %398 = vector.extract_strided_slice %393 {offsets = [0, 0], sizes = [8, 253], strides = [1, 1]} : vector<8x256xf32> to vector<8x253xf32>
      %399 = tpu.concatenate %397, %398 in 1 : vector<8x3xf32>, vector<8x253xf32> -> vector<8x256xf32>
      %cst_331 = arith.constant 0.000000e+00 : f32
      %400 = vector.broadcast %cst_331 : f32 to vector<8x2xf32>
      %401 = vector.extract_strided_slice %393 {offsets = [0, 0], sizes = [8, 254], strides = [1, 1]} : vector<8x256xf32> to vector<8x254xf32>
      %402 = tpu.concatenate %400, %401 in 1 : vector<8x2xf32>, vector<8x254xf32> -> vector<8x256xf32>
      %cst_332 = arith.constant 0.000000e+00 : f32
      %403 = vector.broadcast %cst_332 : f32 to vector<8x1xf32>
      %404 = vector.extract_strided_slice %393 {offsets = [0, 0], sizes = [8, 255], strides = [1, 1]} : vector<8x256xf32> to vector<8x255xf32>
      %405 = tpu.concatenate %403, %404 in 1 : vector<8x1xf32>, vector<8x255xf32> -> vector<8x256xf32>
      %cst_333 = arith.constant 0.000000e+00 : f32
      %406 = vector.broadcast %cst_333 : f32 to vector<8x1xf32>
      %407 = vector.extract_strided_slice %393 {offsets = [0, 1], sizes = [8, 255], strides = [1, 1]} : vector<8x256xf32> to vector<8x255xf32>
      %408 = tpu.concatenate %407, %406 in 1 : vector<8x255xf32>, vector<8x1xf32> -> vector<8x256xf32>
      %cst_334 = arith.constant 0.000000e+00 : f32
      %409 = vector.broadcast %cst_334 : f32 to vector<8x2xf32>
      %410 = vector.extract_strided_slice %393 {offsets = [0, 2], sizes = [8, 254], strides = [1, 1]} : vector<8x256xf32> to vector<8x254xf32>
      %411 = tpu.concatenate %410, %409 in 1 : vector<8x254xf32>, vector<8x2xf32> -> vector<8x256xf32>
      %cst_335 = arith.constant 0.000000e+00 : f32
      %412 = vector.broadcast %cst_335 : f32 to vector<8x3xf32>
      %413 = vector.extract_strided_slice %393 {offsets = [0, 3], sizes = [8, 253], strides = [1, 1]} : vector<8x256xf32> to vector<8x253xf32>
      %414 = tpu.concatenate %413, %412 in 1 : vector<8x253xf32>, vector<8x3xf32> -> vector<8x256xf32>
      %cst_336 = arith.constant 0.000000e+00 : f32
      %415 = vector.broadcast %cst_336 : f32 to vector<8x4xf32>
      %416 = vector.extract_strided_slice %393 {offsets = [0, 4], sizes = [8, 252], strides = [1, 1]} : vector<8x256xf32> to vector<8x252xf32>
      %417 = tpu.concatenate %416, %415 in 1 : vector<8x252xf32>, vector<8x4xf32> -> vector<8x256xf32>
      %418 = tpu.concatenate %396, %399, %402, %405, %393, %408, %411, %414, %417 in 0 : vector<8x256xf32>, vector<8x256xf32>, vector<8x256xf32>, vector<8x256xf32>, vector<8x256xf32>, vector<8x256xf32>, vector<8x256xf32>, vector<8x256xf32>, vector<8x256xf32> -> vector<72x256xf32>
      %c0_337 = arith.constant 0 : index
      %c0_338 = arith.constant 0 : index
      %419 = vector.load %arg3[%c0_337, %c0_338] : memref<8x72xf32, #tpu.memory_space<vmem>>, vector<8x72xf32>
      %cst_339 = arith.constant dense<0.000000e+00> : vector<8x256xf32>
      %420 = tpu.matmul %419, %418, %cst_339 {dimension_numbers = #tpu.dot_dimension_numbers<[1], [0], [0], [1], [0, 0, 1, 1], [], []>} : vector<8x72xf32>, vector<72x256xf32>, vector<8x256xf32> -> vector<8x256xf32>
      %c0_340 = arith.constant 0 : index
      %c0_341 = arith.constant 0 : index
      %421 = vector.load %arg4[%c0_340, %c0_341] : memref<8x1xf32, #tpu.memory_space<vmem>>, vector<8x1xf32>
      %422 = vector.broadcast %421 : vector<8x1xf32> to vector<8x256xf32>
      %423 = arith.addf %420, %422 : vector<8x256xf32>
      %cst_342 = arith.constant 0.000000e+00 : f32
      %424 = vector.broadcast %cst_342 : f32 to vector<8x256xf32>
      %425 = arith.maximumf %423, %424 : vector<8x256xf32>
      %cst_343 = arith.constant 0.000000e+00 : f32
      %426 = vector.broadcast %cst_343 : f32 to vector<8x1xf32>
      %427 = vector.extract_strided_slice %425 {offsets = [0, 1], sizes = [8, 255], strides = [1, 1]} : vector<8x256xf32> to vector<8x255xf32>
      %428 = tpu.concatenate %427, %426 in 1 : vector<8x255xf32>, vector<8x1xf32> -> vector<8x256xf32>
      %429 = arith.maximumf %425, %428 : vector<8x256xf32>
      %430 = vector.broadcast %392 : vector<1x256xf32> to vector<8x256xf32>
      %431 = arith.mulf %429, %430 : vector<8x256xf32>
      %cst_344 = arith.constant 0.000000e+00 : f32
      %432 = vector.broadcast %cst_344 : f32 to vector<8x6xf32>
      %433 = vector.extract_strided_slice %431 {offsets = [0, 0], sizes = [8, 250], strides = [1, 1]} : vector<8x256xf32> to vector<8x250xf32>
      %434 = tpu.concatenate %432, %433 in 1 : vector<8x6xf32>, vector<8x250xf32> -> vector<8x256xf32>
      %cst_345 = arith.constant 0.000000e+00 : f32
      %435 = vector.broadcast %cst_345 : f32 to vector<8x4xf32>
      %436 = vector.extract_strided_slice %431 {offsets = [0, 0], sizes = [8, 252], strides = [1, 1]} : vector<8x256xf32> to vector<8x252xf32>
      %437 = tpu.concatenate %435, %436 in 1 : vector<8x4xf32>, vector<8x252xf32> -> vector<8x256xf32>
      %cst_346 = arith.constant 0.000000e+00 : f32
      %438 = vector.broadcast %cst_346 : f32 to vector<8x2xf32>
      %439 = vector.extract_strided_slice %431 {offsets = [0, 0], sizes = [8, 254], strides = [1, 1]} : vector<8x256xf32> to vector<8x254xf32>
      %440 = tpu.concatenate %438, %439 in 1 : vector<8x2xf32>, vector<8x254xf32> -> vector<8x256xf32>
      %cst_347 = arith.constant 0.000000e+00 : f32
      %441 = vector.broadcast %cst_347 : f32 to vector<8x2xf32>
      %442 = vector.extract_strided_slice %431 {offsets = [0, 2], sizes = [8, 254], strides = [1, 1]} : vector<8x256xf32> to vector<8x254xf32>
      %443 = tpu.concatenate %442, %441 in 1 : vector<8x254xf32>, vector<8x2xf32> -> vector<8x256xf32>
      %cst_348 = arith.constant 0.000000e+00 : f32
      %444 = vector.broadcast %cst_348 : f32 to vector<8x4xf32>
      %445 = vector.extract_strided_slice %431 {offsets = [0, 4], sizes = [8, 252], strides = [1, 1]} : vector<8x256xf32> to vector<8x252xf32>
      %446 = tpu.concatenate %445, %444 in 1 : vector<8x252xf32>, vector<8x4xf32> -> vector<8x256xf32>
      %cst_349 = arith.constant 0.000000e+00 : f32
      %447 = vector.broadcast %cst_349 : f32 to vector<8x6xf32>
      %448 = vector.extract_strided_slice %431 {offsets = [0, 6], sizes = [8, 250], strides = [1, 1]} : vector<8x256xf32> to vector<8x250xf32>
      %449 = tpu.concatenate %448, %447 in 1 : vector<8x250xf32>, vector<8x6xf32> -> vector<8x256xf32>
      %450 = tpu.concatenate %434, %437, %440, %431, %443, %446, %449 in 0 : vector<8x256xf32>, vector<8x256xf32>, vector<8x256xf32>, vector<8x256xf32>, vector<8x256xf32>, vector<8x256xf32>, vector<8x256xf32> -> vector<56x256xf32>
      %c0_350 = arith.constant 0 : index
      %c0_351 = arith.constant 0 : index
      %451 = vector.load %arg5[%c0_350, %c0_351] : memref<8x56xf32, #tpu.memory_space<vmem>>, vector<8x56xf32>
      %cst_352 = arith.constant dense<0.000000e+00> : vector<8x256xf32>
      %452 = tpu.matmul %451, %450, %cst_352 {dimension_numbers = #tpu.dot_dimension_numbers<[1], [0], [0], [1], [0, 0, 1, 1], [], []>} : vector<8x56xf32>, vector<56x256xf32>, vector<8x256xf32> -> vector<8x256xf32>
      %c0_353 = arith.constant 0 : index
      %c0_354 = arith.constant 0 : index
      %453 = vector.load %arg6[%c0_353, %c0_354] : memref<8x1xf32, #tpu.memory_space<vmem>>, vector<8x1xf32>
      %454 = vector.broadcast %453 : vector<8x1xf32> to vector<8x256xf32>
      %455 = arith.addf %452, %454 : vector<8x256xf32>
      %cst_355 = arith.constant 0.000000e+00 : f32
      %456 = vector.broadcast %cst_355 : f32 to vector<8x256xf32>
      %457 = arith.maximumf %455, %456 : vector<8x256xf32>
      %cst_356 = arith.constant 0.000000e+00 : f32
      %458 = vector.broadcast %cst_356 : f32 to vector<8x2xf32>
      %459 = vector.extract_strided_slice %457 {offsets = [0, 2], sizes = [8, 254], strides = [1, 1]} : vector<8x256xf32> to vector<8x254xf32>
      %460 = tpu.concatenate %459, %458 in 1 : vector<8x254xf32>, vector<8x2xf32> -> vector<8x256xf32>
      %461 = arith.maximumf %457, %460 : vector<8x256xf32>
      %462 = vector.broadcast %392 : vector<1x256xf32> to vector<8x256xf32>
      %463 = arith.mulf %461, %462 : vector<8x256xf32>
      %cst_357 = arith.constant 0.000000e+00 : f32
      %464 = vector.broadcast %cst_357 : f32 to vector<8x8xf32>
      %465 = vector.extract_strided_slice %463 {offsets = [0, 0], sizes = [8, 248], strides = [1, 1]} : vector<8x256xf32> to vector<8x248xf32>
      %466 = tpu.concatenate %464, %465 in 1 : vector<8x8xf32>, vector<8x248xf32> -> vector<8x256xf32>
      %cst_358 = arith.constant 0.000000e+00 : f32
      %467 = vector.broadcast %cst_358 : f32 to vector<8x4xf32>
      %468 = vector.extract_strided_slice %463 {offsets = [0, 0], sizes = [8, 252], strides = [1, 1]} : vector<8x256xf32> to vector<8x252xf32>
      %469 = tpu.concatenate %467, %468 in 1 : vector<8x4xf32>, vector<8x252xf32> -> vector<8x256xf32>
      %cst_359 = arith.constant 0.000000e+00 : f32
      %470 = vector.broadcast %cst_359 : f32 to vector<8x4xf32>
      %471 = vector.extract_strided_slice %463 {offsets = [0, 4], sizes = [8, 252], strides = [1, 1]} : vector<8x256xf32> to vector<8x252xf32>
      %472 = tpu.concatenate %471, %470 in 1 : vector<8x252xf32>, vector<8x4xf32> -> vector<8x256xf32>
      %cst_360 = arith.constant 0.000000e+00 : f32
      %473 = vector.broadcast %cst_360 : f32 to vector<8x8xf32>
      %474 = vector.extract_strided_slice %463 {offsets = [0, 8], sizes = [8, 248], strides = [1, 1]} : vector<8x256xf32> to vector<8x248xf32>
      %475 = tpu.concatenate %474, %473 in 1 : vector<8x248xf32>, vector<8x8xf32> -> vector<8x256xf32>
      %476 = tpu.concatenate %466, %469, %463, %472, %475 in 0 : vector<8x256xf32>, vector<8x256xf32>, vector<8x256xf32>, vector<8x256xf32>, vector<8x256xf32> -> vector<40x256xf32>
      %c0_361 = arith.constant 0 : index
      %c0_362 = arith.constant 0 : index
      %477 = vector.load %arg7[%c0_361, %c0_362] : memref<16x40xf32, #tpu.memory_space<vmem>>, vector<16x40xf32>
      %cst_363 = arith.constant dense<0.000000e+00> : vector<16x256xf32>
      %478 = tpu.matmul %477, %476, %cst_363 {dimension_numbers = #tpu.dot_dimension_numbers<[1], [0], [0], [1], [0, 0, 1, 1], [], []>} : vector<16x40xf32>, vector<40x256xf32>, vector<16x256xf32> -> vector<16x256xf32>
      %c0_364 = arith.constant 0 : index
      %c0_365 = arith.constant 0 : index
      %479 = vector.load %arg8[%c0_364, %c0_365] : memref<16x1xf32, #tpu.memory_space<vmem>>, vector<16x1xf32>
      %480 = vector.broadcast %479 : vector<16x1xf32> to vector<16x256xf32>
      %481 = arith.addf %478, %480 : vector<16x256xf32>
      %cst_366 = arith.constant 0.000000e+00 : f32
      %482 = vector.broadcast %cst_366 : f32 to vector<16x256xf32>
      %483 = arith.maximumf %481, %482 : vector<16x256xf32>
      %cst_367 = arith.constant 0.000000e+00 : f32
      %484 = vector.broadcast %cst_367 : f32 to vector<16x4xf32>
      %485 = vector.extract_strided_slice %483 {offsets = [0, 4], sizes = [16, 252], strides = [1, 1]} : vector<16x256xf32> to vector<16x252xf32>
      %486 = tpu.concatenate %485, %484 in 1 : vector<16x252xf32>, vector<16x4xf32> -> vector<16x256xf32>
      %487 = arith.maximumf %483, %486 : vector<16x256xf32>
      %488 = vector.broadcast %392 : vector<1x256xf32> to vector<16x256xf32>
      %489 = arith.mulf %487, %488 : vector<16x256xf32>
      %cst_368 = arith.constant 0.000000e+00 : f32
      %490 = vector.broadcast %cst_368 : f32 to vector<16x8xf32>
      %491 = vector.extract_strided_slice %489 {offsets = [0, 0], sizes = [16, 248], strides = [1, 1]} : vector<16x256xf32> to vector<16x248xf32>
      %492 = tpu.concatenate %490, %491 in 1 : vector<16x8xf32>, vector<16x248xf32> -> vector<16x256xf32>
      %cst_369 = arith.constant 0.000000e+00 : f32
      %493 = vector.broadcast %cst_369 : f32 to vector<16x8xf32>
      %494 = vector.extract_strided_slice %489 {offsets = [0, 8], sizes = [16, 248], strides = [1, 1]} : vector<16x256xf32> to vector<16x248xf32>
      %495 = tpu.concatenate %494, %493 in 1 : vector<16x248xf32>, vector<16x8xf32> -> vector<16x256xf32>
      %496 = tpu.concatenate %492, %489, %495 in 0 : vector<16x256xf32>, vector<16x256xf32>, vector<16x256xf32> -> vector<48x256xf32>
      %c0_370 = arith.constant 0 : index
      %c0_371 = arith.constant 0 : index
      %497 = vector.load %arg9[%c0_370, %c0_371] : memref<32x48xf32, #tpu.memory_space<vmem>>, vector<32x48xf32>
      %cst_372 = arith.constant dense<0.000000e+00> : vector<32x256xf32>
      %498 = tpu.matmul %497, %496, %cst_372 {dimension_numbers = #tpu.dot_dimension_numbers<[1], [0], [0], [1], [0, 0, 1, 1], [], []>} : vector<32x48xf32>, vector<48x256xf32>, vector<32x256xf32> -> vector<32x256xf32>
      %c0_373 = arith.constant 0 : index
      %c0_374 = arith.constant 0 : index
      %499 = vector.load %arg10[%c0_373, %c0_374] : memref<32x1xf32, #tpu.memory_space<vmem>>, vector<32x1xf32>
      %500 = vector.broadcast %499 : vector<32x1xf32> to vector<32x256xf32>
      %501 = arith.addf %498, %500 : vector<32x256xf32>
      %cst_375 = arith.constant 0.000000e+00 : f32
      %502 = vector.broadcast %cst_375 : f32 to vector<32x256xf32>
      %503 = arith.maximumf %501, %502 : vector<32x256xf32>
      %cst_376 = arith.constant 0.000000e+00 : f32
      %504 = vector.broadcast %cst_376 : f32 to vector<32x8xf32>
      %505 = vector.extract_strided_slice %503 {offsets = [0, 8], sizes = [32, 248], strides = [1, 1]} : vector<32x256xf32> to vector<32x248xf32>
      %506 = tpu.concatenate %505, %504 in 1 : vector<32x248xf32>, vector<32x8xf32> -> vector<32x256xf32>
      %507 = arith.maximumf %503, %506 : vector<32x256xf32>
      %508 = tpu.iota {dimensions = array<i32: 0>} : vector<128x6xi32>
      %509 = tpu.iota {dimensions = array<i32: 1>} : vector<128x6xi32>
      %c16_i32_377 = arith.constant 16 : i32
      %510 = vector.broadcast %c16_i32_377 : i32 to vector<128x6xi32>
      %511 = arith.muli %510, %509 : vector<128x6xi32>
      %c16_i32_378 = arith.constant 16 : i32
      %512 = vector.broadcast %c16_i32_378 : i32 to vector<128x6xi32>
      %513 = arith.addi %512, %511 : vector<128x6xi32>
      %514 = arith.cmpi eq, %508, %513 : vector<128x6xi32>
      %515 = arith.extui %514 : vector<128x6xi1> to vector<128x6xi32>
      %516 = arith.sitofp %515 : vector<128x6xi32> to vector<128x6xf32>
      %517 = arith.truncf %516 : vector<128x6xf32> to vector<128x6xbf16>
      %518 = arith.truncf %507 : vector<32x256xf32> to vector<32x256xbf16>
      %519 = vector.extract_strided_slice %518 {offsets = [0, 0], sizes = [32, 128], strides = [1, 1]} : vector<32x256xbf16> to vector<32x128xbf16>
      %cst_379 = arith.constant dense<0.000000e+00> : vector<32x6xf32>
      %520 = tpu.matmul %519, %517, %cst_379 {dimension_numbers = #tpu.dot_dimension_numbers<[1], [0], [0], [1], [0, 0, 1, 1], [], []>} : vector<32x128xbf16>, vector<128x6xbf16>, vector<32x6xf32> -> vector<32x6xf32>
      %c0_380 = arith.constant 0 : index
      %c0_381 = arith.constant 0 : index
      %c0_382 = arith.constant 0 : index
      %521 = vector.load %arg18[%c0_380, %c0_381, %c0_382] : memref<32x2x6xf32, #tpu.memory_space<vmem>>, vector<32x1x6xf32>
      %522 = vector.shape_cast %521 : vector<32x1x6xf32> to vector<32x6xf32>
      %523 = vector.shape_cast %520 : vector<32x6xf32> to vector<32x1x6xf32>
      tpu.vector_store %arg18[%c0_380, %c0_381, %c0_382], %523 {strides = array<i32>} : memref<32x2x6xf32, #tpu.memory_space<vmem>>, vector<32x1x6xf32>,
      %524 = vector.extract_strided_slice %518 {offsets = [0, 128], sizes = [32, 128], strides = [1, 1]} : vector<32x256xbf16> to vector<32x128xbf16>
      %cst_383 = arith.constant dense<0.000000e+00> : vector<32x6xf32>
      %525 = tpu.matmul %524, %517, %cst_383 {dimension_numbers = #tpu.dot_dimension_numbers<[1], [0], [0], [1], [0, 0, 1, 1], [], []>} : vector<32x128xbf16>, vector<128x6xbf16>, vector<32x6xf32> -> vector<32x6xf32>
      %c0_384 = arith.constant 0 : index
      %c1_385 = arith.constant 1 : index
      %c0_386 = arith.constant 0 : index
      %526 = vector.load %arg18[%c0_384, %c1_385, %c0_386] : memref<32x2x6xf32, #tpu.memory_space<vmem>>, vector<32x1x6xf32>
      %527 = vector.shape_cast %526 : vector<32x1x6xf32> to vector<32x6xf32>
      %528 = vector.shape_cast %525 : vector<32x6xf32> to vector<32x1x6xf32>
      tpu.vector_store %arg18[%c0_384, %c1_385, %c0_386], %528 {strides = array<i32>} : memref<32x2x6xf32, #tpu.memory_space<vmem>>, vector<32x1x6xf32>,
    } else {
    }
    %c0 = arith.constant 0 : index
    %c0_1 = arith.constant 0 : index
    %3 = vector.load %arg19[%c0, %c0_1] : memref<2x1500xf32, #tpu.memory_space<vmem>>, vector<2x1500xf32>
    %c32_i32 = arith.constant 32 : i32
    %4 = arith.muli %arg0, %c32_i32 : i32
    %c0_i32_2 = arith.constant 0 : i32
    %5 = arith.addi %4, %c0_i32_2 : i32
    %6 = arith.index_cast %5 : i32 to index
    %c0_3 = arith.constant 0 : index
    %c0_4 = arith.constant 0 : index
    %7 = vector.load %arg18[%6, %c0_3, %c0_4] : memref<32x2x6xf32, #tpu.memory_space<vmem>>, vector<1x2x6xf32>
    %8 = vector.shape_cast %7 : vector<1x2x6xf32> to vector<2x6xf32>
    %9 = arith.truncf %8 : vector<2x6xf32> to vector<2x6xbf16>
    %c0_5 = arith.constant 0 : index
    %c0_6 = arith.constant 0 : index
    %c0_7 = arith.constant 0 : index
    %10 = vector.load %arg11[%c0_5, %c0_6, %c0_7] : memref<32x6x1500xbf16, #tpu.memory_space<vmem>>, vector<1x6x1500xbf16>
    %11 = vector.shape_cast %10 : vector<1x6x1500xbf16> to vector<6x1500xbf16>
    %cst = arith.constant dense<0.000000e+00> : vector<2x1500xf32>
    %12 = tpu.matmul %9, %11, %cst {dimension_numbers = #tpu.dot_dimension_numbers<[1], [0], [0], [1], [0, 0, 1, 1], [], []>} : vector<2x6xbf16>, vector<6x1500xbf16>, vector<2x1500xf32> -> vector<2x1500xf32>
    %13 = arith.addf %3, %12 : vector<2x1500xf32>
    %c0_8 = arith.constant 0 : index
    %c0_9 = arith.constant 0 : index
    %14 = vector.load %arg19[%c0_8, %c0_9] : memref<2x1500xf32, #tpu.memory_space<vmem>>, vector<2x1500xf32>
    tpu.vector_store %arg19[%c0_8, %c0_9], %13 {strides = array<i32>} : memref<2x1500xf32, #tpu.memory_space<vmem>>, vector<2x1500xf32>,
    %c0_10 = arith.constant 0 : index
    %c0_11 = arith.constant 0 : index
    %15 = vector.load %arg19[%c0_10, %c0_11] : memref<2x1500xf32, #tpu.memory_space<vmem>>, vector<2x1500xf32>
    %c32_i32_12 = arith.constant 32 : i32
    %16 = arith.muli %arg0, %c32_i32_12 : i32
    %c1_i32 = arith.constant 1 : i32
    %17 = arith.addi %16, %c1_i32 : i32
    %18 = arith.index_cast %17 : i32 to index
    %c0_13 = arith.constant 0 : index
    %c0_14 = arith.constant 0 : index
    %19 = vector.load %arg18[%18, %c0_13, %c0_14] : memref<32x2x6xf32, #tpu.memory_space<vmem>>, vector<1x2x6xf32>
    %20 = vector.shape_cast %19 : vector<1x2x6xf32> to vector<2x6xf32>
    %21 = arith.truncf %20 : vector<2x6xf32> to vector<2x6xbf16>
    %c1 = arith.constant 1 : index
    %c0_15 = arith.constant 0 : index
    %c0_16 = arith.constant 0 : index
    %22 = vector.load %arg11[%c1, %c0_15, %c0_16] : memref<32x6x1500xbf16, #tpu.memory_space<vmem>>, vector<1x6x1500xbf16>
    %23 = vector.shape_cast %22 : vector<1x6x1500xbf16> to vector<6x1500xbf16>
    %cst_17 = arith.constant dense<0.000000e+00> : vector<2x1500xf32>
    %24 = tpu.matmul %21, %23, %cst_17 {dimension_numbers = #tpu.dot_dimension_numbers<[1], [0], [0], [1], [0, 0, 1, 1], [], []>} : vector<2x6xbf16>, vector<6x1500xbf16>, vector<2x1500xf32> -> vector<2x1500xf32>
    %25 = arith.addf %15, %24 : vector<2x1500xf32>
    %c0_18 = arith.constant 0 : index
    %c0_19 = arith.constant 0 : index
    %26 = vector.load %arg19[%c0_18, %c0_19] : memref<2x1500xf32, #tpu.memory_space<vmem>>, vector<2x1500xf32>
    tpu.vector_store %arg19[%c0_18, %c0_19], %25 {strides = array<i32>} : memref<2x1500xf32, #tpu.memory_space<vmem>>, vector<2x1500xf32>,
    %c0_20 = arith.constant 0 : index
    %c0_21 = arith.constant 0 : index
    %27 = vector.load %arg19[%c0_20, %c0_21] : memref<2x1500xf32, #tpu.memory_space<vmem>>, vector<2x1500xf32>
    %c32_i32_22 = arith.constant 32 : i32
    %28 = arith.muli %arg0, %c32_i32_22 : i32
    %c2_i32 = arith.constant 2 : i32
    %29 = arith.addi %28, %c2_i32 : i32
    %30 = arith.index_cast %29 : i32 to index
    %c0_23 = arith.constant 0 : index
    %c0_24 = arith.constant 0 : index
    %31 = vector.load %arg18[%30, %c0_23, %c0_24] : memref<32x2x6xf32, #tpu.memory_space<vmem>>, vector<1x2x6xf32>
    %32 = vector.shape_cast %31 : vector<1x2x6xf32> to vector<2x6xf32>
    %33 = arith.truncf %32 : vector<2x6xf32> to vector<2x6xbf16>
    %c2 = arith.constant 2 : index
    %c0_25 = arith.constant 0 : index
    %c0_26 = arith.constant 0 : index
    %34 = vector.load %arg11[%c2, %c0_25, %c0_26] : memref<32x6x1500xbf16, #tpu.memory_space<vmem>>, vector<1x6x1500xbf16>
    %35 = vector.shape_cast %34 : vector<1x6x1500xbf16> to vector<6x1500xbf16>
    %cst_27 = arith.constant dense<0.000000e+00> : vector<2x1500xf32>
    %36 = tpu.matmul %33, %35, %cst_27 {dimension_numbers = #tpu.dot_dimension_numbers<[1], [0], [0], [1], [0, 0, 1, 1], [], []>} : vector<2x6xbf16>, vector<6x1500xbf16>, vector<2x1500xf32> -> vector<2x1500xf32>
    %37 = arith.addf %27, %36 : vector<2x1500xf32>
    %c0_28 = arith.constant 0 : index
    %c0_29 = arith.constant 0 : index
    %38 = vector.load %arg19[%c0_28, %c0_29] : memref<2x1500xf32, #tpu.memory_space<vmem>>, vector<2x1500xf32>
    tpu.vector_store %arg19[%c0_28, %c0_29], %37 {strides = array<i32>} : memref<2x1500xf32, #tpu.memory_space<vmem>>, vector<2x1500xf32>,
    %c0_30 = arith.constant 0 : index
    %c0_31 = arith.constant 0 : index
    %39 = vector.load %arg19[%c0_30, %c0_31] : memref<2x1500xf32, #tpu.memory_space<vmem>>, vector<2x1500xf32>
    %c32_i32_32 = arith.constant 32 : i32
    %40 = arith.muli %arg0, %c32_i32_32 : i32
    %c3_i32 = arith.constant 3 : i32
    %41 = arith.addi %40, %c3_i32 : i32
    %42 = arith.index_cast %41 : i32 to index
    %c0_33 = arith.constant 0 : index
    %c0_34 = arith.constant 0 : index
    %43 = vector.load %arg18[%42, %c0_33, %c0_34] : memref<32x2x6xf32, #tpu.memory_space<vmem>>, vector<1x2x6xf32>
    %44 = vector.shape_cast %43 : vector<1x2x6xf32> to vector<2x6xf32>
    %45 = arith.truncf %44 : vector<2x6xf32> to vector<2x6xbf16>
    %c3 = arith.constant 3 : index
    %c0_35 = arith.constant 0 : index
    %c0_36 = arith.constant 0 : index
    %46 = vector.load %arg11[%c3, %c0_35, %c0_36] : memref<32x6x1500xbf16, #tpu.memory_space<vmem>>, vector<1x6x1500xbf16>
    %47 = vector.shape_cast %46 : vector<1x6x1500xbf16> to vector<6x1500xbf16>
    %cst_37 = arith.constant dense<0.000000e+00> : vector<2x1500xf32>
    %48 = tpu.matmul %45, %47, %cst_37 {dimension_numbers = #tpu.dot_dimension_numbers<[1], [0], [0], [1], [0, 0, 1, 1], [], []>} : vector<2x6xbf16>, vector<6x1500xbf16>, vector<2x1500xf32> -> vector<2x1500xf32>
    %49 = arith.addf %39, %48 : vector<2x1500xf32>
    %c0_38 = arith.constant 0 : index
    %c0_39 = arith.constant 0 : index
    %50 = vector.load %arg19[%c0_38, %c0_39] : memref<2x1500xf32, #tpu.memory_space<vmem>>, vector<2x1500xf32>
    tpu.vector_store %arg19[%c0_38, %c0_39], %49 {strides = array<i32>} : memref<2x1500xf32, #tpu.memory_space<vmem>>, vector<2x1500xf32>,
    %c0_40 = arith.constant 0 : index
    %c0_41 = arith.constant 0 : index
    %51 = vector.load %arg19[%c0_40, %c0_41] : memref<2x1500xf32, #tpu.memory_space<vmem>>, vector<2x1500xf32>
    %c32_i32_42 = arith.constant 32 : i32
    %52 = arith.muli %arg0, %c32_i32_42 : i32
    %c4_i32 = arith.constant 4 : i32
    %53 = arith.addi %52, %c4_i32 : i32
    %54 = arith.index_cast %53 : i32 to index
    %c0_43 = arith.constant 0 : index
    %c0_44 = arith.constant 0 : index
    %55 = vector.load %arg18[%54, %c0_43, %c0_44] : memref<32x2x6xf32, #tpu.memory_space<vmem>>, vector<1x2x6xf32>
    %56 = vector.shape_cast %55 : vector<1x2x6xf32> to vector<2x6xf32>
    %57 = arith.truncf %56 : vector<2x6xf32> to vector<2x6xbf16>
    %c4 = arith.constant 4 : index
    %c0_45 = arith.constant 0 : index
    %c0_46 = arith.constant 0 : index
    %58 = vector.load %arg11[%c4, %c0_45, %c0_46] : memref<32x6x1500xbf16, #tpu.memory_space<vmem>>, vector<1x6x1500xbf16>
    %59 = vector.shape_cast %58 : vector<1x6x1500xbf16> to vector<6x1500xbf16>
    %cst_47 = arith.constant dense<0.000000e+00> : vector<2x1500xf32>
    %60 = tpu.matmul %57, %59, %cst_47 {dimension_numbers = #tpu.dot_dimension_numbers<[1], [0], [0], [1], [0, 0, 1, 1], [], []>} : vector<2x6xbf16>, vector<6x1500xbf16>, vector<2x1500xf32> -> vector<2x1500xf32>
    %61 = arith.addf %51, %60 : vector<2x1500xf32>
    %c0_48 = arith.constant 0 : index
    %c0_49 = arith.constant 0 : index
    %62 = vector.load %arg19[%c0_48, %c0_49] : memref<2x1500xf32, #tpu.memory_space<vmem>>, vector<2x1500xf32>
    tpu.vector_store %arg19[%c0_48, %c0_49], %61 {strides = array<i32>} : memref<2x1500xf32, #tpu.memory_space<vmem>>, vector<2x1500xf32>,
    %c0_50 = arith.constant 0 : index
    %c0_51 = arith.constant 0 : index
    %63 = vector.load %arg19[%c0_50, %c0_51] : memref<2x1500xf32, #tpu.memory_space<vmem>>, vector<2x1500xf32>
    %c32_i32_52 = arith.constant 32 : i32
    %64 = arith.muli %arg0, %c32_i32_52 : i32
    %c5_i32 = arith.constant 5 : i32
    %65 = arith.addi %64, %c5_i32 : i32
    %66 = arith.index_cast %65 : i32 to index
    %c0_53 = arith.constant 0 : index
    %c0_54 = arith.constant 0 : index
    %67 = vector.load %arg18[%66, %c0_53, %c0_54] : memref<32x2x6xf32, #tpu.memory_space<vmem>>, vector<1x2x6xf32>
    %68 = vector.shape_cast %67 : vector<1x2x6xf32> to vector<2x6xf32>
    %69 = arith.truncf %68 : vector<2x6xf32> to vector<2x6xbf16>
    %c5 = arith.constant 5 : index
    %c0_55 = arith.constant 0 : index
    %c0_56 = arith.constant 0 : index
    %70 = vector.load %arg11[%c5, %c0_55, %c0_56] : memref<32x6x1500xbf16, #tpu.memory_space<vmem>>, vector<1x6x1500xbf16>
    %71 = vector.shape_cast %70 : vector<1x6x1500xbf16> to vector<6x1500xbf16>
    %cst_57 = arith.constant dense<0.000000e+00> : vector<2x1500xf32>
    %72 = tpu.matmul %69, %71, %cst_57 {dimension_numbers = #tpu.dot_dimension_numbers<[1], [0], [0], [1], [0, 0, 1, 1], [], []>} : vector<2x6xbf16>, vector<6x1500xbf16>, vector<2x1500xf32> -> vector<2x1500xf32>
    %73 = arith.addf %63, %72 : vector<2x1500xf32>
    %c0_58 = arith.constant 0 : index
    %c0_59 = arith.constant 0 : index
    %74 = vector.load %arg19[%c0_58, %c0_59] : memref<2x1500xf32, #tpu.memory_space<vmem>>, vector<2x1500xf32>
    tpu.vector_store %arg19[%c0_58, %c0_59], %73 {strides = array<i32>} : memref<2x1500xf32, #tpu.memory_space<vmem>>, vector<2x1500xf32>,
    %c0_60 = arith.constant 0 : index
    %c0_61 = arith.constant 0 : index
    %75 = vector.load %arg19[%c0_60, %c0_61] : memref<2x1500xf32, #tpu.memory_space<vmem>>, vector<2x1500xf32>
    %c32_i32_62 = arith.constant 32 : i32
    %76 = arith.muli %arg0, %c32_i32_62 : i32
    %c6_i32 = arith.constant 6 : i32
    %77 = arith.addi %76, %c6_i32 : i32
    %78 = arith.index_cast %77 : i32 to index
    %c0_63 = arith.constant 0 : index
    %c0_64 = arith.constant 0 : index
    %79 = vector.load %arg18[%78, %c0_63, %c0_64] : memref<32x2x6xf32, #tpu.memory_space<vmem>>, vector<1x2x6xf32>
    %80 = vector.shape_cast %79 : vector<1x2x6xf32> to vector<2x6xf32>
    %81 = arith.truncf %80 : vector<2x6xf32> to vector<2x6xbf16>
    %c6 = arith.constant 6 : index
    %c0_65 = arith.constant 0 : index
    %c0_66 = arith.constant 0 : index
    %82 = vector.load %arg11[%c6, %c0_65, %c0_66] : memref<32x6x1500xbf16, #tpu.memory_space<vmem>>, vector<1x6x1500xbf16>
    %83 = vector.shape_cast %82 : vector<1x6x1500xbf16> to vector<6x1500xbf16>
    %cst_67 = arith.constant dense<0.000000e+00> : vector<2x1500xf32>
    %84 = tpu.matmul %81, %83, %cst_67 {dimension_numbers = #tpu.dot_dimension_numbers<[1], [0], [0], [1], [0, 0, 1, 1], [], []>} : vector<2x6xbf16>, vector<6x1500xbf16>, vector<2x1500xf32> -> vector<2x1500xf32>
    %85 = arith.addf %75, %84 : vector<2x1500xf32>
    %c0_68 = arith.constant 0 : index
    %c0_69 = arith.constant 0 : index
    %86 = vector.load %arg19[%c0_68, %c0_69] : memref<2x1500xf32, #tpu.memory_space<vmem>>, vector<2x1500xf32>
    tpu.vector_store %arg19[%c0_68, %c0_69], %85 {strides = array<i32>} : memref<2x1500xf32, #tpu.memory_space<vmem>>, vector<2x1500xf32>,
    %c0_70 = arith.constant 0 : index
    %c0_71 = arith.constant 0 : index
    %87 = vector.load %arg19[%c0_70, %c0_71] : memref<2x1500xf32, #tpu.memory_space<vmem>>, vector<2x1500xf32>
    %c32_i32_72 = arith.constant 32 : i32
    %88 = arith.muli %arg0, %c32_i32_72 : i32
    %c7_i32 = arith.constant 7 : i32
    %89 = arith.addi %88, %c7_i32 : i32
    %90 = arith.index_cast %89 : i32 to index
    %c0_73 = arith.constant 0 : index
    %c0_74 = arith.constant 0 : index
    %91 = vector.load %arg18[%90, %c0_73, %c0_74] : memref<32x2x6xf32, #tpu.memory_space<vmem>>, vector<1x2x6xf32>
    %92 = vector.shape_cast %91 : vector<1x2x6xf32> to vector<2x6xf32>
    %93 = arith.truncf %92 : vector<2x6xf32> to vector<2x6xbf16>
    %c7 = arith.constant 7 : index
    %c0_75 = arith.constant 0 : index
    %c0_76 = arith.constant 0 : index
    %94 = vector.load %arg11[%c7, %c0_75, %c0_76] : memref<32x6x1500xbf16, #tpu.memory_space<vmem>>, vector<1x6x1500xbf16>
    %95 = vector.shape_cast %94 : vector<1x6x1500xbf16> to vector<6x1500xbf16>
    %cst_77 = arith.constant dense<0.000000e+00> : vector<2x1500xf32>
    %96 = tpu.matmul %93, %95, %cst_77 {dimension_numbers = #tpu.dot_dimension_numbers<[1], [0], [0], [1], [0, 0, 1, 1], [], []>} : vector<2x6xbf16>, vector<6x1500xbf16>, vector<2x1500xf32> -> vector<2x1500xf32>
    %97 = arith.addf %87, %96 : vector<2x1500xf32>
    %c0_78 = arith.constant 0 : index
    %c0_79 = arith.constant 0 : index
    %98 = vector.load %arg19[%c0_78, %c0_79] : memref<2x1500xf32, #tpu.memory_space<vmem>>, vector<2x1500xf32>
    tpu.vector_store %arg19[%c0_78, %c0_79], %97 {strides = array<i32>} : memref<2x1500xf32, #tpu.memory_space<vmem>>, vector<2x1500xf32>,
    %c0_80 = arith.constant 0 : index
    %c0_81 = arith.constant 0 : index
    %99 = vector.load %arg19[%c0_80, %c0_81] : memref<2x1500xf32, #tpu.memory_space<vmem>>, vector<2x1500xf32>
    %c32_i32_82 = arith.constant 32 : i32
    %100 = arith.muli %arg0, %c32_i32_82 : i32
    %c8_i32 = arith.constant 8 : i32
    %101 = arith.addi %100, %c8_i32 : i32
    %102 = arith.index_cast %101 : i32 to index
    %c0_83 = arith.constant 0 : index
    %c0_84 = arith.constant 0 : index
    %103 = vector.load %arg18[%102, %c0_83, %c0_84] : memref<32x2x6xf32, #tpu.memory_space<vmem>>, vector<1x2x6xf32>
    %104 = vector.shape_cast %103 : vector<1x2x6xf32> to vector<2x6xf32>
    %105 = arith.truncf %104 : vector<2x6xf32> to vector<2x6xbf16>
    %c8 = arith.constant 8 : index
    %c0_85 = arith.constant 0 : index
    %c0_86 = arith.constant 0 : index
    %106 = vector.load %arg11[%c8, %c0_85, %c0_86] : memref<32x6x1500xbf16, #tpu.memory_space<vmem>>, vector<1x6x1500xbf16>
    %107 = vector.shape_cast %106 : vector<1x6x1500xbf16> to vector<6x1500xbf16>
    %cst_87 = arith.constant dense<0.000000e+00> : vector<2x1500xf32>
    %108 = tpu.matmul %105, %107, %cst_87 {dimension_numbers = #tpu.dot_dimension_numbers<[1], [0], [0], [1], [0, 0, 1, 1], [], []>} : vector<2x6xbf16>, vector<6x1500xbf16>, vector<2x1500xf32> -> vector<2x1500xf32>
    %109 = arith.addf %99, %108 : vector<2x1500xf32>
    %c0_88 = arith.constant 0 : index
    %c0_89 = arith.constant 0 : index
    %110 = vector.load %arg19[%c0_88, %c0_89] : memref<2x1500xf32, #tpu.memory_space<vmem>>, vector<2x1500xf32>
    tpu.vector_store %arg19[%c0_88, %c0_89], %109 {strides = array<i32>} : memref<2x1500xf32, #tpu.memory_space<vmem>>, vector<2x1500xf32>,
    %c0_90 = arith.constant 0 : index
    %c0_91 = arith.constant 0 : index
    %111 = vector.load %arg19[%c0_90, %c0_91] : memref<2x1500xf32, #tpu.memory_space<vmem>>, vector<2x1500xf32>
    %c32_i32_92 = arith.constant 32 : i32
    %112 = arith.muli %arg0, %c32_i32_92 : i32
    %c9_i32 = arith.constant 9 : i32
    %113 = arith.addi %112, %c9_i32 : i32
    %114 = arith.index_cast %113 : i32 to index
    %c0_93 = arith.constant 0 : index
    %c0_94 = arith.constant 0 : index
    %115 = vector.load %arg18[%114, %c0_93, %c0_94] : memref<32x2x6xf32, #tpu.memory_space<vmem>>, vector<1x2x6xf32>
    %116 = vector.shape_cast %115 : vector<1x2x6xf32> to vector<2x6xf32>
    %117 = arith.truncf %116 : vector<2x6xf32> to vector<2x6xbf16>
    %c9 = arith.constant 9 : index
    %c0_95 = arith.constant 0 : index
    %c0_96 = arith.constant 0 : index
    %118 = vector.load %arg11[%c9, %c0_95, %c0_96] : memref<32x6x1500xbf16, #tpu.memory_space<vmem>>, vector<1x6x1500xbf16>
    %119 = vector.shape_cast %118 : vector<1x6x1500xbf16> to vector<6x1500xbf16>
    %cst_97 = arith.constant dense<0.000000e+00> : vector<2x1500xf32>
    %120 = tpu.matmul %117, %119, %cst_97 {dimension_numbers = #tpu.dot_dimension_numbers<[1], [0], [0], [1], [0, 0, 1, 1], [], []>} : vector<2x6xbf16>, vector<6x1500xbf16>, vector<2x1500xf32> -> vector<2x1500xf32>
    %121 = arith.addf %111, %120 : vector<2x1500xf32>
    %c0_98 = arith.constant 0 : index
    %c0_99 = arith.constant 0 : index
    %122 = vector.load %arg19[%c0_98, %c0_99] : memref<2x1500xf32, #tpu.memory_space<vmem>>, vector<2x1500xf32>
    tpu.vector_store %arg19[%c0_98, %c0_99], %121 {strides = array<i32>} : memref<2x1500xf32, #tpu.memory_space<vmem>>, vector<2x1500xf32>,
    %c0_100 = arith.constant 0 : index
    %c0_101 = arith.constant 0 : index
    %123 = vector.load %arg19[%c0_100, %c0_101] : memref<2x1500xf32, #tpu.memory_space<vmem>>, vector<2x1500xf32>
    %c32_i32_102 = arith.constant 32 : i32
    %124 = arith.muli %arg0, %c32_i32_102 : i32
    %c10_i32 = arith.constant 10 : i32
    %125 = arith.addi %124, %c10_i32 : i32
    %126 = arith.index_cast %125 : i32 to index
    %c0_103 = arith.constant 0 : index
    %c0_104 = arith.constant 0 : index
    %127 = vector.load %arg18[%126, %c0_103, %c0_104] : memref<32x2x6xf32, #tpu.memory_space<vmem>>, vector<1x2x6xf32>
    %128 = vector.shape_cast %127 : vector<1x2x6xf32> to vector<2x6xf32>
    %129 = arith.truncf %128 : vector<2x6xf32> to vector<2x6xbf16>
    %c10 = arith.constant 10 : index
    %c0_105 = arith.constant 0 : index
    %c0_106 = arith.constant 0 : index
    %130 = vector.load %arg11[%c10, %c0_105, %c0_106] : memref<32x6x1500xbf16, #tpu.memory_space<vmem>>, vector<1x6x1500xbf16>
    %131 = vector.shape_cast %130 : vector<1x6x1500xbf16> to vector<6x1500xbf16>
    %cst_107 = arith.constant dense<0.000000e+00> : vector<2x1500xf32>
    %132 = tpu.matmul %129, %131, %cst_107 {dimension_numbers = #tpu.dot_dimension_numbers<[1], [0], [0], [1], [0, 0, 1, 1], [], []>} : vector<2x6xbf16>, vector<6x1500xbf16>, vector<2x1500xf32> -> vector<2x1500xf32>
    %133 = arith.addf %123, %132 : vector<2x1500xf32>
    %c0_108 = arith.constant 0 : index
    %c0_109 = arith.constant 0 : index
    %134 = vector.load %arg19[%c0_108, %c0_109] : memref<2x1500xf32, #tpu.memory_space<vmem>>, vector<2x1500xf32>
    tpu.vector_store %arg19[%c0_108, %c0_109], %133 {strides = array<i32>} : memref<2x1500xf32, #tpu.memory_space<vmem>>, vector<2x1500xf32>,
    %c0_110 = arith.constant 0 : index
    %c0_111 = arith.constant 0 : index
    %135 = vector.load %arg19[%c0_110, %c0_111] : memref<2x1500xf32, #tpu.memory_space<vmem>>, vector<2x1500xf32>
    %c32_i32_112 = arith.constant 32 : i32
    %136 = arith.muli %arg0, %c32_i32_112 : i32
    %c11_i32 = arith.constant 11 : i32
    %137 = arith.addi %136, %c11_i32 : i32
    %138 = arith.index_cast %137 : i32 to index
    %c0_113 = arith.constant 0 : index
    %c0_114 = arith.constant 0 : index
    %139 = vector.load %arg18[%138, %c0_113, %c0_114] : memref<32x2x6xf32, #tpu.memory_space<vmem>>, vector<1x2x6xf32>
    %140 = vector.shape_cast %139 : vector<1x2x6xf32> to vector<2x6xf32>
    %141 = arith.truncf %140 : vector<2x6xf32> to vector<2x6xbf16>
    %c11 = arith.constant 11 : index
    %c0_115 = arith.constant 0 : index
    %c0_116 = arith.constant 0 : index
    %142 = vector.load %arg11[%c11, %c0_115, %c0_116] : memref<32x6x1500xbf16, #tpu.memory_space<vmem>>, vector<1x6x1500xbf16>
    %143 = vector.shape_cast %142 : vector<1x6x1500xbf16> to vector<6x1500xbf16>
    %cst_117 = arith.constant dense<0.000000e+00> : vector<2x1500xf32>
    %144 = tpu.matmul %141, %143, %cst_117 {dimension_numbers = #tpu.dot_dimension_numbers<[1], [0], [0], [1], [0, 0, 1, 1], [], []>} : vector<2x6xbf16>, vector<6x1500xbf16>, vector<2x1500xf32> -> vector<2x1500xf32>
    %145 = arith.addf %135, %144 : vector<2x1500xf32>
    %c0_118 = arith.constant 0 : index
    %c0_119 = arith.constant 0 : index
    %146 = vector.load %arg19[%c0_118, %c0_119] : memref<2x1500xf32, #tpu.memory_space<vmem>>, vector<2x1500xf32>
    tpu.vector_store %arg19[%c0_118, %c0_119], %145 {strides = array<i32>} : memref<2x1500xf32, #tpu.memory_space<vmem>>, vector<2x1500xf32>,
    %c0_120 = arith.constant 0 : index
    %c0_121 = arith.constant 0 : index
    %147 = vector.load %arg19[%c0_120, %c0_121] : memref<2x1500xf32, #tpu.memory_space<vmem>>, vector<2x1500xf32>
    %c32_i32_122 = arith.constant 32 : i32
    %148 = arith.muli %arg0, %c32_i32_122 : i32
    %c12_i32 = arith.constant 12 : i32
    %149 = arith.addi %148, %c12_i32 : i32
    %150 = arith.index_cast %149 : i32 to index
    %c0_123 = arith.constant 0 : index
    %c0_124 = arith.constant 0 : index
    %151 = vector.load %arg18[%150, %c0_123, %c0_124] : memref<32x2x6xf32, #tpu.memory_space<vmem>>, vector<1x2x6xf32>
    %152 = vector.shape_cast %151 : vector<1x2x6xf32> to vector<2x6xf32>
    %153 = arith.truncf %152 : vector<2x6xf32> to vector<2x6xbf16>
    %c12 = arith.constant 12 : index
    %c0_125 = arith.constant 0 : index
    %c0_126 = arith.constant 0 : index
    %154 = vector.load %arg11[%c12, %c0_125, %c0_126] : memref<32x6x1500xbf16, #tpu.memory_space<vmem>>, vector<1x6x1500xbf16>
    %155 = vector.shape_cast %154 : vector<1x6x1500xbf16> to vector<6x1500xbf16>
    %cst_127 = arith.constant dense<0.000000e+00> : vector<2x1500xf32>
    %156 = tpu.matmul %153, %155, %cst_127 {dimension_numbers = #tpu.dot_dimension_numbers<[1], [0], [0], [1], [0, 0, 1, 1], [], []>} : vector<2x6xbf16>, vector<6x1500xbf16>, vector<2x1500xf32> -> vector<2x1500xf32>
    %157 = arith.addf %147, %156 : vector<2x1500xf32>
    %c0_128 = arith.constant 0 : index
    %c0_129 = arith.constant 0 : index
    %158 = vector.load %arg19[%c0_128, %c0_129] : memref<2x1500xf32, #tpu.memory_space<vmem>>, vector<2x1500xf32>
    tpu.vector_store %arg19[%c0_128, %c0_129], %157 {strides = array<i32>} : memref<2x1500xf32, #tpu.memory_space<vmem>>, vector<2x1500xf32>,
    %c0_130 = arith.constant 0 : index
    %c0_131 = arith.constant 0 : index
    %159 = vector.load %arg19[%c0_130, %c0_131] : memref<2x1500xf32, #tpu.memory_space<vmem>>, vector<2x1500xf32>
    %c32_i32_132 = arith.constant 32 : i32
    %160 = arith.muli %arg0, %c32_i32_132 : i32
    %c13_i32 = arith.constant 13 : i32
    %161 = arith.addi %160, %c13_i32 : i32
    %162 = arith.index_cast %161 : i32 to index
    %c0_133 = arith.constant 0 : index
    %c0_134 = arith.constant 0 : index
    %163 = vector.load %arg18[%162, %c0_133, %c0_134] : memref<32x2x6xf32, #tpu.memory_space<vmem>>, vector<1x2x6xf32>
    %164 = vector.shape_cast %163 : vector<1x2x6xf32> to vector<2x6xf32>
    %165 = arith.truncf %164 : vector<2x6xf32> to vector<2x6xbf16>
    %c13 = arith.constant 13 : index
    %c0_135 = arith.constant 0 : index
    %c0_136 = arith.constant 0 : index
    %166 = vector.load %arg11[%c13, %c0_135, %c0_136] : memref<32x6x1500xbf16, #tpu.memory_space<vmem>>, vector<1x6x1500xbf16>
    %167 = vector.shape_cast %166 : vector<1x6x1500xbf16> to vector<6x1500xbf16>
    %cst_137 = arith.constant dense<0.000000e+00> : vector<2x1500xf32>
    %168 = tpu.matmul %165, %167, %cst_137 {dimension_numbers = #tpu.dot_dimension_numbers<[1], [0], [0], [1], [0, 0, 1, 1], [], []>} : vector<2x6xbf16>, vector<6x1500xbf16>, vector<2x1500xf32> -> vector<2x1500xf32>
    %169 = arith.addf %159, %168 : vector<2x1500xf32>
    %c0_138 = arith.constant 0 : index
    %c0_139 = arith.constant 0 : index
    %170 = vector.load %arg19[%c0_138, %c0_139] : memref<2x1500xf32, #tpu.memory_space<vmem>>, vector<2x1500xf32>
    tpu.vector_store %arg19[%c0_138, %c0_139], %169 {strides = array<i32>} : memref<2x1500xf32, #tpu.memory_space<vmem>>, vector<2x1500xf32>,
    %c0_140 = arith.constant 0 : index
    %c0_141 = arith.constant 0 : index
    %171 = vector.load %arg19[%c0_140, %c0_141] : memref<2x1500xf32, #tpu.memory_space<vmem>>, vector<2x1500xf32>
    %c32_i32_142 = arith.constant 32 : i32
    %172 = arith.muli %arg0, %c32_i32_142 : i32
    %c14_i32 = arith.constant 14 : i32
    %173 = arith.addi %172, %c14_i32 : i32
    %174 = arith.index_cast %173 : i32 to index
    %c0_143 = arith.constant 0 : index
    %c0_144 = arith.constant 0 : index
    %175 = vector.load %arg18[%174, %c0_143, %c0_144] : memref<32x2x6xf32, #tpu.memory_space<vmem>>, vector<1x2x6xf32>
    %176 = vector.shape_cast %175 : vector<1x2x6xf32> to vector<2x6xf32>
    %177 = arith.truncf %176 : vector<2x6xf32> to vector<2x6xbf16>
    %c14 = arith.constant 14 : index
    %c0_145 = arith.constant 0 : index
    %c0_146 = arith.constant 0 : index
    %178 = vector.load %arg11[%c14, %c0_145, %c0_146] : memref<32x6x1500xbf16, #tpu.memory_space<vmem>>, vector<1x6x1500xbf16>
    %179 = vector.shape_cast %178 : vector<1x6x1500xbf16> to vector<6x1500xbf16>
    %cst_147 = arith.constant dense<0.000000e+00> : vector<2x1500xf32>
    %180 = tpu.matmul %177, %179, %cst_147 {dimension_numbers = #tpu.dot_dimension_numbers<[1], [0], [0], [1], [0, 0, 1, 1], [], []>} : vector<2x6xbf16>, vector<6x1500xbf16>, vector<2x1500xf32> -> vector<2x1500xf32>
    %181 = arith.addf %171, %180 : vector<2x1500xf32>
    %c0_148 = arith.constant 0 : index
    %c0_149 = arith.constant 0 : index
    %182 = vector.load %arg19[%c0_148, %c0_149] : memref<2x1500xf32, #tpu.memory_space<vmem>>, vector<2x1500xf32>
    tpu.vector_store %arg19[%c0_148, %c0_149], %181 {strides = array<i32>} : memref<2x1500xf32, #tpu.memory_space<vmem>>, vector<2x1500xf32>,
    %c0_150 = arith.constant 0 : index
    %c0_151 = arith.constant 0 : index
    %183 = vector.load %arg19[%c0_150, %c0_151] : memref<2x1500xf32, #tpu.memory_space<vmem>>, vector<2x1500xf32>
    %c32_i32_152 = arith.constant 32 : i32
    %184 = arith.muli %arg0, %c32_i32_152 : i32
    %c15_i32 = arith.constant 15 : i32
    %185 = arith.addi %184, %c15_i32 : i32
    %186 = arith.index_cast %185 : i32 to index
    %c0_153 = arith.constant 0 : index
    %c0_154 = arith.constant 0 : index
    %187 = vector.load %arg18[%186, %c0_153, %c0_154] : memref<32x2x6xf32, #tpu.memory_space<vmem>>, vector<1x2x6xf32>
    %188 = vector.shape_cast %187 : vector<1x2x6xf32> to vector<2x6xf32>
    %189 = arith.truncf %188 : vector<2x6xf32> to vector<2x6xbf16>
    %c15 = arith.constant 15 : index
    %c0_155 = arith.constant 0 : index
    %c0_156 = arith.constant 0 : index
    %190 = vector.load %arg11[%c15, %c0_155, %c0_156] : memref<32x6x1500xbf16, #tpu.memory_space<vmem>>, vector<1x6x1500xbf16>
    %191 = vector.shape_cast %190 : vector<1x6x1500xbf16> to vector<6x1500xbf16>
    %cst_157 = arith.constant dense<0.000000e+00> : vector<2x1500xf32>
    %192 = tpu.matmul %189, %191, %cst_157 {dimension_numbers = #tpu.dot_dimension_numbers<[1], [0], [0], [1], [0, 0, 1, 1], [], []>} : vector<2x6xbf16>, vector<6x1500xbf16>, vector<2x1500xf32> -> vector<2x1500xf32>
    %193 = arith.addf %183, %192 : vector<2x1500xf32>
    %c0_158 = arith.constant 0 : index
    %c0_159 = arith.constant 0 : index
    %194 = vector.load %arg19[%c0_158, %c0_159] : memref<2x1500xf32, #tpu.memory_space<vmem>>, vector<2x1500xf32>
    tpu.vector_store %arg19[%c0_158, %c0_159], %193 {strides = array<i32>} : memref<2x1500xf32, #tpu.memory_space<vmem>>, vector<2x1500xf32>,
    %c0_160 = arith.constant 0 : index
    %c0_161 = arith.constant 0 : index
    %195 = vector.load %arg19[%c0_160, %c0_161] : memref<2x1500xf32, #tpu.memory_space<vmem>>, vector<2x1500xf32>
    %c32_i32_162 = arith.constant 32 : i32
    %196 = arith.muli %arg0, %c32_i32_162 : i32
    %c16_i32 = arith.constant 16 : i32
    %197 = arith.addi %196, %c16_i32 : i32
    %198 = arith.index_cast %197 : i32 to index
    %c0_163 = arith.constant 0 : index
    %c0_164 = arith.constant 0 : index
    %199 = vector.load %arg18[%198, %c0_163, %c0_164] : memref<32x2x6xf32, #tpu.memory_space<vmem>>, vector<1x2x6xf32>
    %200 = vector.shape_cast %199 : vector<1x2x6xf32> to vector<2x6xf32>
    %201 = arith.truncf %200 : vector<2x6xf32> to vector<2x6xbf16>
    %c16 = arith.constant 16 : index
    %c0_165 = arith.constant 0 : index
    %c0_166 = arith.constant 0 : index
    %202 = vector.load %arg11[%c16, %c0_165, %c0_166] : memref<32x6x1500xbf16, #tpu.memory_space<vmem>>, vector<1x6x1500xbf16>
    %203 = vector.shape_cast %202 : vector<1x6x1500xbf16> to vector<6x1500xbf16>
    %cst_167 = arith.constant dense<0.000000e+00> : vector<2x1500xf32>
    %204 = tpu.matmul %201, %203, %cst_167 {dimension_numbers = #tpu.dot_dimension_numbers<[1], [0], [0], [1], [0, 0, 1, 1], [], []>} : vector<2x6xbf16>, vector<6x1500xbf16>, vector<2x1500xf32> -> vector<2x1500xf32>
    %205 = arith.addf %195, %204 : vector<2x1500xf32>
    %c0_168 = arith.constant 0 : index
    %c0_169 = arith.constant 0 : index
    %206 = vector.load %arg19[%c0_168, %c0_169] : memref<2x1500xf32, #tpu.memory_space<vmem>>, vector<2x1500xf32>
    tpu.vector_store %arg19[%c0_168, %c0_169], %205 {strides = array<i32>} : memref<2x1500xf32, #tpu.memory_space<vmem>>, vector<2x1500xf32>,
    %c0_170 = arith.constant 0 : index
    %c0_171 = arith.constant 0 : index
    %207 = vector.load %arg19[%c0_170, %c0_171] : memref<2x1500xf32, #tpu.memory_space<vmem>>, vector<2x1500xf32>
    %c32_i32_172 = arith.constant 32 : i32
    %208 = arith.muli %arg0, %c32_i32_172 : i32
    %c17_i32 = arith.constant 17 : i32
    %209 = arith.addi %208, %c17_i32 : i32
    %210 = arith.index_cast %209 : i32 to index
    %c0_173 = arith.constant 0 : index
    %c0_174 = arith.constant 0 : index
    %211 = vector.load %arg18[%210, %c0_173, %c0_174] : memref<32x2x6xf32, #tpu.memory_space<vmem>>, vector<1x2x6xf32>
    %212 = vector.shape_cast %211 : vector<1x2x6xf32> to vector<2x6xf32>
    %213 = arith.truncf %212 : vector<2x6xf32> to vector<2x6xbf16>
    %c17 = arith.constant 17 : index
    %c0_175 = arith.constant 0 : index
    %c0_176 = arith.constant 0 : index
    %214 = vector.load %arg11[%c17, %c0_175, %c0_176] : memref<32x6x1500xbf16, #tpu.memory_space<vmem>>, vector<1x6x1500xbf16>
    %215 = vector.shape_cast %214 : vector<1x6x1500xbf16> to vector<6x1500xbf16>
    %cst_177 = arith.constant dense<0.000000e+00> : vector<2x1500xf32>
    %216 = tpu.matmul %213, %215, %cst_177 {dimension_numbers = #tpu.dot_dimension_numbers<[1], [0], [0], [1], [0, 0, 1, 1], [], []>} : vector<2x6xbf16>, vector<6x1500xbf16>, vector<2x1500xf32> -> vector<2x1500xf32>
    %217 = arith.addf %207, %216 : vector<2x1500xf32>
    %c0_178 = arith.constant 0 : index
    %c0_179 = arith.constant 0 : index
    %218 = vector.load %arg19[%c0_178, %c0_179] : memref<2x1500xf32, #tpu.memory_space<vmem>>, vector<2x1500xf32>
    tpu.vector_store %arg19[%c0_178, %c0_179], %217 {strides = array<i32>} : memref<2x1500xf32, #tpu.memory_space<vmem>>, vector<2x1500xf32>,
    %c0_180 = arith.constant 0 : index
    %c0_181 = arith.constant 0 : index
    %219 = vector.load %arg19[%c0_180, %c0_181] : memref<2x1500xf32, #tpu.memory_space<vmem>>, vector<2x1500xf32>
    %c32_i32_182 = arith.constant 32 : i32
    %220 = arith.muli %arg0, %c32_i32_182 : i32
    %c18_i32 = arith.constant 18 : i32
    %221 = arith.addi %220, %c18_i32 : i32
    %222 = arith.index_cast %221 : i32 to index
    %c0_183 = arith.constant 0 : index
    %c0_184 = arith.constant 0 : index
    %223 = vector.load %arg18[%222, %c0_183, %c0_184] : memref<32x2x6xf32, #tpu.memory_space<vmem>>, vector<1x2x6xf32>
    %224 = vector.shape_cast %223 : vector<1x2x6xf32> to vector<2x6xf32>
    %225 = arith.truncf %224 : vector<2x6xf32> to vector<2x6xbf16>
    %c18 = arith.constant 18 : index
    %c0_185 = arith.constant 0 : index
    %c0_186 = arith.constant 0 : index
    %226 = vector.load %arg11[%c18, %c0_185, %c0_186] : memref<32x6x1500xbf16, #tpu.memory_space<vmem>>, vector<1x6x1500xbf16>
    %227 = vector.shape_cast %226 : vector<1x6x1500xbf16> to vector<6x1500xbf16>
    %cst_187 = arith.constant dense<0.000000e+00> : vector<2x1500xf32>
    %228 = tpu.matmul %225, %227, %cst_187 {dimension_numbers = #tpu.dot_dimension_numbers<[1], [0], [0], [1], [0, 0, 1, 1], [], []>} : vector<2x6xbf16>, vector<6x1500xbf16>, vector<2x1500xf32> -> vector<2x1500xf32>
    %229 = arith.addf %219, %228 : vector<2x1500xf32>
    %c0_188 = arith.constant 0 : index
    %c0_189 = arith.constant 0 : index
    %230 = vector.load %arg19[%c0_188, %c0_189] : memref<2x1500xf32, #tpu.memory_space<vmem>>, vector<2x1500xf32>
    tpu.vector_store %arg19[%c0_188, %c0_189], %229 {strides = array<i32>} : memref<2x1500xf32, #tpu.memory_space<vmem>>, vector<2x1500xf32>,
    %c0_190 = arith.constant 0 : index
    %c0_191 = arith.constant 0 : index
    %231 = vector.load %arg19[%c0_190, %c0_191] : memref<2x1500xf32, #tpu.memory_space<vmem>>, vector<2x1500xf32>
    %c32_i32_192 = arith.constant 32 : i32
    %232 = arith.muli %arg0, %c32_i32_192 : i32
    %c19_i32 = arith.constant 19 : i32
    %233 = arith.addi %232, %c19_i32 : i32
    %234 = arith.index_cast %233 : i32 to index
    %c0_193 = arith.constant 0 : index
    %c0_194 = arith.constant 0 : index
    %235 = vector.load %arg18[%234, %c0_193, %c0_194] : memref<32x2x6xf32, #tpu.memory_space<vmem>>, vector<1x2x6xf32>
    %236 = vector.shape_cast %235 : vector<1x2x6xf32> to vector<2x6xf32>
    %237 = arith.truncf %236 : vector<2x6xf32> to vector<2x6xbf16>
    %c19 = arith.constant 19 : index
    %c0_195 = arith.constant 0 : index
    %c0_196 = arith.constant 0 : index
    %238 = vector.load %arg11[%c19, %c0_195, %c0_196] : memref<32x6x1500xbf16, #tpu.memory_space<vmem>>, vector<1x6x1500xbf16>
    %239 = vector.shape_cast %238 : vector<1x6x1500xbf16> to vector<6x1500xbf16>
    %cst_197 = arith.constant dense<0.000000e+00> : vector<2x1500xf32>
    %240 = tpu.matmul %237, %239, %cst_197 {dimension_numbers = #tpu.dot_dimension_numbers<[1], [0], [0], [1], [0, 0, 1, 1], [], []>} : vector<2x6xbf16>, vector<6x1500xbf16>, vector<2x1500xf32> -> vector<2x1500xf32>
    %241 = arith.addf %231, %240 : vector<2x1500xf32>
    %c0_198 = arith.constant 0 : index
    %c0_199 = arith.constant 0 : index
    %242 = vector.load %arg19[%c0_198, %c0_199] : memref<2x1500xf32, #tpu.memory_space<vmem>>, vector<2x1500xf32>
    tpu.vector_store %arg19[%c0_198, %c0_199], %241 {strides = array<i32>} : memref<2x1500xf32, #tpu.memory_space<vmem>>, vector<2x1500xf32>,
    %c0_200 = arith.constant 0 : index
    %c0_201 = arith.constant 0 : index
    %243 = vector.load %arg19[%c0_200, %c0_201] : memref<2x1500xf32, #tpu.memory_space<vmem>>, vector<2x1500xf32>
    %c32_i32_202 = arith.constant 32 : i32
    %244 = arith.muli %arg0, %c32_i32_202 : i32
    %c20_i32 = arith.constant 20 : i32
    %245 = arith.addi %244, %c20_i32 : i32
    %246 = arith.index_cast %245 : i32 to index
    %c0_203 = arith.constant 0 : index
    %c0_204 = arith.constant 0 : index
    %247 = vector.load %arg18[%246, %c0_203, %c0_204] : memref<32x2x6xf32, #tpu.memory_space<vmem>>, vector<1x2x6xf32>
    %248 = vector.shape_cast %247 : vector<1x2x6xf32> to vector<2x6xf32>
    %249 = arith.truncf %248 : vector<2x6xf32> to vector<2x6xbf16>
    %c20 = arith.constant 20 : index
    %c0_205 = arith.constant 0 : index
    %c0_206 = arith.constant 0 : index
    %250 = vector.load %arg11[%c20, %c0_205, %c0_206] : memref<32x6x1500xbf16, #tpu.memory_space<vmem>>, vector<1x6x1500xbf16>
    %251 = vector.shape_cast %250 : vector<1x6x1500xbf16> to vector<6x1500xbf16>
    %cst_207 = arith.constant dense<0.000000e+00> : vector<2x1500xf32>
    %252 = tpu.matmul %249, %251, %cst_207 {dimension_numbers = #tpu.dot_dimension_numbers<[1], [0], [0], [1], [0, 0, 1, 1], [], []>} : vector<2x6xbf16>, vector<6x1500xbf16>, vector<2x1500xf32> -> vector<2x1500xf32>
    %253 = arith.addf %243, %252 : vector<2x1500xf32>
    %c0_208 = arith.constant 0 : index
    %c0_209 = arith.constant 0 : index
    %254 = vector.load %arg19[%c0_208, %c0_209] : memref<2x1500xf32, #tpu.memory_space<vmem>>, vector<2x1500xf32>
    tpu.vector_store %arg19[%c0_208, %c0_209], %253 {strides = array<i32>} : memref<2x1500xf32, #tpu.memory_space<vmem>>, vector<2x1500xf32>,
    %c0_210 = arith.constant 0 : index
    %c0_211 = arith.constant 0 : index
    %255 = vector.load %arg19[%c0_210, %c0_211] : memref<2x1500xf32, #tpu.memory_space<vmem>>, vector<2x1500xf32>
    %c32_i32_212 = arith.constant 32 : i32
    %256 = arith.muli %arg0, %c32_i32_212 : i32
    %c21_i32 = arith.constant 21 : i32
    %257 = arith.addi %256, %c21_i32 : i32
    %258 = arith.index_cast %257 : i32 to index
    %c0_213 = arith.constant 0 : index
    %c0_214 = arith.constant 0 : index
    %259 = vector.load %arg18[%258, %c0_213, %c0_214] : memref<32x2x6xf32, #tpu.memory_space<vmem>>, vector<1x2x6xf32>
    %260 = vector.shape_cast %259 : vector<1x2x6xf32> to vector<2x6xf32>
    %261 = arith.truncf %260 : vector<2x6xf32> to vector<2x6xbf16>
    %c21 = arith.constant 21 : index
    %c0_215 = arith.constant 0 : index
    %c0_216 = arith.constant 0 : index
    %262 = vector.load %arg11[%c21, %c0_215, %c0_216] : memref<32x6x1500xbf16, #tpu.memory_space<vmem>>, vector<1x6x1500xbf16>
    %263 = vector.shape_cast %262 : vector<1x6x1500xbf16> to vector<6x1500xbf16>
    %cst_217 = arith.constant dense<0.000000e+00> : vector<2x1500xf32>
    %264 = tpu.matmul %261, %263, %cst_217 {dimension_numbers = #tpu.dot_dimension_numbers<[1], [0], [0], [1], [0, 0, 1, 1], [], []>} : vector<2x6xbf16>, vector<6x1500xbf16>, vector<2x1500xf32> -> vector<2x1500xf32>
    %265 = arith.addf %255, %264 : vector<2x1500xf32>
    %c0_218 = arith.constant 0 : index
    %c0_219 = arith.constant 0 : index
    %266 = vector.load %arg19[%c0_218, %c0_219] : memref<2x1500xf32, #tpu.memory_space<vmem>>, vector<2x1500xf32>
    tpu.vector_store %arg19[%c0_218, %c0_219], %265 {strides = array<i32>} : memref<2x1500xf32, #tpu.memory_space<vmem>>, vector<2x1500xf32>,
    %c0_220 = arith.constant 0 : index
    %c0_221 = arith.constant 0 : index
    %267 = vector.load %arg19[%c0_220, %c0_221] : memref<2x1500xf32, #tpu.memory_space<vmem>>, vector<2x1500xf32>
    %c32_i32_222 = arith.constant 32 : i32
    %268 = arith.muli %arg0, %c32_i32_222 : i32
    %c22_i32 = arith.constant 22 : i32
    %269 = arith.addi %268, %c22_i32 : i32
    %270 = arith.index_cast %269 : i32 to index
    %c0_223 = arith.constant 0 : index
    %c0_224 = arith.constant 0 : index
    %271 = vector.load %arg18[%270, %c0_223, %c0_224] : memref<32x2x6xf32, #tpu.memory_space<vmem>>, vector<1x2x6xf32>
    %272 = vector.shape_cast %271 : vector<1x2x6xf32> to vector<2x6xf32>
    %273 = arith.truncf %272 : vector<2x6xf32> to vector<2x6xbf16>
    %c22 = arith.constant 22 : index
    %c0_225 = arith.constant 0 : index
    %c0_226 = arith.constant 0 : index
    %274 = vector.load %arg11[%c22, %c0_225, %c0_226] : memref<32x6x1500xbf16, #tpu.memory_space<vmem>>, vector<1x6x1500xbf16>
    %275 = vector.shape_cast %274 : vector<1x6x1500xbf16> to vector<6x1500xbf16>
    %cst_227 = arith.constant dense<0.000000e+00> : vector<2x1500xf32>
    %276 = tpu.matmul %273, %275, %cst_227 {dimension_numbers = #tpu.dot_dimension_numbers<[1], [0], [0], [1], [0, 0, 1, 1], [], []>} : vector<2x6xbf16>, vector<6x1500xbf16>, vector<2x1500xf32> -> vector<2x1500xf32>
    %277 = arith.addf %267, %276 : vector<2x1500xf32>
    %c0_228 = arith.constant 0 : index
    %c0_229 = arith.constant 0 : index
    %278 = vector.load %arg19[%c0_228, %c0_229] : memref<2x1500xf32, #tpu.memory_space<vmem>>, vector<2x1500xf32>
    tpu.vector_store %arg19[%c0_228, %c0_229], %277 {strides = array<i32>} : memref<2x1500xf32, #tpu.memory_space<vmem>>, vector<2x1500xf32>,
    %c0_230 = arith.constant 0 : index
    %c0_231 = arith.constant 0 : index
    %279 = vector.load %arg19[%c0_230, %c0_231] : memref<2x1500xf32, #tpu.memory_space<vmem>>, vector<2x1500xf32>
    %c32_i32_232 = arith.constant 32 : i32
    %280 = arith.muli %arg0, %c32_i32_232 : i32
    %c23_i32 = arith.constant 23 : i32
    %281 = arith.addi %280, %c23_i32 : i32
    %282 = arith.index_cast %281 : i32 to index
    %c0_233 = arith.constant 0 : index
    %c0_234 = arith.constant 0 : index
    %283 = vector.load %arg18[%282, %c0_233, %c0_234] : memref<32x2x6xf32, #tpu.memory_space<vmem>>, vector<1x2x6xf32>
    %284 = vector.shape_cast %283 : vector<1x2x6xf32> to vector<2x6xf32>
    %285 = arith.truncf %284 : vector<2x6xf32> to vector<2x6xbf16>
    %c23 = arith.constant 23 : index
    %c0_235 = arith.constant 0 : index
    %c0_236 = arith.constant 0 : index
    %286 = vector.load %arg11[%c23, %c0_235, %c0_236] : memref<32x6x1500xbf16, #tpu.memory_space<vmem>>, vector<1x6x1500xbf16>
    %287 = vector.shape_cast %286 : vector<1x6x1500xbf16> to vector<6x1500xbf16>
    %cst_237 = arith.constant dense<0.000000e+00> : vector<2x1500xf32>
    %288 = tpu.matmul %285, %287, %cst_237 {dimension_numbers = #tpu.dot_dimension_numbers<[1], [0], [0], [1], [0, 0, 1, 1], [], []>} : vector<2x6xbf16>, vector<6x1500xbf16>, vector<2x1500xf32> -> vector<2x1500xf32>
    %289 = arith.addf %279, %288 : vector<2x1500xf32>
    %c0_238 = arith.constant 0 : index
    %c0_239 = arith.constant 0 : index
    %290 = vector.load %arg19[%c0_238, %c0_239] : memref<2x1500xf32, #tpu.memory_space<vmem>>, vector<2x1500xf32>
    tpu.vector_store %arg19[%c0_238, %c0_239], %289 {strides = array<i32>} : memref<2x1500xf32, #tpu.memory_space<vmem>>, vector<2x1500xf32>,
    %c0_240 = arith.constant 0 : index
    %c0_241 = arith.constant 0 : index
    %291 = vector.load %arg19[%c0_240, %c0_241] : memref<2x1500xf32, #tpu.memory_space<vmem>>, vector<2x1500xf32>
    %c32_i32_242 = arith.constant 32 : i32
    %292 = arith.muli %arg0, %c32_i32_242 : i32
    %c24_i32 = arith.constant 24 : i32
    %293 = arith.addi %292, %c24_i32 : i32
    %294 = arith.index_cast %293 : i32 to index
    %c0_243 = arith.constant 0 : index
    %c0_244 = arith.constant 0 : index
    %295 = vector.load %arg18[%294, %c0_243, %c0_244] : memref<32x2x6xf32, #tpu.memory_space<vmem>>, vector<1x2x6xf32>
    %296 = vector.shape_cast %295 : vector<1x2x6xf32> to vector<2x6xf32>
    %297 = arith.truncf %296 : vector<2x6xf32> to vector<2x6xbf16>
    %c24 = arith.constant 24 : index
    %c0_245 = arith.constant 0 : index
    %c0_246 = arith.constant 0 : index
    %298 = vector.load %arg11[%c24, %c0_245, %c0_246] : memref<32x6x1500xbf16, #tpu.memory_space<vmem>>, vector<1x6x1500xbf16>
    %299 = vector.shape_cast %298 : vector<1x6x1500xbf16> to vector<6x1500xbf16>
    %cst_247 = arith.constant dense<0.000000e+00> : vector<2x1500xf32>
    %300 = tpu.matmul %297, %299, %cst_247 {dimension_numbers = #tpu.dot_dimension_numbers<[1], [0], [0], [1], [0, 0, 1, 1], [], []>} : vector<2x6xbf16>, vector<6x1500xbf16>, vector<2x1500xf32> -> vector<2x1500xf32>
    %301 = arith.addf %291, %300 : vector<2x1500xf32>
    %c0_248 = arith.constant 0 : index
    %c0_249 = arith.constant 0 : index
    %302 = vector.load %arg19[%c0_248, %c0_249] : memref<2x1500xf32, #tpu.memory_space<vmem>>, vector<2x1500xf32>
    tpu.vector_store %arg19[%c0_248, %c0_249], %301 {strides = array<i32>} : memref<2x1500xf32, #tpu.memory_space<vmem>>, vector<2x1500xf32>,
    %c0_250 = arith.constant 0 : index
    %c0_251 = arith.constant 0 : index
    %303 = vector.load %arg19[%c0_250, %c0_251] : memref<2x1500xf32, #tpu.memory_space<vmem>>, vector<2x1500xf32>
    %c32_i32_252 = arith.constant 32 : i32
    %304 = arith.muli %arg0, %c32_i32_252 : i32
    %c25_i32 = arith.constant 25 : i32
    %305 = arith.addi %304, %c25_i32 : i32
    %306 = arith.index_cast %305 : i32 to index
    %c0_253 = arith.constant 0 : index
    %c0_254 = arith.constant 0 : index
    %307 = vector.load %arg18[%306, %c0_253, %c0_254] : memref<32x2x6xf32, #tpu.memory_space<vmem>>, vector<1x2x6xf32>
    %308 = vector.shape_cast %307 : vector<1x2x6xf32> to vector<2x6xf32>
    %309 = arith.truncf %308 : vector<2x6xf32> to vector<2x6xbf16>
    %c25 = arith.constant 25 : index
    %c0_255 = arith.constant 0 : index
    %c0_256 = arith.constant 0 : index
    %310 = vector.load %arg11[%c25, %c0_255, %c0_256] : memref<32x6x1500xbf16, #tpu.memory_space<vmem>>, vector<1x6x1500xbf16>
    %311 = vector.shape_cast %310 : vector<1x6x1500xbf16> to vector<6x1500xbf16>
    %cst_257 = arith.constant dense<0.000000e+00> : vector<2x1500xf32>
    %312 = tpu.matmul %309, %311, %cst_257 {dimension_numbers = #tpu.dot_dimension_numbers<[1], [0], [0], [1], [0, 0, 1, 1], [], []>} : vector<2x6xbf16>, vector<6x1500xbf16>, vector<2x1500xf32> -> vector<2x1500xf32>
    %313 = arith.addf %303, %312 : vector<2x1500xf32>
    %c0_258 = arith.constant 0 : index
    %c0_259 = arith.constant 0 : index
    %314 = vector.load %arg19[%c0_258, %c0_259] : memref<2x1500xf32, #tpu.memory_space<vmem>>, vector<2x1500xf32>
    tpu.vector_store %arg19[%c0_258, %c0_259], %313 {strides = array<i32>} : memref<2x1500xf32, #tpu.memory_space<vmem>>, vector<2x1500xf32>,
    %c0_260 = arith.constant 0 : index
    %c0_261 = arith.constant 0 : index
    %315 = vector.load %arg19[%c0_260, %c0_261] : memref<2x1500xf32, #tpu.memory_space<vmem>>, vector<2x1500xf32>
    %c32_i32_262 = arith.constant 32 : i32
    %316 = arith.muli %arg0, %c32_i32_262 : i32
    %c26_i32 = arith.constant 26 : i32
    %317 = arith.addi %316, %c26_i32 : i32
    %318 = arith.index_cast %317 : i32 to index
    %c0_263 = arith.constant 0 : index
    %c0_264 = arith.constant 0 : index
    %319 = vector.load %arg18[%318, %c0_263, %c0_264] : memref<32x2x6xf32, #tpu.memory_space<vmem>>, vector<1x2x6xf32>
    %320 = vector.shape_cast %319 : vector<1x2x6xf32> to vector<2x6xf32>
    %321 = arith.truncf %320 : vector<2x6xf32> to vector<2x6xbf16>
    %c26 = arith.constant 26 : index
    %c0_265 = arith.constant 0 : index
    %c0_266 = arith.constant 0 : index
    %322 = vector.load %arg11[%c26, %c0_265, %c0_266] : memref<32x6x1500xbf16, #tpu.memory_space<vmem>>, vector<1x6x1500xbf16>
    %323 = vector.shape_cast %322 : vector<1x6x1500xbf16> to vector<6x1500xbf16>
    %cst_267 = arith.constant dense<0.000000e+00> : vector<2x1500xf32>
    %324 = tpu.matmul %321, %323, %cst_267 {dimension_numbers = #tpu.dot_dimension_numbers<[1], [0], [0], [1], [0, 0, 1, 1], [], []>} : vector<2x6xbf16>, vector<6x1500xbf16>, vector<2x1500xf32> -> vector<2x1500xf32>
    %325 = arith.addf %315, %324 : vector<2x1500xf32>
    %c0_268 = arith.constant 0 : index
    %c0_269 = arith.constant 0 : index
    %326 = vector.load %arg19[%c0_268, %c0_269] : memref<2x1500xf32, #tpu.memory_space<vmem>>, vector<2x1500xf32>
    tpu.vector_store %arg19[%c0_268, %c0_269], %325 {strides = array<i32>} : memref<2x1500xf32, #tpu.memory_space<vmem>>, vector<2x1500xf32>,
    %c0_270 = arith.constant 0 : index
    %c0_271 = arith.constant 0 : index
    %327 = vector.load %arg19[%c0_270, %c0_271] : memref<2x1500xf32, #tpu.memory_space<vmem>>, vector<2x1500xf32>
    %c32_i32_272 = arith.constant 32 : i32
    %328 = arith.muli %arg0, %c32_i32_272 : i32
    %c27_i32 = arith.constant 27 : i32
    %329 = arith.addi %328, %c27_i32 : i32
    %330 = arith.index_cast %329 : i32 to index
    %c0_273 = arith.constant 0 : index
    %c0_274 = arith.constant 0 : index
    %331 = vector.load %arg18[%330, %c0_273, %c0_274] : memref<32x2x6xf32, #tpu.memory_space<vmem>>, vector<1x2x6xf32>
    %332 = vector.shape_cast %331 : vector<1x2x6xf32> to vector<2x6xf32>
    %333 = arith.truncf %332 : vector<2x6xf32> to vector<2x6xbf16>
    %c27 = arith.constant 27 : index
    %c0_275 = arith.constant 0 : index
    %c0_276 = arith.constant 0 : index
    %334 = vector.load %arg11[%c27, %c0_275, %c0_276] : memref<32x6x1500xbf16, #tpu.memory_space<vmem>>, vector<1x6x1500xbf16>
    %335 = vector.shape_cast %334 : vector<1x6x1500xbf16> to vector<6x1500xbf16>
    %cst_277 = arith.constant dense<0.000000e+00> : vector<2x1500xf32>
    %336 = tpu.matmul %333, %335, %cst_277 {dimension_numbers = #tpu.dot_dimension_numbers<[1], [0], [0], [1], [0, 0, 1, 1], [], []>} : vector<2x6xbf16>, vector<6x1500xbf16>, vector<2x1500xf32> -> vector<2x1500xf32>
    %337 = arith.addf %327, %336 : vector<2x1500xf32>
    %c0_278 = arith.constant 0 : index
    %c0_279 = arith.constant 0 : index
    %338 = vector.load %arg19[%c0_278, %c0_279] : memref<2x1500xf32, #tpu.memory_space<vmem>>, vector<2x1500xf32>
    tpu.vector_store %arg19[%c0_278, %c0_279], %337 {strides = array<i32>} : memref<2x1500xf32, #tpu.memory_space<vmem>>, vector<2x1500xf32>,
    %c0_280 = arith.constant 0 : index
    %c0_281 = arith.constant 0 : index
    %339 = vector.load %arg19[%c0_280, %c0_281] : memref<2x1500xf32, #tpu.memory_space<vmem>>, vector<2x1500xf32>
    %c32_i32_282 = arith.constant 32 : i32
    %340 = arith.muli %arg0, %c32_i32_282 : i32
    %c28_i32 = arith.constant 28 : i32
    %341 = arith.addi %340, %c28_i32 : i32
    %342 = arith.index_cast %341 : i32 to index
    %c0_283 = arith.constant 0 : index
    %c0_284 = arith.constant 0 : index
    %343 = vector.load %arg18[%342, %c0_283, %c0_284] : memref<32x2x6xf32, #tpu.memory_space<vmem>>, vector<1x2x6xf32>
    %344 = vector.shape_cast %343 : vector<1x2x6xf32> to vector<2x6xf32>
    %345 = arith.truncf %344 : vector<2x6xf32> to vector<2x6xbf16>
    %c28 = arith.constant 28 : index
    %c0_285 = arith.constant 0 : index
    %c0_286 = arith.constant 0 : index
    %346 = vector.load %arg11[%c28, %c0_285, %c0_286] : memref<32x6x1500xbf16, #tpu.memory_space<vmem>>, vector<1x6x1500xbf16>
    %347 = vector.shape_cast %346 : vector<1x6x1500xbf16> to vector<6x1500xbf16>
    %cst_287 = arith.constant dense<0.000000e+00> : vector<2x1500xf32>
    %348 = tpu.matmul %345, %347, %cst_287 {dimension_numbers = #tpu.dot_dimension_numbers<[1], [0], [0], [1], [0, 0, 1, 1], [], []>} : vector<2x6xbf16>, vector<6x1500xbf16>, vector<2x1500xf32> -> vector<2x1500xf32>
    %349 = arith.addf %339, %348 : vector<2x1500xf32>
    %c0_288 = arith.constant 0 : index
    %c0_289 = arith.constant 0 : index
    %350 = vector.load %arg19[%c0_288, %c0_289] : memref<2x1500xf32, #tpu.memory_space<vmem>>, vector<2x1500xf32>
    tpu.vector_store %arg19[%c0_288, %c0_289], %349 {strides = array<i32>} : memref<2x1500xf32, #tpu.memory_space<vmem>>, vector<2x1500xf32>,
    %c0_290 = arith.constant 0 : index
    %c0_291 = arith.constant 0 : index
    %351 = vector.load %arg19[%c0_290, %c0_291] : memref<2x1500xf32, #tpu.memory_space<vmem>>, vector<2x1500xf32>
    %c32_i32_292 = arith.constant 32 : i32
    %352 = arith.muli %arg0, %c32_i32_292 : i32
    %c29_i32 = arith.constant 29 : i32
    %353 = arith.addi %352, %c29_i32 : i32
    %354 = arith.index_cast %353 : i32 to index
    %c0_293 = arith.constant 0 : index
    %c0_294 = arith.constant 0 : index
    %355 = vector.load %arg18[%354, %c0_293, %c0_294] : memref<32x2x6xf32, #tpu.memory_space<vmem>>, vector<1x2x6xf32>
    %356 = vector.shape_cast %355 : vector<1x2x6xf32> to vector<2x6xf32>
    %357 = arith.truncf %356 : vector<2x6xf32> to vector<2x6xbf16>
    %c29 = arith.constant 29 : index
    %c0_295 = arith.constant 0 : index
    %c0_296 = arith.constant 0 : index
    %358 = vector.load %arg11[%c29, %c0_295, %c0_296] : memref<32x6x1500xbf16, #tpu.memory_space<vmem>>, vector<1x6x1500xbf16>
    %359 = vector.shape_cast %358 : vector<1x6x1500xbf16> to vector<6x1500xbf16>
    %cst_297 = arith.constant dense<0.000000e+00> : vector<2x1500xf32>
    %360 = tpu.matmul %357, %359, %cst_297 {dimension_numbers = #tpu.dot_dimension_numbers<[1], [0], [0], [1], [0, 0, 1, 1], [], []>} : vector<2x6xbf16>, vector<6x1500xbf16>, vector<2x1500xf32> -> vector<2x1500xf32>
    %361 = arith.addf %351, %360 : vector<2x1500xf32>
    %c0_298 = arith.constant 0 : index
    %c0_299 = arith.constant 0 : index
    %362 = vector.load %arg19[%c0_298, %c0_299] : memref<2x1500xf32, #tpu.memory_space<vmem>>, vector<2x1500xf32>
    tpu.vector_store %arg19[%c0_298, %c0_299], %361 {strides = array<i32>} : memref<2x1500xf32, #tpu.memory_space<vmem>>, vector<2x1500xf32>,
    %c0_300 = arith.constant 0 : index
    %c0_301 = arith.constant 0 : index
    %363 = vector.load %arg19[%c0_300, %c0_301] : memref<2x1500xf32, #tpu.memory_space<vmem>>, vector<2x1500xf32>
    %c32_i32_302 = arith.constant 32 : i32
    %364 = arith.muli %arg0, %c32_i32_302 : i32
    %c30_i32 = arith.constant 30 : i32
    %365 = arith.addi %364, %c30_i32 : i32
    %366 = arith.index_cast %365 : i32 to index
    %c0_303 = arith.constant 0 : index
    %c0_304 = arith.constant 0 : index
    %367 = vector.load %arg18[%366, %c0_303, %c0_304] : memref<32x2x6xf32, #tpu.memory_space<vmem>>, vector<1x2x6xf32>
    %368 = vector.shape_cast %367 : vector<1x2x6xf32> to vector<2x6xf32>
    %369 = arith.truncf %368 : vector<2x6xf32> to vector<2x6xbf16>
    %c30 = arith.constant 30 : index
    %c0_305 = arith.constant 0 : index
    %c0_306 = arith.constant 0 : index
    %370 = vector.load %arg11[%c30, %c0_305, %c0_306] : memref<32x6x1500xbf16, #tpu.memory_space<vmem>>, vector<1x6x1500xbf16>
    %371 = vector.shape_cast %370 : vector<1x6x1500xbf16> to vector<6x1500xbf16>
    %cst_307 = arith.constant dense<0.000000e+00> : vector<2x1500xf32>
    %372 = tpu.matmul %369, %371, %cst_307 {dimension_numbers = #tpu.dot_dimension_numbers<[1], [0], [0], [1], [0, 0, 1, 1], [], []>} : vector<2x6xbf16>, vector<6x1500xbf16>, vector<2x1500xf32> -> vector<2x1500xf32>
    %373 = arith.addf %363, %372 : vector<2x1500xf32>
    %c0_308 = arith.constant 0 : index
    %c0_309 = arith.constant 0 : index
    %374 = vector.load %arg19[%c0_308, %c0_309] : memref<2x1500xf32, #tpu.memory_space<vmem>>, vector<2x1500xf32>
    tpu.vector_store %arg19[%c0_308, %c0_309], %373 {strides = array<i32>} : memref<2x1500xf32, #tpu.memory_space<vmem>>, vector<2x1500xf32>,
    %c0_310 = arith.constant 0 : index
    %c0_311 = arith.constant 0 : index
    %375 = vector.load %arg19[%c0_310, %c0_311] : memref<2x1500xf32, #tpu.memory_space<vmem>>, vector<2x1500xf32>
    %c32_i32_312 = arith.constant 32 : i32
    %376 = arith.muli %arg0, %c32_i32_312 : i32
    %c31_i32 = arith.constant 31 : i32
    %377 = arith.addi %376, %c31_i32 : i32
    %378 = arith.index_cast %377 : i32 to index
    %c0_313 = arith.constant 0 : index
    %c0_314 = arith.constant 0 : index
    %379 = vector.load %arg18[%378, %c0_313, %c0_314] : memref<32x2x6xf32, #tpu.memory_space<vmem>>, vector<1x2x6xf32>
    %380 = vector.shape_cast %379 : vector<1x2x6xf32> to vector<2x6xf32>
    %381 = arith.truncf %380 : vector<2x6xf32> to vector<2x6xbf16>
    %c31 = arith.constant 31 : index
    %c0_315 = arith.constant 0 : index
    %c0_316 = arith.constant 0 : index
    %382 = vector.load %arg11[%c31, %c0_315, %c0_316] : memref<32x6x1500xbf16, #tpu.memory_space<vmem>>, vector<1x6x1500xbf16>
    %383 = vector.shape_cast %382 : vector<1x6x1500xbf16> to vector<6x1500xbf16>
    %cst_317 = arith.constant dense<0.000000e+00> : vector<2x1500xf32>
    %384 = tpu.matmul %381, %383, %cst_317 {dimension_numbers = #tpu.dot_dimension_numbers<[1], [0], [0], [1], [0, 0, 1, 1], [], []>} : vector<2x6xbf16>, vector<6x1500xbf16>, vector<2x1500xf32> -> vector<2x1500xf32>
    %385 = arith.addf %375, %384 : vector<2x1500xf32>
    %c0_318 = arith.constant 0 : index
    %c0_319 = arith.constant 0 : index
    %386 = vector.load %arg19[%c0_318, %c0_319] : memref<2x1500xf32, #tpu.memory_space<vmem>>, vector<2x1500xf32>
    tpu.vector_store %arg19[%c0_318, %c0_319], %385 {strides = array<i32>} : memref<2x1500xf32, #tpu.memory_space<vmem>>, vector<2x1500xf32>,
    %c0_i32_320 = arith.constant 0 : i32
    %387 = arith.cmpi eq, %arg0, %c0_i32_320 : i32
    %388 = arith.extui %387 : i1 to i32
    %c0_i32_321 = arith.constant 0 : i32
    %389 = arith.cmpi ne, %388, %c0_i32_321 : i32
    scf.if %389 {
      %c0_322 = arith.constant 0 : index
      %c0_323 = arith.constant 0 : index
      %390 = vector.load %arg19[%c0_322, %c0_323] : memref<2x1500xf32, #tpu.memory_space<vmem>>, vector<2x1500xf32>
      %c0_324 = arith.constant 0 : index
      %c0_325 = arith.constant 0 : index
      %391 = vector.load %arg12[%c0_324, %c0_325] : memref<1x1500xf32, #tpu.memory_space<vmem>>, vector<1x1500xf32>
      %392 = vector.broadcast %391 : vector<1x1500xf32> to vector<2x1500xf32>
      %393 = arith.addf %390, %392 : vector<2x1500xf32>
      %cst_326 = arith.constant 0.000000e+00 : f32
      %394 = vector.broadcast %cst_326 : f32 to vector<2x1500xf32>
      %395 = arith.maximumf %393, %394 : vector<2x1500xf32>
      %c0_327 = arith.constant 0 : index
      %c0_328 = arith.constant 0 : index
      %396 = vector.load %arg13[%c0_327, %c0_328] : memref<1500x100xf32, #tpu.memory_space<vmem>>, vector<1500x100xf32>
      %cst_329 = arith.constant dense<0.000000e+00> : vector<2x100xf32>
      %397 = tpu.matmul %395, %396, %cst_329 {dimension_numbers = #tpu.dot_dimension_numbers<[1], [0], [0], [1], [0, 0, 1, 1], [], []>} : vector<2x1500xf32>, vector<1500x100xf32>, vector<2x100xf32> -> vector<2x100xf32>
      %c0_330 = arith.constant 0 : index
      %c0_331 = arith.constant 0 : index
      %398 = vector.load %arg14[%c0_330, %c0_331] : memref<1x100xf32, #tpu.memory_space<vmem>>, vector<1x100xf32>
      %399 = vector.broadcast %398 : vector<1x100xf32> to vector<2x100xf32>
      %400 = arith.addf %397, %399 : vector<2x100xf32>
      %cst_332 = arith.constant 0.000000e+00 : f32
      %401 = vector.broadcast %cst_332 : f32 to vector<2x100xf32>
      %402 = arith.maximumf %400, %401 : vector<2x100xf32>
      %c0_333 = arith.constant 0 : index
      %c0_334 = arith.constant 0 : index
      %403 = vector.load %arg15[%c0_333, %c0_334] : memref<1x100xf32, #tpu.memory_space<vmem>>, vector<1x100xf32>
      %404 = vector.broadcast %403 : vector<1x100xf32> to vector<2x100xf32>
      %405 = arith.mulf %402, %404 : vector<2x100xf32>
      %cst_335 = arith.constant dense<0.000000e+00> : vector<2xf32>
      %406 = vector.multi_reduction <add>, %405, %cst_335 [1] : vector<2x100xf32> to vector<2xf32>
      %407 = vector.shape_cast %406 : vector<2xf32> to vector<2x1xf32>
      %c0_336 = arith.constant 0 : index
      %c0_337 = arith.constant 0 : index
      %408 = vector.load %arg16[%c0_336, %c0_337] : memref<1x1xf32, #tpu.memory_space<vmem>>, vector<1x1xf32>
      %409 = vector.broadcast %408 : vector<1x1xf32> to vector<2x1xf32>
      %410 = arith.addf %407, %409 : vector<2x1xf32>
      %411 = math.absf %410 : vector<2x1xf32>
      %cst_338 = arith.constant 0.000000e+00 : f32
      %412 = vector.broadcast %cst_338 : f32 to vector<2x1xf32>
      %413 = arith.subf %412, %411 : vector<2x1xf32>
      %414 = math.exp %413 : vector<2x1xf32>
      %cst_339 = arith.constant 1.000000e+00 : f32
      %415 = vector.broadcast %cst_339 : f32 to vector<2x1xf32>
      %416 = arith.addf %415, %414 : vector<2x1xf32>
      %cst_340 = arith.constant 1.000000e+00 : f32
      %417 = vector.broadcast %cst_340 : f32 to vector<2x1xf32>
      %418 = arith.divf %417, %416 : vector<2x1xf32>
      %cst_341 = arith.constant 0.000000e+00 : f32
      %419 = vector.broadcast %cst_341 : f32 to vector<2x1xf32>
      %420 = arith.cmpf oge, %410, %419 : vector<2x1xf32>
      %cst_342 = arith.constant 1.000000e+00 : f32
      %421 = vector.broadcast %cst_342 : f32 to vector<2x1xf32>
      %422 = arith.subf %421, %418 : vector<2x1xf32>
      %423 = arith.select %420, %418, %422 : vector<2x1xi1>, vector<2x1xf32>
      %c0_343 = arith.constant 0 : index
      %c0_344 = arith.constant 0 : index
      %424 = vector.load %arg17[%c0_343, %c0_344] : memref<2x1xf32, #tpu.memory_space<vmem>>, vector<2x1xf32>
      tpu.vector_store %arg17[%c0_343, %c0_344], %423 {strides = array<i32>} : memref<2x1xf32, #tpu.memory_space<vmem>>, vector<2x1xf32>,
    } else {
    }
    return
  }
  func.func @transform_0(%arg0: i32) -> (i32, i32) {
    %c0_i32 = arith.constant 0 : i32
    %c0_i32_0 = arith.constant 0 : i32
    %c0_i32_1 = arith.constant 0 : i32
    return %c0_i32, %c0_i32_0 : i32, i32
  }
  func.func @transform_1(%arg0: i32) -> (i32, i32) {
    %c0_i32 = arith.constant 0 : i32
    %c0_i32_0 = arith.constant 0 : i32
    %c0_i32_1 = arith.constant 0 : i32
    return %c0_i32, %c0_i32_0 : i32, i32
  }
  func.func @transform_2(%arg0: i32) -> (i32, i32) {
    %c0_i32 = arith.constant 0 : i32
    %c0_i32_0 = arith.constant 0 : i32
    %c0_i32_1 = arith.constant 0 : i32
    return %c0_i32, %c0_i32_0 : i32, i32
  }
  func.func @transform_3(%arg0: i32) -> (i32, i32) {
    %c0_i32 = arith.constant 0 : i32
    %c0_i32_0 = arith.constant 0 : i32
    %c0_i32_1 = arith.constant 0 : i32
    return %c0_i32, %c0_i32_0 : i32, i32
  }
  func.func @transform_4(%arg0: i32) -> (i32, i32) {
    %c0_i32 = arith.constant 0 : i32
    %c0_i32_0 = arith.constant 0 : i32
    %c0_i32_1 = arith.constant 0 : i32
    return %c0_i32, %c0_i32_0 : i32, i32
  }
  func.func @transform_5(%arg0: i32) -> (i32, i32) {
    %c0_i32 = arith.constant 0 : i32
    %c0_i32_0 = arith.constant 0 : i32
    %c0_i32_1 = arith.constant 0 : i32
    return %c0_i32, %c0_i32_0 : i32, i32
  }
  func.func @transform_6(%arg0: i32) -> (i32, i32) {
    %c0_i32 = arith.constant 0 : i32
    %c0_i32_0 = arith.constant 0 : i32
    %c0_i32_1 = arith.constant 0 : i32
    return %c0_i32, %c0_i32_0 : i32, i32
  }
  func.func @transform_7(%arg0: i32) -> (i32, i32) {
    %c0_i32 = arith.constant 0 : i32
    %c0_i32_0 = arith.constant 0 : i32
    %c0_i32_1 = arith.constant 0 : i32
    return %c0_i32, %c0_i32_0 : i32, i32
  }
  func.func @transform_8(%arg0: i32) -> (i32, i32) {
    %c0_i32 = arith.constant 0 : i32
    %c0_i32_0 = arith.constant 0 : i32
    %c0_i32_1 = arith.constant 0 : i32
    return %c0_i32, %c0_i32_0 : i32, i32
  }
  func.func @transform_9(%arg0: i32) -> (i32, i32) {
    %c0_i32 = arith.constant 0 : i32
    %c0_i32_0 = arith.constant 0 : i32
    %c0_i32_1 = arith.constant 0 : i32
    return %c0_i32, %c0_i32_0 : i32, i32
  }
  func.func @transform_10(%arg0: i32) -> (i32, i32, i32) {
    %c0_i32 = arith.constant 0 : i32
    %c0_i32_0 = arith.constant 0 : i32
    %c0_i32_1 = arith.constant 0 : i32
    return %arg0, %c0_i32, %c0_i32_0 : i32, i32, i32
  }
  func.func @transform_11(%arg0: i32) -> (i32, i32) {
    %c0_i32 = arith.constant 0 : i32
    %c0_i32_0 = arith.constant 0 : i32
    %c0_i32_1 = arith.constant 0 : i32
    return %c0_i32, %c0_i32_0 : i32, i32
  }
  func.func @transform_12(%arg0: i32) -> (i32, i32) {
    %c0_i32 = arith.constant 0 : i32
    %c0_i32_0 = arith.constant 0 : i32
    %c0_i32_1 = arith.constant 0 : i32
    return %c0_i32, %c0_i32_0 : i32, i32
  }
  func.func @transform_13(%arg0: i32) -> (i32, i32) {
    %c0_i32 = arith.constant 0 : i32
    %c0_i32_0 = arith.constant 0 : i32
    %c0_i32_1 = arith.constant 0 : i32
    return %c0_i32, %c0_i32_0 : i32, i32
  }
  func.func @transform_14(%arg0: i32) -> (i32, i32) {
    %c0_i32 = arith.constant 0 : i32
    %c0_i32_0 = arith.constant 0 : i32
    %c0_i32_1 = arith.constant 0 : i32
    return %c0_i32, %c0_i32_0 : i32, i32
  }
  func.func @transform_15(%arg0: i32) -> (i32, i32) {
    %c0_i32 = arith.constant 0 : i32
    %c0_i32_0 = arith.constant 0 : i32
    %c0_i32_1 = arith.constant 0 : i32
    return %c0_i32, %c0_i32_0 : i32, i32
  }
  func.func @transform_16(%arg0: i32) -> (i32, i32) {
    %c0_i32 = arith.constant 0 : i32
    %c0_i32_0 = arith.constant 0 : i32
    %c0_i32_1 = arith.constant 0 : i32
    return %c0_i32, %c0_i32_0 : i32, i32
  }
}

</mosaic_0001>

<llo_original>
// kernel: tpu_custom_call.1
$region0: #{tpu_custom_call.1}
  #allocation0 [shape = 'u32[]', space=smem, size = 0x4, offset = 0x4, fixed_abs, tag = 'smem constant byte address 0x4 - core index']
  #allocation1 [shape = 'u32[72,128]{1,0:T(1,128)}', space=vmem, size = 0x9000, scoped, tag = 'internal scratch']
  #allocation2 [shape = 'f32[32,2,6]{2,1,0:T(2,128)}', space=vmem, size = 0x8000, scoped, tag = 'scratch operand']
  #allocation3 [shape = 'f32[2,1500]{1,0:T(2,128)}', space=vmem, size = 0x3000, scoped, tag = 'scratch operand']
  #allocation4 [shape = 'f32[1,1]{1,0:T(1,128)S(1)}', space=vmem, size = 0x200, scoped, tag = 'scoped memory for tpu_custom_call.1']
  %s0 = inlined_call_operand.vmem [shape: f32[8,256], index: 0, kind: input, shape index: {}]
  %s1 = inlined_call_operand.vmem [shape: f32[1,256], index: 1, kind: input, shape index: {}]
  %s2 = inlined_call_operand.vmem [shape: f32[8,72], index: 2, kind: input, shape index: {}]
  %s3 = inlined_call_operand.vmem [shape: f32[8,1], index: 3, kind: input, shape index: {}]
  %s4 = inlined_call_operand.vmem [shape: f32[8,56], index: 4, kind: input, shape index: {}]
  %s5 = inlined_call_operand.vmem [shape: f32[8,1], index: 5, kind: input, shape index: {}]
  %s6 = inlined_call_operand.vmem [shape: f32[16,40], index: 6, kind: input, shape index: {}]
  %s7 = inlined_call_operand.vmem [shape: f32[16,1], index: 7, kind: input, shape index: {}]
  %s8 = inlined_call_operand.vmem [shape: f32[32,48], index: 8, kind: input, shape index: {}]
  %s9 = inlined_call_operand.vmem [shape: f32[32,1], index: 9, kind: input, shape index: {}]
  %s10 = inlined_call_operand.vmem [shape: bf16[32,6,1500], index: 10, kind: input, shape index: {}]
  %s11 = inlined_call_operand.vmem [shape: f32[1,1500], index: 11, kind: input, shape index: {}]
  %s12 = inlined_call_operand.vmem [shape: f32[1500,100], index: 12, kind: input, shape index: {}]
  %s13 = inlined_call_operand.vmem [shape: f32[1,100], index: 13, kind: input, shape index: {}]
  %s14 = inlined_call_operand.vmem [shape: f32[1,100], index: 14, kind: input, shape index: {}]
  %s15 = inlined_call_operand.<no memory space> [shape: f32[1,1], index: 15, kind: input, shape index: {}]
  %s16 = inlined_call_operand.vmem [shape: f32[2,1], index: 16, kind: output, shape index: {}]
  %s17 = sld [smem:[#allocation0]]
  $region82: #{tpu_custom_call.1} parent=0
    _
  %s19 = ssub.s32 1, %s17
  %s20 = scalar_select 0, %s19, %s17
  %v21 = vstv %s15
  %22 = vst [vmem:[#allocation4] sm:$0x1] %v21
  // Predicated region
  $region2: #{tpu_custom_call.1} parent=0 // pred_check
    _
  $region3: #{tpu_custom_call.1} parent=0 // pred_check_branch
    %24 = sbr.rel (0) target = $region5
  $region4: #{tpu_custom_call.1} parent=0 // pred_region
    _
  $region5: #{tpu_custom_call.1} parent=0 // pred_fallthru
    _
  // Predicated region
  $region6: #{tpu_custom_call.1} parent=0 // pred_check
    _
  $region7: #{tpu_custom_call.1} parent=0 // pred_check_branch
    %26 = sbr.rel (0) target = $region9
  $region8: #{tpu_custom_call.1} parent=0 // pred_region
    _
  $region9: #{tpu_custom_call.1} parent=0 // pred_fallthru
    _
  // Predicated region
  $region10: #{tpu_custom_call.1} parent=0 // pred_check
    _
  $region11: #{tpu_custom_call.1} parent=0 // pred_check_branch
    %28 = sbr.rel (0) target = $region13
  $region12: #{tpu_custom_call.1} parent=0 // pred_region
    _
  $region13: #{tpu_custom_call.1} parent=0 // pred_fallthru
    _
  // Predicated region
  $region14: #{tpu_custom_call.1} parent=0 // pred_check
    _
  $region15: #{tpu_custom_call.1} parent=0 // pred_check_branch
    %30 = sbr.rel (0) target = $region17
  $region16: #{tpu_custom_call.1} parent=0 // pred_region
    _
  $region17: #{tpu_custom_call.1} parent=0 // pred_fallthru
    _
  // Predicated region
  $region18: #{tpu_custom_call.1} parent=0 // pred_check
    _
  $region19: #{tpu_custom_call.1} parent=0 // pred_check_branch
    %32 = sbr.rel (0) target = $region21
  $region20: #{tpu_custom_call.1} parent=0 // pred_region
    _
  $region21: #{tpu_custom_call.1} parent=0 // pred_fallthru
    _
  // Predicated region
  $region22: #{tpu_custom_call.1} parent=0 // pred_check
    _
  $region23: #{tpu_custom_call.1} parent=0 // pred_check_branch
    %34 = sbr.rel (0) target = $region25
  $region24: #{tpu_custom_call.1} parent=0 // pred_region
    _
  $region25: #{tpu_custom_call.1} parent=0 // pred_fallthru
    _
  // Predicated region
  $region26: #{tpu_custom_call.1} parent=0 // pred_check
    _
  $region27: #{tpu_custom_call.1} parent=0 // pred_check_branch
    %36 = sbr.rel (0) target = $region29
  $region28: #{tpu_custom_call.1} parent=0 // pred_region
    _
  $region29: #{tpu_custom_call.1} parent=0 // pred_fallthru
    _
  // Predicated region
  $region30: #{tpu_custom_call.1} parent=0 // pred_check
    _
  $region31: #{tpu_custom_call.1} parent=0 // pred_check_branch
    %38 = sbr.rel (0) target = $region33
  $region32: #{tpu_custom_call.1} parent=0 // pred_region
    _
  $region33: #{tpu_custom_call.1} parent=0 // pred_fallthru
    _
  // Predicated region
  $region34: #{tpu_custom_call.1} parent=0 // pred_check
    _
  $region35: #{tpu_custom_call.1} parent=0 // pred_check_branch
    %40 = sbr.rel (0) target = $region37
  $region36: #{tpu_custom_call.1} parent=0 // pred_region
    _
  $region37: #{tpu_custom_call.1} parent=0 // pred_fallthru
    _
  // Predicated region
  $region38: #{tpu_custom_call.1} parent=0 // pred_check
    _
  $region39: #{tpu_custom_call.1} parent=0 // pred_check_branch
    %42 = sbr.rel (0) target = $region41
  $region40: #{tpu_custom_call.1} parent=0 // pred_region
    _
  $region41: #{tpu_custom_call.1} parent=0 // pred_fallthru
    _
  // Predicated region
  $region42: #{tpu_custom_call.1} parent=0 // pred_check
    _
  $region43: #{tpu_custom_call.1} parent=0 // pred_check_branch
    %44 = sbr.rel (0) target = $region45
  $region44: #{tpu_custom_call.1} parent=0 // pred_region
    _
  $region45: #{tpu_custom_call.1} parent=0 // pred_fallthru
    _
  // Predicated region
  $region46: #{tpu_custom_call.1} parent=0 // pred_check
    _
  $region47: #{tpu_custom_call.1} parent=0 // pred_check_branch
    %46 = sbr.rel (0) target = $region49
  $region48: #{tpu_custom_call.1} parent=0 // pred_region
    _
  $region49: #{tpu_custom_call.1} parent=0 // pred_fallthru
    _
  // Predicated region
  $region50: #{tpu_custom_call.1} parent=0 // pred_check
    _
  $region51: #{tpu_custom_call.1} parent=0 // pred_check_branch
    %48 = sbr.rel (0) target = $region53
  $region52: #{tpu_custom_call.1} parent=0 // pred_region
    _
  $region53: #{tpu_custom_call.1} parent=0 // pred_fallthru
    _
  // Predicated region
  $region54: #{tpu_custom_call.1} parent=0 // pred_check
    _
  $region55: #{tpu_custom_call.1} parent=0 // pred_check_branch
    %50 = sbr.rel (0) target = $region57
  $region56: #{tpu_custom_call.1} parent=0 // pred_region
    _
  $region57: #{tpu_custom_call.1} parent=0 // pred_fallthru
    _
  // Predicated region
  $region58: #{tpu_custom_call.1} parent=0 // pred_check
    _
  $region59: #{tpu_custom_call.1} parent=0 // pred_check_branch
    %52 = sbr.rel (0) target = $region61
  $region60: #{tpu_custom_call.1} parent=0 // pred_region
    _
  $region61: #{tpu_custom_call.1} parent=0 // pred_fallthru
    _
  // Predicated region
  $region62: #{tpu_custom_call.1} parent=0 // pred_check
    _
  $region63: #{tpu_custom_call.1} parent=0 // pred_check_branch
    %54 = sbr.rel (0) target = $region65
  $region64: #{tpu_custom_call.1} parent=0 // pred_region
    _
  $region65: #{tpu_custom_call.1} parent=0 // pred_fallthru
    _
  %p56 = scmp.eq.s32.totalorder 0, 0
  // Predicated region
  $region66: #{tpu_custom_call.1} parent=0 // pred_check
    %p57 = pneg %p56
  $region67: #{tpu_custom_call.1} parent=0 // pred_check_branch
    %59 = sbr.rel (%p57) target = $region69
  $region68: #{tpu_custom_call.1} parent=0 // pred_region
    %60 = vst [vmem:[#allocation3] sm:$0xff] 0.0
    %61 = vst [vmem:[#allocation3 + $0x8] sm:$0xff] 0.0
    %vm62 = vcmask 1041408
    %vm63 = vcmask 1043458
    %vm64 = vmor %vm63, %vm62
    %vm65 = vcmask 1045508
    %vm66 = vmor %vm65, %vm64
    %vm67 = vcmask 752646
    %vm68 = vmor %vm67, %vm66
    %69 = vst.msk [vmem:[#allocation3 + $0x10] sm:$0xff] %vm68, 0.0
    %v70 = vld [vmem:[%s1] sm:$0x3]
    %v71 = vld [vmem:[%s0] sm:$0xff]
    %v72 = vld [vmem:[%s0 + $0x8] sm:$0xff]
    %75 = vrot.lane.b32.xlu0 %v71, 4
    %v76 = vpop.permute.xlu0 %75
    %77 = vrot.lane.b32.xlu0 %v72, 4
    %v78 = vpop.permute.xlu0 %77
    %vm79 = vcmask 31744
    %v80 = vsel %vm79, %v76, %v78
    %v83 = vsel %vm79, 0.0, %v76
    %84 = vrot.lane.b32.xlu0 %v71, 3
    %v85 = vpop.permute.xlu0 %84
    %86 = vrot.lane.b32.xlu0 %v72, 3
    %v87 = vpop.permute.xlu0 %86
    %vm88 = vcmask 23552
    %v89 = vsel %vm88, %v85, %v87
    %v92 = vsel %vm88, 0.0, %v85
    %93 = vrot.lane.b32.xlu0 %v71, 2
    %v94 = vpop.permute.xlu0 %93
    %95 = vrot.lane.b32.xlu0 %v72, 2
    %v96 = vpop.permute.xlu0 %95
    %vm97 = vcmask 15360
    %v98 = vsel %vm97, %v94, %v96
    %v101 = vsel %vm97, 0.0, %v94
    %102 = vrot.lane.b32.xlu0 %v71, 1
    %v103 = vpop.permute.xlu0 %102
    %104 = vrot.lane.b32.xlu0 %v72, 1
    %v105 = vpop.permute.xlu0 %104
    %vm106 = vcmask 7168
    %v107 = vsel %vm106, %v103, %v105
    %v110 = vsel %vm106, 0.0, %v103
    %111 = vrot.lane.b32.xlu0 %v71, 127
    %v112 = vpop.permute.xlu0 %111
    %113 = vrot.lane.b32.xlu0 %v72, 127
    %v114 = vpop.permute.xlu0 %113
    %vm115 = vcmask 1039360
    %v116 = vsel %vm115, %v112, %v114
    %v119 = vsel %vm115, %v114, 0.0
    %120 = vrot.lane.b32.xlu0 %v71, 126
    %v121 = vpop.permute.xlu0 %120
    %122 = vrot.lane.b32.xlu0 %v72, 126
    %v123 = vpop.permute.xlu0 %122
    %vm124 = vcmask 1031168
    %v125 = vsel %vm124, %v121, %v123
    %v128 = vsel %vm124, %v123, 0.0
    %129 = vrot.lane.b32.xlu0 %v71, 125
    %v130 = vpop.permute.xlu0 %129
    %131 = vrot.lane.b32.xlu0 %v72, 125
    %v132 = vpop.permute.xlu0 %131
    %vm133 = vcmask 1022976
    %v134 = vsel %vm133, %v130, %v132
    %v137 = vsel %vm133, %v132, 0.0
    %138 = vrot.lane.b32.xlu0 %v71, 124
    %v139 = vpop.permute.xlu0 %138
    %140 = vrot.lane.b32.xlu0 %v72, 124
    %v141 = vpop.permute.xlu0 %140
    %vm142 = vcmask 1014784
    %v143 = vsel %vm142, %v139, %v141
    %v146 = vsel %vm142, %v141, 0.0
    %v147 = vld [vmem:[%s2] sm:$0xff]
    %v148 = vld [vmem:[%s3] sm:$0xff]
    %150 = vset.pattern.permute.xlu0 0
    %151 = vperm.xlu0 %150, %v148
    %v152 = vpop.permute.xlu0 %151
    %vm154 = vcmask 588800
    %v156 = vsel %vm154, %v147, 0
    %158 = vmatpush.msra.mxu0 0.0
    %159 = vmatpush.msra.mxu0 0.0
    %160 = vmatpush.msra.mxu0 0.0
    %161 = vmatpush.msra.mxu0 0.0
    %162 = vmatpush.msra.mxu0 0.0
    %163 = vmatpush.msra.mxu0 0.0
    %164 = vmatpush.msra.mxu0 0.0
    %165 = vmatpush.msra.mxu0 %v143
    %166 = vmatpush.msra.mxu0 %v134
    %167 = vmatpush.msra.mxu0 %v125
    %168 = vmatpush.msra.mxu0 %v116
    %169 = vmatpush.msra.mxu0 %v71
    %170 = vmatpush.msra.mxu0 %v110
    %171 = vmatpush.msra.mxu0 %v101
    %172 = vmatpush.msra.mxu0 %v92
    %173 = vmatpush.msra.mxu0 %v83
    %174 = vmatmul.f32.gmra.mxu0 %v156
    %v175 = vpop.f32.mrf.mxu0
    %v176 = vadd.f32 %v152, %v175
    %177 = vdwg.mxu0
    %178 = vmatpush.msra.mxu0 0.0
    %179 = vmatpush.msra.mxu0 0.0
    %180 = vmatpush.msra.mxu0 0.0
    %181 = vmatpush.msra.mxu0 0.0
    %182 = vmatpush.msra.mxu0 0.0
    %183 = vmatpush.msra.mxu0 0.0
    %184 = vmatpush.msra.mxu0 0.0
    %185 = vmatpush.msra.mxu0 %v146
    %186 = vmatpush.msra.mxu0 %v137
    %187 = vmatpush.msra.mxu0 %v128
    %188 = vmatpush.msra.mxu0 %v119
    %189 = vmatpush.msra.mxu0 %v72
    %190 = vmatpush.msra.mxu0 %v107
    %191 = vmatpush.msra.mxu0 %v98
    %192 = vmatpush.msra.mxu0 %v89
    %193 = vmatpush.msra.mxu0 %v80
    %194 = vmatmul.f32.gmra.mxu0 %v156
    %v195 = vpop.f32.mrf.mxu0
    %v196 = vadd.f32 %v152, %v195
    %197 = vdwg.mxu0
    %v198 = vmax.f32 %v176, 0.0
    %v199 = vmax.f32 %v196, 0.0
    %202 = vrot.lane.b32.xlu0 %v198, 127
    %v203 = vpop.permute.xlu0 %202
    %204 = vrot.lane.b32.xlu0 %v199, 127
    %v205 = vpop.permute.xlu0 %204
    %v206 = vsel %vm115, %v203, %v205
    %v209 = vsel %vm115, %v205, 0.0
    %v210 = vmax.f32 %v198, %v206
    %v211 = vmax.f32 %v199, %v209
    %v213 = vperm.slane %v70, 0
    %v214 = vperm.slane %v70, 1
    %v217 = vmul.f32 %v210, %v213
    %v218 = vmul.f32 %v211, %v214
    %221 = vrot.lane.b32.xlu0 %v217, 6
    %v222 = vpop.permute.xlu0 %221
    %223 = vrot.lane.b32.xlu0 %v218, 6
    %v224 = vpop.permute.xlu0 %223
    %vm225 = vcmask 48128
    %v226 = vsel %vm225, %v222, %v224
    %v229 = vsel %vm225, 0.0, %v222
    %230 = vrot.lane.b32.xlu0 %v217, 4
    %v231 = vpop.permute.xlu0 %230
    %232 = vrot.lane.b32.xlu0 %v218, 4
    %v233 = vpop.permute.xlu0 %232
    %v234 = vsel %vm79, %v231, %v233
    %v237 = vsel %vm79, 0.0, %v231
    %238 = vrot.lane.b32.xlu0 %v217, 2
    %v239 = vpop.permute.xlu0 %238
    %240 = vrot.lane.b32.xlu0 %v218, 2
    %v241 = vpop.permute.xlu0 %240
    %v242 = vsel %vm97, %v239, %v241
    %v245 = vsel %vm97, 0.0, %v239
    %246 = vrot.lane.b32.xlu0 %v217, 126
    %v247 = vpop.permute.xlu0 %246
    %248 = vrot.lane.b32.xlu0 %v218, 126
    %v249 = vpop.permute.xlu0 %248
    %v250 = vsel %vm124, %v247, %v249
    %v253 = vsel %vm124, %v249, 0.0
    %254 = vrot.lane.b32.xlu0 %v217, 124
    %v255 = vpop.permute.xlu0 %254
    %256 = vrot.lane.b32.xlu0 %v218, 124
    %v257 = vpop.permute.xlu0 %256
    %v258 = vsel %vm142, %v255, %v257
    %v261 = vsel %vm142, %v257, 0.0
    %262 = vrot.lane.b32.xlu0 %v217, 122
    %v263 = vpop.permute.xlu0 %262
    %264 = vrot.lane.b32.xlu0 %v218, 122
    %v265 = vpop.permute.xlu0 %264
    %vm266 = vcmask 998400
    %v267 = vsel %vm266, %v263, %v265
    %v270 = vsel %vm266, %v265, 0.0
    %v271 = vld [vmem:[%s4] sm:$0xff]
    %v272 = vld [vmem:[%s5] sm:$0xff]
    %274 = vset.pattern.permute.xlu0 0
    %275 = vperm.xlu0 %274, %v272
    %v276 = vpop.permute.xlu0 %275
    %vm278 = vcmask 457728
    %v280 = vsel %vm278, %v271, 0
    %282 = vmatpush.msra.mxu0 0.0
    %283 = vmatpush.msra.mxu0 0.0
    %284 = vmatpush.msra.mxu0 0.0
    %285 = vmatpush.msra.mxu0 0.0
    %286 = vmatpush.msra.mxu0 0.0
    %287 = vmatpush.msra.mxu0 0.0
    %288 = vmatpush.msra.mxu0 0.0
    %289 = vmatpush.msra.mxu0 0.0
    %290 = vmatpush.msra.mxu0 0.0
    %291 = vmatpush.msra.mxu0 %v267
    %292 = vmatpush.msra.mxu0 %v258
    %293 = vmatpush.msra.mxu0 %v250
    %294 = vmatpush.msra.mxu0 %v217
    %295 = vmatpush.msra.mxu0 %v245
    %296 = vmatpush.msra.mxu0 %v237
    %297 = vmatpush.msra.mxu0 %v229
    %298 = vmatmul.f32.gmra.mxu0 %v280
    %v299 = vpop.f32.mrf.mxu0
    %v300 = vadd.f32 %v276, %v299
    %301 = vdwg.mxu0
    %302 = vmatpush.msra.mxu0 0.0
    %303 = vmatpush.msra.mxu0 0.0
    %304 = vmatpush.msra.mxu0 0.0
    %305 = vmatpush.msra.mxu0 0.0
    %306 = vmatpush.msra.mxu0 0.0
    %307 = vmatpush.msra.mxu0 0.0
    %308 = vmatpush.msra.mxu0 0.0
    %309 = vmatpush.msra.mxu0 0.0
    %310 = vmatpush.msra.mxu0 0.0
    %311 = vmatpush.msra.mxu0 %v270
    %312 = vmatpush.msra.mxu0 %v261
    %313 = vmatpush.msra.mxu0 %v253
    %314 = vmatpush.msra.mxu0 %v218
    %315 = vmatpush.msra.mxu0 %v242
    %316 = vmatpush.msra.mxu0 %v234
    %317 = vmatpush.msra.mxu0 %v226
    %318 = vmatmul.f32.gmra.mxu0 %v280
    %v319 = vpop.f32.mrf.mxu0
    %v320 = vadd.f32 %v276, %v319
    %321 = vdwg.mxu0
    %v322 = vmax.f32 %v300, 0.0
    %v323 = vmax.f32 %v320, 0.0
    %326 = vrot.lane.b32.xlu0 %v322, 126
    %v327 = vpop.permute.xlu0 %326
    %328 = vrot.lane.b32.xlu0 %v323, 126
    %v329 = vpop.permute.xlu0 %328
    %v330 = vsel %vm124, %v327, %v329
    %v333 = vsel %vm124, %v329, 0.0
    %v334 = vmax.f32 %v322, %v330
    %v335 = vmax.f32 %v323, %v333
    %v336 = vmul.f32 %v334, %v213
    %v337 = vmul.f32 %v335, %v214
    %340 = vrot.lane.b32.xlu0 %v336, 8
    %v341 = vpop.permute.xlu0 %340
    %342 = vrot.lane.b32.xlu0 %v337, 8
    %v343 = vpop.permute.xlu0 %342
    %vm344 = vcmask 64512
    %v345 = vsel %vm344, %v341, %v343
    %v348 = vsel %vm344, 0.0, %v341
    %349 = vrot.lane.b32.xlu0 %v336, 4
    %v350 = vpop.permute.xlu0 %349
    %351 = vrot.lane.b32.xlu0 %v337, 4
    %v352 = vpop.permute.xlu0 %351
    %v353 = vsel %vm79, %v350, %v352
    %v356 = vsel %vm79, 0.0, %v350
    %357 = vrot.lane.b32.xlu0 %v336, 124
    %v358 = vpop.permute.xlu0 %357
    %359 = vrot.lane.b32.xlu0 %v337, 124
    %v360 = vpop.permute.xlu0 %359
    %v361 = vsel %vm142, %v358, %v360
    %v364 = vsel %vm142, %v360, 0.0
    %365 = vrot.lane.b32.xlu0 %v336, 120
    %v366 = vpop.permute.xlu0 %365
    %367 = vrot.lane.b32.xlu0 %v337, 120
    %v368 = vpop.permute.xlu0 %367
    %vm369 = vcmask 982016
    %v370 = vsel %vm369, %v366, %v368
    %v373 = vsel %vm369, %v368, 0.0
    %v374 = vld [vmem:[%s6] sm:$0xff]
    %v375 = vld [vmem:[%s6 + $0x8] sm:$0xff]
    %v376 = vld [vmem:[%s7] sm:$0xff]
    %v377 = vld [vmem:[%s7 + $0x8] sm:$0xff]
    %379 = vset.pattern.permute.xlu0 0
    %380 = vperm.xlu0 %379, %v376
    %v381 = vpop.permute.xlu0 %380
    %384 = vset.pattern.permute.xlu0 0
    %385 = vperm.xlu0 %384, %v377
    %v386 = vpop.permute.xlu0 %385
    %vm388 = vcmask 326656
    %v390 = vsel %vm388, %v374, 0
    %v393 = vsel %vm388, %v375, 0
    %395 = vmatpush.msra.mxu0 0.0
    %396 = vmatpush.msra.mxu0 0.0
    %397 = vmatpush.msra.mxu0 0.0
    %398 = vmatpush.msra.mxu0 0.0
    %399 = vmatpush.msra.mxu0 0.0
    %400 = vmatpush.msra.mxu0 0.0
    %401 = vmatpush.msra.mxu0 0.0
    %402 = vmatpush.msra.mxu0 0.0
    %403 = vmatpush.msra.mxu0 0.0
    %404 = vmatpush.msra.mxu0 0.0
    %405 = vmatpush.msra.mxu0 0.0
    %406 = vmatpush.msra.mxu0 %v370
    %407 = vmatpush.msra.mxu0 %v361
    %408 = vmatpush.msra.mxu0 %v336
    %409 = vmatpush.msra.mxu0 %v356
    %410 = vmatpush.msra.mxu0 %v348
    %411 = vmatmul.f32.gmra.mxu0 %v390
    %v412 = vpop.f32.mrf.mxu0
    %v413 = vadd.f32 %v381, %v412
    %414 = vmatmul.f32.gmra.mxu0 %v393
    %v415 = vpop.f32.mrf.mxu0
    %v416 = vadd.f32 %v386, %v415
    %417 = vdwg.mxu0
    %418 = vmatpush.msra.mxu0 0.0
    %419 = vmatpush.msra.mxu0 0.0
    %420 = vmatpush.msra.mxu0 0.0
    %421 = vmatpush.msra.mxu0 0.0
    %422 = vmatpush.msra.mxu0 0.0
    %423 = vmatpush.msra.mxu0 0.0
    %424 = vmatpush.msra.mxu0 0.0
    %425 = vmatpush.msra.mxu0 0.0
    %426 = vmatpush.msra.mxu0 0.0
    %427 = vmatpush.msra.mxu0 0.0
    %428 = vmatpush.msra.mxu0 0.0
    %429 = vmatpush.msra.mxu0 %v373
    %430 = vmatpush.msra.mxu0 %v364
    %431 = vmatpush.msra.mxu0 %v337
    %432 = vmatpush.msra.mxu0 %v353
    %433 = vmatpush.msra.mxu0 %v345
    %434 = vmatmul.f32.gmra.mxu0 %v390
    %v435 = vpop.f32.mrf.mxu0
    %v436 = vadd.f32 %v381, %v435
    %437 = vmatmul.f32.gmra.mxu0 %v393
    %v438 = vpop.f32.mrf.mxu0
    %v439 = vadd.f32 %v386, %v438
    %440 = vdwg.mxu0
    %v441 = vmax.f32 %v413, 0.0
    %v442 = vmax.f32 %v436, 0.0
    %v443 = vmax.f32 %v416, 0.0
    %v444 = vmax.f32 %v439, 0.0
    %449 = vrot.lane.b32.xlu0 %v441, 124
    %v450 = vpop.permute.xlu0 %449
    %451 = vrot.lane.b32.xlu0 %v442, 124
    %v452 = vpop.permute.xlu0 %451
    %453 = vrot.lane.b32.xlu0 %v443, 124
    %v454 = vpop.permute.xlu0 %453
    %455 = vrot.lane.b32.xlu0 %v444, 124
    %v456 = vpop.permute.xlu0 %455
    %v457 = vsel %vm142, %v450, %v452
    %v458 = vsel %vm142, %v454, %v456
    %v463 = vsel %vm142, %v452, 0.0
    %v464 = vsel %vm142, %v456, 0.0
    %v465 = vmax.f32 %v441, %v457
    %v466 = vmax.f32 %v442, %v463
    %v467 = vmax.f32 %v443, %v458
    %v468 = vmax.f32 %v444, %v464
    %v469 = vmul.f32 %v465, %v213
    %v470 = vmul.f32 %v466, %v214
    %v471 = vmul.f32 %v467, %v213
    %v472 = vmul.f32 %v468, %v214
    %477 = vrot.lane.b32.xlu0 %v469, 8
    %v478 = vpop.permute.xlu0 %477
    %479 = vrot.lane.b32.xlu0 %v470, 8
    %v480 = vpop.permute.xlu0 %479
    %481 = vrot.lane.b32.xlu0 %v471, 8
    %v482 = vpop.permute.xlu0 %481
    %483 = vrot.lane.b32.xlu0 %v472, 8
    %v484 = vpop.permute.xlu0 %483
    %v485 = vsel %vm344, %v478, %v480
    %v486 = vsel %vm344, %v482, %v484
    %v491 = vsel %vm344, 0.0, %v478
    %v492 = vsel %vm344, 0.0, %v482
    %493 = vrot.lane.b32.xlu0 %v469, 120
    %v494 = vpop.permute.xlu0 %493
    %495 = vrot.lane.b32.xlu0 %v470, 120
    %v496 = vpop.permute.xlu0 %495
    %497 = vrot.lane.b32.xlu0 %v471, 120
    %v498 = vpop.permute.xlu0 %497
    %499 = vrot.lane.b32.xlu0 %v472, 120
    %v500 = vpop.permute.xlu0 %499
    %v501 = vsel %vm369, %v494, %v496
    %v502 = vsel %vm369, %v498, %v500
    %v507 = vsel %vm369, %v496, 0.0
    %v508 = vsel %vm369, %v500, 0.0
    %v509 = vld [vmem:[%s8] sm:$0xff]
    %v510 = vld [vmem:[%s8 + $0x8] sm:$0xff]
    %v511 = vld [vmem:[%s8 + $0x10] sm:$0xff]
    %v512 = vld [vmem:[%s8 + $0x18] sm:$0xff]
    %v513 = vld [vmem:[%s9] sm:$0xff]
    %v514 = vld [vmem:[%s9 + $0x8] sm:$0xff]
    %v515 = vld [vmem:[%s9 + $0x10] sm:$0xff]
    %v516 = vld [vmem:[%s9 + $0x18] sm:$0xff]
    %518 = vset.pattern.permute.xlu0 0
    %519 = vperm.xlu0 %518, %v513
    %v520 = vpop.permute.xlu0 %519
    %523 = vset.pattern.permute.xlu0 0
    %524 = vperm.xlu0 %523, %v514
    %v525 = vpop.permute.xlu0 %524
    %528 = vset.pattern.permute.xlu0 0
    %529 = vperm.xlu0 %528, %v515
    %v530 = vpop.permute.xlu0 %529
    %533 = vset.pattern.permute.xlu0 0
    %534 = vperm.xlu0 %533, %v516
    %v535 = vpop.permute.xlu0 %534
    %vm537 = vcmask 392192
    %v539 = vsel %vm537, %v509, 0
    %v542 = vsel %vm537, %v510, 0
    %v545 = vsel %vm537, %v511, 0
    %v548 = vsel %vm537, %v512, 0
    %550 = vmatpush.msra.mxu0 0.0
    %551 = vmatpush.msra.mxu0 0.0
    %552 = vmatpush.msra.mxu0 0.0
    %553 = vmatpush.msra.mxu0 0.0
    %554 = vmatpush.msra.mxu0 0.0
    %555 = vmatpush.msra.mxu0 0.0
    %556 = vmatpush.msra.mxu0 0.0
    %557 = vmatpush.msra.mxu0 0.0
    %558 = vmatpush.msra.mxu0 0.0
    %559 = vmatpush.msra.mxu0 0.0
    %560 = vmatpush.msra.mxu0 %v502
    %561 = vmatpush.msra.mxu0 %v501
    %562 = vmatpush.msra.mxu0 %v471
    %563 = vmatpush.msra.mxu0 %v469
    %564 = vmatpush.msra.mxu0 %v492
    %565 = vmatpush.msra.mxu0 %v491
    %566 = vmatmul.f32.gmra.mxu0 %v539
    %v567 = vpop.f32.mrf.mxu0
    %v568 = vadd.f32 %v520, %v567
    %569 = vmatmul.f32.gmra.mxu0 %v542
    %v570 = vpop.f32.mrf.mxu0
    %v571 = vadd.f32 %v525, %v570
    %572 = vmatmul.f32.gmra.mxu0 %v545
    %v573 = vpop.f32.mrf.mxu0
    %v574 = vadd.f32 %v530, %v573
    %575 = vmatmul.f32.gmra.mxu0 %v548
    %v576 = vpop.f32.mrf.mxu0
    %v577 = vadd.f32 %v535, %v576
    %578 = vdwg.mxu0
    %579 = vmatpush.msra.mxu0 0.0
    %580 = vmatpush.msra.mxu0 0.0
    %581 = vmatpush.msra.mxu0 0.0
    %582 = vmatpush.msra.mxu0 0.0
    %583 = vmatpush.msra.mxu0 0.0
    %584 = vmatpush.msra.mxu0 0.0
    %585 = vmatpush.msra.mxu0 0.0
    %586 = vmatpush.msra.mxu0 0.0
    %587 = vmatpush.msra.mxu0 0.0
    %588 = vmatpush.msra.mxu0 0.0
    %589 = vmatpush.msra.mxu0 %v508
    %590 = vmatpush.msra.mxu0 %v507
    %591 = vmatpush.msra.mxu0 %v472
    %592 = vmatpush.msra.mxu0 %v470
    %593 = vmatpush.msra.mxu0 %v486
    %594 = vmatpush.msra.mxu0 %v485
    %595 = vmatmul.f32.gmra.mxu0 %v539
    %v596 = vpop.f32.mrf.mxu0
    %v597 = vadd.f32 %v520, %v596
    %598 = vmatmul.f32.gmra.mxu0 %v542
    %v599 = vpop.f32.mrf.mxu0
    %v600 = vadd.f32 %v525, %v599
    %601 = vmatmul.f32.gmra.mxu0 %v545
    %v602 = vpop.f32.mrf.mxu0
    %v603 = vadd.f32 %v530, %v602
    %604 = vmatmul.f32.gmra.mxu0 %v548
    %v605 = vpop.f32.mrf.mxu0
    %v606 = vadd.f32 %v535, %v605
    %607 = vdwg.mxu0
    %v608 = vmax.f32 %v568, 0.0
    %v609 = vmax.f32 %v597, 0.0
    %v610 = vmax.f32 %v571, 0.0
    %v611 = vmax.f32 %v600, 0.0
    %v612 = vmax.f32 %v574, 0.0
    %v613 = vmax.f32 %v603, 0.0
    %v614 = vmax.f32 %v577, 0.0
    %v615 = vmax.f32 %v606, 0.0
    %624 = vrot.lane.b32.xlu0 %v608, 120
    %v625 = vpop.permute.xlu0 %624
    %626 = vrot.lane.b32.xlu0 %v609, 120
    %v627 = vpop.permute.xlu0 %626
    %628 = vrot.lane.b32.xlu0 %v610, 120
    %v629 = vpop.permute.xlu0 %628
    %630 = vrot.lane.b32.xlu0 %v611, 120
    %v631 = vpop.permute.xlu0 %630
    %632 = vrot.lane.b32.xlu0 %v612, 120
    %v633 = vpop.permute.xlu0 %632
    %634 = vrot.lane.b32.xlu0 %v613, 120
    %v635 = vpop.permute.xlu0 %634
    %636 = vrot.lane.b32.xlu0 %v614, 120
    %v637 = vpop.permute.xlu0 %636
    %638 = vrot.lane.b32.xlu0 %v615, 120
    %v639 = vpop.permute.xlu0 %638
    %v640 = vsel %vm369, %v625, %v627
    %v641 = vsel %vm369, %v629, %v631
    %v642 = vsel %vm369, %v633, %v635
    %v643 = vsel %vm369, %v637, %v639
    %v652 = vsel %vm369, %v627, 0.0
    %v653 = vsel %vm369, %v631, 0.0
    %v654 = vsel %vm369, %v635, 0.0
    %v655 = vsel %vm369, %v639, 0.0
    %v656 = vmax.f32 %v608, %v640
    %v657 = vmax.f32 %v609, %v652
    %v658 = vmax.f32 %v610, %v641
    %v659 = vmax.f32 %v611, %v653
    %v660 = vmax.f32 %v612, %v642
    %v661 = vmax.f32 %v613, %v654
    %v662 = vmax.f32 %v614, %v643
    %v663 = vmax.f32 %v615, %v655
    %v664 = vlaneseq
    %v665 = vshrl.u32 %v664, 7
    %v666 = vadd.s32 %v665, 8
    %v667 = vadd.s32 %v665, 16
    %v668 = vadd.s32 %v665, 24
    %v669 = vadd.s32 %v665, 32
    %v670 = vadd.s32 %v665, 40
    %v671 = vadd.s32 %v665, 48
    %v672 = vadd.s32 %v665, 56
    %v673 = vadd.s32 %v665, 64
    %v674 = vadd.s32 %v665, 72
    %v675 = vadd.s32 %v665, 80
    %v676 = vadd.s32 %v665, 88
    %v677 = vadd.s32 %v665, 96
    %v678 = vadd.s32 %v665, 104
    %v679 = vadd.s32 %v665, 112
    %v680 = vadd.s32 %v665, 120
    %v681 = vlaneseq
    %v682 = vand.u32 %v681, 127
    %v683 = vmul.u32 %v682, 16
    %v684 = vadd.s32 %v683, 16
    %vm685 = vcmp.eq.s32.totalorder %v665, %v684
    %vm686 = vcmp.eq.s32.totalorder %v666, %v684
    %vm687 = vcmp.eq.s32.totalorder %v667, %v684
    %vm688 = vcmp.eq.s32.totalorder %v668, %v684
    %vm689 = vcmp.eq.s32.totalorder %v669, %v684
    %vm690 = vcmp.eq.s32.totalorder %v670, %v684
    %vm691 = vcmp.eq.s32.totalorder %v671, %v684
    %vm692 = vcmp.eq.s32.totalorder %v672, %v684
    %vm693 = vcmp.eq.s32.totalorder %v673, %v684
    %vm694 = vcmp.eq.s32.totalorder %v674, %v684
    %vm695 = vcmp.eq.s32.totalorder %v675, %v684
    %vm696 = vcmp.eq.s32.totalorder %v676, %v684
    %vm697 = vcmp.eq.s32.totalorder %v677, %v684
    %vm698 = vcmp.eq.s32.totalorder %v678, %v684
    %vm699 = vcmp.eq.s32.totalorder %v679, %v684
    %vm700 = vcmp.eq.s32.totalorder %v680, %v684
    %v701 = vsel %vm685, 1, 0
    %v702 = vsel %vm686, 1, 0
    %v703 = vsel %vm687, 1, 0
    %v704 = vsel %vm688, 1, 0
    %v705 = vsel %vm689, 1, 0
    %v706 = vsel %vm690, 1, 0
    %v707 = vsel %vm691, 1, 0
    %v708 = vsel %vm692, 1, 0
    %v709 = vsel %vm693, 1, 0
    %v710 = vsel %vm694, 1, 0
    %v711 = vsel %vm695, 1, 0
    %v712 = vsel %vm696, 1, 0
    %v713 = vsel %vm697, 1, 0
    %v714 = vsel %vm698, 1, 0
    %v715 = vsel %vm699, 1, 0
    %v716 = vsel %vm700, 1, 0
    %v717 = vcvt.s32.f32 %v701
    %v718 = vcvt.s32.f32 %v702
    %v719 = vcvt.s32.f32 %v703
    %v720 = vcvt.s32.f32 %v704
    %v721 = vcvt.s32.f32 %v705
    %v722 = vcvt.s32.f32 %v706
    %v723 = vcvt.s32.f32 %v707
    %v724 = vcvt.s32.f32 %v708
    %v725 = vcvt.s32.f32 %v709
    %v726 = vcvt.s32.f32 %v710
    %v727 = vcvt.s32.f32 %v711
    %v728 = vcvt.s32.f32 %v712
    %v729 = vcvt.s32.f32 %v713
    %v730 = vcvt.s32.f32 %v714
    %v731 = vcvt.s32.f32 %v715
    %v732 = vcvt.s32.f32 %v716
    %v733 = vpack.c.bf16 %v718, %v717
    %v734 = vpack.c.bf16 %v720, %v719
    %v735 = vpack.c.bf16 %v722, %v721
    %v736 = vpack.c.bf16 %v724, %v723
    %v737 = vpack.c.bf16 %v726, %v725
    %v738 = vpack.c.bf16 %v728, %v727
    %v739 = vpack.c.bf16 %v730, %v729
    %v740 = vpack.c.bf16 %v732, %v731
    %v741 = vpack.c.bf16 %v657, %v656
    %v742 = vpack.c.bf16 %v659, %v658
    %v743 = vpack.c.bf16 %v661, %v660
    %v744 = vpack.c.bf16 %v663, %v662
    %v749 = vunpack.c.l.b16 %v741
    %v750 = vunpack.c.l.b16 %v742
    %v751 = vunpack.c.l.b16 %v743
    %v752 = vunpack.c.l.b16 %v744
    %v753 = vpack.c.b16 %v750, %v749
    %v754 = vpack.c.b16 %v752, %v751
    %757 = vmatpush.bf16.msra.mxu0 %v740
    %758 = vmatpush.bf16.msra.mxu0 %v739
    %759 = vmatpush.bf16.msra.mxu0 %v738
    %760 = vmatpush.bf16.msra.mxu0 %v737
    %761 = vmatpush.bf16.msra.mxu0 %v736
    %762 = vmatpush.bf16.msra.mxu0 %v735
    %763 = vmatpush.bf16.msra.mxu0 %v734
    %764 = vmatpush.bf16.msra.mxu0 %v733
    %765 = vmatmul.bf16.gmra.mxu0 %v753
    %v766 = vpop.f32.mrf.mxu0
    %v767 = vadd.f32 0.0, %v766
    %v768 = vpop.f32.mrf.mxu0
    %v769 = vadd.f32 0.0, %v768
    %770 = vmatmul.bf16.gmra.mxu0 %v754
    %v771 = vpop.f32.mrf.mxu0
    %v772 = vadd.f32 0.0, %v771
    %v773 = vpop.f32.mrf.mxu0
    %v774 = vadd.f32 0.0, %v773
    %775 = vdwg.mxu0
    %v780 = vrot.slane %v767, 1
    %v781 = vrot.slane %v767, 2
    %v782 = vrot.slane %v767, 3
    %v783 = vrot.slane %v767, 4
    %v784 = vrot.slane %v767, 5
    %v785 = vrot.slane %v767, 6
    %v786 = vrot.slane %v767, 7
    %v787 = vrot.slane %v769, 1
    %v788 = vrot.slane %v769, 2
    %v789 = vrot.slane %v769, 3
    %v790 = vrot.slane %v769, 4
    %v791 = vrot.slane %v769, 5
    %v792 = vrot.slane %v769, 6
    %v793 = vrot.slane %v769, 7
    %v794 = vrot.slane %v772, 1
    %v795 = vrot.slane %v772, 2
    %v796 = vrot.slane %v772, 3
    %v797 = vrot.slane %v772, 4
    %v798 = vrot.slane %v772, 5
    %v799 = vrot.slane %v772, 6
    %v800 = vrot.slane %v772, 7
    %v801 = vrot.slane %v774, 1
    %v802 = vrot.slane %v774, 2
    %v803 = vrot.slane %v774, 3
    %v804 = vrot.slane %v774, 4
    %v805 = vrot.slane %v774, 5
    %v806 = vrot.slane %v774, 6
    %v807 = vrot.slane %v774, 7
    %vm836 = vcmask 40960
    %837 = vst.msk [vmem:[#allocation2] sm:$0x1] %vm836, %v767
    %838 = vst.msk [vmem:[#allocation2 + $0x2] sm:$0x1] %vm836, %v780
    %839 = vst.msk [vmem:[#allocation2 + $0x4] sm:$0x1] %vm836, %v781
    %840 = vst.msk [vmem:[#allocation2 + $0x6] sm:$0x1] %vm836, %v782
    %841 = vst.msk [vmem:[#allocation2 + $0x8] sm:$0x1] %vm836, %v783
    %842 = vst.msk [vmem:[#allocation2 + $0xa] sm:$0x1] %vm836, %v784
    %843 = vst.msk [vmem:[#allocation2 + $0xc] sm:$0x1] %vm836, %v785
    %844 = vst.msk [vmem:[#allocation2 + $0xe] sm:$0x1] %vm836, %v786
    %845 = vst.msk [vmem:[#allocation2 + $0x10] sm:$0x1] %vm836, %v769
    %846 = vst.msk [vmem:[#allocation2 + $0x12] sm:$0x1] %vm836, %v787
    %847 = vst.msk [vmem:[#allocation2 + $0x14] sm:$0x1] %vm836, %v788
    %848 = vst.msk [vmem:[#allocation2 + $0x16] sm:$0x1] %vm836, %v789
    %849 = vst.msk [vmem:[#allocation2 + $0x18] sm:$0x1] %vm836, %v790
    %850 = vst.msk [vmem:[#allocation2 + $0x1a] sm:$0x1] %vm836, %v791
    %851 = vst.msk [vmem:[#allocation2 + $0x1c] sm:$0x1] %vm836, %v792
    %852 = vst.msk [vmem:[#allocation2 + $0x1e] sm:$0x1] %vm836, %v793
    %853 = vst.msk [vmem:[#allocation2 + $0x20] sm:$0x1] %vm836, %v772
    %854 = vst.msk [vmem:[#allocation2 + $0x22] sm:$0x1] %vm836, %v794
    %855 = vst.msk [vmem:[#allocation2 + $0x24] sm:$0x1] %vm836, %v795
    %856 = vst.msk [vmem:[#allocation2 + $0x26] sm:$0x1] %vm836, %v796
    %857 = vst.msk [vmem:[#allocation2 + $0x28] sm:$0x1] %vm836, %v797
    %858 = vst.msk [vmem:[#allocation2 + $0x2a] sm:$0x1] %vm836, %v798
    %859 = vst.msk [vmem:[#allocation2 + $0x2c] sm:$0x1] %vm836, %v799
    %860 = vst.msk [vmem:[#allocation2 + $0x2e] sm:$0x1] %vm836, %v800
    %861 = vst.msk [vmem:[#allocation2 + $0x30] sm:$0x1] %vm836, %v774
    %862 = vst.msk [vmem:[#allocation2 + $0x32] sm:$0x1] %vm836, %v801
    %863 = vst.msk [vmem:[#allocation2 + $0x34] sm:$0x1] %vm836, %v802
    %864 = vst.msk [vmem:[#allocation2 + $0x36] sm:$0x1] %vm836, %v803
    %865 = vst.msk [vmem:[#allocation2 + $0x38] sm:$0x1] %vm836, %v804
    %866 = vst.msk [vmem:[#allocation2 + $0x3a] sm:$0x1] %vm836, %v805
    %867 = vst.msk [vmem:[#allocation2 + $0x3c] sm:$0x1] %vm836, %v806
    %868 = vst.msk [vmem:[#allocation2 + $0x3e] sm:$0x1] %vm836, %v807
    %v869 = vunpack.c.h.b16 %v741
    %v870 = vunpack.c.h.b16 %v742
    %v871 = vunpack.c.h.b16 %v743
    %v872 = vunpack.c.h.b16 %v744
    %v873 = vpack.c.b16 %v870, %v869
    %v874 = vpack.c.b16 %v872, %v871
    %877 = vmatpush.bf16.msra.mxu0 %v740
    %878 = vmatpush.bf16.msra.mxu0 %v739
    %879 = vmatpush.bf16.msra.mxu0 %v738
    %880 = vmatpush.bf16.msra.mxu0 %v737
    %881 = vmatpush.bf16.msra.mxu0 %v736
    %882 = vmatpush.bf16.msra.mxu0 %v735
    %883 = vmatpush.bf16.msra.mxu0 %v734
    %884 = vmatpush.bf16.msra.mxu0 %v733
    %885 = vmatmul.bf16.gmra.mxu0 %v873
    %v886 = vpop.f32.mrf.mxu0
    %v887 = vadd.f32 0.0, %v886
    %v888 = vpop.f32.mrf.mxu0
    %v889 = vadd.f32 0.0, %v888
    %890 = vmatmul.bf16.gmra.mxu0 %v874
    %v891 = vpop.f32.mrf.mxu0
    %v892 = vadd.f32 0.0, %v891
    %v893 = vpop.f32.mrf.mxu0
    %v894 = vadd.f32 0.0, %v893
    %895 = vdwg.mxu0
    %v900 = vrot.slane %v887, 1
    %v901 = vrot.slane %v887, 2
    %v902 = vrot.slane %v887, 3
    %v903 = vrot.slane %v887, 4
    %v904 = vrot.slane %v887, 5
    %v905 = vrot.slane %v887, 6
    %v906 = vrot.slane %v887, 7
    %v907 = vrot.slane %v889, 1
    %v908 = vrot.slane %v889, 2
    %v909 = vrot.slane %v889, 3
    %v910 = vrot.slane %v889, 4
    %v911 = vrot.slane %v889, 5
    %v912 = vrot.slane %v889, 6
    %v913 = vrot.slane %v889, 7
    %v914 = vrot.slane %v892, 1
    %v915 = vrot.slane %v892, 2
    %v916 = vrot.slane %v892, 3
    %v917 = vrot.slane %v892, 4
    %v918 = vrot.slane %v892, 5
    %v919 = vrot.slane %v892, 6
    %v920 = vrot.slane %v892, 7
    %v921 = vrot.slane %v894, 1
    %v922 = vrot.slane %v894, 2
    %v923 = vrot.slane %v894, 3
    %v924 = vrot.slane %v894, 4
    %v925 = vrot.slane %v894, 5
    %v926 = vrot.slane %v894, 6
    %v927 = vrot.slane %v894, 7
    %956 = vst.msk [vmem:[#allocation2 + $0x1] sm:$0x1] %vm836, %v887
    %957 = vst.msk [vmem:[#allocation2 + $0x3] sm:$0x1] %vm836, %v900
    %958 = vst.msk [vmem:[#allocation2 + $0x5] sm:$0x1] %vm836, %v901
    %959 = vst.msk [vmem:[#allocation2 + $0x7] sm:$0x1] %vm836, %v902
    %960 = vst.msk [vmem:[#allocation2 + $0x9] sm:$0x1] %vm836, %v903
    %961 = vst.msk [vmem:[#allocation2 + $0xb] sm:$0x1] %vm836, %v904
    %962 = vst.msk [vmem:[#allocation2 + $0xd] sm:$0x1] %vm836, %v905
    %963 = vst.msk [vmem:[#allocation2 + $0xf] sm:$0x1] %vm836, %v906
    %964 = vst.msk [vmem:[#allocation2 + $0x11] sm:$0x1] %vm836, %v889
    %965 = vst.msk [vmem:[#allocation2 + $0x13] sm:$0x1] %vm836, %v907
    %966 = vst.msk [vmem:[#allocation2 + $0x15] sm:$0x1] %vm836, %v908
    %967 = vst.msk [vmem:[#allocation2 + $0x17] sm:$0x1] %vm836, %v909
    %968 = vst.msk [vmem:[#allocation2 + $0x19] sm:$0x1] %vm836, %v910
    %969 = vst.msk [vmem:[#allocation2 + $0x1b] sm:$0x1] %vm836, %v911
    %970 = vst.msk [vmem:[#allocation2 + $0x1d] sm:$0x1] %vm836, %v912
    %971 = vst.msk [vmem:[#allocation2 + $0x1f] sm:$0x1] %vm836, %v913
    %972 = vst.msk [vmem:[#allocation2 + $0x21] sm:$0x1] %vm836, %v892
    %973 = vst.msk [vmem:[#allocation2 + $0x23] sm:$0x1] %vm836, %v914
    %974 = vst.msk [vmem:[#allocation2 + $0x25] sm:$0x1] %vm836, %v915
    %975 = vst.msk [vmem:[#allocation2 + $0x27] sm:$0x1] %vm836, %v916
    %976 = vst.msk [vmem:[#allocation2 + $0x29] sm:$0x1] %vm836, %v917
    %977 = vst.msk [vmem:[#allocation2 + $0x2b] sm:$0x1] %vm836, %v918
    %978 = vst.msk [vmem:[#allocation2 + $0x2d] sm:$0x1] %vm836, %v919
    %979 = vst.msk [vmem:[#allocation2 + $0x2f] sm:$0x1] %vm836, %v920
    %980 = vst.msk [vmem:[#allocation2 + $0x31] sm:$0x1] %vm836, %v894
    %981 = vst.msk [vmem:[#allocation2 + $0x33] sm:$0x1] %vm836, %v921
    %982 = vst.msk [vmem:[#allocation2 + $0x35] sm:$0x1] %vm836, %v922
    %983 = vst.msk [vmem:[#allocation2 + $0x37] sm:$0x1] %vm836, %v923
    %984 = vst.msk [vmem:[#allocation2 + $0x39] sm:$0x1] %vm836, %v924
    %985 = vst.msk [vmem:[#allocation2 + $0x3b] sm:$0x1] %vm836, %v925
    %986 = vst.msk [vmem:[#allocation2 + $0x3d] sm:$0x1] %vm836, %v926
    %987 = vst.msk [vmem:[#allocation2 + $0x3f] sm:$0x1] %vm836, %v927
  $region69: #{tpu_custom_call.1} parent=0 // pred_fallthru
    _
  %v988 = vld [vmem:[#allocation3] sm:$0xff]
  %v989 = vld [vmem:[#allocation3 + $0x8] sm:$0xff]
  %v990 = vld [vmem:[#allocation3 + $0x10] sm:$0xff]
  %s991 = smul.u32 0, 32
  %s992 = smul.u32 %s991, 2
  %s993 = scalar_lea.vmem [#allocation2], %s992
  %v994 = vld [vmem:[%s993] sm:$0x3]
  %v995 = vpack.c.bf16 %v994, %v994
  %v996 = vld [vmem:[%s10] sm:$0x77]
  %v997 = vld [vmem:[%s10 + $0x8] sm:$0x77]
  %v998 = vld [vmem:[%s10 + $0x10] sm:$0x77]
  %v999 = vld [vmem:[%s10 + $0x18] sm:$0x77]
  %v1000 = vld [vmem:[%s10 + $0x20] sm:$0x77]
  %v1001 = vld [vmem:[%s10 + $0x28] sm:$0x77]
  %v1008 = vunpack.c.l.b16 %v996
  %v1009 = vunpack.c.h.b16 %v996
  %v1010 = vunpack.c.l.b16 %v997
  %v1011 = vunpack.c.h.b16 %v997
  %v1012 = vunpack.c.l.b16 %v998
  %v1013 = vunpack.c.h.b16 %v998
  %v1014 = vunpack.c.l.b16 %v999
  %v1015 = vunpack.c.h.b16 %v999
  %v1016 = vunpack.c.l.b16 %v1000
  %v1017 = vunpack.c.h.b16 %v1000
  %v1018 = vunpack.c.l.b16 %v1001
  %v1019 = vunpack.c.h.b16 %v1001
  %v1020 = vpack.c.b16 %v1008, %v1008
  %v1021 = vpack.c.b16 %v1009, %v1009
  %v1022 = vpack.c.b16 %v1010, %v1010
  %v1023 = vpack.c.b16 %v1011, %v1011
  %v1024 = vpack.c.b16 %v1012, %v1012
  %v1025 = vpack.c.b16 %v1013, %v1013
  %v1026 = vpack.c.b16 %v1014, %v1014
  %v1027 = vpack.c.b16 %v1015, %v1015
  %v1028 = vpack.c.b16 %v1016, %v1016
  %v1029 = vpack.c.b16 %v1017, %v1017
  %v1030 = vpack.c.b16 %v1018, %v1018
  %v1031 = vpack.c.b16 %v1019, %v1019
  %vm1032 = vcmask 48128
  %v1034 = vsel %vm1032, %v995, 0
  %vm1036 = vcmask 1042432
  %v1038 = vsel %vm1036, %v1020, 0
  %v1041 = vsel %vm1036, %v1021, 0
  %v1044 = vsel %vm1036, %v1022, 0
  %v1047 = vsel %vm1036, %v1023, 0
  %v1050 = vsel %vm1036, %v1024, 0
  %v1053 = vsel %vm1036, %v1025, 0
  %v1056 = vsel %vm1036, %v1026, 0
  %v1059 = vsel %vm1036, %v1027, 0
  %v1062 = vsel %vm1036, %v1028, 0
  %v1065 = vsel %vm1036, %v1029, 0
  %v1068 = vsel %vm1036, %v1030, 0
  %v1071 = vsel %vm1036, %v1031, 0
  %1073 = vmatpush.bf16.msra.mxu0 0
  %1074 = vmatpush.bf16.msra.mxu0 0
  %1075 = vmatpush.bf16.msra.mxu0 0
  %1076 = vmatpush.bf16.msra.mxu0 0
  %1077 = vmatpush.bf16.msra.mxu0 0
  %1078 = vmatpush.bf16.msra.mxu0 0
  %1079 = vmatpush.bf16.msra.mxu0 0
  %1080 = vmatpush.bf16.msra.mxu0 %v1038
  %1081 = vmatmul.bf16.gmra.mxu0 %v1034
  %v1082 = vpop.f32.mrf.mxu0
  %v1083 = vadd.f32 0.0, %v1082
  %v1084 = vpop.f32.mrf.mxu0
  %1085 = vdwg.mxu0
  %1086 = vmatpush.bf16.msra.mxu0 0
  %1087 = vmatpush.bf16.msra.mxu0 0
  %1088 = vmatpush.bf16.msra.mxu0 0
  %1089 = vmatpush.bf16.msra.mxu0 0
  %1090 = vmatpush.bf16.msra.mxu0 0
  %1091 = vmatpush.bf16.msra.mxu0 0
  %1092 = vmatpush.bf16.msra.mxu0 0
  %1093 = vmatpush.bf16.msra.mxu0 %v1041
  %1094 = vmatmul.bf16.gmra.mxu0 %v1034
  %v1095 = vpop.f32.mrf.mxu0
  %v1096 = vadd.f32 0.0, %v1095
  %v1097 = vpop.f32.mrf.mxu0
  %1098 = vdwg.mxu0
  %1099 = vmatpush.bf16.msra.mxu0 0
  %1100 = vmatpush.bf16.msra.mxu0 0
  %1101 = vmatpush.bf16.msra.mxu0 0
  %1102 = vmatpush.bf16.msra.mxu0 0
  %1103 = vmatpush.bf16.msra.mxu0 0
  %1104 = vmatpush.bf16.msra.mxu0 0
  %1105 = vmatpush.bf16.msra.mxu0 0
  %1106 = vmatpush.bf16.msra.mxu0 %v1044
  %1107 = vmatmul.bf16.gmra.mxu0 %v1034
  %v1108 = vpop.f32.mrf.mxu0
  %v1109 = vadd.f32 0.0, %v1108
  %v1110 = vpop.f32.mrf.mxu0
  %1111 = vdwg.mxu0
  %1112 = vmatpush.bf16.msra.mxu0 0
  %1113 = vmatpush.bf16.msra.mxu0 0
  %1114 = vmatpush.bf16.msra.mxu0 0
  %1115 = vmatpush.bf16.msra.mxu0 0
  %1116 = vmatpush.bf16.msra.mxu0 0
  %1117 = vmatpush.bf16.msra.mxu0 0
  %1118 = vmatpush.bf16.msra.mxu0 0
  %1119 = vmatpush.bf16.msra.mxu0 %v1047
  %1120 = vmatmul.bf16.gmra.mxu0 %v1034
  %v1121 = vpop.f32.mrf.mxu0
  %v1122 = vadd.f32 0.0, %v1121
  %v1123 = vpop.f32.mrf.mxu0
  %1124 = vdwg.mxu0
  %1125 = vmatpush.bf16.msra.mxu0 0
  %1126 = vmatpush.bf16.msra.mxu0 0
  %1127 = vmatpush.bf16.msra.mxu0 0
  %1128 = vmatpush.bf16.msra.mxu0 0
  %1129 = vmatpush.bf16.msra.mxu0 0
  %1130 = vmatpush.bf16.msra.mxu0 0
  %1131 = vmatpush.bf16.msra.mxu0 0
  %1132 = vmatpush.bf16.msra.mxu0 %v1050
  %1133 = vmatmul.bf16.gmra.mxu0 %v1034
  %v1134 = vpop.f32.mrf.mxu0
  %v1135 = vadd.f32 0.0, %v1134
  %v1136 = vpop.f32.mrf.mxu0
  %1137 = vdwg.mxu0
  %1138 = vmatpush.bf16.msra.mxu0 0
  %1139 = vmatpush.bf16.msra.mxu0 0
  %1140 = vmatpush.bf16.msra.mxu0 0
  %1141 = vmatpush.bf16.msra.mxu0 0
  %1142 = vmatpush.bf16.msra.mxu0 0
  %1143 = vmatpush.bf16.msra.mxu0 0
  %1144 = vmatpush.bf16.msra.mxu0 0
  %1145 = vmatpush.bf16.msra.mxu0 %v1053
  %1146 = vmatmul.bf16.gmra.mxu0 %v1034
  %v1147 = vpop.f32.mrf.mxu0
  %v1148 = vadd.f32 0.0, %v1147
  %v1149 = vpop.f32.mrf.mxu0
  %1150 = vdwg.mxu0
  %1151 = vmatpush.bf16.msra.mxu0 0
  %1152 = vmatpush.bf16.msra.mxu0 0
  %1153 = vmatpush.bf16.msra.mxu0 0
  %1154 = vmatpush.bf16.msra.mxu0 0
  %1155 = vmatpush.bf16.msra.mxu0 0
  %1156 = vmatpush.bf16.msra.mxu0 0
  %1157 = vmatpush.bf16.msra.mxu0 0
  %1158 = vmatpush.bf16.msra.mxu0 %v1056
  %1159 = vmatmul.bf16.gmra.mxu0 %v1034
  %v1160 = vpop.f32.mrf.mxu0
  %v1161 = vadd.f32 0.0, %v1160
  %v1162 = vpop.f32.mrf.mxu0
  %1163 = vdwg.mxu0
  %1164 = vmatpush.bf16.msra.mxu0 0
  %1165 = vmatpush.bf16.msra.mxu0 0
  %1166 = vmatpush.bf16.msra.mxu0 0
  %1167 = vmatpush.bf16.msra.mxu0 0
  %1168 = vmatpush.bf16.msra.mxu0 0
  %1169 = vmatpush.bf16.msra.mxu0 0
  %1170 = vmatpush.bf16.msra.mxu0 0
  %1171 = vmatpush.bf16.msra.mxu0 %v1059
  %1172 = vmatmul.bf16.gmra.mxu0 %v1034
  %v1173 = vpop.f32.mrf.mxu0
  %v1174 = vadd.f32 0.0, %v1173
  %v1175 = vpop.f32.mrf.mxu0
  %1176 = vdwg.mxu0
  %1177 = vmatpush.bf16.msra.mxu0 0
  %1178 = vmatpush.bf16.msra.mxu0 0
  %1179 = vmatpush.bf16.msra.mxu0 0
  %1180 = vmatpush.bf16.msra.mxu0 0
  %1181 = vmatpush.bf16.msra.mxu0 0
  %1182 = vmatpush.bf16.msra.mxu0 0
  %1183 = vmatpush.bf16.msra.mxu0 0
  %1184 = vmatpush.bf16.msra.mxu0 %v1062
  %1185 = vmatmul.bf16.gmra.mxu0 %v1034
  %v1186 = vpop.f32.mrf.mxu0
  %v1187 = vadd.f32 0.0, %v1186
  %v1188 = vpop.f32.mrf.mxu0
  %1189 = vdwg.mxu0
  %1190 = vmatpush.bf16.msra.mxu0 0
  %1191 = vmatpush.bf16.msra.mxu0 0
  %1192 = vmatpush.bf16.msra.mxu0 0
  %1193 = vmatpush.bf16.msra.mxu0 0
  %1194 = vmatpush.bf16.msra.mxu0 0
  %1195 = vmatpush.bf16.msra.mxu0 0
  %1196 = vmatpush.bf16.msra.mxu0 0
  %1197 = vmatpush.bf16.msra.mxu0 %v1065
  %1198 = vmatmul.bf16.gmra.mxu0 %v1034
  %v1199 = vpop.f32.mrf.mxu0
  %v1200 = vadd.f32 0.0, %v1199
  %v1201 = vpop.f32.mrf.mxu0
  %1202 = vdwg.mxu0
  %1203 = vmatpush.bf16.msra.mxu0 0
  %1204 = vmatpush.bf16.msra.mxu0 0
  %1205 = vmatpush.bf16.msra.mxu0 0
  %1206 = vmatpush.bf16.msra.mxu0 0
  %1207 = vmatpush.bf16.msra.mxu0 0
  %1208 = vmatpush.bf16.msra.mxu0 0
  %1209 = vmatpush.bf16.msra.mxu0 0
  %1210 = vmatpush.bf16.msra.mxu0 %v1068
  %1211 = vmatmul.bf16.gmra.mxu0 %v1034
  %v1212 = vpop.f32.mrf.mxu0
  %v1213 = vadd.f32 0.0, %v1212
  %v1214 = vpop.f32.mrf.mxu0
  %1215 = vdwg.mxu0
  %1216 = vmatpush.bf16.msra.mxu0 0
  %1217 = vmatpush.bf16.msra.mxu0 0
  %1218 = vmatpush.bf16.msra.mxu0 0
  %1219 = vmatpush.bf16.msra.mxu0 0
  %1220 = vmatpush.bf16.msra.mxu0 0
  %1221 = vmatpush.bf16.msra.mxu0 0
  %1222 = vmatpush.bf16.msra.mxu0 0
  %1223 = vmatpush.bf16.msra.mxu0 %v1071
  %1224 = vmatmul.bf16.gmra.mxu0 %v1034
  %v1225 = vpop.f32.mrf.mxu0
  %v1226 = vadd.f32 0.0, %v1225
  %v1227 = vpop.f32.mrf.mxu0
  %1228 = vdwg.mxu0
  %v1241 = vrot.slane %v1096, 6
  %v1242 = vrot.slane %v1109, 4
  %v1243 = vrot.slane %v1122, 2
  %v1244 = vrot.slane %v1148, 6
  %v1245 = vrot.slane %v1161, 4
  %v1246 = vrot.slane %v1174, 2
  %v1247 = vrot.slane %v1200, 6
  %v1248 = vrot.slane %v1213, 4
  %v1249 = vrot.slane %v1226, 2
  %vm1250 = vcmask 1041408
  %v1251 = vsel %vm1250, %v1083, %v1241
  %vm1252 = vcmask 1045508
  %v1253 = vsel %vm1252, %v1242, %v1243
  %vm1254 = vcmask 1043456
  %v1255 = vsel %vm1254, %v1251, %v1253
  %v1256 = vsel %vm1250, %v1135, %v1244
  %v1257 = vsel %vm1252, %v1245, %v1246
  %v1258 = vsel %vm1254, %v1256, %v1257
  %v1259 = vsel %vm1250, %v1187, %v1247
  %v1260 = vsel %vm1252, %v1248, %v1249
  %v1261 = vsel %vm1254, %v1259, %v1260
  %v1265 = vadd.f32 %v988, %v1255
  %v1266 = vadd.f32 %v989, %v1258
  %v1267 = vadd.f32 %v990, %v1261
  %1268 = vst [vmem:[#allocation3] sm:$0xff] %v1265
  %1269 = vst [vmem:[#allocation3 + $0x8] sm:$0xff] %v1266
  %vm1270 = vcmask 1043458
  %vm1271 = vmor %vm1270, %vm1250
  %vm1272 = vmor %vm1252, %vm1271
  %vm1273 = vcmask 752646
  %vm1274 = vmor %vm1273, %vm1272
  %1275 = vst.msk [vmem:[#allocation3 + $0x10] sm:$0xff] %vm1274, %v1267
  %v1276 = vld [vmem:[#allocation3] sm:$0xff]
  %v1277 = vld [vmem:[#allocation3 + $0x8] sm:$0xff]
  %v1278 = vld [vmem:[#allocation3 + $0x10] sm:$0xff]
  %s1279 = sadd.s32 %s991, 1
  %s1280 = smul.u32 %s1279, 2
  %s1281 = scalar_lea.vmem [#allocation2], %s1280
  %v1282 = vld [vmem:[%s1281] sm:$0x3]
  %v1283 = vpack.c.bf16 %v1282, %v1282
  %s1284 = scalar_lea.vmem %s10, 48
  %v1285 = vld [vmem:[%s1284] sm:$0x77]
  %v1286 = vld [vmem:[%s1284 + $0x8] sm:$0x77]
  %v1287 = vld [vmem:[%s1284 + $0x10] sm:$0x77]
  %v1288 = vld [vmem:[%s1284 + $0x18] sm:$0x77]
  %v1289 = vld [vmem:[%s1284 + $0x20] sm:$0x77]
  %v1290 = vld [vmem:[%s1284 + $0x28] sm:$0x77]
  %v1297 = vunpack.c.l.b16 %v1285
  %v1298 = vunpack.c.h.b16 %v1285
  %v1299 = vunpack.c.l.b16 %v1286
  %v1300 = vunpack.c.h.b16 %v1286
  %v1301 = vunpack.c.l.b16 %v1287
  %v1302 = vunpack.c.h.b16 %v1287
  %v1303 = vunpack.c.l.b16 %v1288
  %v1304 = vunpack.c.h.b16 %v1288
  %v1305 = vunpack.c.l.b16 %v1289
  %v1306 = vunpack.c.h.b16 %v1289
  %v1307 = vunpack.c.l.b16 %v1290
  %v1308 = vunpack.c.h.b16 %v1290
  %v1309 = vpack.c.b16 %v1297, %v1297
  %v1310 = vpack.c.b16 %v1298, %v1298
  %v1311 = vpack.c.b16 %v1299, %v1299
  %v1312 = vpack.c.b16 %v1300, %v1300
  %v1313 = vpack.c.b16 %v1301, %v1301
  %v1314 = vpack.c.b16 %v1302, %v1302
  %v1315 = vpack.c.b16 %v1303, %v1303
  %v1316 = vpack.c.b16 %v1304, %v1304
  %v1317 = vpack.c.b16 %v1305, %v1305
  %v1318 = vpack.c.b16 %v1306, %v1306
  %v1319 = vpack.c.b16 %v1307, %v1307
  %v1320 = vpack.c.b16 %v1308, %v1308
  %v1322 = vsel %vm1032, %v1283, 0
  %v1325 = vsel %vm1036, %v1309, 0
  %v1328 = vsel %vm1036, %v1310, 0
  %v1331 = vsel %vm1036, %v1311, 0
  %v1334 = vsel %vm1036, %v1312, 0
  %v1337 = vsel %vm1036, %v1313, 0
  %v1340 = vsel %vm1036, %v1314, 0
  %v1343 = vsel %vm1036, %v1315, 0
  %v1346 = vsel %vm1036, %v1316, 0
  %v1349 = vsel %vm1036, %v1317, 0
  %v1352 = vsel %vm1036, %v1318, 0
  %v1355 = vsel %vm1036, %v1319, 0
  %v1358 = vsel %vm1036, %v1320, 0
  %1360 = vmatpush.bf16.msra.mxu0 0
  %1361 = vmatpush.bf16.msra.mxu0 0
  %1362 = vmatpush.bf16.msra.mxu0 0
  %1363 = vmatpush.bf16.msra.mxu0 0
  %1364 = vmatpush.bf16.msra.mxu0 0
  %1365 = vmatpush.bf16.msra.mxu0 0
  %1366 = vmatpush.bf16.msra.mxu0 0
  %1367 = vmatpush.bf16.msra.mxu0 %v1325
  %1368 = vmatmul.bf16.gmra.mxu0 %v1322
  %v1369 = vpop.f32.mrf.mxu0
  %v1370 = vadd.f32 0.0, %v1369
  %v1371 = vpop.f32.mrf.mxu0
  %1372 = vdwg.mxu0
  %1373 = vmatpush.bf16.msra.mxu0 0
  %1374 = vmatpush.bf16.msra.mxu0 0
  %1375 = vmatpush.bf16.msra.mxu0 0
  %1376 = vmatpush.bf16.msra.mxu0 0
  %1377 = vmatpush.bf16.msra.mxu0 0
  %1378 = vmatpush.bf16.msra.mxu0 0
  %1379 = vmatpush.bf16.msra.mxu0 0
  %1380 = vmatpush.bf16.msra.mxu0 %v1328
  %1381 = vmatmul.bf16.gmra.mxu0 %v1322
  %v1382 = vpop.f32.mrf.mxu0
  %v1383 = vadd.f32 0.0, %v1382
  %v1384 = vpop.f32.mrf.mxu0
  %1385 = vdwg.mxu0
  %1386 = vmatpush.bf16.msra.mxu0 0
  %1387 = vmatpush.bf16.msra.mxu0 0
  %1388 = vmatpush.bf16.msra.mxu0 0
  %1389 = vmatpush.bf16.msra.mxu0 0
  %1390 = vmatpush.bf16.msra.mxu0 0
  %1391 = vmatpush.bf16.msra.mxu0 0
  %1392 = vmatpush.bf16.msra.mxu0 0
  %1393 = vmatpush.bf16.msra.mxu0 %v1331
  %1394 = vmatmul.bf16.gmra.mxu0 %v1322
  %v1395 = vpop.f32.mrf.mxu0
  %v1396 = vadd.f32 0.0, %v1395
  %v1397 = vpop.f32.mrf.mxu0
  %1398 = vdwg.mxu0
  %1399 = vmatpush.bf16.msra.mxu0 0
  %1400 = vmatpush.bf16.msra.mxu0 0
  %1401 = vmatpush.bf16.msra.mxu0 0
  %1402 = vmatpush.bf16.msra.mxu0 0
  %1403 = vmatpush.bf16.msra.mxu0 0
  %1404 = vmatpush.bf16.msra.mxu0 0
  %1405 = vmatpush.bf16.msra.mxu0 0
  %1406 = vmatpush.bf16.msra.mxu0 %v1334
  %1407 = vmatmul.bf16.gmra.mxu0 %v1322
  %v1408 = vpop.f32.mrf.mxu0
  %v1409 = vadd.f32 0.0, %v1408
  %v1410 = vpop.f32.mrf.mxu0
  %1411 = vdwg.mxu0
  %1412 = vmatpush.bf16.msra.mxu0 0
  %1413 = vmatpush.bf16.msra.mxu0 0
  %1414 = vmatpush.bf16.msra.mxu0 0
  %1415 = vmatpush.bf16.msra.mxu0 0
  %1416 = vmatpush.bf16.msra.mxu0 0
  %1417 = vmatpush.bf16.msra.mxu0 0
  %1418 = vmatpush.bf16.msra.mxu0 0
  %1419 = vmatpush.bf16.msra.mxu0 %v1337
  %1420 = vmatmul.bf16.gmra.mxu0 %v1322
  %v1421 = vpop.f32.mrf.mxu0
  %v1422 = vadd.f32 0.0, %v1421
  %v1423 = vpop.f32.mrf.mxu0
  %1424 = vdwg.mxu0
  %1425 = vmatpush.bf16.msra.mxu0 0
  %1426 = vmatpush.bf16.msra.mxu0 0
  %1427 = vmatpush.bf16.msra.mxu0 0
  %1428 = vmatpush.bf16.msra.mxu0 0
  %1429 = vmatpush.bf16.msra.mxu0 0
  %1430 = vmatpush.bf16.msra.mxu0 0
  %1431 = vmatpush.bf16.msra.mxu0 0
  %1432 = vmatpush.bf16.msra.mxu0 %v1340
  %1433 = vmatmul.bf16.gmra.mxu0 %v1322
  %v1434 = vpop.f32.mrf.mxu0
  %v1435 = vadd.f32 0.0, %v1434
  %v1436 = vpop.f32.mrf.mxu0
  %1437 = vdwg.mxu0
  %1438 = vmatpush.bf16.msra.mxu0 0
  %1439 = vmatpush.bf16.msra.mxu0 0
  %1440 = vmatpush.bf16.msra.mxu0 0
  %1441 = vmatpush.bf16.msra.mxu0 0
  %1442 = vmatpush.bf16.msra.mxu0 0
  %1443 = vmatpush.bf16.msra.mxu0 0
  %1444 = vmatpush.bf16.msra.mxu0 0
  %1445 = vmatpush.bf16.msra.mxu0 %v1343
  %1446 = vmatmul.bf16.gmra.mxu0 %v1322
  %v1447 = vpop.f32.mrf.mxu0
  %v1448 = vadd.f32 0.0, %v1447
  %v1449 = vpop.f32.mrf.mxu0
  %1450 = vdwg.mxu0
  %1451 = vmatpush.bf16.msra.mxu0 0
  %1452 = vmatpush.bf16.msra.mxu0 0
  %1453 = vmatpush.bf16.msra.mxu0 0
  %1454 = vmatpush.bf16.msra.mxu0 0
  %1455 = vmatpush.bf16.msra.mxu0 0
  %1456 = vmatpush.bf16.msra.mxu0 0
  %1457 = vmatpush.bf16.msra.mxu0 0
  %1458 = vmatpush.bf16.msra.mxu0 %v1346
  %1459 = vmatmul.bf16.gmra.mxu0 %v1322
  %v1460 = vpop.f32.mrf.mxu0
  %v1461 = vadd.f32 0.0, %v1460
  %v1462 = vpop.f32.mrf.mxu0
  %1463 = vdwg.mxu0
  %1464 = vmatpush.bf16.msra.mxu0 0
  %1465 = vmatpush.bf16.msra.mxu0 0
  %1466 = vmatpush.bf16.msra.mxu0 0
  %1467 = vmatpush.bf16.msra.mxu0 0
  %1468 = vmatpush.bf16.msra.mxu0 0
  %1469 = vmatpush.bf16.msra.mxu0 0
  %1470 = vmatpush.bf16.msra.mxu0 0
  %1471 = vmatpush.bf16.msra.mxu0 %v1349
  %1472 = vmatmul.bf16.gmra.mxu0 %v1322
  %v1473 = vpop.f32.mrf.mxu0
  %v1474 = vadd.f32 0.0, %v1473
  %v1475 = vpop.f32.mrf.mxu0
  %1476 = vdwg.mxu0
  %1477 = vmatpush.bf16.msra.mxu0 0
  %1478 = vmatpush.bf16.msra.mxu0 0
  %1479 = vmatpush.bf16.msra.mxu0 0
  %1480 = vmatpush.bf16.msra.mxu0 0
  %1481 = vmatpush.bf16.msra.mxu0 0
  %1482 = vmatpush.bf16.msra.mxu0 0
  %1483 = vmatpush.bf16.msra.mxu0 0
  %1484 = vmatpush.bf16.msra.mxu0 %v1352
  %1485 = vmatmul.bf16.gmra.mxu0 %v1322
  %v1486 = vpop.f32.mrf.mxu0
  %v1487 = vadd.f32 0.0, %v1486
  %v1488 = vpop.f32.mrf.mxu0
  %1489 = vdwg.mxu0
  %1490 = vmatpush.bf16.msra.mxu0 0
  %1491 = vmatpush.bf16.msra.mxu0 0
  %1492 = vmatpush.bf16.msra.mxu0 0
  %1493 = vmatpush.bf16.msra.mxu0 0
  %1494 = vmatpush.bf16.msra.mxu0 0
  %1495 = vmatpush.bf16.msra.mxu0 0
  %1496 = vmatpush.bf16.msra.mxu0 0
  %1497 = vmatpush.bf16.msra.mxu0 %v1355
  %1498 = vmatmul.bf16.gmra.mxu0 %v1322
  %v1499 = vpop.f32.mrf.mxu0
  %v1500 = vadd.f32 0.0, %v1499
  %v1501 = vpop.f32.mrf.mxu0
  %1502 = vdwg.mxu0
  %1503 = vmatpush.bf16.msra.mxu0 0
  %1504 = vmatpush.bf16.msra.mxu0 0
  %1505 = vmatpush.bf16.msra.mxu0 0
  %1506 = vmatpush.bf16.msra.mxu0 0
  %1507 = vmatpush.bf16.msra.mxu0 0
  %1508 = vmatpush.bf16.msra.mxu0 0
  %1509 = vmatpush.bf16.msra.mxu0 0
  %1510 = vmatpush.bf16.msra.mxu0 %v1358
  %1511 = vmatmul.bf16.gmra.mxu0 %v1322
  %v1512 = vpop.f32.mrf.mxu0
  %v1513 = vadd.f32 0.0, %v1512
  %v1514 = vpop.f32.mrf.mxu0
  %1515 = vdwg.mxu0
  %v1528 = vrot.slane %v1383, 6
  %v1529 = vrot.slane %v1396, 4
  %v1530 = vrot.slane %v1409, 2
  %v1531 = vrot.slane %v1435, 6
  %v1532 = vrot.slane %v1448, 4
  %v1533 = vrot.slane %v1461, 2
  %v1534 = vrot.slane %v1487, 6
  %v1535 = vrot.slane %v1500, 4
  %v1536 = vrot.slane %v1513, 2
  %v1537 = vsel %vm1250, %v1370, %v1528
  %v1538 = vsel %vm1252, %v1529, %v1530
  %v1539 = vsel %vm1254, %v1537, %v1538
  %v1540 = vsel %vm1250, %v1422, %v1531
  %v1541 = vsel %vm1252, %v1532, %v1533
  %v1542 = vsel %vm1254, %v1540, %v1541
  %v1543 = vsel %vm1250, %v1474, %v1534
  %v1544 = vsel %vm1252, %v1535, %v1536
  %v1545 = vsel %vm1254, %v1543, %v1544
  %v1549 = vadd.f32 %v1276, %v1539
  %v1550 = vadd.f32 %v1277, %v1542
  %v1551 = vadd.f32 %v1278, %v1545
  %1552 = vst [vmem:[#allocation3] sm:$0xff] %v1549
  %1553 = vst [vmem:[#allocation3 + $0x8] sm:$0xff] %v1550
  %1554 = vst.msk [vmem:[#allocation3 + $0x10] sm:$0xff] %vm1274, %v1551
  %v1555 = vld [vmem:[#allocation3] sm:$0xff]
  %v1556 = vld [vmem:[#allocation3 + $0x8] sm:$0xff]
  %v1557 = vld [vmem:[#allocation3 + $0x10] sm:$0xff]
  %s1558 = sadd.s32 %s991, 2
  %s1559 = smul.u32 %s1558, 2
  %s1560 = scalar_lea.vmem [#allocation2], %s1559
  %v1561 = vld [vmem:[%s1560] sm:$0x3]
  %v1562 = vpack.c.bf16 %v1561, %v1561
  %s1563 = scalar_lea.vmem %s10, 96
  %v1564 = vld [vmem:[%s1563] sm:$0x77]
  %v1565 = vld [vmem:[%s1563 + $0x8] sm:$0x77]
  %v1566 = vld [vmem:[%s1563 + $0x10] sm:$0x77]
  %v1567 = vld [vmem:[%s1563 + $0x18] sm:$0x77]
  %v1568 = vld [vmem:[%s1563 + $0x20] sm:$0x77]
  %v1569 = vld [vmem:[%s1563 + $0x28] sm:$0x77]
  %v1576 = vunpack.c.l.b16 %v1564
  %v1577 = vunpack.c.h.b16 %v1564
  %v1578 = vunpack.c.l.b16 %v1565
  %v1579 = vunpack.c.h.b16 %v1565
  %v1580 = vunpack.c.l.b16 %v1566
  %v1581 = vunpack.c.h.b16 %v1566
  %v1582 = vunpack.c.l.b16 %v1567
  %v1583 = vunpack.c.h.b16 %v1567
  %v1584 = vunpack.c.l.b16 %v1568
  %v1585 = vunpack.c.h.b16 %v1568
  %v1586 = vunpack.c.l.b16 %v1569
  %v1587 = vunpack.c.h.b16 %v1569
  %v1588 = vpack.c.b16 %v1576, %v1576
  %v1589 = vpack.c.b16 %v1577, %v1577
  %v1590 = vpack.c.b16 %v1578, %v1578
  %v1591 = vpack.c.b16 %v1579, %v1579
  %v1592 = vpack.c.b16 %v1580, %v1580
  %v1593 = vpack.c.b16 %v1581, %v1581
  %v1594 = vpack.c.b16 %v1582, %v1582
  %v1595 = vpack.c.b16 %v1583, %v1583
  %v1596 = vpack.c.b16 %v1584, %v1584
  %v1597 = vpack.c.b16 %v1585, %v1585
  %v1598 = vpack.c.b16 %v1586, %v1586
  %v1599 = vpack.c.b16 %v1587, %v1587
  %v1601 = vsel %vm1032, %v1562, 0
  %v1604 = vsel %vm1036, %v1588, 0
  %v1607 = vsel %vm1036, %v1589, 0
  %v1610 = vsel %vm1036, %v1590, 0
  %v1613 = vsel %vm1036, %v1591, 0
  %v1616 = vsel %vm1036, %v1592, 0
  %v1619 = vsel %vm1036, %v1593, 0
  %v1622 = vsel %vm1036, %v1594, 0
  %v1625 = vsel %vm1036, %v1595, 0
  %v1628 = vsel %vm1036, %v1596, 0
  %v1631 = vsel %vm1036, %v1597, 0
  %v1634 = vsel %vm1036, %v1598, 0
  %v1637 = vsel %vm1036, %v1599, 0
  %1639 = vmatpush.bf16.msra.mxu0 0
  %1640 = vmatpush.bf16.msra.mxu0 0
  %1641 = vmatpush.bf16.msra.mxu0 0
  %1642 = vmatpush.bf16.msra.mxu0 0
  %1643 = vmatpush.bf16.msra.mxu0 0
  %1644 = vmatpush.bf16.msra.mxu0 0
  %1645 = vmatpush.bf16.msra.mxu0 0
  %1646 = vmatpush.bf16.msra.mxu0 %v1604
  %1647 = vmatmul.bf16.gmra.mxu0 %v1601
  %v1648 = vpop.f32.mrf.mxu0
  %v1649 = vadd.f32 0.0, %v1648
  %v1650 = vpop.f32.mrf.mxu0
  %1651 = vdwg.mxu0
  %1652 = vmatpush.bf16.msra.mxu0 0
  %1653 = vmatpush.bf16.msra.mxu0 0
  %1654 = vmatpush.bf16.msra.mxu0 0
  %1655 = vmatpush.bf16.msra.mxu0 0
  %1656 = vmatpush.bf16.msra.mxu0 0
  %1657 = vmatpush.bf16.msra.mxu0 0
  %1658 = vmatpush.bf16.msra.mxu0 0
  %1659 = vmatpush.bf16.msra.mxu0 %v1607
  %1660 = vmatmul.bf16.gmra.mxu0 %v1601
  %v1661 = vpop.f32.mrf.mxu0
  %v1662 = vadd.f32 0.0, %v1661
  %v1663 = vpop.f32.mrf.mxu0
  %1664 = vdwg.mxu0
  %1665 = vmatpush.bf16.msra.mxu0 0
  %1666 = vmatpush.bf16.msra.mxu0 0
  %1667 = vmatpush.bf16.msra.mxu0 0
  %1668 = vmatpush.bf16.msra.mxu0 0
  %1669 = vmatpush.bf16.msra.mxu0 0
  %1670 = vmatpush.bf16.msra.mxu0 0
  %1671 = vmatpush.bf16.msra.mxu0 0
  %1672 = vmatpush.bf16.msra.mxu0 %v1610
  %1673 = vmatmul.bf16.gmra.mxu0 %v1601
  %v1674 = vpop.f32.mrf.mxu0
  %v1675 = vadd.f32 0.0, %v1674
  %v1676 = vpop.f32.mrf.mxu0
  %1677 = vdwg.mxu0
  %1678 = vmatpush.bf16.msra.mxu0 0
  %1679 = vmatpush.bf16.msra.mxu0 0
  %1680 = vmatpush.bf16.msra.mxu0 0
  %1681 = vmatpush.bf16.msra.mxu0 0
  %1682 = vmatpush.bf16.msra.mxu0 0
  %1683 = vmatpush.bf16.msra.mxu0 0
  %1684 = vmatpush.bf16.msra.mxu0 0
  %1685 = vmatpush.bf16.msra.mxu0 %v1613
  %1686 = vmatmul.bf16.gmra.mxu0 %v1601
  %v1687 = vpop.f32.mrf.mxu0
  %v1688 = vadd.f32 0.0, %v1687
  %v1689 = vpop.f32.mrf.mxu0
  %1690 = vdwg.mxu0
  %1691 = vmatpush.bf16.msra.mxu0 0
  %1692 = vmatpush.bf16.msra.mxu0 0
  %1693 = vmatpush.bf16.msra.mxu0 0
  %1694 = vmatpush.bf16.msra.mxu0 0
  %1695 = vmatpush.bf16.msra.mxu0 0
  %1696 = vmatpush.bf16.msra.mxu0 0
  %1697 = vmatpush.bf16.msra.mxu0 0
  %1698 = vmatpush.bf16.msra.mxu0 %v1616
  %1699 = vmatmul.bf16.gmra.mxu0 %v1601
  %v1700 = vpop.f32.mrf.mxu0
  %v1701 = vadd.f32 0.0, %v1700
  %v1702 = vpop.f32.mrf.mxu0
  %1703 = vdwg.mxu0
  %1704 = vmatpush.bf16.msra.mxu0 0
  %1705 = vmatpush.bf16.msra.mxu0 0
  %1706 = vmatpush.bf16.msra.mxu0 0
  %1707 = vmatpush.bf16.msra.mxu0 0
  %1708 = vmatpush.bf16.msra.mxu0 0
  %1709 = vmatpush.bf16.msra.mxu0 0
  %1710 = vmatpush.bf16.msra.mxu0 0
  %1711 = vmatpush.bf16.msra.mxu0 %v1619
  %1712 = vmatmul.bf16.gmra.mxu0 %v1601
  %v1713 = vpop.f32.mrf.mxu0
  %v1714 = vadd.f32 0.0, %v1713
  %v1715 = vpop.f32.mrf.mxu0
  %1716 = vdwg.mxu0
  %1717 = vmatpush.bf16.msra.mxu0 0
  %1718 = vmatpush.bf16.msra.mxu0 0
  %1719 = vmatpush.bf16.msra.mxu0 0
  %1720 = vmatpush.bf16.msra.mxu0 0
  %1721 = vmatpush.bf16.msra.mxu0 0
  %1722 = vmatpush.bf16.msra.mxu0 0
  %1723 = vmatpush.bf16.msra.mxu0 0
  %1724 = vmatpush.bf16.msra.mxu0 %v1622
  %1725 = vmatmul.bf16.gmra.mxu0 %v1601
  %v1726 = vpop.f32.mrf.mxu0
  %v1727 = vadd.f32 0.0, %v1726
  %v1728 = vpop.f32.mrf.mxu0
  %1729 = vdwg.mxu0
  %1730 = vmatpush.bf16.msra.mxu0 0
  %1731 = vmatpush.bf16.msra.mxu0 0
  %1732 = vmatpush.bf16.msra.mxu0 0
  %1733 = vmatpush.bf16.msra.mxu0 0
  %1734 = vmatpush.bf16.msra.mxu0 0
  %1735 = vmatpush.bf16.msra.mxu0 0
  %1736 = vmatpush.bf16.msra.mxu0 0
  %1737 = vmatpush.bf16.msra.mxu0 %v1625
  %1738 = vmatmul.bf16.gmra.mxu0 %v1601
  %v1739 = vpop.f32.mrf.mxu0
  %v1740 = vadd.f32 0.0, %v1739
  %v1741 = vpop.f32.mrf.mxu0
  %1742 = vdwg.mxu0
  %1743 = vmatpush.bf16.msra.mxu0 0
  %1744 = vmatpush.bf16.msra.mxu0 0
  %1745 = vmatpush.bf16.msra.mxu0 0
  %1746 = vmatpush.bf16.msra.mxu0 0
  %1747 = vmatpush.bf16.msra.mxu0 0
  %1748 = vmatpush.bf16.msra.mxu0 0
  %1749 = vmatpush.bf16.msra.mxu0 0
  %1750 = vmatpush.bf16.msra.mxu0 %v1628
  %1751 = vmatmul.bf16.gmra.mxu0 %v1601
  %v1752 = vpop.f32.mrf.mxu0
  %v1753 = vadd.f32 0.0, %v1752
  %v1754 = vpop.f32.mrf.mxu0
  %1755 = vdwg.mxu0
  %1756 = vmatpush.bf16.msra.mxu0 0
  %1757 = vmatpush.bf16.msra.mxu0 0
  %1758 = vmatpush.bf16.msra.mxu0 0
  %1759 = vmatpush.bf16.msra.mxu0 0
  %1760 = vmatpush.bf16.msra.mxu0 0
  %1761 = vmatpush.bf16.msra.mxu0 0
  %1762 = vmatpush.bf16.msra.mxu0 0
  %1763 = vmatpush.bf16.msra.mxu0 %v1631
  %1764 = vmatmul.bf16.gmra.mxu0 %v1601
  %v1765 = vpop.f32.mrf.mxu0
  %v1766 = vadd.f32 0.0, %v1765
  %v1767 = vpop.f32.mrf.mxu0
  %1768 = vdwg.mxu0
  %1769 = vmatpush.bf16.msra.mxu0 0
  %1770 = vmatpush.bf16.msra.mxu0 0
  %1771 = vmatpush.bf16.msra.mxu0 0
  %1772 = vmatpush.bf16.msra.mxu0 0
  %1773 = vmatpush.bf16.msra.mxu0 0
  %1774 = vmatpush.bf16.msra.mxu0 0
  %1775 = vmatpush.bf16.msra.mxu0 0
  %1776 = vmatpush.bf16.msra.mxu0 %v1634
  %1777 = vmatmul.bf16.gmra.mxu0 %v1601
  %v1778 = vpop.f32.mrf.mxu0
  %v1779 = vadd.f32 0.0, %v1778
  %v1780 = vpop.f32.mrf.mxu0
  %1781 = vdwg.mxu0
  %1782 = vmatpush.bf16.msra.mxu0 0
  %1783 = vmatpush.bf16.msra.mxu0 0
  %1784 = vmatpush.bf16.msra.mxu0 0
  %1785 = vmatpush.bf16.msra.mxu0 0
  %1786 = vmatpush.bf16.msra.mxu0 0
  %1787 = vmatpush.bf16.msra.mxu0 0
  %1788 = vmatpush.bf16.msra.mxu0 0
  %1789 = vmatpush.bf16.msra.mxu0 %v1637
  %1790 = vmatmul.bf16.gmra.mxu0 %v1601
  %v1791 = vpop.f32.mrf.mxu0
  %v1792 = vadd.f32 0.0, %v1791
  %v1793 = vpop.f32.mrf.mxu0
  %1794 = vdwg.mxu0
  %v1807 = vrot.slane %v1662, 6
  %v1808 = vrot.slane %v1675, 4
  %v1809 = vrot.slane %v1688, 2
  %v1810 = vrot.slane %v1714, 6
  %v1811 = vrot.slane %v1727, 4
  %v1812 = vrot.slane %v1740, 2
  %v1813 = vrot.slane %v1766, 6
  %v1814 = vrot.slane %v1779, 4
  %v1815 = vrot.slane %v1792, 2
  %v1816 = vsel %vm1250, %v1649, %v1807
  %v1817 = vsel %vm1252, %v1808, %v1809
  %v1818 = vsel %vm1254, %v1816, %v1817
  %v1819 = vsel %vm1250, %v1701, %v1810
  %v1820 = vsel %vm1252, %v1811, %v1812
  %v1821 = vsel %vm1254, %v1819, %v1820
  %v1822 = vsel %vm1250, %v1753, %v1813
  %v1823 = vsel %vm1252, %v1814, %v1815
  %v1824 = vsel %vm1254, %v1822, %v1823
  %v1828 = vadd.f32 %v1555, %v1818
  %v1829 = vadd.f32 %v1556, %v1821
  %v1830 = vadd.f32 %v1557, %v1824
  %1831 = vst [vmem:[#allocation3] sm:$0xff] %v1828
  %1832 = vst [vmem:[#allocation3 + $0x8] sm:$0xff] %v1829
  %1833 = vst.msk [vmem:[#allocation3 + $0x10] sm:$0xff] %vm1274, %v1830
  %v1834 = vld [vmem:[#allocation3] sm:$0xff]
  %v1835 = vld [vmem:[#allocation3 + $0x8] sm:$0xff]
  %v1836 = vld [vmem:[#allocation3 + $0x10] sm:$0xff]
  %s1837 = sadd.s32 %s991, 3
  %s1838 = smul.u32 %s1837, 2
  %s1839 = scalar_lea.vmem [#allocation2], %s1838
  %v1840 = vld [vmem:[%s1839] sm:$0x3]
  %v1841 = vpack.c.bf16 %v1840, %v1840
  %s1842 = scalar_lea.vmem %s10, 144
  %v1843 = vld [vmem:[%s1842] sm:$0x77]
  %v1844 = vld [vmem:[%s1842 + $0x8] sm:$0x77]
  %v1845 = vld [vmem:[%s1842 + $0x10] sm:$0x77]
  %v1846 = vld [vmem:[%s1842 + $0x18] sm:$0x77]
  %v1847 = vld [vmem:[%s1842 + $0x20] sm:$0x77]
  %v1848 = vld [vmem:[%s1842 + $0x28] sm:$0x77]
  %v1855 = vunpack.c.l.b16 %v1843
  %v1856 = vunpack.c.h.b16 %v1843
  %v1857 = vunpack.c.l.b16 %v1844
  %v1858 = vunpack.c.h.b16 %v1844
  %v1859 = vunpack.c.l.b16 %v1845
  %v1860 = vunpack.c.h.b16 %v1845
  %v1861 = vunpack.c.l.b16 %v1846
  %v1862 = vunpack.c.h.b16 %v1846
  %v1863 = vunpack.c.l.b16 %v1847
  %v1864 = vunpack.c.h.b16 %v1847
  %v1865 = vunpack.c.l.b16 %v1848
  %v1866 = vunpack.c.h.b16 %v1848
  %v1867 = vpack.c.b16 %v1855, %v1855
  %v1868 = vpack.c.b16 %v1856, %v1856
  %v1869 = vpack.c.b16 %v1857, %v1857
  %v1870 = vpack.c.b16 %v1858, %v1858
  %v1871 = vpack.c.b16 %v1859, %v1859
  %v1872 = vpack.c.b16 %v1860, %v1860
  %v1873 = vpack.c.b16 %v1861, %v1861
  %v1874 = vpack.c.b16 %v1862, %v1862
  %v1875 = vpack.c.b16 %v1863, %v1863
  %v1876 = vpack.c.b16 %v1864, %v1864
  %v1877 = vpack.c.b16 %v1865, %v1865
  %v1878 = vpack.c.b16 %v1866, %v1866
  %v1880 = vsel %vm1032, %v1841, 0
  %v1883 = vsel %vm1036, %v1867, 0
  %v1886 = vsel %vm1036, %v1868, 0
  %v1889 = vsel %vm1036, %v1869, 0
  %v1892 = vsel %vm1036, %v1870, 0
  %v1895 = vsel %vm1036, %v1871, 0
  %v1898 = vsel %vm1036, %v1872, 0
  %v1901 = vsel %vm1036, %v1873, 0
  %v1904 = vsel %vm1036, %v1874, 0
  %v1907 = vsel %vm1036, %v1875, 0
  %v1910 = vsel %vm1036, %v1876, 0
  %v1913 = vsel %vm1036, %v1877, 0
  %v1916 = vsel %vm1036, %v1878, 0
  %1918 = vmatpush.bf16.msra.mxu0 0
  %1919 = vmatpush.bf16.msra.mxu0 0
  %1920 = vmatpush.bf16.msra.mxu0 0
  %1921 = vmatpush.bf16.msra.mxu0 0
  %1922 = vmatpush.bf16.msra.mxu0 0
  %1923 = vmatpush.bf16.msra.mxu0 0
  %1924 = vmatpush.bf16.msra.mxu0 0
  %1925 = vmatpush.bf16.msra.mxu0 %v1883
  %1926 = vmatmul.bf16.gmra.mxu0 %v1880
  %v1927 = vpop.f32.mrf.mxu0
  %v1928 = vadd.f32 0.0, %v1927
  %v1929 = vpop.f32.mrf.mxu0
  %1930 = vdwg.mxu0
  %1931 = vmatpush.bf16.msra.mxu0 0
  %1932 = vmatpush.bf16.msra.mxu0 0
  %1933 = vmatpush.bf16.msra.mxu0 0
  %1934 = vmatpush.bf16.msra.mxu0 0
  %1935 = vmatpush.bf16.msra.mxu0 0
  %1936 = vmatpush.bf16.msra.mxu0 0
  %1937 = vmatpush.bf16.msra.mxu0 0
  %1938 = vmatpush.bf16.msra.mxu0 %v1886
  %1939 = vmatmul.bf16.gmra.mxu0 %v1880
  %v1940 = vpop.f32.mrf.mxu0
  %v1941 = vadd.f32 0.0, %v1940
  %v1942 = vpop.f32.mrf.mxu0
  %1943 = vdwg.mxu0
  %1944 = vmatpush.bf16.msra.mxu0 0
  %1945 = vmatpush.bf16.msra.mxu0 0
  %1946 = vmatpush.bf16.msra.mxu0 0
  %1947 = vmatpush.bf16.msra.mxu0 0
  %1948 = vmatpush.bf16.msra.mxu0 0
  %1949 = vmatpush.bf16.msra.mxu0 0
  %1950 = vmatpush.bf16.msra.mxu0 0
  %1951 = vmatpush.bf16.msra.mxu0 %v1889
  %1952 = vmatmul.bf16.gmra.mxu0 %v1880
  %v1953 = vpop.f32.mrf.mxu0
  %v1954 = vadd.f32 0.0, %v1953
  %v1955 = vpop.f32.mrf.mxu0
  %1956 = vdwg.mxu0
  %1957 = vmatpush.bf16.msra.mxu0 0
  %1958 = vmatpush.bf16.msra.mxu0 0
  %1959 = vmatpush.bf16.msra.mxu0 0
  %1960 = vmatpush.bf16.msra.mxu0 0
  %1961 = vmatpush.bf16.msra.mxu0 0
  %1962 = vmatpush.bf16.msra.mxu0 0
  %1963 = vmatpush.bf16.msra.mxu0 0
  %1964 = vmatpush.bf16.msra.mxu0 %v1892
  %1965 = vmatmul.bf16.gmra.mxu0 %v1880
  %v1966 = vpop.f32.mrf.mxu0
  %v1967 = vadd.f32 0.0, %v1966
  %v1968 = vpop.f32.mrf.mxu0
  %1969 = vdwg.mxu0
  %1970 = vmatpush.bf16.msra.mxu0 0
  %1971 = vmatpush.bf16.msra.mxu0 0
  %1972 = vmatpush.bf16.msra.mxu0 0
  %1973 = vmatpush.bf16.msra.mxu0 0
  %1974 = vmatpush.bf16.msra.mxu0 0
  %1975 = vmatpush.bf16.msra.mxu0 0
  %1976 = vmatpush.bf16.msra.mxu0 0
  %1977 = vmatpush.bf16.msra.mxu0 %v1895
  %1978 = vmatmul.bf16.gmra.mxu0 %v1880
  %v1979 = vpop.f32.mrf.mxu0
  %v1980 = vadd.f32 0.0, %v1979
  %v1981 = vpop.f32.mrf.mxu0
  %1982 = vdwg.mxu0
  %1983 = vmatpush.bf16.msra.mxu0 0
  %1984 = vmatpush.bf16.msra.mxu0 0
  %1985 = vmatpush.bf16.msra.mxu0 0
  %1986 = vmatpush.bf16.msra.mxu0 0
  %1987 = vmatpush.bf16.msra.mxu0 0
  %1988 = vmatpush.bf16.msra.mxu0 0
  %1989 = vmatpush.bf16.msra.mxu0 0
  %1990 = vmatpush.bf16.msra.mxu0 %v1898
  %1991 = vmatmul.bf16.gmra.mxu0 %v1880
  %v1992 = vpop.f32.mrf.mxu0
  %v1993 = vadd.f32 0.0, %v1992
  %v1994 = vpop.f32.mrf.mxu0
  %1995 = vdwg.mxu0
  %1996 = vmatpush.bf16.msra.mxu0 0
  %1997 = vmatpush.bf16.msra.mxu0 0
  %1998 = vmatpush.bf16.msra.mxu0 0
  %1999 = vmatpush.bf16.msra.mxu0 0
  %2000 = vmatpush.bf16.msra.mxu0 0
  %2001 = vmatpush.bf16.msra.mxu0 0
  %2002 = vmatpush.bf16.msra.mxu0 0
  %2003 = vmatpush.bf16.msra.mxu0 %v1901
  %2004 = vmatmul.bf16.gmra.mxu0 %v1880
  %v2005 = vpop.f32.mrf.mxu0
  %v2006 = vadd.f32 0.0, %v2005
  %v2007 = vpop.f32.mrf.mxu0
  %2008 = vdwg.mxu0
  %2009 = vmatpush.bf16.msra.mxu0 0
  %2010 = vmatpush.bf16.msra.mxu0 0
  %2011 = vmatpush.bf16.msra.mxu0 0
  %2012 = vmatpush.bf16.msra.mxu0 0
  %2013 = vmatpush.bf16.msra.mxu0 0
  %2014 = vmatpush.bf16.msra.mxu0 0
  %2015 = vmatpush.bf16.msra.mxu0 0
  %2016 = vmatpush.bf16.msra.mxu0 %v1904
  %2017 = vmatmul.bf16.gmra.mxu0 %v1880
  %v2018 = vpop.f32.mrf.mxu0
  %v2019 = vadd.f32 0.0, %v2018
  %v2020 = vpop.f32.mrf.mxu0
  %2021 = vdwg.mxu0
  %2022 = vmatpush.bf16.msra.mxu0 0
  %2023 = vmatpush.bf16.msra.mxu0 0
  %2024 = vmatpush.bf16.msra.mxu0 0
  %2025 = vmatpush.bf16.msra.mxu0 0
  %2026 = vmatpush.bf16.msra.mxu0 0
  %2027 = vmatpush.bf16.msra.mxu0 0
  %2028 = vmatpush.bf16.msra.mxu0 0
  %2029 = vmatpush.bf16.msra.mxu0 %v1907
  %2030 = vmatmul.bf16.gmra.mxu0 %v1880
  %v2031 = vpop.f32.mrf.mxu0
  %v2032 = vadd.f32 0.0, %v2031
  %v2033 = vpop.f32.mrf.mxu0
  %2034 = vdwg.mxu0
  %2035 = vmatpush.bf16.msra.mxu0 0
  %2036 = vmatpush.bf16.msra.mxu0 0
  %2037 = vmatpush.bf16.msra.mxu0 0
  %2038 = vmatpush.bf16.msra.mxu0 0
  %2039 = vmatpush.bf16.msra.mxu0 0
  %2040 = vmatpush.bf16.msra.mxu0 0
  %2041 = vmatpush.bf16.msra.mxu0 0
  %2042 = vmatpush.bf16.msra.mxu0 %v1910
  %2043 = vmatmul.bf16.gmra.mxu0 %v1880
  %v2044 = vpop.f32.mrf.mxu0
  %v2045 = vadd.f32 0.0, %v2044
  %v2046 = vpop.f32.mrf.mxu0
  %2047 = vdwg.mxu0
  %2048 = vmatpush.bf16.msra.mxu0 0
  %2049 = vmatpush.bf16.msra.mxu0 0
  %2050 = vmatpush.bf16.msra.mxu0 0
  %2051 = vmatpush.bf16.msra.mxu0 0
  %2052 = vmatpush.bf16.msra.mxu0 0
  %2053 = vmatpush.bf16.msra.mxu0 0
  %2054 = vmatpush.bf16.msra.mxu0 0
  %2055 = vmatpush.bf16.msra.mxu0 %v1913
  %2056 = vmatmul.bf16.gmra.mxu0 %v1880
  %v2057 = vpop.f32.mrf.mxu0
  %v2058 = vadd.f32 0.0, %v2057
  %v2059 = vpop.f32.mrf.mxu0
  %2060 = vdwg.mxu0
  %2061 = vmatpush.bf16.msra.mxu0 0
  %2062 = vmatpush.bf16.msra.mxu0 0
  %2063 = vmatpush.bf16.msra.mxu0 0
  %2064 = vmatpush.bf16.msra.mxu0 0
  %2065 = vmatpush.bf16.msra.mxu0 0
  %2066 = vmatpush.bf16.msra.mxu0 0
  %2067 = vmatpush.bf16.msra.mxu0 0
  %2068 = vmatpush.bf16.msra.mxu0 %v1916
  %2069 = vmatmul.bf16.gmra.mxu0 %v1880
  %v2070 = vpop.f32.mrf.mxu0
  %v2071 = vadd.f32 0.0, %v2070
  %v2072 = vpop.f32.mrf.mxu0
  %2073 = vdwg.mxu0
  %v2086 = vrot.slane %v1941, 6
  %v2087 = vrot.slane %v1954, 4
  %v2088 = vrot.slane %v1967, 2
  %v2089 = vrot.slane %v1993, 6
  %v2090 = vrot.slane %v2006, 4
  %v2091 = vrot.slane %v2019, 2
  %v2092 = vrot.slane %v2045, 6
  %v2093 = vrot.slane %v2058, 4
  %v2094 = vrot.slane %v2071, 2
  %v2095 = vsel %vm1250, %v1928, %v2086
  %v2096 = vsel %vm1252, %v2087, %v2088
  %v2097 = vsel %vm1254, %v2095, %v2096
  %v2098 = vsel %vm1250, %v1980, %v2089
  %v2099 = vsel %vm1252, %v2090, %v2091
  %v2100 = vsel %vm1254, %v2098, %v2099
  %v2101 = vsel %vm1250, %v2032, %v2092
  %v2102 = vsel %vm1252, %v2093, %v2094
  %v2103 = vsel %vm1254, %v2101, %v2102
  %v2107 = vadd.f32 %v1834, %v2097
  %v2108 = vadd.f32 %v1835, %v2100
  %v2109 = vadd.f32 %v1836, %v2103
  %2110 = vst [vmem:[#allocation3] sm:$0xff] %v2107
  %2111 = vst [vmem:[#allocation3 + $0x8] sm:$0xff] %v2108
  %2112 = vst.msk [vmem:[#allocation3 + $0x10] sm:$0xff] %vm1274, %v2109
  %v2113 = vld [vmem:[#allocation3] sm:$0xff]
  %v2114 = vld [vmem:[#allocation3 + $0x8] sm:$0xff]
  %v2115 = vld [vmem:[#allocation3 + $0x10] sm:$0xff]
  %s2116 = sadd.s32 %s991, 4
  %s2117 = smul.u32 %s2116, 2
  %s2118 = scalar_lea.vmem [#allocation2], %s2117
  %v2119 = vld [vmem:[%s2118] sm:$0x3]
  %v2120 = vpack.c.bf16 %v2119, %v2119
  %s2121 = scalar_lea.vmem %s10, 192
  %v2122 = vld [vmem:[%s2121] sm:$0x77]
  %v2123 = vld [vmem:[%s2121 + $0x8] sm:$0x77]
  %v2124 = vld [vmem:[%s2121 + $0x10] sm:$0x77]
  %v2125 = vld [vmem:[%s2121 + $0x18] sm:$0x77]
  %v2126 = vld [vmem:[%s2121 + $0x20] sm:$0x77]
  %v2127 = vld [vmem:[%s2121 + $0x28] sm:$0x77]
  %v2134 = vunpack.c.l.b16 %v2122
  %v2135 = vunpack.c.h.b16 %v2122
  %v2136 = vunpack.c.l.b16 %v2123
  %v2137 = vunpack.c.h.b16 %v2123
  %v2138 = vunpack.c.l.b16 %v2124
  %v2139 = vunpack.c.h.b16 %v2124
  %v2140 = vunpack.c.l.b16 %v2125
  %v2141 = vunpack.c.h.b16 %v2125
  %v2142 = vunpack.c.l.b16 %v2126
  %v2143 = vunpack.c.h.b16 %v2126
  %v2144 = vunpack.c.l.b16 %v2127
  %v2145 = vunpack.c.h.b16 %v2127
  %v2146 = vpack.c.b16 %v2134, %v2134
  %v2147 = vpack.c.b16 %v2135, %v2135
  %v2148 = vpack.c.b16 %v2136, %v2136
  %v2149 = vpack.c.b16 %v2137, %v2137
  %v2150 = vpack.c.b16 %v2138, %v2138
  %v2151 = vpack.c.b16 %v2139, %v2139
  %v2152 = vpack.c.b16 %v2140, %v2140
  %v2153 = vpack.c.b16 %v2141, %v2141
  %v2154 = vpack.c.b16 %v2142, %v2142
  %v2155 = vpack.c.b16 %v2143, %v2143
  %v2156 = vpack.c.b16 %v2144, %v2144
  %v2157 = vpack.c.b16 %v2145, %v2145
  %v2159 = vsel %vm1032, %v2120, 0
  %v2162 = vsel %vm1036, %v2146, 0
  %v2165 = vsel %vm1036, %v2147, 0
  %v2168 = vsel %vm1036, %v2148, 0
  %v2171 = vsel %vm1036, %v2149, 0
  %v2174 = vsel %vm1036, %v2150, 0
  %v2177 = vsel %vm1036, %v2151, 0
  %v2180 = vsel %vm1036, %v2152, 0
  %v2183 = vsel %vm1036, %v2153, 0
  %v2186 = vsel %vm1036, %v2154, 0
  %v2189 = vsel %vm1036, %v2155, 0
  %v2192 = vsel %vm1036, %v2156, 0
  %v2195 = vsel %vm1036, %v2157, 0
  %2197 = vmatpush.bf16.msra.mxu0 0
  %2198 = vmatpush.bf16.msra.mxu0 0
  %2199 = vmatpush.bf16.msra.mxu0 0
  %2200 = vmatpush.bf16.msra.mxu0 0
  %2201 = vmatpush.bf16.msra.mxu0 0
  %2202 = vmatpush.bf16.msra.mxu0 0
  %2203 = vmatpush.bf16.msra.mxu0 0
  %2204 = vmatpush.bf16.msra.mxu0 %v2162
  %2205 = vmatmul.bf16.gmra.mxu0 %v2159
  %v2206 = vpop.f32.mrf.mxu0
  %v2207 = vadd.f32 0.0, %v2206
  %v2208 = vpop.f32.mrf.mxu0
  %2209 = vdwg.mxu0
  %2210 = vmatpush.bf16.msra.mxu0 0
  %2211 = vmatpush.bf16.msra.mxu0 0
  %2212 = vmatpush.bf16.msra.mxu0 0
  %2213 = vmatpush.bf16.msra.mxu0 0
  %2214 = vmatpush.bf16.msra.mxu0 0
  %2215 = vmatpush.bf16.msra.mxu0 0
  %2216 = vmatpush.bf16.msra.mxu0 0
  %2217 = vmatpush.bf16.msra.mxu0 %v2165
  %2218 = vmatmul.bf16.gmra.mxu0 %v2159
  %v2219 = vpop.f32.mrf.mxu0
  %v2220 = vadd.f32 0.0, %v2219
  %v2221 = vpop.f32.mrf.mxu0
  %2222 = vdwg.mxu0
  %2223 = vmatpush.bf16.msra.mxu0 0
  %2224 = vmatpush.bf16.msra.mxu0 0
  %2225 = vmatpush.bf16.msra.mxu0 0
  %2226 = vmatpush.bf16.msra.mxu0 0
  %2227 = vmatpush.bf16.msra.mxu0 0
  %2228 = vmatpush.bf16.msra.mxu0 0
  %2229 = vmatpush.bf16.msra.mxu0 0
  %2230 = vmatpush.bf16.msra.mxu0 %v2168
  %2231 = vmatmul.bf16.gmra.mxu0 %v2159
  %v2232 = vpop.f32.mrf.mxu0
  %v2233 = vadd.f32 0.0, %v2232
  %v2234 = vpop.f32.mrf.mxu0
  %2235 = vdwg.mxu0
  %2236 = vmatpush.bf16.msra.mxu0 0
  %2237 = vmatpush.bf16.msra.mxu0 0
  %2238 = vmatpush.bf16.msra.mxu0 0
  %2239 = vmatpush.bf16.msra.mxu0 0
  %2240 = vmatpush.bf16.msra.mxu0 0
  %2241 = vmatpush.bf16.msra.mxu0 0
  %2242 = vmatpush.bf16.msra.mxu0 0
  %2243 = vmatpush.bf16.msra.mxu0 %v2171
  %2244 = vmatmul.bf16.gmra.mxu0 %v2159
  %v2245 = vpop.f32.mrf.mxu0
  %v2246 = vadd.f32 0.0, %v2245
  %v2247 = vpop.f32.mrf.mxu0
  %2248 = vdwg.mxu0
  %2249 = vmatpush.bf16.msra.mxu0 0
  %2250 = vmatpush.bf16.msra.mxu0 0
  %2251 = vmatpush.bf16.msra.mxu0 0
  %2252 = vmatpush.bf16.msra.mxu0 0
  %2253 = vmatpush.bf16.msra.mxu0 0
  %2254 = vmatpush.bf16.msra.mxu0 0
  %2255 = vmatpush.bf16.msra.mxu0 0
  %2256 = vmatpush.bf16.msra.mxu0 %v2174
  %2257 = vmatmul.bf16.gmra.mxu0 %v2159
  %v2258 = vpop.f32.mrf.mxu0
  %v2259 = vadd.f32 0.0, %v2258
  %v2260 = vpop.f32.mrf.mxu0
  %2261 = vdwg.mxu0
  %2262 = vmatpush.bf16.msra.mxu0 0
  %2263 = vmatpush.bf16.msra.mxu0 0
  %2264 = vmatpush.bf16.msra.mxu0 0
  %2265 = vmatpush.bf16.msra.mxu0 0
  %2266 = vmatpush.bf16.msra.mxu0 0
  %2267 = vmatpush.bf16.msra.mxu0 0
  %2268 = vmatpush.bf16.msra.mxu0 0
  %2269 = vmatpush.bf16.msra.mxu0 %v2177
  %2270 = vmatmul.bf16.gmra.mxu0 %v2159
  %v2271 = vpop.f32.mrf.mxu0
  %v2272 = vadd.f32 0.0, %v2271
  %v2273 = vpop.f32.mrf.mxu0
  %2274 = vdwg.mxu0
  %2275 = vmatpush.bf16.msra.mxu0 0
  %2276 = vmatpush.bf16.msra.mxu0 0
  %2277 = vmatpush.bf16.msra.mxu0 0
  %2278 = vmatpush.bf16.msra.mxu0 0
  %2279 = vmatpush.bf16.msra.mxu0 0
  %2280 = vmatpush.bf16.msra.mxu0 0
  %2281 = vmatpush.bf16.msra.mxu0 0
  %2282 = vmatpush.bf16.msra.mxu0 %v2180
  %2283 = vmatmul.bf16.gmra.mxu0 %v2159
  %v2284 = vpop.f32.mrf.mxu0
  %v2285 = vadd.f32 0.0, %v2284
  %v2286 = vpop.f32.mrf.mxu0
  %2287 = vdwg.mxu0
  %2288 = vmatpush.bf16.msra.mxu0 0
  %2289 = vmatpush.bf16.msra.mxu0 0
  %2290 = vmatpush.bf16.msra.mxu0 0
  %2291 = vmatpush.bf16.msra.mxu0 0
  %2292 = vmatpush.bf16.msra.mxu0 0
  %2293 = vmatpush.bf16.msra.mxu0 0
  %2294 = vmatpush.bf16.msra.mxu0 0
  %2295 = vmatpush.bf16.msra.mxu0 %v2183
  %2296 = vmatmul.bf16.gmra.mxu0 %v2159
  %v2297 = vpop.f32.mrf.mxu0
  %v2298 = vadd.f32 0.0, %v2297
  %v2299 = vpop.f32.mrf.mxu0
  %2300 = vdwg.mxu0
  %2301 = vmatpush.bf16.msra.mxu0 0
  %2302 = vmatpush.bf16.msra.mxu0 0
  %2303 = vmatpush.bf16.msra.mxu0 0
  %2304 = vmatpush.bf16.msra.mxu0 0
  %2305 = vmatpush.bf16.msra.mxu0 0
  %2306 = vmatpush.bf16.msra.mxu0 0
  %2307 = vmatpush.bf16.msra.mxu0 0
  %2308 = vmatpush.bf16.msra.mxu0 %v2186
  %2309 = vmatmul.bf16.gmra.mxu0 %v2159
  %v2310 = vpop.f32.mrf.mxu0
  %v2311 = vadd.f32 0.0, %v2310
  %v2312 = vpop.f32.mrf.mxu0
  %2313 = vdwg.mxu0
  %2314 = vmatpush.bf16.msra.mxu0 0
  %2315 = vmatpush.bf16.msra.mxu0 0
  %2316 = vmatpush.bf16.msra.mxu0 0
  %2317 = vmatpush.bf16.msra.mxu0 0
  %2318 = vmatpush.bf16.msra.mxu0 0
  %2319 = vmatpush.bf16.msra.mxu0 0
  %2320 = vmatpush.bf16.msra.mxu0 0
  %2321 = vmatpush.bf16.msra.mxu0 %v2189
  %2322 = vmatmul.bf16.gmra.mxu0 %v2159
  %v2323 = vpop.f32.mrf.mxu0
  %v2324 = vadd.f32 0.0, %v2323
  %v2325 = vpop.f32.mrf.mxu0
  %2326 = vdwg.mxu0
  %2327 = vmatpush.bf16.msra.mxu0 0
  %2328 = vmatpush.bf16.msra.mxu0 0
  %2329 = vmatpush.bf16.msra.mxu0 0
  %2330 = vmatpush.bf16.msra.mxu0 0
  %2331 = vmatpush.bf16.msra.mxu0 0
  %2332 = vmatpush.bf16.msra.mxu0 0
  %2333 = vmatpush.bf16.msra.mxu0 0
  %2334 = vmatpush.bf16.msra.mxu0 %v2192
  %2335 = vmatmul.bf16.gmra.mxu0 %v2159
  %v2336 = vpop.f32.mrf.mxu0
  %v2337 = vadd.f32 0.0, %v2336
  %v2338 = vpop.f32.mrf.mxu0
  %2339 = vdwg.mxu0
  %2340 = vmatpush.bf16.msra.mxu0 0
  %2341 = vmatpush.bf16.msra.mxu0 0
  %2342 = vmatpush.bf16.msra.mxu0 0
  %2343 = vmatpush.bf16.msra.mxu0 0
  %2344 = vmatpush.bf16.msra.mxu0 0
  %2345 = vmatpush.bf16.msra.mxu0 0
  %2346 = vmatpush.bf16.msra.mxu0 0
  %2347 = vmatpush.bf16.msra.mxu0 %v2195
  %2348 = vmatmul.bf16.gmra.mxu0 %v2159
  %v2349 = vpop.f32.mrf.mxu0
  %v2350 = vadd.f32 0.0, %v2349
  %v2351 = vpop.f32.mrf.mxu0
  %2352 = vdwg.mxu0
  %v2365 = vrot.slane %v2220, 6
  %v2366 = vrot.slane %v2233, 4
  %v2367 = vrot.slane %v2246, 2
  %v2368 = vrot.slane %v2272, 6
  %v2369 = vrot.slane %v2285, 4
  %v2370 = vrot.slane %v2298, 2
  %v2371 = vrot.slane %v2324, 6
  %v2372 = vrot.slane %v2337, 4
  %v2373 = vrot.slane %v2350, 2
  %v2374 = vsel %vm1250, %v2207, %v2365
  %v2375 = vsel %vm1252, %v2366, %v2367
  %v2376 = vsel %vm1254, %v2374, %v2375
  %v2377 = vsel %vm1250, %v2259, %v2368
  %v2378 = vsel %vm1252, %v2369, %v2370
  %v2379 = vsel %vm1254, %v2377, %v2378
  %v2380 = vsel %vm1250, %v2311, %v2371
  %v2381 = vsel %vm1252, %v2372, %v2373
  %v2382 = vsel %vm1254, %v2380, %v2381
  %v2386 = vadd.f32 %v2113, %v2376
  %v2387 = vadd.f32 %v2114, %v2379
  %v2388 = vadd.f32 %v2115, %v2382
  %2389 = vst [vmem:[#allocation3] sm:$0xff] %v2386
  %2390 = vst [vmem:[#allocation3 + $0x8] sm:$0xff] %v2387
  %2391 = vst.msk [vmem:[#allocation3 + $0x10] sm:$0xff] %vm1274, %v2388
  %v2392 = vld [vmem:[#allocation3] sm:$0xff]
  %v2393 = vld [vmem:[#allocation3 + $0x8] sm:$0xff]
  %v2394 = vld [vmem:[#allocation3 + $0x10] sm:$0xff]
  %s2395 = sadd.s32 %s991, 5
  %s2396 = smul.u32 %s2395, 2
  %s2397 = scalar_lea.vmem [#allocation2], %s2396
  %v2398 = vld [vmem:[%s2397] sm:$0x3]
  %v2399 = vpack.c.bf16 %v2398, %v2398
  %s2400 = scalar_lea.vmem %s10, 240
  %v2401 = vld [vmem:[%s2400] sm:$0x77]
  %v2402 = vld [vmem:[%s2400 + $0x8] sm:$0x77]
  %v2403 = vld [vmem:[%s2400 + $0x10] sm:$0x77]
  %v2404 = vld [vmem:[%s2400 + $0x18] sm:$0x77]
  %v2405 = vld [vmem:[%s2400 + $0x20] sm:$0x77]
  %v2406 = vld [vmem:[%s2400 + $0x28] sm:$0x77]
  %v2413 = vunpack.c.l.b16 %v2401
  %v2414 = vunpack.c.h.b16 %v2401
  %v2415 = vunpack.c.l.b16 %v2402
  %v2416 = vunpack.c.h.b16 %v2402
  %v2417 = vunpack.c.l.b16 %v2403
  %v2418 = vunpack.c.h.b16 %v2403
  %v2419 = vunpack.c.l.b16 %v2404
  %v2420 = vunpack.c.h.b16 %v2404
  %v2421 = vunpack.c.l.b16 %v2405
  %v2422 = vunpack.c.h.b16 %v2405
  %v2423 = vunpack.c.l.b16 %v2406
  %v2424 = vunpack.c.h.b16 %v2406
  %v2425 = vpack.c.b16 %v2413, %v2413
  %v2426 = vpack.c.b16 %v2414, %v2414
  %v2427 = vpack.c.b16 %v2415, %v2415
  %v2428 = vpack.c.b16 %v2416, %v2416
  %v2429 = vpack.c.b16 %v2417, %v2417
  %v2430 = vpack.c.b16 %v2418, %v2418
  %v2431 = vpack.c.b16 %v2419, %v2419
  %v2432 = vpack.c.b16 %v2420, %v2420
  %v2433 = vpack.c.b16 %v2421, %v2421
  %v2434 = vpack.c.b16 %v2422, %v2422
  %v2435 = vpack.c.b16 %v2423, %v2423
  %v2436 = vpack.c.b16 %v2424, %v2424
  %v2438 = vsel %vm1032, %v2399, 0
  %v2441 = vsel %vm1036, %v2425, 0
  %v2444 = vsel %vm1036, %v2426, 0
  %v2447 = vsel %vm1036, %v2427, 0
  %v2450 = vsel %vm1036, %v2428, 0
  %v2453 = vsel %vm1036, %v2429, 0
  %v2456 = vsel %vm1036, %v2430, 0
  %v2459 = vsel %vm1036, %v2431, 0
  %v2462 = vsel %vm1036, %v2432, 0
  %v2465 = vsel %vm1036, %v2433, 0
  %v2468 = vsel %vm1036, %v2434, 0
  %v2471 = vsel %vm1036, %v2435, 0
  %v2474 = vsel %vm1036, %v2436, 0
  %2476 = vmatpush.bf16.msra.mxu0 0
  %2477 = vmatpush.bf16.msra.mxu0 0
  %2478 = vmatpush.bf16.msra.mxu0 0
  %2479 = vmatpush.bf16.msra.mxu0 0
  %2480 = vmatpush.bf16.msra.mxu0 0
  %2481 = vmatpush.bf16.msra.mxu0 0
  %2482 = vmatpush.bf16.msra.mxu0 0
  %2483 = vmatpush.bf16.msra.mxu0 %v2441
  %2484 = vmatmul.bf16.gmra.mxu0 %v2438
  %v2485 = vpop.f32.mrf.mxu0
  %v2486 = vadd.f32 0.0, %v2485
  %v2487 = vpop.f32.mrf.mxu0
  %2488 = vdwg.mxu0
  %2489 = vmatpush.bf16.msra.mxu0 0
  %2490 = vmatpush.bf16.msra.mxu0 0
  %2491 = vmatpush.bf16.msra.mxu0 0
  %2492 = vmatpush.bf16.msra.mxu0 0
  %2493 = vmatpush.bf16.msra.mxu0 0
  %2494 = vmatpush.bf16.msra.mxu0 0
  %2495 = vmatpush.bf16.msra.mxu0 0
  %2496 = vmatpush.bf16.msra.mxu0 %v2444
  %2497 = vmatmul.bf16.gmra.mxu0 %v2438
  %v2498 = vpop.f32.mrf.mxu0
  %v2499 = vadd.f32 0.0, %v2498
  %v2500 = vpop.f32.mrf.mxu0
  %2501 = vdwg.mxu0
  %2502 = vmatpush.bf16.msra.mxu0 0
  %2503 = vmatpush.bf16.msra.mxu0 0
  %2504 = vmatpush.bf16.msra.mxu0 0
  %2505 = vmatpush.bf16.msra.mxu0 0
  %2506 = vmatpush.bf16.msra.mxu0 0
  %2507 = vmatpush.bf16.msra.mxu0 0
  %2508 = vmatpush.bf16.msra.mxu0 0
  %2509 = vmatpush.bf16.msra.mxu0 %v2447
  %2510 = vmatmul.bf16.gmra.mxu0 %v2438
  %v2511 = vpop.f32.mrf.mxu0
  %v2512 = vadd.f32 0.0, %v2511
  %v2513 = vpop.f32.mrf.mxu0
  %2514 = vdwg.mxu0
  %2515 = vmatpush.bf16.msra.mxu0 0
  %2516 = vmatpush.bf16.msra.mxu0 0
  %2517 = vmatpush.bf16.msra.mxu0 0
  %2518 = vmatpush.bf16.msra.mxu0 0
  %2519 = vmatpush.bf16.msra.mxu0 0
  %2520 = vmatpush.bf16.msra.mxu0 0
  %2521 = vmatpush.bf16.msra.mxu0 0
  %2522 = vmatpush.bf16.msra.mxu0 %v2450
  %2523 = vmatmul.bf16.gmra.mxu0 %v2438
  %v2524 = vpop.f32.mrf.mxu0
  %v2525 = vadd.f32 0.0, %v2524
  %v2526 = vpop.f32.mrf.mxu0
  %2527 = vdwg.mxu0
  %2528 = vmatpush.bf16.msra.mxu0 0
  %2529 = vmatpush.bf16.msra.mxu0 0
  %2530 = vmatpush.bf16.msra.mxu0 0
  %2531 = vmatpush.bf16.msra.mxu0 0
  %2532 = vmatpush.bf16.msra.mxu0 0
  %2533 = vmatpush.bf16.msra.mxu0 0
  %2534 = vmatpush.bf16.msra.mxu0 0
  %2535 = vmatpush.bf16.msra.mxu0 %v2453
  %2536 = vmatmul.bf16.gmra.mxu0 %v2438
  %v2537 = vpop.f32.mrf.mxu0
  %v2538 = vadd.f32 0.0, %v2537
  %v2539 = vpop.f32.mrf.mxu0
  %2540 = vdwg.mxu0
  %2541 = vmatpush.bf16.msra.mxu0 0
  %2542 = vmatpush.bf16.msra.mxu0 0
  %2543 = vmatpush.bf16.msra.mxu0 0
  %2544 = vmatpush.bf16.msra.mxu0 0
  %2545 = vmatpush.bf16.msra.mxu0 0
  %2546 = vmatpush.bf16.msra.mxu0 0
  %2547 = vmatpush.bf16.msra.mxu0 0
  %2548 = vmatpush.bf16.msra.mxu0 %v2456
  %2549 = vmatmul.bf16.gmra.mxu0 %v2438
  %v2550 = vpop.f32.mrf.mxu0
  %v2551 = vadd.f32 0.0, %v2550
  %v2552 = vpop.f32.mrf.mxu0
  %2553 = vdwg.mxu0
  %2554 = vmatpush.bf16.msra.mxu0 0
  %2555 = vmatpush.bf16.msra.mxu0 0
  %2556 = vmatpush.bf16.msra.mxu0 0
  %2557 = vmatpush.bf16.msra.mxu0 0
  %2558 = vmatpush.bf16.msra.mxu0 0
  %2559 = vmatpush.bf16.msra.mxu0 0
  %2560 = vmatpush.bf16.msra.mxu0 0
  %2561 = vmatpush.bf16.msra.mxu0 %v2459
  %2562 = vmatmul.bf16.gmra.mxu0 %v2438
  %v2563 = vpop.f32.mrf.mxu0
  %v2564 = vadd.f32 0.0, %v2563
  %v2565 = vpop.f32.mrf.mxu0
  %2566 = vdwg.mxu0
  %2567 = vmatpush.bf16.msra.mxu0 0
  %2568 = vmatpush.bf16.msra.mxu0 0
  %2569 = vmatpush.bf16.msra.mxu0 0
  %2570 = vmatpush.bf16.msra.mxu0 0
  %2571 = vmatpush.bf16.msra.mxu0 0
  %2572 = vmatpush.bf16.msra.mxu0 0
  %2573 = vmatpush.bf16.msra.mxu0 0
  %2574 = vmatpush.bf16.msra.mxu0 %v2462
  %2575 = vmatmul.bf16.gmra.mxu0 %v2438
  %v2576 = vpop.f32.mrf.mxu0
  %v2577 = vadd.f32 0.0, %v2576
  %v2578 = vpop.f32.mrf.mxu0
  %2579 = vdwg.mxu0
  %2580 = vmatpush.bf16.msra.mxu0 0
  %2581 = vmatpush.bf16.msra.mxu0 0
  %2582 = vmatpush.bf16.msra.mxu0 0
  %2583 = vmatpush.bf16.msra.mxu0 0
  %2584 = vmatpush.bf16.msra.mxu0 0
  %2585 = vmatpush.bf16.msra.mxu0 0
  %2586 = vmatpush.bf16.msra.mxu0 0
  %2587 = vmatpush.bf16.msra.mxu0 %v2465
  %2588 = vmatmul.bf16.gmra.mxu0 %v2438
  %v2589 = vpop.f32.mrf.mxu0
  %v2590 = vadd.f32 0.0, %v2589
  %v2591 = vpop.f32.mrf.mxu0
  %2592 = vdwg.mxu0
  %2593 = vmatpush.bf16.msra.mxu0 0
  %2594 = vmatpush.bf16.msra.mxu0 0
  %2595 = vmatpush.bf16.msra.mxu0 0
  %2596 = vmatpush.bf16.msra.mxu0 0
  %2597 = vmatpush.bf16.msra.mxu0 0
  %2598 = vmatpush.bf16.msra.mxu0 0
  %2599 = vmatpush.bf16.msra.mxu0 0
  %2600 = vmatpush.bf16.msra.mxu0 %v2468
  %2601 = vmatmul.bf16.gmra.mxu0 %v2438
  %v2602 = vpop.f32.mrf.mxu0
  %v2603 = vadd.f32 0.0, %v2602
  %v2604 = vpop.f32.mrf.mxu0
  %2605 = vdwg.mxu0
  %2606 = vmatpush.bf16.msra.mxu0 0
  %2607 = vmatpush.bf16.msra.mxu0 0
  %2608 = vmatpush.bf16.msra.mxu0 0
  %2609 = vmatpush.bf16.msra.mxu0 0
  %2610 = vmatpush.bf16.msra.mxu0 0
  %2611 = vmatpush.bf16.msra.mxu0 0
  %2612 = vmatpush.bf16.msra.mxu0 0
  %2613 = vmatpush.bf16.msra.mxu0 %v2471
  %2614 = vmatmul.bf16.gmra.mxu0 %v2438
  %v2615 = vpop.f32.mrf.mxu0
  %v2616 = vadd.f32 0.0, %v2615
  %v2617 = vpop.f32.mrf.mxu0
  %2618 = vdwg.mxu0
  %2619 = vmatpush.bf16.msra.mxu0 0
  %2620 = vmatpush.bf16.msra.mxu0 0
  %2621 = vmatpush.bf16.msra.mxu0 0
  %2622 = vmatpush.bf16.msra.mxu0 0
  %2623 = vmatpush.bf16.msra.mxu0 0
  %2624 = vmatpush.bf16.msra.mxu0 0
  %2625 = vmatpush.bf16.msra.mxu0 0
  %2626 = vmatpush.bf16.msra.mxu0 %v2474
  %2627 = vmatmul.bf16.gmra.mxu0 %v2438
  %v2628 = vpop.f32.mrf.mxu0
  %v2629 = vadd.f32 0.0, %v2628
  %v2630 = vpop.f32.mrf.mxu0
  %2631 = vdwg.mxu0
  %v2644 = vrot.slane %v2499, 6
  %v2645 = vrot.slane %v2512, 4
  %v2646 = vrot.slane %v2525, 2
  %v2647 = vrot.slane %v2551, 6
  %v2648 = vrot.slane %v2564, 4
  %v2649 = vrot.slane %v2577, 2
  %v2650 = vrot.slane %v2603, 6
  %v2651 = vrot.slane %v2616, 4
  %v2652 = vrot.slane %v2629, 2
  %v2653 = vsel %vm1250, %v2486, %v2644
  %v2654 = vsel %vm1252, %v2645, %v2646
  %v2655 = vsel %vm1254, %v2653, %v2654
  %v2656 = vsel %vm1250, %v2538, %v2647
  %v2657 = vsel %vm1252, %v2648, %v2649
  %v2658 = vsel %vm1254, %v2656, %v2657
  %v2659 = vsel %vm1250, %v2590, %v2650
  %v2660 = vsel %vm1252, %v2651, %v2652
  %v2661 = vsel %vm1254, %v2659, %v2660
  %v2665 = vadd.f32 %v2392, %v2655
  %v2666 = vadd.f32 %v2393, %v2658
  %v2667 = vadd.f32 %v2394, %v2661
  %2668 = vst [vmem:[#allocation3] sm:$0xff] %v2665
  %2669 = vst [vmem:[#allocation3 + $0x8] sm:$0xff] %v2666
  %2670 = vst.msk [vmem:[#allocation3 + $0x10] sm:$0xff] %vm1274, %v2667
  %v2671 = vld [vmem:[#allocation3] sm:$0xff]
  %v2672 = vld [vmem:[#allocation3 + $0x8] sm:$0xff]
  %v2673 = vld [vmem:[#allocation3 + $0x10] sm:$0xff]
  %s2674 = sadd.s32 %s991, 6
  %s2675 = smul.u32 %s2674, 2
  %s2676 = scalar_lea.vmem [#allocation2], %s2675
  %v2677 = vld [vmem:[%s2676] sm:$0x3]
  %v2678 = vpack.c.bf16 %v2677, %v2677
  %s2679 = scalar_lea.vmem %s10, 288
  %v2680 = vld [vmem:[%s2679] sm:$0x77]
  %v2681 = vld [vmem:[%s2679 + $0x8] sm:$0x77]
  %v2682 = vld [vmem:[%s2679 + $0x10] sm:$0x77]
  %v2683 = vld [vmem:[%s2679 + $0x18] sm:$0x77]
  %v2684 = vld [vmem:[%s2679 + $0x20] sm:$0x77]
  %v2685 = vld [vmem:[%s2679 + $0x28] sm:$0x77]
  %v2692 = vunpack.c.l.b16 %v2680
  %v2693 = vunpack.c.h.b16 %v2680
  %v2694 = vunpack.c.l.b16 %v2681
  %v2695 = vunpack.c.h.b16 %v2681
  %v2696 = vunpack.c.l.b16 %v2682
  %v2697 = vunpack.c.h.b16 %v2682
  %v2698 = vunpack.c.l.b16 %v2683
  %v2699 = vunpack.c.h.b16 %v2683
  %v2700 = vunpack.c.l.b16 %v2684
  %v2701 = vunpack.c.h.b16 %v2684
  %v2702 = vunpack.c.l.b16 %v2685
  %v2703 = vunpack.c.h.b16 %v2685
  %v2704 = vpack.c.b16 %v2692, %v2692
  %v2705 = vpack.c.b16 %v2693, %v2693
  %v2706 = vpack.c.b16 %v2694, %v2694
  %v2707 = vpack.c.b16 %v2695, %v2695
  %v2708 = vpack.c.b16 %v2696, %v2696
  %v2709 = vpack.c.b16 %v2697, %v2697
  %v2710 = vpack.c.b16 %v2698, %v2698
  %v2711 = vpack.c.b16 %v2699, %v2699
  %v2712 = vpack.c.b16 %v2700, %v2700
  %v2713 = vpack.c.b16 %v2701, %v2701
  %v2714 = vpack.c.b16 %v2702, %v2702
  %v2715 = vpack.c.b16 %v2703, %v2703
  %v2717 = vsel %vm1032, %v2678, 0
  %v2720 = vsel %vm1036, %v2704, 0
  %v2723 = vsel %vm1036, %v2705, 0
  %v2726 = vsel %vm1036, %v2706, 0
  %v2729 = vsel %vm1036, %v2707, 0
  %v2732 = vsel %vm1036, %v2708, 0
  %v2735 = vsel %vm1036, %v2709, 0
  %v2738 = vsel %vm1036, %v2710, 0
  %v2741 = vsel %vm1036, %v2711, 0
  %v2744 = vsel %vm1036, %v2712, 0
  %v2747 = vsel %vm1036, %v2713, 0
  %v2750 = vsel %vm1036, %v2714, 0
  %v2753 = vsel %vm1036, %v2715, 0
  %2755 = vmatpush.bf16.msra.mxu0 0
  %2756 = vmatpush.bf16.msra.mxu0 0
  %2757 = vmatpush.bf16.msra.mxu0 0
  %2758 = vmatpush.bf16.msra.mxu0 0
  %2759 = vmatpush.bf16.msra.mxu0 0
  %2760 = vmatpush.bf16.msra.mxu0 0
  %2761 = vmatpush.bf16.msra.mxu0 0
  %2762 = vmatpush.bf16.msra.mxu0 %v2720
  %2763 = vmatmul.bf16.gmra.mxu0 %v2717
  %v2764 = vpop.f32.mrf.mxu0
  %v2765 = vadd.f32 0.0, %v2764
  %v2766 = vpop.f32.mrf.mxu0
  %2767 = vdwg.mxu0
  %2768 = vmatpush.bf16.msra.mxu0 0
  %2769 = vmatpush.bf16.msra.mxu0 0
  %2770 = vmatpush.bf16.msra.mxu0 0
  %2771 = vmatpush.bf16.msra.mxu0 0
  %2772 = vmatpush.bf16.msra.mxu0 0
  %2773 = vmatpush.bf16.msra.mxu0 0
  %2774 = vmatpush.bf16.msra.mxu0 0
  %2775 = vmatpush.bf16.msra.mxu0 %v2723
  %2776 = vmatmul.bf16.gmra.mxu0 %v2717
  %v2777 = vpop.f32.mrf.mxu0
  %v2778 = vadd.f32 0.0, %v2777
  %v2779 = vpop.f32.mrf.mxu0
  %2780 = vdwg.mxu0
  %2781 = vmatpush.bf16.msra.mxu0 0
  %2782 = vmatpush.bf16.msra.mxu0 0
  %2783 = vmatpush.bf16.msra.mxu0 0
  %2784 = vmatpush.bf16.msra.mxu0 0
  %2785 = vmatpush.bf16.msra.mxu0 0
  %2786 = vmatpush.bf16.msra.mxu0 0
  %2787 = vmatpush.bf16.msra.mxu0 0
  %2788 = vmatpush.bf16.msra.mxu0 %v2726
  %2789 = vmatmul.bf16.gmra.mxu0 %v2717
  %v2790 = vpop.f32.mrf.mxu0
  %v2791 = vadd.f32 0.0, %v2790
  %v2792 = vpop.f32.mrf.mxu0
  %2793 = vdwg.mxu0
  %2794 = vmatpush.bf16.msra.mxu0 0
  %2795 = vmatpush.bf16.msra.mxu0 0
  %2796 = vmatpush.bf16.msra.mxu0 0
  %2797 = vmatpush.bf16.msra.mxu0 0
  %2798 = vmatpush.bf16.msra.mxu0 0
  %2799 = vmatpush.bf16.msra.mxu0 0
  %2800 = vmatpush.bf16.msra.mxu0 0
  %2801 = vmatpush.bf16.msra.mxu0 %v2729
  %2802 = vmatmul.bf16.gmra.mxu0 %v2717
  %v2803 = vpop.f32.mrf.mxu0
  %v2804 = vadd.f32 0.0, %v2803
  %v2805 = vpop.f32.mrf.mxu0
  %2806 = vdwg.mxu0
  %2807 = vmatpush.bf16.msra.mxu0 0
  %2808 = vmatpush.bf16.msra.mxu0 0
  %2809 = vmatpush.bf16.msra.mxu0 0
  %2810 = vmatpush.bf16.msra.mxu0 0
  %2811 = vmatpush.bf16.msra.mxu0 0
  %2812 = vmatpush.bf16.msra.mxu0 0
  %2813 = vmatpush.bf16.msra.mxu0 0
  %2814 = vmatpush.bf16.msra.mxu0 %v2732
  %2815 = vmatmul.bf16.gmra.mxu0 %v2717
  %v2816 = vpop.f32.mrf.mxu0
  %v2817 = vadd.f32 0.0, %v2816
  %v2818 = vpop.f32.mrf.mxu0
  %2819 = vdwg.mxu0
  %2820 = vmatpush.bf16.msra.mxu0 0
  %2821 = vmatpush.bf16.msra.mxu0 0
  %2822 = vmatpush.bf16.msra.mxu0 0
  %2823 = vmatpush.bf16.msra.mxu0 0
  %2824 = vmatpush.bf16.msra.mxu0 0
  %2825 = vmatpush.bf16.msra.mxu0 0
  %2826 = vmatpush.bf16.msra.mxu0 0
  %2827 = vmatpush.bf16.msra.mxu0 %v2735
  %2828 = vmatmul.bf16.gmra.mxu0 %v2717
  %v2829 = vpop.f32.mrf.mxu0
  %v2830 = vadd.f32 0.0, %v2829
  %v2831 = vpop.f32.mrf.mxu0
  %2832 = vdwg.mxu0
  %2833 = vmatpush.bf16.msra.mxu0 0
  %2834 = vmatpush.bf16.msra.mxu0 0
  %2835 = vmatpush.bf16.msra.mxu0 0
  %2836 = vmatpush.bf16.msra.mxu0 0
  %2837 = vmatpush.bf16.msra.mxu0 0
  %2838 = vmatpush.bf16.msra.mxu0 0
  %2839 = vmatpush.bf16.msra.mxu0 0
  %2840 = vmatpush.bf16.msra.mxu0 %v2738
  %2841 = vmatmul.bf16.gmra.mxu0 %v2717
  %v2842 = vpop.f32.mrf.mxu0
  %v2843 = vadd.f32 0.0, %v2842
  %v2844 = vpop.f32.mrf.mxu0
  %2845 = vdwg.mxu0
  %2846 = vmatpush.bf16.msra.mxu0 0
  %2847 = vmatpush.bf16.msra.mxu0 0
  %2848 = vmatpush.bf16.msra.mxu0 0
  %2849 = vmatpush.bf16.msra.mxu0 0
  %2850 = vmatpush.bf16.msra.mxu0 0
  %2851 = vmatpush.bf16.msra.mxu0 0
  %2852 = vmatpush.bf16.msra.mxu0 0
  %2853 = vmatpush.bf16.msra.mxu0 %v2741
  %2854 = vmatmul.bf16.gmra.mxu0 %v2717
  %v2855 = vpop.f32.mrf.mxu0
  %v2856 = vadd.f32 0.0, %v2855
  %v2857 = vpop.f32.mrf.mxu0
  %2858 = vdwg.mxu0
  %2859 = vmatpush.bf16.msra.mxu0 0
  %2860 = vmatpush.bf16.msra.mxu0 0
  %2861 = vmatpush.bf16.msra.mxu0 0
  %2862 = vmatpush.bf16.msra.mxu0 0
  %2863 = vmatpush.bf16.msra.mxu0 0
  %2864 = vmatpush.bf16.msra.mxu0 0
  %2865 = vmatpush.bf16.msra.mxu0 0
  %2866 = vmatpush.bf16.msra.mxu0 %v2744
  %2867 = vmatmul.bf16.gmra.mxu0 %v2717
  %v2868 = vpop.f32.mrf.mxu0
  %v2869 = vadd.f32 0.0, %v2868
  %v2870 = vpop.f32.mrf.mxu0
  %2871 = vdwg.mxu0
  %2872 = vmatpush.bf16.msra.mxu0 0
  %2873 = vmatpush.bf16.msra.mxu0 0
  %2874 = vmatpush.bf16.msra.mxu0 0
  %2875 = vmatpush.bf16.msra.mxu0 0
  %2876 = vmatpush.bf16.msra.mxu0 0
  %2877 = vmatpush.bf16.msra.mxu0 0
  %2878 = vmatpush.bf16.msra.mxu0 0
  %2879 = vmatpush.bf16.msra.mxu0 %v2747
  %2880 = vmatmul.bf16.gmra.mxu0 %v2717
  %v2881 = vpop.f32.mrf.mxu0
  %v2882 = vadd.f32 0.0, %v2881
  %v2883 = vpop.f32.mrf.mxu0
  %2884 = vdwg.mxu0
  %2885 = vmatpush.bf16.msra.mxu0 0
  %2886 = vmatpush.bf16.msra.mxu0 0
  %2887 = vmatpush.bf16.msra.mxu0 0
  %2888 = vmatpush.bf16.msra.mxu0 0
  %2889 = vmatpush.bf16.msra.mxu0 0
  %2890 = vmatpush.bf16.msra.mxu0 0
  %2891 = vmatpush.bf16.msra.mxu0 0
  %2892 = vmatpush.bf16.msra.mxu0 %v2750
  %2893 = vmatmul.bf16.gmra.mxu0 %v2717
  %v2894 = vpop.f32.mrf.mxu0
  %v2895 = vadd.f32 0.0, %v2894
  %v2896 = vpop.f32.mrf.mxu0
  %2897 = vdwg.mxu0
  %2898 = vmatpush.bf16.msra.mxu0 0
  %2899 = vmatpush.bf16.msra.mxu0 0
  %2900 = vmatpush.bf16.msra.mxu0 0
  %2901 = vmatpush.bf16.msra.mxu0 0
  %2902 = vmatpush.bf16.msra.mxu0 0
  %2903 = vmatpush.bf16.msra.mxu0 0
  %2904 = vmatpush.bf16.msra.mxu0 0
  %2905 = vmatpush.bf16.msra.mxu0 %v2753
  %2906 = vmatmul.bf16.gmra.mxu0 %v2717
  %v2907 = vpop.f32.mrf.mxu0
  %v2908 = vadd.f32 0.0, %v2907
  %v2909 = vpop.f32.mrf.mxu0
  %2910 = vdwg.mxu0
  %v2923 = vrot.slane %v2778, 6
  %v2924 = vrot.slane %v2791, 4
  %v2925 = vrot.slane %v2804, 2
  %v2926 = vrot.slane %v2830, 6
  %v2927 = vrot.slane %v2843, 4
  %v2928 = vrot.slane %v2856, 2
  %v2929 = vrot.slane %v2882, 6
  %v2930 = vrot.slane %v2895, 4
  %v2931 = vrot.slane %v2908, 2
  %v2932 = vsel %vm1250, %v2765, %v2923
  %v2933 = vsel %vm1252, %v2924, %v2925
  %v2934 = vsel %vm1254, %v2932, %v2933
  %v2935 = vsel %vm1250, %v2817, %v2926
  %v2936 = vsel %vm1252, %v2927, %v2928
  %v2937 = vsel %vm1254, %v2935, %v2936
  %v2938 = vsel %vm1250, %v2869, %v2929
  %v2939 = vsel %vm1252, %v2930, %v2931
  %v2940 = vsel %vm1254, %v2938, %v2939
  %v2944 = vadd.f32 %v2671, %v2934
  %v2945 = vadd.f32 %v2672, %v2937
  %v2946 = vadd.f32 %v2673, %v2940
  %2947 = vst [vmem:[#allocation3] sm:$0xff] %v2944
  %2948 = vst [vmem:[#allocation3 + $0x8] sm:$0xff] %v2945
  %2949 = vst.msk [vmem:[#allocation3 + $0x10] sm:$0xff] %vm1274, %v2946
  %v2950 = vld [vmem:[#allocation3] sm:$0xff]
  %v2951 = vld [vmem:[#allocation3 + $0x8] sm:$0xff]
  %v2952 = vld [vmem:[#allocation3 + $0x10] sm:$0xff]
  %s2953 = sadd.s32 %s991, 7
  %s2954 = smul.u32 %s2953, 2
  %s2955 = scalar_lea.vmem [#allocation2], %s2954
  %v2956 = vld [vmem:[%s2955] sm:$0x3]
  %v2957 = vpack.c.bf16 %v2956, %v2956
  %s2958 = scalar_lea.vmem %s10, 336
  %v2959 = vld [vmem:[%s2958] sm:$0x77]
  %v2960 = vld [vmem:[%s2958 + $0x8] sm:$0x77]
  %v2961 = vld [vmem:[%s2958 + $0x10] sm:$0x77]
  %v2962 = vld [vmem:[%s2958 + $0x18] sm:$0x77]
  %v2963 = vld [vmem:[%s2958 + $0x20] sm:$0x77]
  %v2964 = vld [vmem:[%s2958 + $0x28] sm:$0x77]
  %v2971 = vunpack.c.l.b16 %v2959
  %v2972 = vunpack.c.h.b16 %v2959
  %v2973 = vunpack.c.l.b16 %v2960
  %v2974 = vunpack.c.h.b16 %v2960
  %v2975 = vunpack.c.l.b16 %v2961
  %v2976 = vunpack.c.h.b16 %v2961
  %v2977 = vunpack.c.l.b16 %v2962
  %v2978 = vunpack.c.h.b16 %v2962
  %v2979 = vunpack.c.l.b16 %v2963
  %v2980 = vunpack.c.h.b16 %v2963
  %v2981 = vunpack.c.l.b16 %v2964
  %v2982 = vunpack.c.h.b16 %v2964
  %v2983 = vpack.c.b16 %v2971, %v2971
  %v2984 = vpack.c.b16 %v2972, %v2972
  %v2985 = vpack.c.b16 %v2973, %v2973
  %v2986 = vpack.c.b16 %v2974, %v2974
  %v2987 = vpack.c.b16 %v2975, %v2975
  %v2988 = vpack.c.b16 %v2976, %v2976
  %v2989 = vpack.c.b16 %v2977, %v2977
  %v2990 = vpack.c.b16 %v2978, %v2978
  %v2991 = vpack.c.b16 %v2979, %v2979
  %v2992 = vpack.c.b16 %v2980, %v2980
  %v2993 = vpack.c.b16 %v2981, %v2981
  %v2994 = vpack.c.b16 %v2982, %v2982
  %v2996 = vsel %vm1032, %v2957, 0
  %v2999 = vsel %vm1036, %v2983, 0
  %v3002 = vsel %vm1036, %v2984, 0
  %v3005 = vsel %vm1036, %v2985, 0
  %v3008 = vsel %vm1036, %v2986, 0
  %v3011 = vsel %vm1036, %v2987, 0
  %v3014 = vsel %vm1036, %v2988, 0
  %v3017 = vsel %vm1036, %v2989, 0
  %v3020 = vsel %vm1036, %v2990, 0
  %v3023 = vsel %vm1036, %v2991, 0
  %v3026 = vsel %vm1036, %v2992, 0
  %v3029 = vsel %vm1036, %v2993, 0
  %v3032 = vsel %vm1036, %v2994, 0
  %3034 = vmatpush.bf16.msra.mxu0 0
  %3035 = vmatpush.bf16.msra.mxu0 0
  %3036 = vmatpush.bf16.msra.mxu0 0
  %3037 = vmatpush.bf16.msra.mxu0 0
  %3038 = vmatpush.bf16.msra.mxu0 0
  %3039 = vmatpush.bf16.msra.mxu0 0
  %3040 = vmatpush.bf16.msra.mxu0 0
  %3041 = vmatpush.bf16.msra.mxu0 %v2999
  %3042 = vmatmul.bf16.gmra.mxu0 %v2996
  %v3043 = vpop.f32.mrf.mxu0
  %v3044 = vadd.f32 0.0, %v3043
  %v3045 = vpop.f32.mrf.mxu0
  %3046 = vdwg.mxu0
  %3047 = vmatpush.bf16.msra.mxu0 0
  %3048 = vmatpush.bf16.msra.mxu0 0
  %3049 = vmatpush.bf16.msra.mxu0 0
  %3050 = vmatpush.bf16.msra.mxu0 0
  %3051 = vmatpush.bf16.msra.mxu0 0
  %3052 = vmatpush.bf16.msra.mxu0 0
  %3053 = vmatpush.bf16.msra.mxu0 0
  %3054 = vmatpush.bf16.msra.mxu0 %v3002
  %3055 = vmatmul.bf16.gmra.mxu0 %v2996
  %v3056 = vpop.f32.mrf.mxu0
  %v3057 = vadd.f32 0.0, %v3056
  %v3058 = vpop.f32.mrf.mxu0
  %3059 = vdwg.mxu0
  %3060 = vmatpush.bf16.msra.mxu0 0
  %3061 = vmatpush.bf16.msra.mxu0 0
  %3062 = vmatpush.bf16.msra.mxu0 0
  %3063 = vmatpush.bf16.msra.mxu0 0
  %3064 = vmatpush.bf16.msra.mxu0 0
  %3065 = vmatpush.bf16.msra.mxu0 0
  %3066 = vmatpush.bf16.msra.mxu0 0
  %3067 = vmatpush.bf16.msra.mxu0 %v3005
  %3068 = vmatmul.bf16.gmra.mxu0 %v2996
  %v3069 = vpop.f32.mrf.mxu0
  %v3070 = vadd.f32 0.0, %v3069
  %v3071 = vpop.f32.mrf.mxu0
  %3072 = vdwg.mxu0
  %3073 = vmatpush.bf16.msra.mxu0 0
  %3074 = vmatpush.bf16.msra.mxu0 0
  %3075 = vmatpush.bf16.msra.mxu0 0
  %3076 = vmatpush.bf16.msra.mxu0 0
  %3077 = vmatpush.bf16.msra.mxu0 0
  %3078 = vmatpush.bf16.msra.mxu0 0
  %3079 = vmatpush.bf16.msra.mxu0 0
  %3080 = vmatpush.bf16.msra.mxu0 %v3008
  %3081 = vmatmul.bf16.gmra.mxu0 %v2996
  %v3082 = vpop.f32.mrf.mxu0
  %v3083 = vadd.f32 0.0, %v3082
  %v3084 = vpop.f32.mrf.mxu0
  %3085 = vdwg.mxu0
  %3086 = vmatpush.bf16.msra.mxu0 0
  %3087 = vmatpush.bf16.msra.mxu0 0
  %3088 = vmatpush.bf16.msra.mxu0 0
  %3089 = vmatpush.bf16.msra.mxu0 0
  %3090 = vmatpush.bf16.msra.mxu0 0
  %3091 = vmatpush.bf16.msra.mxu0 0
  %3092 = vmatpush.bf16.msra.mxu0 0
  %3093 = vmatpush.bf16.msra.mxu0 %v3011
  %3094 = vmatmul.bf16.gmra.mxu0 %v2996
  %v3095 = vpop.f32.mrf.mxu0
  %v3096 = vadd.f32 0.0, %v3095
  %v3097 = vpop.f32.mrf.mxu0
  %3098 = vdwg.mxu0
  %3099 = vmatpush.bf16.msra.mxu0 0
  %3100 = vmatpush.bf16.msra.mxu0 0
  %3101 = vmatpush.bf16.msra.mxu0 0
  %3102 = vmatpush.bf16.msra.mxu0 0
  %3103 = vmatpush.bf16.msra.mxu0 0
  %3104 = vmatpush.bf16.msra.mxu0 0
  %3105 = vmatpush.bf16.msra.mxu0 0
  %3106 = vmatpush.bf16.msra.mxu0 %v3014
  %3107 = vmatmul.bf16.gmra.mxu0 %v2996
  %v3108 = vpop.f32.mrf.mxu0
  %v3109 = vadd.f32 0.0, %v3108
  %v3110 = vpop.f32.mrf.mxu0
  %3111 = vdwg.mxu0
  %3112 = vmatpush.bf16.msra.mxu0 0
  %3113 = vmatpush.bf16.msra.mxu0 0
  %3114 = vmatpush.bf16.msra.mxu0 0
  %3115 = vmatpush.bf16.msra.mxu0 0
  %3116 = vmatpush.bf16.msra.mxu0 0
  %3117 = vmatpush.bf16.msra.mxu0 0
  %3118 = vmatpush.bf16.msra.mxu0 0
  %3119 = vmatpush.bf16.msra.mxu0 %v3017
  %3120 = vmatmul.bf16.gmra.mxu0 %v2996
  %v3121 = vpop.f32.mrf.mxu0
  %v3122 = vadd.f32 0.0, %v3121
  %v3123 = vpop.f32.mrf.mxu0
  %3124 = vdwg.mxu0
  %3125 = vmatpush.bf16.msra.mxu0 0
  %3126 = vmatpush.bf16.msra.mxu0 0
  %3127 = vmatpush.bf16.msra.mxu0 0
  %3128 = vmatpush.bf16.msra.mxu0 0
  %3129 = vmatpush.bf16.msra.mxu0 0
  %3130 = vmatpush.bf16.msra.mxu0 0
  %3131 = vmatpush.bf16.msra.mxu0 0
  %3132 = vmatpush.bf16.msra.mxu0 %v3020
  %3133 = vmatmul.bf16.gmra.mxu0 %v2996
  %v3134 = vpop.f32.mrf.mxu0
  %v3135 = vadd.f32 0.0, %v3134
  %v3136 = vpop.f32.mrf.mxu0
  %3137 = vdwg.mxu0
  %3138 = vmatpush.bf16.msra.mxu0 0
  %3139 = vmatpush.bf16.msra.mxu0 0
  %3140 = vmatpush.bf16.msra.mxu0 0
  %3141 = vmatpush.bf16.msra.mxu0 0
  %3142 = vmatpush.bf16.msra.mxu0 0
  %3143 = vmatpush.bf16.msra.mxu0 0
  %3144 = vmatpush.bf16.msra.mxu0 0
  %3145 = vmatpush.bf16.msra.mxu0 %v3023
  %3146 = vmatmul.bf16.gmra.mxu0 %v2996
  %v3147 = vpop.f32.mrf.mxu0
  %v3148 = vadd.f32 0.0, %v3147
  %v3149 = vpop.f32.mrf.mxu0
  %3150 = vdwg.mxu0
  %3151 = vmatpush.bf16.msra.mxu0 0
  %3152 = vmatpush.bf16.msra.mxu0 0
  %3153 = vmatpush.bf16.msra.mxu0 0
  %3154 = vmatpush.bf16.msra.mxu0 0
  %3155 = vmatpush.bf16.msra.mxu0 0
  %3156 = vmatpush.bf16.msra.mxu0 0
  %3157 = vmatpush.bf16.msra.mxu0 0
  %3158 = vmatpush.bf16.msra.mxu0 %v3026
  %3159 = vmatmul.bf16.gmra.mxu0 %v2996
  %v3160 = vpop.f32.mrf.mxu0
  %v3161 = vadd.f32 0.0, %v3160
  %v3162 = vpop.f32.mrf.mxu0
  %3163 = vdwg.mxu0
  %3164 = vmatpush.bf16.msra.mxu0 0
  %3165 = vmatpush.bf16.msra.mxu0 0
  %3166 = vmatpush.bf16.msra.mxu0 0
  %3167 = vmatpush.bf16.msra.mxu0 0
  %3168 = vmatpush.bf16.msra.mxu0 0
  %3169 = vmatpush.bf16.msra.mxu0 0
  %3170 = vmatpush.bf16.msra.mxu0 0
  %3171 = vmatpush.bf16.msra.mxu0 %v3029
  %3172 = vmatmul.bf16.gmra.mxu0 %v2996
  %v3173 = vpop.f32.mrf.mxu0
  %v3174 = vadd.f32 0.0, %v3173
  %v3175 = vpop.f32.mrf.mxu0
  %3176 = vdwg.mxu0
  %3177 = vmatpush.bf16.msra.mxu0 0
  %3178 = vmatpush.bf16.msra.mxu0 0
  %3179 = vmatpush.bf16.msra.mxu0 0
  %3180 = vmatpush.bf16.msra.mxu0 0
  %3181 = vmatpush.bf16.msra.mxu0 0
  %3182 = vmatpush.bf16.msra.mxu0 0
  %3183 = vmatpush.bf16.msra.mxu0 0
  %3184 = vmatpush.bf16.msra.mxu0 %v3032
  %3185 = vmatmul.bf16.gmra.mxu0 %v2996
  %v3186 = vpop.f32.mrf.mxu0
  %v3187 = vadd.f32 0.0, %v3186
  %v3188 = vpop.f32.mrf.mxu0
  %3189 = vdwg.mxu0
  %v3202 = vrot.slane %v3057, 6
  %v3203 = vrot.slane %v3070, 4
  %v3204 = vrot.slane %v3083, 2
  %v3205 = vrot.slane %v3109, 6
  %v3206 = vrot.slane %v3122, 4
  %v3207 = vrot.slane %v3135, 2
  %v3208 = vrot.slane %v3161, 6
  %v3209 = vrot.slane %v3174, 4
  %v3210 = vrot.slane %v3187, 2
  %v3211 = vsel %vm1250, %v3044, %v3202
  %v3212 = vsel %vm1252, %v3203, %v3204
  %v3213 = vsel %vm1254, %v3211, %v3212
  %v3214 = vsel %vm1250, %v3096, %v3205
  %v3215 = vsel %vm1252, %v3206, %v3207
  %v3216 = vsel %vm1254, %v3214, %v3215
  %v3217 = vsel %vm1250, %v3148, %v3208
  %v3218 = vsel %vm1252, %v3209, %v3210
  %v3219 = vsel %vm1254, %v3217, %v3218
  %v3223 = vadd.f32 %v2950, %v3213
  %v3224 = vadd.f32 %v2951, %v3216
  %v3225 = vadd.f32 %v2952, %v3219
  %3226 = vst [vmem:[#allocation3] sm:$0xff] %v3223
  %3227 = vst [vmem:[#allocation3 + $0x8] sm:$0xff] %v3224
  %3228 = vst.msk [vmem:[#allocation3 + $0x10] sm:$0xff] %vm1274, %v3225
  %v3229 = vld [vmem:[#allocation3] sm:$0xff]
  %v3230 = vld [vmem:[#allocation3 + $0x8] sm:$0xff]
  %v3231 = vld [vmem:[#allocation3 + $0x10] sm:$0xff]
  %s3232 = sadd.s32 %s991, 8
  %s3233 = smul.u32 %s3232, 2
  %s3234 = scalar_lea.vmem [#allocation2], %s3233
  %v3235 = vld [vmem:[%s3234] sm:$0x3]
  %v3236 = vpack.c.bf16 %v3235, %v3235
  %s3237 = scalar_lea.vmem %s10, 384
  %v3238 = vld [vmem:[%s3237] sm:$0x77]
  %v3239 = vld [vmem:[%s3237 + $0x8] sm:$0x77]
  %v3240 = vld [vmem:[%s3237 + $0x10] sm:$0x77]
  %v3241 = vld [vmem:[%s3237 + $0x18] sm:$0x77]
  %v3242 = vld [vmem:[%s3237 + $0x20] sm:$0x77]
  %v3243 = vld [vmem:[%s3237 + $0x28] sm:$0x77]
  %v3250 = vunpack.c.l.b16 %v3238
  %v3251 = vunpack.c.h.b16 %v3238
  %v3252 = vunpack.c.l.b16 %v3239
  %v3253 = vunpack.c.h.b16 %v3239
  %v3254 = vunpack.c.l.b16 %v3240
  %v3255 = vunpack.c.h.b16 %v3240
  %v3256 = vunpack.c.l.b16 %v3241
  %v3257 = vunpack.c.h.b16 %v3241
  %v3258 = vunpack.c.l.b16 %v3242
  %v3259 = vunpack.c.h.b16 %v3242
  %v3260 = vunpack.c.l.b16 %v3243
  %v3261 = vunpack.c.h.b16 %v3243
  %v3262 = vpack.c.b16 %v3250, %v3250
  %v3263 = vpack.c.b16 %v3251, %v3251
  %v3264 = vpack.c.b16 %v3252, %v3252
  %v3265 = vpack.c.b16 %v3253, %v3253
  %v3266 = vpack.c.b16 %v3254, %v3254
  %v3267 = vpack.c.b16 %v3255, %v3255
  %v3268 = vpack.c.b16 %v3256, %v3256
  %v3269 = vpack.c.b16 %v3257, %v3257
  %v3270 = vpack.c.b16 %v3258, %v3258
  %v3271 = vpack.c.b16 %v3259, %v3259
  %v3272 = vpack.c.b16 %v3260, %v3260
  %v3273 = vpack.c.b16 %v3261, %v3261
  %v3275 = vsel %vm1032, %v3236, 0
  %v3278 = vsel %vm1036, %v3262, 0
  %v3281 = vsel %vm1036, %v3263, 0
  %v3284 = vsel %vm1036, %v3264, 0
  %v3287 = vsel %vm1036, %v3265, 0
  %v3290 = vsel %vm1036, %v3266, 0
  %v3293 = vsel %vm1036, %v3267, 0
  %v3296 = vsel %vm1036, %v3268, 0
  %v3299 = vsel %vm1036, %v3269, 0
  %v3302 = vsel %vm1036, %v3270, 0
  %v3305 = vsel %vm1036, %v3271, 0
  %v3308 = vsel %vm1036, %v3272, 0
  %v3311 = vsel %vm1036, %v3273, 0
  %3313 = vmatpush.bf16.msra.mxu0 0
  %3314 = vmatpush.bf16.msra.mxu0 0
  %3315 = vmatpush.bf16.msra.mxu0 0
  %3316 = vmatpush.bf16.msra.mxu0 0
  %3317 = vmatpush.bf16.msra.mxu0 0
  %3318 = vmatpush.bf16.msra.mxu0 0
  %3319 = vmatpush.bf16.msra.mxu0 0
  %3320 = vmatpush.bf16.msra.mxu0 %v3278
  %3321 = vmatmul.bf16.gmra.mxu0 %v3275
  %v3322 = vpop.f32.mrf.mxu0
  %v3323 = vadd.f32 0.0, %v3322
  %v3324 = vpop.f32.mrf.mxu0
  %3325 = vdwg.mxu0
  %3326 = vmatpush.bf16.msra.mxu0 0
  %3327 = vmatpush.bf16.msra.mxu0 0
  %3328 = vmatpush.bf16.msra.mxu0 0
  %3329 = vmatpush.bf16.msra.mxu0 0
  %3330 = vmatpush.bf16.msra.mxu0 0
  %3331 = vmatpush.bf16.msra.mxu0 0
  %3332 = vmatpush.bf16.msra.mxu0 0
  %3333 = vmatpush.bf16.msra.mxu0 %v3281
  %3334 = vmatmul.bf16.gmra.mxu0 %v3275
  %v3335 = vpop.f32.mrf.mxu0
  %v3336 = vadd.f32 0.0, %v3335
  %v3337 = vpop.f32.mrf.mxu0
  %3338 = vdwg.mxu0
  %3339 = vmatpush.bf16.msra.mxu0 0
  %3340 = vmatpush.bf16.msra.mxu0 0
  %3341 = vmatpush.bf16.msra.mxu0 0
  %3342 = vmatpush.bf16.msra.mxu0 0
  %3343 = vmatpush.bf16.msra.mxu0 0
  %3344 = vmatpush.bf16.msra.mxu0 0
  %3345 = vmatpush.bf16.msra.mxu0 0
  %3346 = vmatpush.bf16.msra.mxu0 %v3284
  %3347 = vmatmul.bf16.gmra.mxu0 %v3275
  %v3348 = vpop.f32.mrf.mxu0
  %v3349 = vadd.f32 0.0, %v3348
  %v3350 = vpop.f32.mrf.mxu0
  %3351 = vdwg.mxu0
  %3352 = vmatpush.bf16.msra.mxu0 0
  %3353 = vmatpush.bf16.msra.mxu0 0
  %3354 = vmatpush.bf16.msra.mxu0 0
  %3355 = vmatpush.bf16.msra.mxu0 0
  %3356 = vmatpush.bf16.msra.mxu0 0
  %3357 = vmatpush.bf16.msra.mxu0 0
  %3358 = vmatpush.bf16.msra.mxu0 0
  %3359 = vmatpush.bf16.msra.mxu0 %v3287
  %3360 = vmatmul.bf16.gmra.mxu0 %v3275
  %v3361 = vpop.f32.mrf.mxu0
  %v3362 = vadd.f32 0.0, %v3361
  %v3363 = vpop.f32.mrf.mxu0
  %3364 = vdwg.mxu0
  %3365 = vmatpush.bf16.msra.mxu0 0
  %3366 = vmatpush.bf16.msra.mxu0 0
  %3367 = vmatpush.bf16.msra.mxu0 0
  %3368 = vmatpush.bf16.msra.mxu0 0
  %3369 = vmatpush.bf16.msra.mxu0 0
  %3370 = vmatpush.bf16.msra.mxu0 0
  %3371 = vmatpush.bf16.msra.mxu0 0
  %3372 = vmatpush.bf16.msra.mxu0 %v3290
  %3373 = vmatmul.bf16.gmra.mxu0 %v3275
  %v3374 = vpop.f32.mrf.mxu0
  %v3375 = vadd.f32 0.0, %v3374
  %v3376 = vpop.f32.mrf.mxu0
  %3377 = vdwg.mxu0
  %3378 = vmatpush.bf16.msra.mxu0 0
  %3379 = vmatpush.bf16.msra.mxu0 0
  %3380 = vmatpush.bf16.msra.mxu0 0
  %3381 = vmatpush.bf16.msra.mxu0 0
  %3382 = vmatpush.bf16.msra.mxu0 0
  %3383 = vmatpush.bf16.msra.mxu0 0
  %3384 = vmatpush.bf16.msra.mxu0 0
  %3385 = vmatpush.bf16.msra.mxu0 %v3293
  %3386 = vmatmul.bf16.gmra.mxu0 %v3275
  %v3387 = vpop.f32.mrf.mxu0
  %v3388 = vadd.f32 0.0, %v3387
  %v3389 = vpop.f32.mrf.mxu0
  %3390 = vdwg.mxu0
  %3391 = vmatpush.bf16.msra.mxu0 0
  %3392 = vmatpush.bf16.msra.mxu0 0
  %3393 = vmatpush.bf16.msra.mxu0 0
  %3394 = vmatpush.bf16.msra.mxu0 0
  %3395 = vmatpush.bf16.msra.mxu0 0
  %3396 = vmatpush.bf16.msra.mxu0 0
  %3397 = vmatpush.bf16.msra.mxu0 0
  %3398 = vmatpush.bf16.msra.mxu0 %v3296
  %3399 = vmatmul.bf16.gmra.mxu0 %v3275
  %v3400 = vpop.f32.mrf.mxu0
  %v3401 = vadd.f32 0.0, %v3400
  %v3402 = vpop.f32.mrf.mxu0
  %3403 = vdwg.mxu0
  %3404 = vmatpush.bf16.msra.mxu0 0
  %3405 = vmatpush.bf16.msra.mxu0 0
  %3406 = vmatpush.bf16.msra.mxu0 0
  %3407 = vmatpush.bf16.msra.mxu0 0
  %3408 = vmatpush.bf16.msra.mxu0 0
  %3409 = vmatpush.bf16.msra.mxu0 0
  %3410 = vmatpush.bf16.msra.mxu0 0
  %3411 = vmatpush.bf16.msra.mxu0 %v3299
  %3412 = vmatmul.bf16.gmra.mxu0 %v3275
  %v3413 = vpop.f32.mrf.mxu0
  %v3414 = vadd.f32 0.0, %v3413
  %v3415 = vpop.f32.mrf.mxu0
  %3416 = vdwg.mxu0
  %3417 = vmatpush.bf16.msra.mxu0 0
  %3418 = vmatpush.bf16.msra.mxu0 0
  %3419 = vmatpush.bf16.msra.mxu0 0
  %3420 = vmatpush.bf16.msra.mxu0 0
  %3421 = vmatpush.bf16.msra.mxu0 0
  %3422 = vmatpush.bf16.msra.mxu0 0
  %3423 = vmatpush.bf16.msra.mxu0 0
  %3424 = vmatpush.bf16.msra.mxu0 %v3302
  %3425 = vmatmul.bf16.gmra.mxu0 %v3275
  %v3426 = vpop.f32.mrf.mxu0
  %v3427 = vadd.f32 0.0, %v3426
  %v3428 = vpop.f32.mrf.mxu0
  %3429 = vdwg.mxu0
  %3430 = vmatpush.bf16.msra.mxu0 0
  %3431 = vmatpush.bf16.msra.mxu0 0
  %3432 = vmatpush.bf16.msra.mxu0 0
  %3433 = vmatpush.bf16.msra.mxu0 0
  %3434 = vmatpush.bf16.msra.mxu0 0
  %3435 = vmatpush.bf16.msra.mxu0 0
  %3436 = vmatpush.bf16.msra.mxu0 0
  %3437 = vmatpush.bf16.msra.mxu0 %v3305
  %3438 = vmatmul.bf16.gmra.mxu0 %v3275
  %v3439 = vpop.f32.mrf.mxu0
  %v3440 = vadd.f32 0.0, %v3439
  %v3441 = vpop.f32.mrf.mxu0
  %3442 = vdwg.mxu0
  %3443 = vmatpush.bf16.msra.mxu0 0
  %3444 = vmatpush.bf16.msra.mxu0 0
  %3445 = vmatpush.bf16.msra.mxu0 0
  %3446 = vmatpush.bf16.msra.mxu0 0
  %3447 = vmatpush.bf16.msra.mxu0 0
  %3448 = vmatpush.bf16.msra.mxu0 0
  %3449 = vmatpush.bf16.msra.mxu0 0
  %3450 = vmatpush.bf16.msra.mxu0 %v3308
  %3451 = vmatmul.bf16.gmra.mxu0 %v3275
  %v3452 = vpop.f32.mrf.mxu0
  %v3453 = vadd.f32 0.0, %v3452
  %v3454 = vpop.f32.mrf.mxu0
  %3455 = vdwg.mxu0
  %3456 = vmatpush.bf16.msra.mxu0 0
  %3457 = vmatpush.bf16.msra.mxu0 0
  %3458 = vmatpush.bf16.msra.mxu0 0
  %3459 = vmatpush.bf16.msra.mxu0 0
  %3460 = vmatpush.bf16.msra.mxu0 0
  %3461 = vmatpush.bf16.msra.mxu0 0
  %3462 = vmatpush.bf16.msra.mxu0 0
  %3463 = vmatpush.bf16.msra.mxu0 %v3311
  %3464 = vmatmul.bf16.gmra.mxu0 %v3275
  %v3465 = vpop.f32.mrf.mxu0
  %v3466 = vadd.f32 0.0, %v3465
  %v3467 = vpop.f32.mrf.mxu0
  %3468 = vdwg.mxu0
  %v3481 = vrot.slane %v3336, 6
  %v3482 = vrot.slane %v3349, 4
  %v3483 = vrot.slane %v3362, 2
  %v3484 = vrot.slane %v3388, 6
  %v3485 = vrot.slane %v3401, 4
  %v3486 = vrot.slane %v3414, 2
  %v3487 = vrot.slane %v3440, 6
  %v3488 = vrot.slane %v3453, 4
  %v3489 = vrot.slane %v3466, 2
  %v3490 = vsel %vm1250, %v3323, %v3481
  %v3491 = vsel %vm1252, %v3482, %v3483
  %v3492 = vsel %vm1254, %v3490, %v3491
  %v3493 = vsel %vm1250, %v3375, %v3484
  %v3494 = vsel %vm1252, %v3485, %v3486
  %v3495 = vsel %vm1254, %v3493, %v3494
  %v3496 = vsel %vm1250, %v3427, %v3487
  %v3497 = vsel %vm1252, %v3488, %v3489
  %v3498 = vsel %vm1254, %v3496, %v3497
  %v3502 = vadd.f32 %v3229, %v3492
  %v3503 = vadd.f32 %v3230, %v3495
  %v3504 = vadd.f32 %v3231, %v3498
  %3505 = vst [vmem:[#allocation3] sm:$0xff] %v3502
  %3506 = vst [vmem:[#allocation3 + $0x8] sm:$0xff] %v3503
  %3507 = vst.msk [vmem:[#allocation3 + $0x10] sm:$0xff] %vm1274, %v3504
  %v3508 = vld [vmem:[#allocation3] sm:$0xff]
  %v3509 = vld [vmem:[#allocation3 + $0x8] sm:$0xff]
  %v3510 = vld [vmem:[#allocation3 + $0x10] sm:$0xff]
  %s3511 = sadd.s32 %s991, 9
  %s3512 = smul.u32 %s3511, 2
  %s3513 = scalar_lea.vmem [#allocation2], %s3512
  %v3514 = vld [vmem:[%s3513] sm:$0x3]
  %v3515 = vpack.c.bf16 %v3514, %v3514
  %s3516 = scalar_lea.vmem %s10, 432
  %v3517 = vld [vmem:[%s3516] sm:$0x77]
  %v3518 = vld [vmem:[%s3516 + $0x8] sm:$0x77]
  %v3519 = vld [vmem:[%s3516 + $0x10] sm:$0x77]
  %v3520 = vld [vmem:[%s3516 + $0x18] sm:$0x77]
  %v3521 = vld [vmem:[%s3516 + $0x20] sm:$0x77]
  %v3522 = vld [vmem:[%s3516 + $0x28] sm:$0x77]
  %v3529 = vunpack.c.l.b16 %v3517
  %v3530 = vunpack.c.h.b16 %v3517
  %v3531 = vunpack.c.l.b16 %v3518
  %v3532 = vunpack.c.h.b16 %v3518
  %v3533 = vunpack.c.l.b16 %v3519
  %v3534 = vunpack.c.h.b16 %v3519
  %v3535 = vunpack.c.l.b16 %v3520
  %v3536 = vunpack.c.h.b16 %v3520
  %v3537 = vunpack.c.l.b16 %v3521
  %v3538 = vunpack.c.h.b16 %v3521
  %v3539 = vunpack.c.l.b16 %v3522
  %v3540 = vunpack.c.h.b16 %v3522
  %v3541 = vpack.c.b16 %v3529, %v3529
  %v3542 = vpack.c.b16 %v3530, %v3530
  %v3543 = vpack.c.b16 %v3531, %v3531
  %v3544 = vpack.c.b16 %v3532, %v3532
  %v3545 = vpack.c.b16 %v3533, %v3533
  %v3546 = vpack.c.b16 %v3534, %v3534
  %v3547 = vpack.c.b16 %v3535, %v3535
  %v3548 = vpack.c.b16 %v3536, %v3536
  %v3549 = vpack.c.b16 %v3537, %v3537
  %v3550 = vpack.c.b16 %v3538, %v3538
  %v3551 = vpack.c.b16 %v3539, %v3539
  %v3552 = vpack.c.b16 %v3540, %v3540
  %v3554 = vsel %vm1032, %v3515, 0
  %v3557 = vsel %vm1036, %v3541, 0
  %v3560 = vsel %vm1036, %v3542, 0
  %v3563 = vsel %vm1036, %v3543, 0
  %v3566 = vsel %vm1036, %v3544, 0
  %v3569 = vsel %vm1036, %v3545, 0
  %v3572 = vsel %vm1036, %v3546, 0
  %v3575 = vsel %vm1036, %v3547, 0
  %v3578 = vsel %vm1036, %v3548, 0
  %v3581 = vsel %vm1036, %v3549, 0
  %v3584 = vsel %vm1036, %v3550, 0
  %v3587 = vsel %vm1036, %v3551, 0
  %v3590 = vsel %vm1036, %v3552, 0
  %3592 = vmatpush.bf16.msra.mxu0 0
  %3593 = vmatpush.bf16.msra.mxu0 0
  %3594 = vmatpush.bf16.msra.mxu0 0
  %3595 = vmatpush.bf16.msra.mxu0 0
  %3596 = vmatpush.bf16.msra.mxu0 0
  %3597 = vmatpush.bf16.msra.mxu0 0
  %3598 = vmatpush.bf16.msra.mxu0 0
  %3599 = vmatpush.bf16.msra.mxu0 %v3557
  %3600 = vmatmul.bf16.gmra.mxu0 %v3554
  %v3601 = vpop.f32.mrf.mxu0
  %v3602 = vadd.f32 0.0, %v3601
  %v3603 = vpop.f32.mrf.mxu0
  %3604 = vdwg.mxu0
  %3605 = vmatpush.bf16.msra.mxu0 0
  %3606 = vmatpush.bf16.msra.mxu0 0
  %3607 = vmatpush.bf16.msra.mxu0 0
  %3608 = vmatpush.bf16.msra.mxu0 0
  %3609 = vmatpush.bf16.msra.mxu0 0
  %3610 = vmatpush.bf16.msra.mxu0 0
  %3611 = vmatpush.bf16.msra.mxu0 0
  %3612 = vmatpush.bf16.msra.mxu0 %v3560
  %3613 = vmatmul.bf16.gmra.mxu0 %v3554
  %v3614 = vpop.f32.mrf.mxu0
  %v3615 = vadd.f32 0.0, %v3614
  %v3616 = vpop.f32.mrf.mxu0
  %3617 = vdwg.mxu0
  %3618 = vmatpush.bf16.msra.mxu0 0
  %3619 = vmatpush.bf16.msra.mxu0 0
  %3620 = vmatpush.bf16.msra.mxu0 0
  %3621 = vmatpush.bf16.msra.mxu0 0
  %3622 = vmatpush.bf16.msra.mxu0 0
  %3623 = vmatpush.bf16.msra.mxu0 0
  %3624 = vmatpush.bf16.msra.mxu0 0
  %3625 = vmatpush.bf16.msra.mxu0 %v3563
  %3626 = vmatmul.bf16.gmra.mxu0 %v3554
  %v3627 = vpop.f32.mrf.mxu0
  %v3628 = vadd.f32 0.0, %v3627
  %v3629 = vpop.f32.mrf.mxu0
  %3630 = vdwg.mxu0
  %3631 = vmatpush.bf16.msra.mxu0 0
  %3632 = vmatpush.bf16.msra.mxu0 0
  %3633 = vmatpush.bf16.msra.mxu0 0
  %3634 = vmatpush.bf16.msra.mxu0 0
  %3635 = vmatpush.bf16.msra.mxu0 0
  %3636 = vmatpush.bf16.msra.mxu0 0
  %3637 = vmatpush.bf16.msra.mxu0 0
  %3638 = vmatpush.bf16.msra.mxu0 %v3566
  %3639 = vmatmul.bf16.gmra.mxu0 %v3554
  %v3640 = vpop.f32.mrf.mxu0
  %v3641 = vadd.f32 0.0, %v3640
  %v3642 = vpop.f32.mrf.mxu0
  %3643 = vdwg.mxu0
  %3644 = vmatpush.bf16.msra.mxu0 0
  %3645 = vmatpush.bf16.msra.mxu0 0
  %3646 = vmatpush.bf16.msra.mxu0 0
  %3647 = vmatpush.bf16.msra.mxu0 0
  %3648 = vmatpush.bf16.msra.mxu0 0
  %3649 = vmatpush.bf16.msra.mxu0 0
  %3650 = vmatpush.bf16.msra.mxu0 0
  %3651 = vmatpush.bf16.msra.mxu0 %v3569
  %3652 = vmatmul.bf16.gmra.mxu0 %v3554
  %v3653 = vpop.f32.mrf.mxu0
  %v3654 = vadd.f32 0.0, %v3653
  %v3655 = vpop.f32.mrf.mxu0
  %3656 = vdwg.mxu0
  %3657 = vmatpush.bf16.msra.mxu0 0
  %3658 = vmatpush.bf16.msra.mxu0 0
  %3659 = vmatpush.bf16.msra.mxu0 0
  %3660 = vmatpush.bf16.msra.mxu0 0
  %3661 = vmatpush.bf16.msra.mxu0 0
  %3662 = vmatpush.bf16.msra.mxu0 0
  %3663 = vmatpush.bf16.msra.mxu0 0
  %3664 = vmatpush.bf16.msra.mxu0 %v3572
  %3665 = vmatmul.bf16.gmra.mxu0 %v3554
  %v3666 = vpop.f32.mrf.mxu0
  %v3667 = vadd.f32 0.0, %v3666
  %v3668 = vpop.f32.mrf.mxu0
  %3669 = vdwg.mxu0
  %3670 = vmatpush.bf16.msra.mxu0 0
  %3671 = vmatpush.bf16.msra.mxu0 0
  %3672 = vmatpush.bf16.msra.mxu0 0
  %3673 = vmatpush.bf16.msra.mxu0 0
  %3674 = vmatpush.bf16.msra.mxu0 0
  %3675 = vmatpush.bf16.msra.mxu0 0
  %3676 = vmatpush.bf16.msra.mxu0 0
  %3677 = vmatpush.bf16.msra.mxu0 %v3575
  %3678 = vmatmul.bf16.gmra.mxu0 %v3554
  %v3679 = vpop.f32.mrf.mxu0
  %v3680 = vadd.f32 0.0, %v3679
  %v3681 = vpop.f32.mrf.mxu0
  %3682 = vdwg.mxu0
  %3683 = vmatpush.bf16.msra.mxu0 0
  %3684 = vmatpush.bf16.msra.mxu0 0
  %3685 = vmatpush.bf16.msra.mxu0 0
  %3686 = vmatpush.bf16.msra.mxu0 0
  %3687 = vmatpush.bf16.msra.mxu0 0
  %3688 = vmatpush.bf16.msra.mxu0 0
  %3689 = vmatpush.bf16.msra.mxu0 0
  %3690 = vmatpush.bf16.msra.mxu0 %v3578
  %3691 = vmatmul.bf16.gmra.mxu0 %v3554
  %v3692 = vpop.f32.mrf.mxu0
  %v3693 = vadd.f32 0.0, %v3692
  %v3694 = vpop.f32.mrf.mxu0
  %3695 = vdwg.mxu0
  %3696 = vmatpush.bf16.msra.mxu0 0
  %3697 = vmatpush.bf16.msra.mxu0 0
  %3698 = vmatpush.bf16.msra.mxu0 0
  %3699 = vmatpush.bf16.msra.mxu0 0
  %3700 = vmatpush.bf16.msra.mxu0 0
  %3701 = vmatpush.bf16.msra.mxu0 0
  %3702 = vmatpush.bf16.msra.mxu0 0
  %3703 = vmatpush.bf16.msra.mxu0 %v3581
  %3704 = vmatmul.bf16.gmra.mxu0 %v3554
  %v3705 = vpop.f32.mrf.mxu0
  %v3706 = vadd.f32 0.0, %v3705
  %v3707 = vpop.f32.mrf.mxu0
  %3708 = vdwg.mxu0
  %3709 = vmatpush.bf16.msra.mxu0 0
  %3710 = vmatpush.bf16.msra.mxu0 0
  %3711 = vmatpush.bf16.msra.mxu0 0
  %3712 = vmatpush.bf16.msra.mxu0 0
  %3713 = vmatpush.bf16.msra.mxu0 0
  %3714 = vmatpush.bf16.msra.mxu0 0
  %3715 = vmatpush.bf16.msra.mxu0 0
  %3716 = vmatpush.bf16.msra.mxu0 %v3584
  %3717 = vmatmul.bf16.gmra.mxu0 %v3554
  %v3718 = vpop.f32.mrf.mxu0
  %v3719 = vadd.f32 0.0, %v3718
  %v3720 = vpop.f32.mrf.mxu0
  %3721 = vdwg.mxu0
  %3722 = vmatpush.bf16.msra.mxu0 0
  %3723 = vmatpush.bf16.msra.mxu0 0
  %3724 = vmatpush.bf16.msra.mxu0 0
  %3725 = vmatpush.bf16.msra.mxu0 0
  %3726 = vmatpush.bf16.msra.mxu0 0
  %3727 = vmatpush.bf16.msra.mxu0 0
  %3728 = vmatpush.bf16.msra.mxu0 0
  %3729 = vmatpush.bf16.msra.mxu0 %v3587
  %3730 = vmatmul.bf16.gmra.mxu0 %v3554
  %v3731 = vpop.f32.mrf.mxu0
  %v3732 = vadd.f32 0.0, %v3731
  %v3733 = vpop.f32.mrf.mxu0
  %3734 = vdwg.mxu0
  %3735 = vmatpush.bf16.msra.mxu0 0
  %3736 = vmatpush.bf16.msra.mxu0 0
  %3737 = vmatpush.bf16.msra.mxu0 0
  %3738 = vmatpush.bf16.msra.mxu0 0
  %3739 = vmatpush.bf16.msra.mxu0 0
  %3740 = vmatpush.bf16.msra.mxu0 0
  %3741 = vmatpush.bf16.msra.mxu0 0
  %3742 = vmatpush.bf16.msra.mxu0 %v3590
  %3743 = vmatmul.bf16.gmra.mxu0 %v3554
  %v3744 = vpop.f32.mrf.mxu0
  %v3745 = vadd.f32 0.0, %v3744
  %v3746 = vpop.f32.mrf.mxu0
  %3747 = vdwg.mxu0
  %v3760 = vrot.slane %v3615, 6
  %v3761 = vrot.slane %v3628, 4
  %v3762 = vrot.slane %v3641, 2
  %v3763 = vrot.slane %v3667, 6
  %v3764 = vrot.slane %v3680, 4
  %v3765 = vrot.slane %v3693, 2
  %v3766 = vrot.slane %v3719, 6
  %v3767 = vrot.slane %v3732, 4
  %v3768 = vrot.slane %v3745, 2
  %v3769 = vsel %vm1250, %v3602, %v3760
  %v3770 = vsel %vm1252, %v3761, %v3762
  %v3771 = vsel %vm1254, %v3769, %v3770
  %v3772 = vsel %vm1250, %v3654, %v3763
  %v3773 = vsel %vm1252, %v3764, %v3765
  %v3774 = vsel %vm1254, %v3772, %v3773
  %v3775 = vsel %vm1250, %v3706, %v3766
  %v3776 = vsel %vm1252, %v3767, %v3768
  %v3777 = vsel %vm1254, %v3775, %v3776
  %v3781 = vadd.f32 %v3508, %v3771
  %v3782 = vadd.f32 %v3509, %v3774
  %v3783 = vadd.f32 %v3510, %v3777
  %3784 = vst [vmem:[#allocation3] sm:$0xff] %v3781
  %3785 = vst [vmem:[#allocation3 + $0x8] sm:$0xff] %v3782
  %3786 = vst.msk [vmem:[#allocation3 + $0x10] sm:$0xff] %vm1274, %v3783
  %v3787 = vld [vmem:[#allocation3] sm:$0xff]
  %v3788 = vld [vmem:[#allocation3 + $0x8] sm:$0xff]
  %v3789 = vld [vmem:[#allocation3 + $0x10] sm:$0xff]
  %s3790 = sadd.s32 %s991, 10
  %s3791 = smul.u32 %s3790, 2
  %s3792 = scalar_lea.vmem [#allocation2], %s3791
  %v3793 = vld [vmem:[%s3792] sm:$0x3]
  %v3794 = vpack.c.bf16 %v3793, %v3793
  %s3795 = scalar_lea.vmem %s10, 480
  %v3796 = vld [vmem:[%s3795] sm:$0x77]
  %v3797 = vld [vmem:[%s3795 + $0x8] sm:$0x77]
  %v3798 = vld [vmem:[%s3795 + $0x10] sm:$0x77]
  %v3799 = vld [vmem:[%s3795 + $0x18] sm:$0x77]
  %v3800 = vld [vmem:[%s3795 + $0x20] sm:$0x77]
  %v3801 = vld [vmem:[%s3795 + $0x28] sm:$0x77]
  %v3808 = vunpack.c.l.b16 %v3796
  %v3809 = vunpack.c.h.b16 %v3796
  %v3810 = vunpack.c.l.b16 %v3797
  %v3811 = vunpack.c.h.b16 %v3797
  %v3812 = vunpack.c.l.b16 %v3798
  %v3813 = vunpack.c.h.b16 %v3798
  %v3814 = vunpack.c.l.b16 %v3799
  %v3815 = vunpack.c.h.b16 %v3799
  %v3816 = vunpack.c.l.b16 %v3800
  %v3817 = vunpack.c.h.b16 %v3800
  %v3818 = vunpack.c.l.b16 %v3801
  %v3819 = vunpack.c.h.b16 %v3801
  %v3820 = vpack.c.b16 %v3808, %v3808
  %v3821 = vpack.c.b16 %v3809, %v3809
  %v3822 = vpack.c.b16 %v3810, %v3810
  %v3823 = vpack.c.b16 %v3811, %v3811
  %v3824 = vpack.c.b16 %v3812, %v3812
  %v3825 = vpack.c.b16 %v3813, %v3813
  %v3826 = vpack.c.b16 %v3814, %v3814
  %v3827 = vpack.c.b16 %v3815, %v3815
  %v3828 = vpack.c.b16 %v3816, %v3816
  %v3829 = vpack.c.b16 %v3817, %v3817
  %v3830 = vpack.c.b16 %v3818, %v3818
  %v3831 = vpack.c.b16 %v3819, %v3819
  %v3833 = vsel %vm1032, %v3794, 0
  %v3836 = vsel %vm1036, %v3820, 0
  %v3839 = vsel %vm1036, %v3821, 0
  %v3842 = vsel %vm1036, %v3822, 0
  %v3845 = vsel %vm1036, %v3823, 0
  %v3848 = vsel %vm1036, %v3824, 0
  %v3851 = vsel %vm1036, %v3825, 0
  %v3854 = vsel %vm1036, %v3826, 0
  %v3857 = vsel %vm1036, %v3827, 0
  %v3860 = vsel %vm1036, %v3828, 0
  %v3863 = vsel %vm1036, %v3829, 0
  %v3866 = vsel %vm1036, %v3830, 0
  %v3869 = vsel %vm1036, %v3831, 0
  %3871 = vmatpush.bf16.msra.mxu0 0
  %3872 = vmatpush.bf16.msra.mxu0 0
  %3873 = vmatpush.bf16.msra.mxu0 0
  %3874 = vmatpush.bf16.msra.mxu0 0
  %3875 = vmatpush.bf16.msra.mxu0 0
  %3876 = vmatpush.bf16.msra.mxu0 0
  %3877 = vmatpush.bf16.msra.mxu0 0
  %3878 = vmatpush.bf16.msra.mxu0 %v3836
  %3879 = vmatmul.bf16.gmra.mxu0 %v3833
  %v3880 = vpop.f32.mrf.mxu0
  %v3881 = vadd.f32 0.0, %v3880
  %v3882 = vpop.f32.mrf.mxu0
  %3883 = vdwg.mxu0
  %3884 = vmatpush.bf16.msra.mxu0 0
  %3885 = vmatpush.bf16.msra.mxu0 0
  %3886 = vmatpush.bf16.msra.mxu0 0
  %3887 = vmatpush.bf16.msra.mxu0 0
  %3888 = vmatpush.bf16.msra.mxu0 0
  %3889 = vmatpush.bf16.msra.mxu0 0
  %3890 = vmatpush.bf16.msra.mxu0 0
  %3891 = vmatpush.bf16.msra.mxu0 %v3839
  %3892 = vmatmul.bf16.gmra.mxu0 %v3833
  %v3893 = vpop.f32.mrf.mxu0
  %v3894 = vadd.f32 0.0, %v3893
  %v3895 = vpop.f32.mrf.mxu0
  %3896 = vdwg.mxu0
  %3897 = vmatpush.bf16.msra.mxu0 0
  %3898 = vmatpush.bf16.msra.mxu0 0
  %3899 = vmatpush.bf16.msra.mxu0 0
  %3900 = vmatpush.bf16.msra.mxu0 0
  %3901 = vmatpush.bf16.msra.mxu0 0
  %3902 = vmatpush.bf16.msra.mxu0 0
  %3903 = vmatpush.bf16.msra.mxu0 0
  %3904 = vmatpush.bf16.msra.mxu0 %v3842
  %3905 = vmatmul.bf16.gmra.mxu0 %v3833
  %v3906 = vpop.f32.mrf.mxu0
  %v3907 = vadd.f32 0.0, %v3906
  %v3908 = vpop.f32.mrf.mxu0
  %3909 = vdwg.mxu0
  %3910 = vmatpush.bf16.msra.mxu0 0
  %3911 = vmatpush.bf16.msra.mxu0 0
  %3912 = vmatpush.bf16.msra.mxu0 0
  %3913 = vmatpush.bf16.msra.mxu0 0
  %3914 = vmatpush.bf16.msra.mxu0 0
  %3915 = vmatpush.bf16.msra.mxu0 0
  %3916 = vmatpush.bf16.msra.mxu0 0
  %3917 = vmatpush.bf16.msra.mxu0 %v3845
  %3918 = vmatmul.bf16.gmra.mxu0 %v3833
  %v3919 = vpop.f32.mrf.mxu0
  %v3920 = vadd.f32 0.0, %v3919
  %v3921 = vpop.f32.mrf.mxu0
  %3922 = vdwg.mxu0
  %3923 = vmatpush.bf16.msra.mxu0 0
  %3924 = vmatpush.bf16.msra.mxu0 0
  %3925 = vmatpush.bf16.msra.mxu0 0
  %3926 = vmatpush.bf16.msra.mxu0 0
  %3927 = vmatpush.bf16.msra.mxu0 0
  %3928 = vmatpush.bf16.msra.mxu0 0
  %3929 = vmatpush.bf16.msra.mxu0 0
  %3930 = vmatpush.bf16.msra.mxu0 %v3848
  %3931 = vmatmul.bf16.gmra.mxu0 %v3833
  %v3932 = vpop.f32.mrf.mxu0
  %v3933 = vadd.f32 0.0, %v3932
  %v3934 = vpop.f32.mrf.mxu0
  %3935 = vdwg.mxu0
  %3936 = vmatpush.bf16.msra.mxu0 0
  %3937 = vmatpush.bf16.msra.mxu0 0
  %3938 = vmatpush.bf16.msra.mxu0 0
  %3939 = vmatpush.bf16.msra.mxu0 0
  %3940 = vmatpush.bf16.msra.mxu0 0
  %3941 = vmatpush.bf16.msra.mxu0 0
  %3942 = vmatpush.bf16.msra.mxu0 0
  %3943 = vmatpush.bf16.msra.mxu0 %v3851
  %3944 = vmatmul.bf16.gmra.mxu0 %v3833
  %v3945 = vpop.f32.mrf.mxu0
  %v3946 = vadd.f32 0.0, %v3945
  %v3947 = vpop.f32.mrf.mxu0
  %3948 = vdwg.mxu0
  %3949 = vmatpush.bf16.msra.mxu0 0
  %3950 = vmatpush.bf16.msra.mxu0 0
  %3951 = vmatpush.bf16.msra.mxu0 0
  %3952 = vmatpush.bf16.msra.mxu0 0
  %3953 = vmatpush.bf16.msra.mxu0 0
  %3954 = vmatpush.bf16.msra.mxu0 0
  %3955 = vmatpush.bf16.msra.mxu0 0
  %3956 = vmatpush.bf16.msra.mxu0 %v3854
  %3957 = vmatmul.bf16.gmra.mxu0 %v3833
  %v3958 = vpop.f32.mrf.mxu0
  %v3959 = vadd.f32 0.0, %v3958
  %v3960 = vpop.f32.mrf.mxu0
  %3961 = vdwg.mxu0
  %3962 = vmatpush.bf16.msra.mxu0 0
  %3963 = vmatpush.bf16.msra.mxu0 0
  %3964 = vmatpush.bf16.msra.mxu0 0
  %3965 = vmatpush.bf16.msra.mxu0 0
  %3966 = vmatpush.bf16.msra.mxu0 0
  %3967 = vmatpush.bf16.msra.mxu0 0
  %3968 = vmatpush.bf16.msra.mxu0 0
  %3969 = vmatpush.bf16.msra.mxu0 %v3857
  %3970 = vmatmul.bf16.gmra.mxu0 %v3833
  %v3971 = vpop.f32.mrf.mxu0
  %v3972 = vadd.f32 0.0, %v3971
  %v3973 = vpop.f32.mrf.mxu0
  %3974 = vdwg.mxu0
  %3975 = vmatpush.bf16.msra.mxu0 0
  %3976 = vmatpush.bf16.msra.mxu0 0
  %3977 = vmatpush.bf16.msra.mxu0 0
  %3978 = vmatpush.bf16.msra.mxu0 0
  %3979 = vmatpush.bf16.msra.mxu0 0
  %3980 = vmatpush.bf16.msra.mxu0 0
  %3981 = vmatpush.bf16.msra.mxu0 0
  %3982 = vmatpush.bf16.msra.mxu0 %v3860
  %3983 = vmatmul.bf16.gmra.mxu0 %v3833
  %v3984 = vpop.f32.mrf.mxu0
  %v3985 = vadd.f32 0.0, %v3984
  %v3986 = vpop.f32.mrf.mxu0
  %3987 = vdwg.mxu0
  %3988 = vmatpush.bf16.msra.mxu0 0
  %3989 = vmatpush.bf16.msra.mxu0 0
  %3990 = vmatpush.bf16.msra.mxu0 0
  %3991 = vmatpush.bf16.msra.mxu0 0
  %3992 = vmatpush.bf16.msra.mxu0 0
  %3993 = vmatpush.bf16.msra.mxu0 0
  %3994 = vmatpush.bf16.msra.mxu0 0
  %3995 = vmatpush.bf16.msra.mxu0 %v3863
  %3996 = vmatmul.bf16.gmra.mxu0 %v3833
  %v3997 = vpop.f32.mrf.mxu0
  %v3998 = vadd.f32 0.0, %v3997
  %v3999 = vpop.f32.mrf.mxu0
  %4000 = vdwg.mxu0
  %4001 = vmatpush.bf16.msra.mxu0 0
  %4002 = vmatpush.bf16.msra.mxu0 0
  %4003 = vmatpush.bf16.msra.mxu0 0
  %4004 = vmatpush.bf16.msra.mxu0 0
  %4005 = vmatpush.bf16.msra.mxu0 0
  %4006 = vmatpush.bf16.msra.mxu0 0
  %4007 = vmatpush.bf16.msra.mxu0 0
  %4008 = vmatpush.bf16.msra.mxu0 %v3866
  %4009 = vmatmul.bf16.gmra.mxu0 %v3833
  %v4010 = vpop.f32.mrf.mxu0
  %v4011 = vadd.f32 0.0, %v4010
  %v4012 = vpop.f32.mrf.mxu0
  %4013 = vdwg.mxu0
  %4014 = vmatpush.bf16.msra.mxu0 0
  %4015 = vmatpush.bf16.msra.mxu0 0
  %4016 = vmatpush.bf16.msra.mxu0 0
  %4017 = vmatpush.bf16.msra.mxu0 0
  %4018 = vmatpush.bf16.msra.mxu0 0
  %4019 = vmatpush.bf16.msra.mxu0 0
  %4020 = vmatpush.bf16.msra.mxu0 0
  %4021 = vmatpush.bf16.msra.mxu0 %v3869
  %4022 = vmatmul.bf16.gmra.mxu0 %v3833
  %v4023 = vpop.f32.mrf.mxu0
  %v4024 = vadd.f32 0.0, %v4023
  %v4025 = vpop.f32.mrf.mxu0
  %4026 = vdwg.mxu0
  %v4039 = vrot.slane %v3894, 6
  %v4040 = vrot.slane %v3907, 4
  %v4041 = vrot.slane %v3920, 2
  %v4042 = vrot.slane %v3946, 6
  %v4043 = vrot.slane %v3959, 4
  %v4044 = vrot.slane %v3972, 2
  %v4045 = vrot.slane %v3998, 6
  %v4046 = vrot.slane %v4011, 4
  %v4047 = vrot.slane %v4024, 2
  %v4048 = vsel %vm1250, %v3881, %v4039
  %v4049 = vsel %vm1252, %v4040, %v4041
  %v4050 = vsel %vm1254, %v4048, %v4049
  %v4051 = vsel %vm1250, %v3933, %v4042
  %v4052 = vsel %vm1252, %v4043, %v4044
  %v4053 = vsel %vm1254, %v4051, %v4052
  %v4054 = vsel %vm1250, %v3985, %v4045
  %v4055 = vsel %vm1252, %v4046, %v4047
  %v4056 = vsel %vm1254, %v4054, %v4055
  %v4060 = vadd.f32 %v3787, %v4050
  %v4061 = vadd.f32 %v3788, %v4053
  %v4062 = vadd.f32 %v3789, %v4056
  %4063 = vst [vmem:[#allocation3] sm:$0xff] %v4060
  %4064 = vst [vmem:[#allocation3 + $0x8] sm:$0xff] %v4061
  %4065 = vst.msk [vmem:[#allocation3 + $0x10] sm:$0xff] %vm1274, %v4062
  %v4066 = vld [vmem:[#allocation3] sm:$0xff]
  %v4067 = vld [vmem:[#allocation3 + $0x8] sm:$0xff]
  %v4068 = vld [vmem:[#allocation3 + $0x10] sm:$0xff]
  %s4069 = sadd.s32 %s991, 11
  %s4070 = smul.u32 %s4069, 2
  %s4071 = scalar_lea.vmem [#allocation2], %s4070
  %v4072 = vld [vmem:[%s4071] sm:$0x3]
  %v4073 = vpack.c.bf16 %v4072, %v4072
  %s4074 = scalar_lea.vmem %s10, 528
  %v4075 = vld [vmem:[%s4074] sm:$0x77]
  %v4076 = vld [vmem:[%s4074 + $0x8] sm:$0x77]
  %v4077 = vld [vmem:[%s4074 + $0x10] sm:$0x77]
  %v4078 = vld [vmem:[%s4074 + $0x18] sm:$0x77]
  %v4079 = vld [vmem:[%s4074 + $0x20] sm:$0x77]
  %v4080 = vld [vmem:[%s4074 + $0x28] sm:$0x77]
  %v4087 = vunpack.c.l.b16 %v4075
  %v4088 = vunpack.c.h.b16 %v4075
  %v4089 = vunpack.c.l.b16 %v4076
  %v4090 = vunpack.c.h.b16 %v4076
  %v4091 = vunpack.c.l.b16 %v4077
  %v4092 = vunpack.c.h.b16 %v4077
  %v4093 = vunpack.c.l.b16 %v4078
  %v4094 = vunpack.c.h.b16 %v4078
  %v4095 = vunpack.c.l.b16 %v4079
  %v4096 = vunpack.c.h.b16 %v4079
  %v4097 = vunpack.c.l.b16 %v4080
  %v4098 = vunpack.c.h.b16 %v4080
  %v4099 = vpack.c.b16 %v4087, %v4087
  %v4100 = vpack.c.b16 %v4088, %v4088
  %v4101 = vpack.c.b16 %v4089, %v4089
  %v4102 = vpack.c.b16 %v4090, %v4090
  %v4103 = vpack.c.b16 %v4091, %v4091
  %v4104 = vpack.c.b16 %v4092, %v4092
  %v4105 = vpack.c.b16 %v4093, %v4093
  %v4106 = vpack.c.b16 %v4094, %v4094
  %v4107 = vpack.c.b16 %v4095, %v4095
  %v4108 = vpack.c.b16 %v4096, %v4096
  %v4109 = vpack.c.b16 %v4097, %v4097
  %v4110 = vpack.c.b16 %v4098, %v4098
  %v4112 = vsel %vm1032, %v4073, 0
  %v4115 = vsel %vm1036, %v4099, 0
  %v4118 = vsel %vm1036, %v4100, 0
  %v4121 = vsel %vm1036, %v4101, 0
  %v4124 = vsel %vm1036, %v4102, 0
  %v4127 = vsel %vm1036, %v4103, 0
  %v4130 = vsel %vm1036, %v4104, 0
  %v4133 = vsel %vm1036, %v4105, 0
  %v4136 = vsel %vm1036, %v4106, 0
  %v4139 = vsel %vm1036, %v4107, 0
  %v4142 = vsel %vm1036, %v4108, 0
  %v4145 = vsel %vm1036, %v4109, 0
  %v4148 = vsel %vm1036, %v4110, 0
  %4150 = vmatpush.bf16.msra.mxu0 0
  %4151 = vmatpush.bf16.msra.mxu0 0
  %4152 = vmatpush.bf16.msra.mxu0 0
  %4153 = vmatpush.bf16.msra.mxu0 0
  %4154 = vmatpush.bf16.msra.mxu0 0
  %4155 = vmatpush.bf16.msra.mxu0 0
  %4156 = vmatpush.bf16.msra.mxu0 0
  %4157 = vmatpush.bf16.msra.mxu0 %v4115
  %4158 = vmatmul.bf16.gmra.mxu0 %v4112
  %v4159 = vpop.f32.mrf.mxu0
  %v4160 = vadd.f32 0.0, %v4159
  %v4161 = vpop.f32.mrf.mxu0
  %4162 = vdwg.mxu0
  %4163 = vmatpush.bf16.msra.mxu0 0
  %4164 = vmatpush.bf16.msra.mxu0 0
  %4165 = vmatpush.bf16.msra.mxu0 0
  %4166 = vmatpush.bf16.msra.mxu0 0
  %4167 = vmatpush.bf16.msra.mxu0 0
  %4168 = vmatpush.bf16.msra.mxu0 0
  %4169 = vmatpush.bf16.msra.mxu0 0
  %4170 = vmatpush.bf16.msra.mxu0 %v4118
  %4171 = vmatmul.bf16.gmra.mxu0 %v4112
  %v4172 = vpop.f32.mrf.mxu0
  %v4173 = vadd.f32 0.0, %v4172
  %v4174 = vpop.f32.mrf.mxu0
  %4175 = vdwg.mxu0
  %4176 = vmatpush.bf16.msra.mxu0 0
  %4177 = vmatpush.bf16.msra.mxu0 0
  %4178 = vmatpush.bf16.msra.mxu0 0
  %4179 = vmatpush.bf16.msra.mxu0 0
  %4180 = vmatpush.bf16.msra.mxu0 0
  %4181 = vmatpush.bf16.msra.mxu0 0
  %4182 = vmatpush.bf16.msra.mxu0 0
  %4183 = vmatpush.bf16.msra.mxu0 %v4121
  %4184 = vmatmul.bf16.gmra.mxu0 %v4112
  %v4185 = vpop.f32.mrf.mxu0
  %v4186 = vadd.f32 0.0, %v4185
  %v4187 = vpop.f32.mrf.mxu0
  %4188 = vdwg.mxu0
  %4189 = vmatpush.bf16.msra.mxu0 0
  %4190 = vmatpush.bf16.msra.mxu0 0
  %4191 = vmatpush.bf16.msra.mxu0 0
  %4192 = vmatpush.bf16.msra.mxu0 0
  %4193 = vmatpush.bf16.msra.mxu0 0
  %4194 = vmatpush.bf16.msra.mxu0 0
  %4195 = vmatpush.bf16.msra.mxu0 0
  %4196 = vmatpush.bf16.msra.mxu0 %v4124
  %4197 = vmatmul.bf16.gmra.mxu0 %v4112
  %v4198 = vpop.f32.mrf.mxu0
  %v4199 = vadd.f32 0.0, %v4198
  %v4200 = vpop.f32.mrf.mxu0
  %4201 = vdwg.mxu0
  %4202 = vmatpush.bf16.msra.mxu0 0
  %4203 = vmatpush.bf16.msra.mxu0 0
  %4204 = vmatpush.bf16.msra.mxu0 0
  %4205 = vmatpush.bf16.msra.mxu0 0
  %4206 = vmatpush.bf16.msra.mxu0 0
  %4207 = vmatpush.bf16.msra.mxu0 0
  %4208 = vmatpush.bf16.msra.mxu0 0
  %4209 = vmatpush.bf16.msra.mxu0 %v4127
  %4210 = vmatmul.bf16.gmra.mxu0 %v4112
  %v4211 = vpop.f32.mrf.mxu0
  %v4212 = vadd.f32 0.0, %v4211
  %v4213 = vpop.f32.mrf.mxu0
  %4214 = vdwg.mxu0
  %4215 = vmatpush.bf16.msra.mxu0 0
  %4216 = vmatpush.bf16.msra.mxu0 0
  %4217 = vmatpush.bf16.msra.mxu0 0
  %4218 = vmatpush.bf16.msra.mxu0 0
  %4219 = vmatpush.bf16.msra.mxu0 0
  %4220 = vmatpush.bf16.msra.mxu0 0
  %4221 = vmatpush.bf16.msra.mxu0 0
  %4222 = vmatpush.bf16.msra.mxu0 %v4130
  %4223 = vmatmul.bf16.gmra.mxu0 %v4112
  %v4224 = vpop.f32.mrf.mxu0
  %v4225 = vadd.f32 0.0, %v4224
  %v4226 = vpop.f32.mrf.mxu0
  %4227 = vdwg.mxu0
  %4228 = vmatpush.bf16.msra.mxu0 0
  %4229 = vmatpush.bf16.msra.mxu0 0
  %4230 = vmatpush.bf16.msra.mxu0 0
  %4231 = vmatpush.bf16.msra.mxu0 0
  %4232 = vmatpush.bf16.msra.mxu0 0
  %4233 = vmatpush.bf16.msra.mxu0 0
  %4234 = vmatpush.bf16.msra.mxu0 0
  %4235 = vmatpush.bf16.msra.mxu0 %v4133
  %4236 = vmatmul.bf16.gmra.mxu0 %v4112
  %v4237 = vpop.f32.mrf.mxu0
  %v4238 = vadd.f32 0.0, %v4237
  %v4239 = vpop.f32.mrf.mxu0
  %4240 = vdwg.mxu0
  %4241 = vmatpush.bf16.msra.mxu0 0
  %4242 = vmatpush.bf16.msra.mxu0 0
  %4243 = vmatpush.bf16.msra.mxu0 0
  %4244 = vmatpush.bf16.msra.mxu0 0
  %4245 = vmatpush.bf16.msra.mxu0 0
  %4246 = vmatpush.bf16.msra.mxu0 0
  %4247 = vmatpush.bf16.msra.mxu0 0
  %4248 = vmatpush.bf16.msra.mxu0 %v4136
  %4249 = vmatmul.bf16.gmra.mxu0 %v4112
  %v4250 = vpop.f32.mrf.mxu0
  %v4251 = vadd.f32 0.0, %v4250
  %v4252 = vpop.f32.mrf.mxu0
  %4253 = vdwg.mxu0
  %4254 = vmatpush.bf16.msra.mxu0 0
  %4255 = vmatpush.bf16.msra.mxu0 0
  %4256 = vmatpush.bf16.msra.mxu0 0
  %4257 = vmatpush.bf16.msra.mxu0 0
  %4258 = vmatpush.bf16.msra.mxu0 0
  %4259 = vmatpush.bf16.msra.mxu0 0
  %4260 = vmatpush.bf16.msra.mxu0 0
  %4261 = vmatpush.bf16.msra.mxu0 %v4139
  %4262 = vmatmul.bf16.gmra.mxu0 %v4112
  %v4263 = vpop.f32.mrf.mxu0
  %v4264 = vadd.f32 0.0, %v4263
  %v4265 = vpop.f32.mrf.mxu0
  %4266 = vdwg.mxu0
  %4267 = vmatpush.bf16.msra.mxu0 0
  %4268 = vmatpush.bf16.msra.mxu0 0
  %4269 = vmatpush.bf16.msra.mxu0 0
  %4270 = vmatpush.bf16.msra.mxu0 0
  %4271 = vmatpush.bf16.msra.mxu0 0
  %4272 = vmatpush.bf16.msra.mxu0 0
  %4273 = vmatpush.bf16.msra.mxu0 0
  %4274 = vmatpush.bf16.msra.mxu0 %v4142
  %4275 = vmatmul.bf16.gmra.mxu0 %v4112
  %v4276 = vpop.f32.mrf.mxu0
  %v4277 = vadd.f32 0.0, %v4276
  %v4278 = vpop.f32.mrf.mxu0
  %4279 = vdwg.mxu0
  %4280 = vmatpush.bf16.msra.mxu0 0
  %4281 = vmatpush.bf16.msra.mxu0 0
  %4282 = vmatpush.bf16.msra.mxu0 0
  %4283 = vmatpush.bf16.msra.mxu0 0
  %4284 = vmatpush.bf16.msra.mxu0 0
  %4285 = vmatpush.bf16.msra.mxu0 0
  %4286 = vmatpush.bf16.msra.mxu0 0
  %4287 = vmatpush.bf16.msra.mxu0 %v4145
  %4288 = vmatmul.bf16.gmra.mxu0 %v4112
  %v4289 = vpop.f32.mrf.mxu0
  %v4290 = vadd.f32 0.0, %v4289
  %v4291 = vpop.f32.mrf.mxu0
  %4292 = vdwg.mxu0
  %4293 = vmatpush.bf16.msra.mxu0 0
  %4294 = vmatpush.bf16.msra.mxu0 0
  %4295 = vmatpush.bf16.msra.mxu0 0
  %4296 = vmatpush.bf16.msra.mxu0 0
  %4297 = vmatpush.bf16.msra.mxu0 0
  %4298 = vmatpush.bf16.msra.mxu0 0
  %4299 = vmatpush.bf16.msra.mxu0 0
  %4300 = vmatpush.bf16.msra.mxu0 %v4148
  %4301 = vmatmul.bf16.gmra.mxu0 %v4112
  %v4302 = vpop.f32.mrf.mxu0
  %v4303 = vadd.f32 0.0, %v4302
  %v4304 = vpop.f32.mrf.mxu0
  %4305 = vdwg.mxu0
  %v4318 = vrot.slane %v4173, 6
  %v4319 = vrot.slane %v4186, 4
  %v4320 = vrot.slane %v4199, 2
  %v4321 = vrot.slane %v4225, 6
  %v4322 = vrot.slane %v4238, 4
  %v4323 = vrot.slane %v4251, 2
  %v4324 = vrot.slane %v4277, 6
  %v4325 = vrot.slane %v4290, 4
  %v4326 = vrot.slane %v4303, 2
  %v4327 = vsel %vm1250, %v4160, %v4318
  %v4328 = vsel %vm1252, %v4319, %v4320
  %v4329 = vsel %vm1254, %v4327, %v4328
  %v4330 = vsel %vm1250, %v4212, %v4321
  %v4331 = vsel %vm1252, %v4322, %v4323
  %v4332 = vsel %vm1254, %v4330, %v4331
  %v4333 = vsel %vm1250, %v4264, %v4324
  %v4334 = vsel %vm1252, %v4325, %v4326
  %v4335 = vsel %vm1254, %v4333, %v4334
  %v4339 = vadd.f32 %v4066, %v4329
  %v4340 = vadd.f32 %v4067, %v4332
  %v4341 = vadd.f32 %v4068, %v4335
  %4342 = vst [vmem:[#allocation3] sm:$0xff] %v4339
  %4343 = vst [vmem:[#allocation3 + $0x8] sm:$0xff] %v4340
  %4344 = vst.msk [vmem:[#allocation3 + $0x10] sm:$0xff] %vm1274, %v4341
  %v4345 = vld [vmem:[#allocation3] sm:$0xff]
  %v4346 = vld [vmem:[#allocation3 + $0x8] sm:$0xff]
  %v4347 = vld [vmem:[#allocation3 + $0x10] sm:$0xff]
  %s4348 = sadd.s32 %s991, 12
  %s4349 = smul.u32 %s4348, 2
  %s4350 = scalar_lea.vmem [#allocation2], %s4349
  %v4351 = vld [vmem:[%s4350] sm:$0x3]
  %v4352 = vpack.c.bf16 %v4351, %v4351
  %s4353 = scalar_lea.vmem %s10, 576
  %v4354 = vld [vmem:[%s4353] sm:$0x77]
  %v4355 = vld [vmem:[%s4353 + $0x8] sm:$0x77]
  %v4356 = vld [vmem:[%s4353 + $0x10] sm:$0x77]
  %v4357 = vld [vmem:[%s4353 + $0x18] sm:$0x77]
  %v4358 = vld [vmem:[%s4353 + $0x20] sm:$0x77]
  %v4359 = vld [vmem:[%s4353 + $0x28] sm:$0x77]
  %v4366 = vunpack.c.l.b16 %v4354
  %v4367 = vunpack.c.h.b16 %v4354
  %v4368 = vunpack.c.l.b16 %v4355
  %v4369 = vunpack.c.h.b16 %v4355
  %v4370 = vunpack.c.l.b16 %v4356
  %v4371 = vunpack.c.h.b16 %v4356
  %v4372 = vunpack.c.l.b16 %v4357
  %v4373 = vunpack.c.h.b16 %v4357
  %v4374 = vunpack.c.l.b16 %v4358
  %v4375 = vunpack.c.h.b16 %v4358
  %v4376 = vunpack.c.l.b16 %v4359
  %v4377 = vunpack.c.h.b16 %v4359
  %v4378 = vpack.c.b16 %v4366, %v4366
  %v4379 = vpack.c.b16 %v4367, %v4367
  %v4380 = vpack.c.b16 %v4368, %v4368
  %v4381 = vpack.c.b16 %v4369, %v4369
  %v4382 = vpack.c.b16 %v4370, %v4370
  %v4383 = vpack.c.b16 %v4371, %v4371
  %v4384 = vpack.c.b16 %v4372, %v4372
  %v4385 = vpack.c.b16 %v4373, %v4373
  %v4386 = vpack.c.b16 %v4374, %v4374
  %v4387 = vpack.c.b16 %v4375, %v4375
  %v4388 = vpack.c.b16 %v4376, %v4376
  %v4389 = vpack.c.b16 %v4377, %v4377
  %v4391 = vsel %vm1032, %v4352, 0
  %v4394 = vsel %vm1036, %v4378, 0
  %v4397 = vsel %vm1036, %v4379, 0
  %v4400 = vsel %vm1036, %v4380, 0
  %v4403 = vsel %vm1036, %v4381, 0
  %v4406 = vsel %vm1036, %v4382, 0
  %v4409 = vsel %vm1036, %v4383, 0
  %v4412 = vsel %vm1036, %v4384, 0
  %v4415 = vsel %vm1036, %v4385, 0
  %v4418 = vsel %vm1036, %v4386, 0
  %v4421 = vsel %vm1036, %v4387, 0
  %v4424 = vsel %vm1036, %v4388, 0
  %v4427 = vsel %vm1036, %v4389, 0
  %4429 = vmatpush.bf16.msra.mxu0 0
  %4430 = vmatpush.bf16.msra.mxu0 0
  %4431 = vmatpush.bf16.msra.mxu0 0
  %4432 = vmatpush.bf16.msra.mxu0 0
  %4433 = vmatpush.bf16.msra.mxu0 0
  %4434 = vmatpush.bf16.msra.mxu0 0
  %4435 = vmatpush.bf16.msra.mxu0 0
  %4436 = vmatpush.bf16.msra.mxu0 %v4394
  %4437 = vmatmul.bf16.gmra.mxu0 %v4391
  %v4438 = vpop.f32.mrf.mxu0
  %v4439 = vadd.f32 0.0, %v4438
  %v4440 = vpop.f32.mrf.mxu0
  %4441 = vdwg.mxu0
  %4442 = vmatpush.bf16.msra.mxu0 0
  %4443 = vmatpush.bf16.msra.mxu0 0
  %4444 = vmatpush.bf16.msra.mxu0 0
  %4445 = vmatpush.bf16.msra.mxu0 0
  %4446 = vmatpush.bf16.msra.mxu0 0
  %4447 = vmatpush.bf16.msra.mxu0 0
  %4448 = vmatpush.bf16.msra.mxu0 0
  %4449 = vmatpush.bf16.msra.mxu0 %v4397
  %4450 = vmatmul.bf16.gmra.mxu0 %v4391
  %v4451 = vpop.f32.mrf.mxu0
  %v4452 = vadd.f32 0.0, %v4451
  %v4453 = vpop.f32.mrf.mxu0
  %4454 = vdwg.mxu0
  %4455 = vmatpush.bf16.msra.mxu0 0
  %4456 = vmatpush.bf16.msra.mxu0 0
  %4457 = vmatpush.bf16.msra.mxu0 0
  %4458 = vmatpush.bf16.msra.mxu0 0
  %4459 = vmatpush.bf16.msra.mxu0 0
  %4460 = vmatpush.bf16.msra.mxu0 0
  %4461 = vmatpush.bf16.msra.mxu0 0
  %4462 = vmatpush.bf16.msra.mxu0 %v4400
  %4463 = vmatmul.bf16.gmra.mxu0 %v4391
  %v4464 = vpop.f32.mrf.mxu0
  %v4465 = vadd.f32 0.0, %v4464
  %v4466 = vpop.f32.mrf.mxu0
  %4467 = vdwg.mxu0
  %4468 = vmatpush.bf16.msra.mxu0 0
  %4469 = vmatpush.bf16.msra.mxu0 0
  %4470 = vmatpush.bf16.msra.mxu0 0
  %4471 = vmatpush.bf16.msra.mxu0 0
  %4472 = vmatpush.bf16.msra.mxu0 0
  %4473 = vmatpush.bf16.msra.mxu0 0
  %4474 = vmatpush.bf16.msra.mxu0 0
  %4475 = vmatpush.bf16.msra.mxu0 %v4403
  %4476 = vmatmul.bf16.gmra.mxu0 %v4391
  %v4477 = vpop.f32.mrf.mxu0
  %v4478 = vadd.f32 0.0, %v4477
  %v4479 = vpop.f32.mrf.mxu0
  %4480 = vdwg.mxu0
  %4481 = vmatpush.bf16.msra.mxu0 0
  %4482 = vmatpush.bf16.msra.mxu0 0
  %4483 = vmatpush.bf16.msra.mxu0 0
  %4484 = vmatpush.bf16.msra.mxu0 0
  %4485 = vmatpush.bf16.msra.mxu0 0
  %4486 = vmatpush.bf16.msra.mxu0 0
  %4487 = vmatpush.bf16.msra.mxu0 0
  %4488 = vmatpush.bf16.msra.mxu0 %v4406
  %4489 = vmatmul.bf16.gmra.mxu0 %v4391
  %v4490 = vpop.f32.mrf.mxu0
  %v4491 = vadd.f32 0.0, %v4490
  %v4492 = vpop.f32.mrf.mxu0
  %4493 = vdwg.mxu0
  %4494 = vmatpush.bf16.msra.mxu0 0
  %4495 = vmatpush.bf16.msra.mxu0 0
  %4496 = vmatpush.bf16.msra.mxu0 0
  %4497 = vmatpush.bf16.msra.mxu0 0
  %4498 = vmatpush.bf16.msra.mxu0 0
  %4499 = vmatpush.bf16.msra.mxu0 0
  %4500 = vmatpush.bf16.msra.mxu0 0
  %4501 = vmatpush.bf16.msra.mxu0 %v4409
  %4502 = vmatmul.bf16.gmra.mxu0 %v4391
  %v4503 = vpop.f32.mrf.mxu0
  %v4504 = vadd.f32 0.0, %v4503
  %v4505 = vpop.f32.mrf.mxu0
  %4506 = vdwg.mxu0
  %4507 = vmatpush.bf16.msra.mxu0 0
  %4508 = vmatpush.bf16.msra.mxu0 0
  %4509 = vmatpush.bf16.msra.mxu0 0
  %4510 = vmatpush.bf16.msra.mxu0 0
  %4511 = vmatpush.bf16.msra.mxu0 0
  %4512 = vmatpush.bf16.msra.mxu0 0
  %4513 = vmatpush.bf16.msra.mxu0 0
  %4514 = vmatpush.bf16.msra.mxu0 %v4412
  %4515 = vmatmul.bf16.gmra.mxu0 %v4391
  %v4516 = vpop.f32.mrf.mxu0
  %v4517 = vadd.f32 0.0, %v4516
  %v4518 = vpop.f32.mrf.mxu0
  %4519 = vdwg.mxu0
  %4520 = vmatpush.bf16.msra.mxu0 0
  %4521 = vmatpush.bf16.msra.mxu0 0
  %4522 = vmatpush.bf16.msra.mxu0 0
  %4523 = vmatpush.bf16.msra.mxu0 0
  %4524 = vmatpush.bf16.msra.mxu0 0
  %4525 = vmatpush.bf16.msra.mxu0 0
  %4526 = vmatpush.bf16.msra.mxu0 0
  %4527 = vmatpush.bf16.msra.mxu0 %v4415
  %4528 = vmatmul.bf16.gmra.mxu0 %v4391
  %v4529 = vpop.f32.mrf.mxu0
  %v4530 = vadd.f32 0.0, %v4529
  %v4531 = vpop.f32.mrf.mxu0
  %4532 = vdwg.mxu0
  %4533 = vmatpush.bf16.msra.mxu0 0
  %4534 = vmatpush.bf16.msra.mxu0 0
  %4535 = vmatpush.bf16.msra.mxu0 0
  %4536 = vmatpush.bf16.msra.mxu0 0
  %4537 = vmatpush.bf16.msra.mxu0 0
  %4538 = vmatpush.bf16.msra.mxu0 0
  %4539 = vmatpush.bf16.msra.mxu0 0
  %4540 = vmatpush.bf16.msra.mxu0 %v4418
  %4541 = vmatmul.bf16.gmra.mxu0 %v4391
  %v4542 = vpop.f32.mrf.mxu0
  %v4543 = vadd.f32 0.0, %v4542
  %v4544 = vpop.f32.mrf.mxu0
  %4545 = vdwg.mxu0
  %4546 = vmatpush.bf16.msra.mxu0 0
  %4547 = vmatpush.bf16.msra.mxu0 0
  %4548 = vmatpush.bf16.msra.mxu0 0
  %4549 = vmatpush.bf16.msra.mxu0 0
  %4550 = vmatpush.bf16.msra.mxu0 0
  %4551 = vmatpush.bf16.msra.mxu0 0
  %4552 = vmatpush.bf16.msra.mxu0 0
  %4553 = vmatpush.bf16.msra.mxu0 %v4421
  %4554 = vmatmul.bf16.gmra.mxu0 %v4391
  %v4555 = vpop.f32.mrf.mxu0
  %v4556 = vadd.f32 0.0, %v4555
  %v4557 = vpop.f32.mrf.mxu0
  %4558 = vdwg.mxu0
  %4559 = vmatpush.bf16.msra.mxu0 0
  %4560 = vmatpush.bf16.msra.mxu0 0
  %4561 = vmatpush.bf16.msra.mxu0 0
  %4562 = vmatpush.bf16.msra.mxu0 0
  %4563 = vmatpush.bf16.msra.mxu0 0
  %4564 = vmatpush.bf16.msra.mxu0 0
  %4565 = vmatpush.bf16.msra.mxu0 0
  %4566 = vmatpush.bf16.msra.mxu0 %v4424
  %4567 = vmatmul.bf16.gmra.mxu0 %v4391
  %v4568 = vpop.f32.mrf.mxu0
  %v4569 = vadd.f32 0.0, %v4568
  %v4570 = vpop.f32.mrf.mxu0
  %4571 = vdwg.mxu0
  %4572 = vmatpush.bf16.msra.mxu0 0
  %4573 = vmatpush.bf16.msra.mxu0 0
  %4574 = vmatpush.bf16.msra.mxu0 0
  %4575 = vmatpush.bf16.msra.mxu0 0
  %4576 = vmatpush.bf16.msra.mxu0 0
  %4577 = vmatpush.bf16.msra.mxu0 0
  %4578 = vmatpush.bf16.msra.mxu0 0
  %4579 = vmatpush.bf16.msra.mxu0 %v4427
  %4580 = vmatmul.bf16.gmra.mxu0 %v4391
  %v4581 = vpop.f32.mrf.mxu0
  %v4582 = vadd.f32 0.0, %v4581
  %v4583 = vpop.f32.mrf.mxu0
  %4584 = vdwg.mxu0
  %v4597 = vrot.slane %v4452, 6
  %v4598 = vrot.slane %v4465, 4
  %v4599 = vrot.slane %v4478, 2
  %v4600 = vrot.slane %v4504, 6
  %v4601 = vrot.slane %v4517, 4
  %v4602 = vrot.slane %v4530, 2
  %v4603 = vrot.slane %v4556, 6
  %v4604 = vrot.slane %v4569, 4
  %v4605 = vrot.slane %v4582, 2
  %v4606 = vsel %vm1250, %v4439, %v4597
  %v4607 = vsel %vm1252, %v4598, %v4599
  %v4608 = vsel %vm1254, %v4606, %v4607
  %v4609 = vsel %vm1250, %v4491, %v4600
  %v4610 = vsel %vm1252, %v4601, %v4602
  %v4611 = vsel %vm1254, %v4609, %v4610
  %v4612 = vsel %vm1250, %v4543, %v4603
  %v4613 = vsel %vm1252, %v4604, %v4605
  %v4614 = vsel %vm1254, %v4612, %v4613
  %v4618 = vadd.f32 %v4345, %v4608
  %v4619 = vadd.f32 %v4346, %v4611
  %v4620 = vadd.f32 %v4347, %v4614
  %4621 = vst [vmem:[#allocation3] sm:$0xff] %v4618
  %4622 = vst [vmem:[#allocation3 + $0x8] sm:$0xff] %v4619
  %4623 = vst.msk [vmem:[#allocation3 + $0x10] sm:$0xff] %vm1274, %v4620
  %v4624 = vld [vmem:[#allocation3] sm:$0xff]
  %v4625 = vld [vmem:[#allocation3 + $0x8] sm:$0xff]
  %v4626 = vld [vmem:[#allocation3 + $0x10] sm:$0xff]
  %s4627 = sadd.s32 %s991, 13
  %s4628 = smul.u32 %s4627, 2
  %s4629 = scalar_lea.vmem [#allocation2], %s4628
  %v4630 = vld [vmem:[%s4629] sm:$0x3]
  %v4631 = vpack.c.bf16 %v4630, %v4630
  %s4632 = scalar_lea.vmem %s10, 624
  %v4633 = vld [vmem:[%s4632] sm:$0x77]
  %v4634 = vld [vmem:[%s4632 + $0x8] sm:$0x77]
  %v4635 = vld [vmem:[%s4632 + $0x10] sm:$0x77]
  %v4636 = vld [vmem:[%s4632 + $0x18] sm:$0x77]
  %v4637 = vld [vmem:[%s4632 + $0x20] sm:$0x77]
  %v4638 = vld [vmem:[%s4632 + $0x28] sm:$0x77]
  %v4645 = vunpack.c.l.b16 %v4633
  %v4646 = vunpack.c.h.b16 %v4633
  %v4647 = vunpack.c.l.b16 %v4634
  %v4648 = vunpack.c.h.b16 %v4634
  %v4649 = vunpack.c.l.b16 %v4635
  %v4650 = vunpack.c.h.b16 %v4635
  %v4651 = vunpack.c.l.b16 %v4636
  %v4652 = vunpack.c.h.b16 %v4636
  %v4653 = vunpack.c.l.b16 %v4637
  %v4654 = vunpack.c.h.b16 %v4637
  %v4655 = vunpack.c.l.b16 %v4638
  %v4656 = vunpack.c.h.b16 %v4638
  %v4657 = vpack.c.b16 %v4645, %v4645
  %v4658 = vpack.c.b16 %v4646, %v4646
  %v4659 = vpack.c.b16 %v4647, %v4647
  %v4660 = vpack.c.b16 %v4648, %v4648
  %v4661 = vpack.c.b16 %v4649, %v4649
  %v4662 = vpack.c.b16 %v4650, %v4650
  %v4663 = vpack.c.b16 %v4651, %v4651
  %v4664 = vpack.c.b16 %v4652, %v4652
  %v4665 = vpack.c.b16 %v4653, %v4653
  %v4666 = vpack.c.b16 %v4654, %v4654
  %v4667 = vpack.c.b16 %v4655, %v4655
  %v4668 = vpack.c.b16 %v4656, %v4656
  %v4670 = vsel %vm1032, %v4631, 0
  %v4673 = vsel %vm1036, %v4657, 0
  %v4676 = vsel %vm1036, %v4658, 0
  %v4679 = vsel %vm1036, %v4659, 0
  %v4682 = vsel %vm1036, %v4660, 0
  %v4685 = vsel %vm1036, %v4661, 0
  %v4688 = vsel %vm1036, %v4662, 0
  %v4691 = vsel %vm1036, %v4663, 0
  %v4694 = vsel %vm1036, %v4664, 0
  %v4697 = vsel %vm1036, %v4665, 0
  %v4700 = vsel %vm1036, %v4666, 0
  %v4703 = vsel %vm1036, %v4667, 0
  %v4706 = vsel %vm1036, %v4668, 0
  %4708 = vmatpush.bf16.msra.mxu0 0
  %4709 = vmatpush.bf16.msra.mxu0 0
  %4710 = vmatpush.bf16.msra.mxu0 0
  %4711 = vmatpush.bf16.msra.mxu0 0
  %4712 = vmatpush.bf16.msra.mxu0 0
  %4713 = vmatpush.bf16.msra.mxu0 0
  %4714 = vmatpush.bf16.msra.mxu0 0
  %4715 = vmatpush.bf16.msra.mxu0 %v4673
  %4716 = vmatmul.bf16.gmra.mxu0 %v4670
  %v4717 = vpop.f32.mrf.mxu0
  %v4718 = vadd.f32 0.0, %v4717
  %v4719 = vpop.f32.mrf.mxu0
  %4720 = vdwg.mxu0
  %4721 = vmatpush.bf16.msra.mxu0 0
  %4722 = vmatpush.bf16.msra.mxu0 0
  %4723 = vmatpush.bf16.msra.mxu0 0
  %4724 = vmatpush.bf16.msra.mxu0 0
  %4725 = vmatpush.bf16.msra.mxu0 0
  %4726 = vmatpush.bf16.msra.mxu0 0
  %4727 = vmatpush.bf16.msra.mxu0 0
  %4728 = vmatpush.bf16.msra.mxu0 %v4676
  %4729 = vmatmul.bf16.gmra.mxu0 %v4670
  %v4730 = vpop.f32.mrf.mxu0
  %v4731 = vadd.f32 0.0, %v4730
  %v4732 = vpop.f32.mrf.mxu0
  %4733 = vdwg.mxu0
  %4734 = vmatpush.bf16.msra.mxu0 0
  %4735 = vmatpush.bf16.msra.mxu0 0
  %4736 = vmatpush.bf16.msra.mxu0 0
  %4737 = vmatpush.bf16.msra.mxu0 0
  %4738 = vmatpush.bf16.msra.mxu0 0
  %4739 = vmatpush.bf16.msra.mxu0 0
  %4740 = vmatpush.bf16.msra.mxu0 0
  %4741 = vmatpush.bf16.msra.mxu0 %v4679
  %4742 = vmatmul.bf16.gmra.mxu0 %v4670
  %v4743 = vpop.f32.mrf.mxu0
  %v4744 = vadd.f32 0.0, %v4743
  %v4745 = vpop.f32.mrf.mxu0
  %4746 = vdwg.mxu0
  %4747 = vmatpush.bf16.msra.mxu0 0
  %4748 = vmatpush.bf16.msra.mxu0 0
  %4749 = vmatpush.bf16.msra.mxu0 0
  %4750 = vmatpush.bf16.msra.mxu0 0
  %4751 = vmatpush.bf16.msra.mxu0 0
  %4752 = vmatpush.bf16.msra.mxu0 0
  %4753 = vmatpush.bf16.msra.mxu0 0
  %4754 = vmatpush.bf16.msra.mxu0 %v4682
  %4755 = vmatmul.bf16.gmra.mxu0 %v4670
  %v4756 = vpop.f32.mrf.mxu0
  %v4757 = vadd.f32 0.0, %v4756
  %v4758 = vpop.f32.mrf.mxu0
  %4759 = vdwg.mxu0
  %4760 = vmatpush.bf16.msra.mxu0 0
  %4761 = vmatpush.bf16.msra.mxu0 0
  %4762 = vmatpush.bf16.msra.mxu0 0
  %4763 = vmatpush.bf16.msra.mxu0 0
  %4764 = vmatpush.bf16.msra.mxu0 0
  %4765 = vmatpush.bf16.msra.mxu0 0
  %4766 = vmatpush.bf16.msra.mxu0 0
  %4767 = vmatpush.bf16.msra.mxu0 %v4685
  %4768 = vmatmul.bf16.gmra.mxu0 %v4670
  %v4769 = vpop.f32.mrf.mxu0
  %v4770 = vadd.f32 0.0, %v4769
  %v4771 = vpop.f32.mrf.mxu0
  %4772 = vdwg.mxu0
  %4773 = vmatpush.bf16.msra.mxu0 0
  %4774 = vmatpush.bf16.msra.mxu0 0
  %4775 = vmatpush.bf16.msra.mxu0 0
  %4776 = vmatpush.bf16.msra.mxu0 0
  %4777 = vmatpush.bf16.msra.mxu0 0
  %4778 = vmatpush.bf16.msra.mxu0 0
  %4779 = vmatpush.bf16.msra.mxu0 0
  %4780 = vmatpush.bf16.msra.mxu0 %v4688
  %4781 = vmatmul.bf16.gmra.mxu0 %v4670
  %v4782 = vpop.f32.mrf.mxu0
  %v4783 = vadd.f32 0.0, %v4782
  %v4784 = vpop.f32.mrf.mxu0
  %4785 = vdwg.mxu0
  %4786 = vmatpush.bf16.msra.mxu0 0
  %4787 = vmatpush.bf16.msra.mxu0 0
  %4788 = vmatpush.bf16.msra.mxu0 0
  %4789 = vmatpush.bf16.msra.mxu0 0
  %4790 = vmatpush.bf16.msra.mxu0 0
  %4791 = vmatpush.bf16.msra.mxu0 0
  %4792 = vmatpush.bf16.msra.mxu0 0
  %4793 = vmatpush.bf16.msra.mxu0 %v4691
  %4794 = vmatmul.bf16.gmra.mxu0 %v4670
  %v4795 = vpop.f32.mrf.mxu0
  %v4796 = vadd.f32 0.0, %v4795
  %v4797 = vpop.f32.mrf.mxu0
  %4798 = vdwg.mxu0
  %4799 = vmatpush.bf16.msra.mxu0 0
  %4800 = vmatpush.bf16.msra.mxu0 0
  %4801 = vmatpush.bf16.msra.mxu0 0
  %4802 = vmatpush.bf16.msra.mxu0 0
  %4803 = vmatpush.bf16.msra.mxu0 0
  %4804 = vmatpush.bf16.msra.mxu0 0
  %4805 = vmatpush.bf16.msra.mxu0 0
  %4806 = vmatpush.bf16.msra.mxu0 %v4694
  %4807 = vmatmul.bf16.gmra.mxu0 %v4670
  %v4808 = vpop.f32.mrf.mxu0
  %v4809 = vadd.f32 0.0, %v4808
  %v4810 = vpop.f32.mrf.mxu0
  %4811 = vdwg.mxu0
  %4812 = vmatpush.bf16.msra.mxu0 0
  %4813 = vmatpush.bf16.msra.mxu0 0
  %4814 = vmatpush.bf16.msra.mxu0 0
  %4815 = vmatpush.bf16.msra.mxu0 0
  %4816 = vmatpush.bf16.msra.mxu0 0
  %4817 = vmatpush.bf16.msra.mxu0 0
  %4818 = vmatpush.bf16.msra.mxu0 0
  %4819 = vmatpush.bf16.msra.mxu0 %v4697
  %4820 = vmatmul.bf16.gmra.mxu0 %v4670
  %v4821 = vpop.f32.mrf.mxu0
  %v4822 = vadd.f32 0.0, %v4821
  %v4823 = vpop.f32.mrf.mxu0
  %4824 = vdwg.mxu0
  %4825 = vmatpush.bf16.msra.mxu0 0
  %4826 = vmatpush.bf16.msra.mxu0 0
  %4827 = vmatpush.bf16.msra.mxu0 0
  %4828 = vmatpush.bf16.msra.mxu0 0
  %4829 = vmatpush.bf16.msra.mxu0 0
  %4830 = vmatpush.bf16.msra.mxu0 0
  %4831 = vmatpush.bf16.msra.mxu0 0
  %4832 = vmatpush.bf16.msra.mxu0 %v4700
  %4833 = vmatmul.bf16.gmra.mxu0 %v4670
  %v4834 = vpop.f32.mrf.mxu0
  %v4835 = vadd.f32 0.0, %v4834
  %v4836 = vpop.f32.mrf.mxu0
  %4837 = vdwg.mxu0
  %4838 = vmatpush.bf16.msra.mxu0 0
  %4839 = vmatpush.bf16.msra.mxu0 0
  %4840 = vmatpush.bf16.msra.mxu0 0
  %4841 = vmatpush.bf16.msra.mxu0 0
  %4842 = vmatpush.bf16.msra.mxu0 0
  %4843 = vmatpush.bf16.msra.mxu0 0
  %4844 = vmatpush.bf16.msra.mxu0 0
  %4845 = vmatpush.bf16.msra.mxu0 %v4703
  %4846 = vmatmul.bf16.gmra.mxu0 %v4670
  %v4847 = vpop.f32.mrf.mxu0
  %v4848 = vadd.f32 0.0, %v4847
  %v4849 = vpop.f32.mrf.mxu0
  %4850 = vdwg.mxu0
  %4851 = vmatpush.bf16.msra.mxu0 0
  %4852 = vmatpush.bf16.msra.mxu0 0
  %4853 = vmatpush.bf16.msra.mxu0 0
  %4854 = vmatpush.bf16.msra.mxu0 0
  %4855 = vmatpush.bf16.msra.mxu0 0
  %4856 = vmatpush.bf16.msra.mxu0 0
  %4857 = vmatpush.bf16.msra.mxu0 0
  %4858 = vmatpush.bf16.msra.mxu0 %v4706
  %4859 = vmatmul.bf16.gmra.mxu0 %v4670
  %v4860 = vpop.f32.mrf.mxu0
  %v4861 = vadd.f32 0.0, %v4860
  %v4862 = vpop.f32.mrf.mxu0
  %4863 = vdwg.mxu0
  %v4876 = vrot.slane %v4731, 6
  %v4877 = vrot.slane %v4744, 4
  %v4878 = vrot.slane %v4757, 2
  %v4879 = vrot.slane %v4783, 6
  %v4880 = vrot.slane %v4796, 4
  %v4881 = vrot.slane %v4809, 2
  %v4882 = vrot.slane %v4835, 6
  %v4883 = vrot.slane %v4848, 4
  %v4884 = vrot.slane %v4861, 2
  %v4885 = vsel %vm1250, %v4718, %v4876
  %v4886 = vsel %vm1252, %v4877, %v4878
  %v4887 = vsel %vm1254, %v4885, %v4886
  %v4888 = vsel %vm1250, %v4770, %v4879
  %v4889 = vsel %vm1252, %v4880, %v4881
  %v4890 = vsel %vm1254, %v4888, %v4889
  %v4891 = vsel %vm1250, %v4822, %v4882
  %v4892 = vsel %vm1252, %v4883, %v4884
  %v4893 = vsel %vm1254, %v4891, %v4892
  %v4897 = vadd.f32 %v4624, %v4887
  %v4898 = vadd.f32 %v4625, %v4890
  %v4899 = vadd.f32 %v4626, %v4893
  %4900 = vst [vmem:[#allocation3] sm:$0xff] %v4897
  %4901 = vst [vmem:[#allocation3 + $0x8] sm:$0xff] %v4898
  %4902 = vst.msk [vmem:[#allocation3 + $0x10] sm:$0xff] %vm1274, %v4899
  %v4903 = vld [vmem:[#allocation3] sm:$0xff]
  %v4904 = vld [vmem:[#allocation3 + $0x8] sm:$0xff]
  %v4905 = vld [vmem:[#allocation3 + $0x10] sm:$0xff]
  %s4906 = sadd.s32 %s991, 14
  %s4907 = smul.u32 %s4906, 2
  %s4908 = scalar_lea.vmem [#allocation2], %s4907
  %v4909 = vld [vmem:[%s4908] sm:$0x3]
  %v4910 = vpack.c.bf16 %v4909, %v4909
  %s4911 = scalar_lea.vmem %s10, 672
  %v4912 = vld [vmem:[%s4911] sm:$0x77]
  %v4913 = vld [vmem:[%s4911 + $0x8] sm:$0x77]
  %v4914 = vld [vmem:[%s4911 + $0x10] sm:$0x77]
  %v4915 = vld [vmem:[%s4911 + $0x18] sm:$0x77]
  %v4916 = vld [vmem:[%s4911 + $0x20] sm:$0x77]
  %v4917 = vld [vmem:[%s4911 + $0x28] sm:$0x77]
  %v4924 = vunpack.c.l.b16 %v4912
  %v4925 = vunpack.c.h.b16 %v4912
  %v4926 = vunpack.c.l.b16 %v4913
  %v4927 = vunpack.c.h.b16 %v4913
  %v4928 = vunpack.c.l.b16 %v4914
  %v4929 = vunpack.c.h.b16 %v4914
  %v4930 = vunpack.c.l.b16 %v4915
  %v4931 = vunpack.c.h.b16 %v4915
  %v4932 = vunpack.c.l.b16 %v4916
  %v4933 = vunpack.c.h.b16 %v4916
  %v4934 = vunpack.c.l.b16 %v4917
  %v4935 = vunpack.c.h.b16 %v4917
  %v4936 = vpack.c.b16 %v4924, %v4924
  %v4937 = vpack.c.b16 %v4925, %v4925
  %v4938 = vpack.c.b16 %v4926, %v4926
  %v4939 = vpack.c.b16 %v4927, %v4927
  %v4940 = vpack.c.b16 %v4928, %v4928
  %v4941 = vpack.c.b16 %v4929, %v4929
  %v4942 = vpack.c.b16 %v4930, %v4930
  %v4943 = vpack.c.b16 %v4931, %v4931
  %v4944 = vpack.c.b16 %v4932, %v4932
  %v4945 = vpack.c.b16 %v4933, %v4933
  %v4946 = vpack.c.b16 %v4934, %v4934
  %v4947 = vpack.c.b16 %v4935, %v4935
  %v4949 = vsel %vm1032, %v4910, 0
  %v4952 = vsel %vm1036, %v4936, 0
  %v4955 = vsel %vm1036, %v4937, 0
  %v4958 = vsel %vm1036, %v4938, 0
  %v4961 = vsel %vm1036, %v4939, 0
  %v4964 = vsel %vm1036, %v4940, 0
  %v4967 = vsel %vm1036, %v4941, 0
  %v4970 = vsel %vm1036, %v4942, 0
  %v4973 = vsel %vm1036, %v4943, 0
  %v4976 = vsel %vm1036, %v4944, 0
  %v4979 = vsel %vm1036, %v4945, 0
  %v4982 = vsel %vm1036, %v4946, 0
  %v4985 = vsel %vm1036, %v4947, 0
  %4987 = vmatpush.bf16.msra.mxu0 0
  %4988 = vmatpush.bf16.msra.mxu0 0
  %4989 = vmatpush.bf16.msra.mxu0 0
  %4990 = vmatpush.bf16.msra.mxu0 0
  %4991 = vmatpush.bf16.msra.mxu0 0
  %4992 = vmatpush.bf16.msra.mxu0 0
  %4993 = vmatpush.bf16.msra.mxu0 0
  %4994 = vmatpush.bf16.msra.mxu0 %v4952
  %4995 = vmatmul.bf16.gmra.mxu0 %v4949
  %v4996 = vpop.f32.mrf.mxu0
  %v4997 = vadd.f32 0.0, %v4996
  %v4998 = vpop.f32.mrf.mxu0
  %4999 = vdwg.mxu0
  %5000 = vmatpush.bf16.msra.mxu0 0
  %5001 = vmatpush.bf16.msra.mxu0 0
  %5002 = vmatpush.bf16.msra.mxu0 0
  %5003 = vmatpush.bf16.msra.mxu0 0
  %5004 = vmatpush.bf16.msra.mxu0 0
  %5005 = vmatpush.bf16.msra.mxu0 0
  %5006 = vmatpush.bf16.msra.mxu0 0
  %5007 = vmatpush.bf16.msra.mxu0 %v4955
  %5008 = vmatmul.bf16.gmra.mxu0 %v4949
  %v5009 = vpop.f32.mrf.mxu0
  %v5010 = vadd.f32 0.0, %v5009
  %v5011 = vpop.f32.mrf.mxu0
  %5012 = vdwg.mxu0
  %5013 = vmatpush.bf16.msra.mxu0 0
  %5014 = vmatpush.bf16.msra.mxu0 0
  %5015 = vmatpush.bf16.msra.mxu0 0
  %5016 = vmatpush.bf16.msra.mxu0 0
  %5017 = vmatpush.bf16.msra.mxu0 0
  %5018 = vmatpush.bf16.msra.mxu0 0
  %5019 = vmatpush.bf16.msra.mxu0 0
  %5020 = vmatpush.bf16.msra.mxu0 %v4958
  %5021 = vmatmul.bf16.gmra.mxu0 %v4949
  %v5022 = vpop.f32.mrf.mxu0
  %v5023 = vadd.f32 0.0, %v5022
  %v5024 = vpop.f32.mrf.mxu0
  %5025 = vdwg.mxu0
  %5026 = vmatpush.bf16.msra.mxu0 0
  %5027 = vmatpush.bf16.msra.mxu0 0
  %5028 = vmatpush.bf16.msra.mxu0 0
  %5029 = vmatpush.bf16.msra.mxu0 0
  %5030 = vmatpush.bf16.msra.mxu0 0
  %5031 = vmatpush.bf16.msra.mxu0 0
  %5032 = vmatpush.bf16.msra.mxu0 0
  %5033 = vmatpush.bf16.msra.mxu0 %v4961
  %5034 = vmatmul.bf16.gmra.mxu0 %v4949
  %v5035 = vpop.f32.mrf.mxu0
  %v5036 = vadd.f32 0.0, %v5035
  %v5037 = vpop.f32.mrf.mxu0
  %5038 = vdwg.mxu0
  %5039 = vmatpush.bf16.msra.mxu0 0
  %5040 = vmatpush.bf16.msra.mxu0 0
  %5041 = vmatpush.bf16.msra.mxu0 0
  %5042 = vmatpush.bf16.msra.mxu0 0
  %5043 = vmatpush.bf16.msra.mxu0 0
  %5044 = vmatpush.bf16.msra.mxu0 0
  %5045 = vmatpush.bf16.msra.mxu0 0
  %5046 = vmatpush.bf16.msra.mxu0 %v4964
  %5047 = vmatmul.bf16.gmra.mxu0 %v4949
  %v5048 = vpop.f32.mrf.mxu0
  %v5049 = vadd.f32 0.0, %v5048
  %v5050 = vpop.f32.mrf.mxu0
  %5051 = vdwg.mxu0
  %5052 = vmatpush.bf16.msra.mxu0 0
  %5053 = vmatpush.bf16.msra.mxu0 0
  %5054 = vmatpush.bf16.msra.mxu0 0
  %5055 = vmatpush.bf16.msra.mxu0 0
  %5056 = vmatpush.bf16.msra.mxu0 0
  %5057 = vmatpush.bf16.msra.mxu0 0
  %5058 = vmatpush.bf16.msra.mxu0 0
  %5059 = vmatpush.bf16.msra.mxu0 %v4967
  %5060 = vmatmul.bf16.gmra.mxu0 %v4949
  %v5061 = vpop.f32.mrf.mxu0
  %v5062 = vadd.f32 0.0, %v5061
  %v5063 = vpop.f32.mrf.mxu0
  %5064 = vdwg.mxu0
  %5065 = vmatpush.bf16.msra.mxu0 0
  %5066 = vmatpush.bf16.msra.mxu0 0
  %5067 = vmatpush.bf16.msra.mxu0 0
  %5068 = vmatpush.bf16.msra.mxu0 0
  %5069 = vmatpush.bf16.msra.mxu0 0
  %5070 = vmatpush.bf16.msra.mxu0 0
  %5071 = vmatpush.bf16.msra.mxu0 0
  %5072 = vmatpush.bf16.msra.mxu0 %v4970
  %5073 = vmatmul.bf16.gmra.mxu0 %v4949
  %v5074 = vpop.f32.mrf.mxu0
  %v5075 = vadd.f32 0.0, %v5074
  %v5076 = vpop.f32.mrf.mxu0
  %5077 = vdwg.mxu0
  %5078 = vmatpush.bf16.msra.mxu0 0
  %5079 = vmatpush.bf16.msra.mxu0 0
  %5080 = vmatpush.bf16.msra.mxu0 0
  %5081 = vmatpush.bf16.msra.mxu0 0
  %5082 = vmatpush.bf16.msra.mxu0 0
  %5083 = vmatpush.bf16.msra.mxu0 0
  %5084 = vmatpush.bf16.msra.mxu0 0
  %5085 = vmatpush.bf16.msra.mxu0 %v4973
  %5086 = vmatmul.bf16.gmra.mxu0 %v4949
  %v5087 = vpop.f32.mrf.mxu0
  %v5088 = vadd.f32 0.0, %v5087
  %v5089 = vpop.f32.mrf.mxu0
  %5090 = vdwg.mxu0
  %5091 = vmatpush.bf16.msra.mxu0 0
  %5092 = vmatpush.bf16.msra.mxu0 0
  %5093 = vmatpush.bf16.msra.mxu0 0
  %5094 = vmatpush.bf16.msra.mxu0 0
  %5095 = vmatpush.bf16.msra.mxu0 0
  %5096 = vmatpush.bf16.msra.mxu0 0
  %5097 = vmatpush.bf16.msra.mxu0 0
  %5098 = vmatpush.bf16.msra.mxu0 %v4976
  %5099 = vmatmul.bf16.gmra.mxu0 %v4949
  %v5100 = vpop.f32.mrf.mxu0
  %v5101 = vadd.f32 0.0, %v5100
  %v5102 = vpop.f32.mrf.mxu0
  %5103 = vdwg.mxu0
  %5104 = vmatpush.bf16.msra.mxu0 0
  %5105 = vmatpush.bf16.msra.mxu0 0
  %5106 = vmatpush.bf16.msra.mxu0 0
  %5107 = vmatpush.bf16.msra.mxu0 0
  %5108 = vmatpush.bf16.msra.mxu0 0
  %5109 = vmatpush.bf16.msra.mxu0 0
  %5110 = vmatpush.bf16.msra.mxu0 0
  %5111 = vmatpush.bf16.msra.mxu0 %v4979
  %5112 = vmatmul.bf16.gmra.mxu0 %v4949
  %v5113 = vpop.f32.mrf.mxu0
  %v5114 = vadd.f32 0.0, %v5113
  %v5115 = vpop.f32.mrf.mxu0
  %5116 = vdwg.mxu0
  %5117 = vmatpush.bf16.msra.mxu0 0
  %5118 = vmatpush.bf16.msra.mxu0 0
  %5119 = vmatpush.bf16.msra.mxu0 0
  %5120 = vmatpush.bf16.msra.mxu0 0
  %5121 = vmatpush.bf16.msra.mxu0 0
  %5122 = vmatpush.bf16.msra.mxu0 0
  %5123 = vmatpush.bf16.msra.mxu0 0
  %5124 = vmatpush.bf16.msra.mxu0 %v4982
  %5125 = vmatmul.bf16.gmra.mxu0 %v4949
  %v5126 = vpop.f32.mrf.mxu0
  %v5127 = vadd.f32 0.0, %v5126
  %v5128 = vpop.f32.mrf.mxu0
  %5129 = vdwg.mxu0
  %5130 = vmatpush.bf16.msra.mxu0 0
  %5131 = vmatpush.bf16.msra.mxu0 0
  %5132 = vmatpush.bf16.msra.mxu0 0
  %5133 = vmatpush.bf16.msra.mxu0 0
  %5134 = vmatpush.bf16.msra.mxu0 0
  %5135 = vmatpush.bf16.msra.mxu0 0
  %5136 = vmatpush.bf16.msra.mxu0 0
  %5137 = vmatpush.bf16.msra.mxu0 %v4985
  %5138 = vmatmul.bf16.gmra.mxu0 %v4949
  %v5139 = vpop.f32.mrf.mxu0
  %v5140 = vadd.f32 0.0, %v5139
  %v5141 = vpop.f32.mrf.mxu0
  %5142 = vdwg.mxu0
  %v5155 = vrot.slane %v5010, 6
  %v5156 = vrot.slane %v5023, 4
  %v5157 = vrot.slane %v5036, 2
  %v5158 = vrot.slane %v5062, 6
  %v5159 = vrot.slane %v5075, 4
  %v5160 = vrot.slane %v5088, 2
  %v5161 = vrot.slane %v5114, 6
  %v5162 = vrot.slane %v5127, 4
  %v5163 = vrot.slane %v5140, 2
  %v5164 = vsel %vm1250, %v4997, %v5155
  %v5165 = vsel %vm1252, %v5156, %v5157
  %v5166 = vsel %vm1254, %v5164, %v5165
  %v5167 = vsel %vm1250, %v5049, %v5158
  %v5168 = vsel %vm1252, %v5159, %v5160
  %v5169 = vsel %vm1254, %v5167, %v5168
  %v5170 = vsel %vm1250, %v5101, %v5161
  %v5171 = vsel %vm1252, %v5162, %v5163
  %v5172 = vsel %vm1254, %v5170, %v5171
  %v5176 = vadd.f32 %v4903, %v5166
  %v5177 = vadd.f32 %v4904, %v5169
  %v5178 = vadd.f32 %v4905, %v5172
  %5179 = vst [vmem:[#allocation3] sm:$0xff] %v5176
  %5180 = vst [vmem:[#allocation3 + $0x8] sm:$0xff] %v5177
  %5181 = vst.msk [vmem:[#allocation3 + $0x10] sm:$0xff] %vm1274, %v5178
  %v5182 = vld [vmem:[#allocation3] sm:$0xff]
  %v5183 = vld [vmem:[#allocation3 + $0x8] sm:$0xff]
  %v5184 = vld [vmem:[#allocation3 + $0x10] sm:$0xff]
  %s5185 = sadd.s32 %s991, 15
  %s5186 = smul.u32 %s5185, 2
  %s5187 = scalar_lea.vmem [#allocation2], %s5186
  %v5188 = vld [vmem:[%s5187] sm:$0x3]
  %v5189 = vpack.c.bf16 %v5188, %v5188
  %s5190 = scalar_lea.vmem %s10, 720
  %v5191 = vld [vmem:[%s5190] sm:$0x77]
  %v5192 = vld [vmem:[%s5190 + $0x8] sm:$0x77]
  %v5193 = vld [vmem:[%s5190 + $0x10] sm:$0x77]
  %v5194 = vld [vmem:[%s5190 + $0x18] sm:$0x77]
  %v5195 = vld [vmem:[%s5190 + $0x20] sm:$0x77]
  %v5196 = vld [vmem:[%s5190 + $0x28] sm:$0x77]
  %v5203 = vunpack.c.l.b16 %v5191
  %v5204 = vunpack.c.h.b16 %v5191
  %v5205 = vunpack.c.l.b16 %v5192
  %v5206 = vunpack.c.h.b16 %v5192
  %v5207 = vunpack.c.l.b16 %v5193
  %v5208 = vunpack.c.h.b16 %v5193
  %v5209 = vunpack.c.l.b16 %v5194
  %v5210 = vunpack.c.h.b16 %v5194
  %v5211 = vunpack.c.l.b16 %v5195
  %v5212 = vunpack.c.h.b16 %v5195
  %v5213 = vunpack.c.l.b16 %v5196
  %v5214 = vunpack.c.h.b16 %v5196
  %v5215 = vpack.c.b16 %v5203, %v5203
  %v5216 = vpack.c.b16 %v5204, %v5204
  %v5217 = vpack.c.b16 %v5205, %v5205
  %v5218 = vpack.c.b16 %v5206, %v5206
  %v5219 = vpack.c.b16 %v5207, %v5207
  %v5220 = vpack.c.b16 %v5208, %v5208
  %v5221 = vpack.c.b16 %v5209, %v5209
  %v5222 = vpack.c.b16 %v5210, %v5210
  %v5223 = vpack.c.b16 %v5211, %v5211
  %v5224 = vpack.c.b16 %v5212, %v5212
  %v5225 = vpack.c.b16 %v5213, %v5213
  %v5226 = vpack.c.b16 %v5214, %v5214
  %v5228 = vsel %vm1032, %v5189, 0
  %v5231 = vsel %vm1036, %v5215, 0
  %v5234 = vsel %vm1036, %v5216, 0
  %v5237 = vsel %vm1036, %v5217, 0
  %v5240 = vsel %vm1036, %v5218, 0
  %v5243 = vsel %vm1036, %v5219, 0
  %v5246 = vsel %vm1036, %v5220, 0
  %v5249 = vsel %vm1036, %v5221, 0
  %v5252 = vsel %vm1036, %v5222, 0
  %v5255 = vsel %vm1036, %v5223, 0
  %v5258 = vsel %vm1036, %v5224, 0
  %v5261 = vsel %vm1036, %v5225, 0
  %v5264 = vsel %vm1036, %v5226, 0
  %5266 = vmatpush.bf16.msra.mxu0 0
  %5267 = vmatpush.bf16.msra.mxu0 0
  %5268 = vmatpush.bf16.msra.mxu0 0
  %5269 = vmatpush.bf16.msra.mxu0 0
  %5270 = vmatpush.bf16.msra.mxu0 0
  %5271 = vmatpush.bf16.msra.mxu0 0
  %5272 = vmatpush.bf16.msra.mxu0 0
  %5273 = vmatpush.bf16.msra.mxu0 %v5231
  %5274 = vmatmul.bf16.gmra.mxu0 %v5228
  %v5275 = vpop.f32.mrf.mxu0
  %v5276 = vadd.f32 0.0, %v5275
  %v5277 = vpop.f32.mrf.mxu0
  %5278 = vdwg.mxu0
  %5279 = vmatpush.bf16.msra.mxu0 0
  %5280 = vmatpush.bf16.msra.mxu0 0
  %5281 = vmatpush.bf16.msra.mxu0 0
  %5282 = vmatpush.bf16.msra.mxu0 0
  %5283 = vmatpush.bf16.msra.mxu0 0
  %5284 = vmatpush.bf16.msra.mxu0 0
  %5285 = vmatpush.bf16.msra.mxu0 0
  %5286 = vmatpush.bf16.msra.mxu0 %v5234
  %5287 = vmatmul.bf16.gmra.mxu0 %v5228
  %v5288 = vpop.f32.mrf.mxu0
  %v5289 = vadd.f32 0.0, %v5288
  %v5290 = vpop.f32.mrf.mxu0
  %5291 = vdwg.mxu0
  %5292 = vmatpush.bf16.msra.mxu0 0
  %5293 = vmatpush.bf16.msra.mxu0 0
  %5294 = vmatpush.bf16.msra.mxu0 0
  %5295 = vmatpush.bf16.msra.mxu0 0
  %5296 = vmatpush.bf16.msra.mxu0 0
  %5297 = vmatpush.bf16.msra.mxu0 0
  %5298 = vmatpush.bf16.msra.mxu0 0
  %5299 = vmatpush.bf16.msra.mxu0 %v5237
  %5300 = vmatmul.bf16.gmra.mxu0 %v5228
  %v5301 = vpop.f32.mrf.mxu0
  %v5302 = vadd.f32 0.0, %v5301
  %v5303 = vpop.f32.mrf.mxu0
  %5304 = vdwg.mxu0
  %5305 = vmatpush.bf16.msra.mxu0 0
  %5306 = vmatpush.bf16.msra.mxu0 0
  %5307 = vmatpush.bf16.msra.mxu0 0
  %5308 = vmatpush.bf16.msra.mxu0 0
  %5309 = vmatpush.bf16.msra.mxu0 0
  %5310 = vmatpush.bf16.msra.mxu0 0
  %5311 = vmatpush.bf16.msra.mxu0 0
  %5312 = vmatpush.bf16.msra.mxu0 %v5240
  %5313 = vmatmul.bf16.gmra.mxu0 %v5228
  %v5314 = vpop.f32.mrf.mxu0
  %v5315 = vadd.f32 0.0, %v5314
  %v5316 = vpop.f32.mrf.mxu0
  %5317 = vdwg.mxu0
  %5318 = vmatpush.bf16.msra.mxu0 0
  %5319 = vmatpush.bf16.msra.mxu0 0
  %5320 = vmatpush.bf16.msra.mxu0 0
  %5321 = vmatpush.bf16.msra.mxu0 0
  %5322 = vmatpush.bf16.msra.mxu0 0
  %5323 = vmatpush.bf16.msra.mxu0 0
  %5324 = vmatpush.bf16.msra.mxu0 0
  %5325 = vmatpush.bf16.msra.mxu0 %v5243
  %5326 = vmatmul.bf16.gmra.mxu0 %v5228
  %v5327 = vpop.f32.mrf.mxu0
  %v5328 = vadd.f32 0.0, %v5327
  %v5329 = vpop.f32.mrf.mxu0
  %5330 = vdwg.mxu0
  %5331 = vmatpush.bf16.msra.mxu0 0
  %5332 = vmatpush.bf16.msra.mxu0 0
  %5333 = vmatpush.bf16.msra.mxu0 0
  %5334 = vmatpush.bf16.msra.mxu0 0
  %5335 = vmatpush.bf16.msra.mxu0 0
  %5336 = vmatpush.bf16.msra.mxu0 0
  %5337 = vmatpush.bf16.msra.mxu0 0
  %5338 = vmatpush.bf16.msra.mxu0 %v5246
  %5339 = vmatmul.bf16.gmra.mxu0 %v5228
  %v5340 = vpop.f32.mrf.mxu0
  %v5341 = vadd.f32 0.0, %v5340
  %v5342 = vpop.f32.mrf.mxu0
  %5343 = vdwg.mxu0
  %5344 = vmatpush.bf16.msra.mxu0 0
  %5345 = vmatpush.bf16.msra.mxu0 0
  %5346 = vmatpush.bf16.msra.mxu0 0
  %5347 = vmatpush.bf16.msra.mxu0 0
  %5348 = vmatpush.bf16.msra.mxu0 0
  %5349 = vmatpush.bf16.msra.mxu0 0
  %5350 = vmatpush.bf16.msra.mxu0 0
  %5351 = vmatpush.bf16.msra.mxu0 %v5249
  %5352 = vmatmul.bf16.gmra.mxu0 %v5228
  %v5353 = vpop.f32.mrf.mxu0
  %v5354 = vadd.f32 0.0, %v5353
  %v5355 = vpop.f32.mrf.mxu0
  %5356 = vdwg.mxu0
  %5357 = vmatpush.bf16.msra.mxu0 0
  %5358 = vmatpush.bf16.msra.mxu0 0
  %5359 = vmatpush.bf16.msra.mxu0 0
  %5360 = vmatpush.bf16.msra.mxu0 0
  %5361 = vmatpush.bf16.msra.mxu0 0
  %5362 = vmatpush.bf16.msra.mxu0 0
  %5363 = vmatpush.bf16.msra.mxu0 0
  %5364 = vmatpush.bf16.msra.mxu0 %v5252
  %5365 = vmatmul.bf16.gmra.mxu0 %v5228
  %v5366 = vpop.f32.mrf.mxu0
  %v5367 = vadd.f32 0.0, %v5366
  %v5368 = vpop.f32.mrf.mxu0
  %5369 = vdwg.mxu0
  %5370 = vmatpush.bf16.msra.mxu0 0
  %5371 = vmatpush.bf16.msra.mxu0 0
  %5372 = vmatpush.bf16.msra.mxu0 0
  %5373 = vmatpush.bf16.msra.mxu0 0
  %5374 = vmatpush.bf16.msra.mxu0 0
  %5375 = vmatpush.bf16.msra.mxu0 0
  %5376 = vmatpush.bf16.msra.mxu0 0
  %5377 = vmatpush.bf16.msra.mxu0 %v5255
  %5378 = vmatmul.bf16.gmra.mxu0 %v5228
  %v5379 = vpop.f32.mrf.mxu0
  %v5380 = vadd.f32 0.0, %v5379
  %v5381 = vpop.f32.mrf.mxu0
  %5382 = vdwg.mxu0
  %5383 = vmatpush.bf16.msra.mxu0 0
  %5384 = vmatpush.bf16.msra.mxu0 0
  %5385 = vmatpush.bf16.msra.mxu0 0
  %5386 = vmatpush.bf16.msra.mxu0 0
  %5387 = vmatpush.bf16.msra.mxu0 0
  %5388 = vmatpush.bf16.msra.mxu0 0
  %5389 = vmatpush.bf16.msra.mxu0 0
  %5390 = vmatpush.bf16.msra.mxu0 %v5258
  %5391 = vmatmul.bf16.gmra.mxu0 %v5228
  %v5392 = vpop.f32.mrf.mxu0
  %v5393 = vadd.f32 0.0, %v5392
  %v5394 = vpop.f32.mrf.mxu0
  %5395 = vdwg.mxu0
  %5396 = vmatpush.bf16.msra.mxu0 0
  %5397 = vmatpush.bf16.msra.mxu0 0
  %5398 = vmatpush.bf16.msra.mxu0 0
  %5399 = vmatpush.bf16.msra.mxu0 0
  %5400 = vmatpush.bf16.msra.mxu0 0
  %5401 = vmatpush.bf16.msra.mxu0 0
  %5402 = vmatpush.bf16.msra.mxu0 0
  %5403 = vmatpush.bf16.msra.mxu0 %v5261
  %5404 = vmatmul.bf16.gmra.mxu0 %v5228
  %v5405 = vpop.f32.mrf.mxu0
  %v5406 = vadd.f32 0.0, %v5405
  %v5407 = vpop.f32.mrf.mxu0
  %5408 = vdwg.mxu0
  %5409 = vmatpush.bf16.msra.mxu0 0
  %5410 = vmatpush.bf16.msra.mxu0 0
  %5411 = vmatpush.bf16.msra.mxu0 0
  %5412 = vmatpush.bf16.msra.mxu0 0
  %5413 = vmatpush.bf16.msra.mxu0 0
  %5414 = vmatpush.bf16.msra.mxu0 0
  %5415 = vmatpush.bf16.msra.mxu0 0
  %5416 = vmatpush.bf16.msra.mxu0 %v5264
  %5417 = vmatmul.bf16.gmra.mxu0 %v5228
  %v5418 = vpop.f32.mrf.mxu0
  %v5419 = vadd.f32 0.0, %v5418
  %v5420 = vpop.f32.mrf.mxu0
  %5421 = vdwg.mxu0
  %v5434 = vrot.slane %v5289, 6
  %v5435 = vrot.slane %v5302, 4
  %v5436 = vrot.slane %v5315, 2
  %v5437 = vrot.slane %v5341, 6
  %v5438 = vrot.slane %v5354, 4
  %v5439 = vrot.slane %v5367, 2
  %v5440 = vrot.slane %v5393, 6
  %v5441 = vrot.slane %v5406, 4
  %v5442 = vrot.slane %v5419, 2
  %v5443 = vsel %vm1250, %v5276, %v5434
  %v5444 = vsel %vm1252, %v5435, %v5436
  %v5445 = vsel %vm1254, %v5443, %v5444
  %v5446 = vsel %vm1250, %v5328, %v5437
  %v5447 = vsel %vm1252, %v5438, %v5439
  %v5448 = vsel %vm1254, %v5446, %v5447
  %v5449 = vsel %vm1250, %v5380, %v5440
  %v5450 = vsel %vm1252, %v5441, %v5442
  %v5451 = vsel %vm1254, %v5449, %v5450
  %v5455 = vadd.f32 %v5182, %v5445
  %v5456 = vadd.f32 %v5183, %v5448
  %v5457 = vadd.f32 %v5184, %v5451
  %5458 = vst [vmem:[#allocation3] sm:$0xff] %v5455
  %5459 = vst [vmem:[#allocation3 + $0x8] sm:$0xff] %v5456
  %5460 = vst.msk [vmem:[#allocation3 + $0x10] sm:$0xff] %vm1274, %v5457
  %v5461 = vld [vmem:[#allocation3] sm:$0xff]
  %v5462 = vld [vmem:[#allocation3 + $0x8] sm:$0xff]
  %v5463 = vld [vmem:[#allocation3 + $0x10] sm:$0xff]
  %s5464 = sadd.s32 %s991, 16
  %s5465 = smul.u32 %s5464, 2
  %s5466 = scalar_lea.vmem [#allocation2], %s5465
  %v5467 = vld [vmem:[%s5466] sm:$0x3]
  %v5468 = vpack.c.bf16 %v5467, %v5467
  %s5469 = scalar_lea.vmem %s10, 768
  %v5470 = vld [vmem:[%s5469] sm:$0x77]
  %v5471 = vld [vmem:[%s5469 + $0x8] sm:$0x77]
  %v5472 = vld [vmem:[%s5469 + $0x10] sm:$0x77]
  %v5473 = vld [vmem:[%s5469 + $0x18] sm:$0x77]
  %v5474 = vld [vmem:[%s5469 + $0x20] sm:$0x77]
  %v5475 = vld [vmem:[%s5469 + $0x28] sm:$0x77]
  %v5482 = vunpack.c.l.b16 %v5470
  %v5483 = vunpack.c.h.b16 %v5470
  %v5484 = vunpack.c.l.b16 %v5471
  %v5485 = vunpack.c.h.b16 %v5471
  %v5486 = vunpack.c.l.b16 %v5472
  %v5487 = vunpack.c.h.b16 %v5472
  %v5488 = vunpack.c.l.b16 %v5473
  %v5489 = vunpack.c.h.b16 %v5473
  %v5490 = vunpack.c.l.b16 %v5474
  %v5491 = vunpack.c.h.b16 %v5474
  %v5492 = vunpack.c.l.b16 %v5475
  %v5493 = vunpack.c.h.b16 %v5475
  %v5494 = vpack.c.b16 %v5482, %v5482
  %v5495 = vpack.c.b16 %v5483, %v5483
  %v5496 = vpack.c.b16 %v5484, %v5484
  %v5497 = vpack.c.b16 %v5485, %v5485
  %v5498 = vpack.c.b16 %v5486, %v5486
  %v5499 = vpack.c.b16 %v5487, %v5487
  %v5500 = vpack.c.b16 %v5488, %v5488
  %v5501 = vpack.c.b16 %v5489, %v5489
  %v5502 = vpack.c.b16 %v5490, %v5490
  %v5503 = vpack.c.b16 %v5491, %v5491
  %v5504 = vpack.c.b16 %v5492, %v5492
  %v5505 = vpack.c.b16 %v5493, %v5493
  %v5507 = vsel %vm1032, %v5468, 0
  %v5510 = vsel %vm1036, %v5494, 0
  %v5513 = vsel %vm1036, %v5495, 0
  %v5516 = vsel %vm1036, %v5496, 0
  %v5519 = vsel %vm1036, %v5497, 0
  %v5522 = vsel %vm1036, %v5498, 0
  %v5525 = vsel %vm1036, %v5499, 0
  %v5528 = vsel %vm1036, %v5500, 0
  %v5531 = vsel %vm1036, %v5501, 0
  %v5534 = vsel %vm1036, %v5502, 0
  %v5537 = vsel %vm1036, %v5503, 0
  %v5540 = vsel %vm1036, %v5504, 0
  %v5543 = vsel %vm1036, %v5505, 0
  %5545 = vmatpush.bf16.msra.mxu0 0
  %5546 = vmatpush.bf16.msra.mxu0 0
  %5547 = vmatpush.bf16.msra.mxu0 0
  %5548 = vmatpush.bf16.msra.mxu0 0
  %5549 = vmatpush.bf16.msra.mxu0 0
  %5550 = vmatpush.bf16.msra.mxu0 0
  %5551 = vmatpush.bf16.msra.mxu0 0
  %5552 = vmatpush.bf16.msra.mxu0 %v5510
  %5553 = vmatmul.bf16.gmra.mxu0 %v5507
  %v5554 = vpop.f32.mrf.mxu0
  %v5555 = vadd.f32 0.0, %v5554
  %v5556 = vpop.f32.mrf.mxu0
  %5557 = vdwg.mxu0
  %5558 = vmatpush.bf16.msra.mxu0 0
  %5559 = vmatpush.bf16.msra.mxu0 0
  %5560 = vmatpush.bf16.msra.mxu0 0
  %5561 = vmatpush.bf16.msra.mxu0 0
  %5562 = vmatpush.bf16.msra.mxu0 0
  %5563 = vmatpush.bf16.msra.mxu0 0
  %5564 = vmatpush.bf16.msra.mxu0 0
  %5565 = vmatpush.bf16.msra.mxu0 %v5513
  %5566 = vmatmul.bf16.gmra.mxu0 %v5507
  %v5567 = vpop.f32.mrf.mxu0
  %v5568 = vadd.f32 0.0, %v5567
  %v5569 = vpop.f32.mrf.mxu0
  %5570 = vdwg.mxu0
  %5571 = vmatpush.bf16.msra.mxu0 0
  %5572 = vmatpush.bf16.msra.mxu0 0
  %5573 = vmatpush.bf16.msra.mxu0 0
  %5574 = vmatpush.bf16.msra.mxu0 0
  %5575 = vmatpush.bf16.msra.mxu0 0
  %5576 = vmatpush.bf16.msra.mxu0 0
  %5577 = vmatpush.bf16.msra.mxu0 0
  %5578 = vmatpush.bf16.msra.mxu0 %v5516
  %5579 = vmatmul.bf16.gmra.mxu0 %v5507
  %v5580 = vpop.f32.mrf.mxu0
  %v5581 = vadd.f32 0.0, %v5580
  %v5582 = vpop.f32.mrf.mxu0
  %5583 = vdwg.mxu0
  %5584 = vmatpush.bf16.msra.mxu0 0
  %5585 = vmatpush.bf16.msra.mxu0 0
  %5586 = vmatpush.bf16.msra.mxu0 0
  %5587 = vmatpush.bf16.msra.mxu0 0
  %5588 = vmatpush.bf16.msra.mxu0 0
  %5589 = vmatpush.bf16.msra.mxu0 0
  %5590 = vmatpush.bf16.msra.mxu0 0
  %5591 = vmatpush.bf16.msra.mxu0 %v5519
  %5592 = vmatmul.bf16.gmra.mxu0 %v5507
  %v5593 = vpop.f32.mrf.mxu0
  %v5594 = vadd.f32 0.0, %v5593
  %v5595 = vpop.f32.mrf.mxu0
  %5596 = vdwg.mxu0
  %5597 = vmatpush.bf16.msra.mxu0 0
  %5598 = vmatpush.bf16.msra.mxu0 0
  %5599 = vmatpush.bf16.msra.mxu0 0
  %5600 = vmatpush.bf16.msra.mxu0 0
  %5601 = vmatpush.bf16.msra.mxu0 0
  %5602 = vmatpush.bf16.msra.mxu0 0
  %5603 = vmatpush.bf16.msra.mxu0 0
  %5604 = vmatpush.bf16.msra.mxu0 %v5522
  %5605 = vmatmul.bf16.gmra.mxu0 %v5507
  %v5606 = vpop.f32.mrf.mxu0
  %v5607 = vadd.f32 0.0, %v5606
  %v5608 = vpop.f32.mrf.mxu0
  %5609 = vdwg.mxu0
  %5610 = vmatpush.bf16.msra.mxu0 0
  %5611 = vmatpush.bf16.msra.mxu0 0
  %5612 = vmatpush.bf16.msra.mxu0 0
  %5613 = vmatpush.bf16.msra.mxu0 0
  %5614 = vmatpush.bf16.msra.mxu0 0
  %5615 = vmatpush.bf16.msra.mxu0 0
  %5616 = vmatpush.bf16.msra.mxu0 0
  %5617 = vmatpush.bf16.msra.mxu0 %v5525
  %5618 = vmatmul.bf16.gmra.mxu0 %v5507
  %v5619 = vpop.f32.mrf.mxu0
  %v5620 = vadd.f32 0.0, %v5619
  %v5621 = vpop.f32.mrf.mxu0
  %5622 = vdwg.mxu0
  %5623 = vmatpush.bf16.msra.mxu0 0
  %5624 = vmatpush.bf16.msra.mxu0 0
  %5625 = vmatpush.bf16.msra.mxu0 0
  %5626 = vmatpush.bf16.msra.mxu0 0
  %5627 = vmatpush.bf16.msra.mxu0 0
  %5628 = vmatpush.bf16.msra.mxu0 0
  %5629 = vmatpush.bf16.msra.mxu0 0
  %5630 = vmatpush.bf16.msra.mxu0 %v5528
  %5631 = vmatmul.bf16.gmra.mxu0 %v5507
  %v5632 = vpop.f32.mrf.mxu0
  %v5633 = vadd.f32 0.0, %v5632
  %v5634 = vpop.f32.mrf.mxu0
  %5635 = vdwg.mxu0
  %5636 = vmatpush.bf16.msra.mxu0 0
  %5637 = vmatpush.bf16.msra.mxu0 0
  %5638 = vmatpush.bf16.msra.mxu0 0
  %5639 = vmatpush.bf16.msra.mxu0 0
  %5640 = vmatpush.bf16.msra.mxu0 0
  %5641 = vmatpush.bf16.msra.mxu0 0
  %5642 = vmatpush.bf16.msra.mxu0 0
  %5643 = vmatpush.bf16.msra.mxu0 %v5531
  %5644 = vmatmul.bf16.gmra.mxu0 %v5507
  %v5645 = vpop.f32.mrf.mxu0
  %v5646 = vadd.f32 0.0, %v5645
  %v5647 = vpop.f32.mrf.mxu0
  %5648 = vdwg.mxu0
  %5649 = vmatpush.bf16.msra.mxu0 0
  %5650 = vmatpush.bf16.msra.mxu0 0
  %5651 = vmatpush.bf16.msra.mxu0 0
  %5652 = vmatpush.bf16.msra.mxu0 0
  %5653 = vmatpush.bf16.msra.mxu0 0
  %5654 = vmatpush.bf16.msra.mxu0 0
  %5655 = vmatpush.bf16.msra.mxu0 0
  %5656 = vmatpush.bf16.msra.mxu0 %v5534
  %5657 = vmatmul.bf16.gmra.mxu0 %v5507
  %v5658 = vpop.f32.mrf.mxu0
  %v5659 = vadd.f32 0.0, %v5658
  %v5660 = vpop.f32.mrf.mxu0
  %5661 = vdwg.mxu0
  %5662 = vmatpush.bf16.msra.mxu0 0
  %5663 = vmatpush.bf16.msra.mxu0 0
  %5664 = vmatpush.bf16.msra.mxu0 0
  %5665 = vmatpush.bf16.msra.mxu0 0
  %5666 = vmatpush.bf16.msra.mxu0 0
  %5667 = vmatpush.bf16.msra.mxu0 0
  %5668 = vmatpush.bf16.msra.mxu0 0
  %5669 = vmatpush.bf16.msra.mxu0 %v5537
  %5670 = vmatmul.bf16.gmra.mxu0 %v5507
  %v5671 = vpop.f32.mrf.mxu0
  %v5672 = vadd.f32 0.0, %v5671
  %v5673 = vpop.f32.mrf.mxu0
  %5674 = vdwg.mxu0
  %5675 = vmatpush.bf16.msra.mxu0 0
  %5676 = vmatpush.bf16.msra.mxu0 0
  %5677 = vmatpush.bf16.msra.mxu0 0
  %5678 = vmatpush.bf16.msra.mxu0 0
  %5679 = vmatpush.bf16.msra.mxu0 0
  %5680 = vmatpush.bf16.msra.mxu0 0
  %5681 = vmatpush.bf16.msra.mxu0 0
  %5682 = vmatpush.bf16.msra.mxu0 %v5540
  %5683 = vmatmul.bf16.gmra.mxu0 %v5507
  %v5684 = vpop.f32.mrf.mxu0
  %v5685 = vadd.f32 0.0, %v5684
  %v5686 = vpop.f32.mrf.mxu0
  %5687 = vdwg.mxu0
  %5688 = vmatpush.bf16.msra.mxu0 0
  %5689 = vmatpush.bf16.msra.mxu0 0
  %5690 = vmatpush.bf16.msra.mxu0 0
  %5691 = vmatpush.bf16.msra.mxu0 0
  %5692 = vmatpush.bf16.msra.mxu0 0
  %5693 = vmatpush.bf16.msra.mxu0 0
  %5694 = vmatpush.bf16.msra.mxu0 0
  %5695 = vmatpush.bf16.msra.mxu0 %v5543
  %5696 = vmatmul.bf16.gmra.mxu0 %v5507
  %v5697 = vpop.f32.mrf.mxu0
  %v5698 = vadd.f32 0.0, %v5697
  %v5699 = vpop.f32.mrf.mxu0
  %5700 = vdwg.mxu0
  %v5713 = vrot.slane %v5568, 6
  %v5714 = vrot.slane %v5581, 4
  %v5715 = vrot.slane %v5594, 2
  %v5716 = vrot.slane %v5620, 6
  %v5717 = vrot.slane %v5633, 4
  %v5718 = vrot.slane %v5646, 2
  %v5719 = vrot.slane %v5672, 6
  %v5720 = vrot.slane %v5685, 4
  %v5721 = vrot.slane %v5698, 2
  %v5722 = vsel %vm1250, %v5555, %v5713
  %v5723 = vsel %vm1252, %v5714, %v5715
  %v5724 = vsel %vm1254, %v5722, %v5723
  %v5725 = vsel %vm1250, %v5607, %v5716
  %v5726 = vsel %vm1252, %v5717, %v5718
  %v5727 = vsel %vm1254, %v5725, %v5726
  %v5728 = vsel %vm1250, %v5659, %v5719
  %v5729 = vsel %vm1252, %v5720, %v5721
  %v5730 = vsel %vm1254, %v5728, %v5729
  %v5734 = vadd.f32 %v5461, %v5724
  %v5735 = vadd.f32 %v5462, %v5727
  %v5736 = vadd.f32 %v5463, %v5730
  %5737 = vst [vmem:[#allocation3] sm:$0xff] %v5734
  %5738 = vst [vmem:[#allocation3 + $0x8] sm:$0xff] %v5735
  %5739 = vst.msk [vmem:[#allocation3 + $0x10] sm:$0xff] %vm1274, %v5736
  %v5740 = vld [vmem:[#allocation3] sm:$0xff]
  %v5741 = vld [vmem:[#allocation3 + $0x8] sm:$0xff]
  %v5742 = vld [vmem:[#allocation3 + $0x10] sm:$0xff]
  %s5743 = sadd.s32 %s991, 17
  %s5744 = smul.u32 %s5743, 2
  %s5745 = scalar_lea.vmem [#allocation2], %s5744
  %v5746 = vld [vmem:[%s5745] sm:$0x3]
  %v5747 = vpack.c.bf16 %v5746, %v5746
  %s5748 = scalar_lea.vmem %s10, 816
  %v5749 = vld [vmem:[%s5748] sm:$0x77]
  %v5750 = vld [vmem:[%s5748 + $0x8] sm:$0x77]
  %v5751 = vld [vmem:[%s5748 + $0x10] sm:$0x77]
  %v5752 = vld [vmem:[%s5748 + $0x18] sm:$0x77]
  %v5753 = vld [vmem:[%s5748 + $0x20] sm:$0x77]
  %v5754 = vld [vmem:[%s5748 + $0x28] sm:$0x77]
  %v5761 = vunpack.c.l.b16 %v5749
  %v5762 = vunpack.c.h.b16 %v5749
  %v5763 = vunpack.c.l.b16 %v5750
  %v5764 = vunpack.c.h.b16 %v5750
  %v5765 = vunpack.c.l.b16 %v5751
  %v5766 = vunpack.c.h.b16 %v5751
  %v5767 = vunpack.c.l.b16 %v5752
  %v5768 = vunpack.c.h.b16 %v5752
  %v5769 = vunpack.c.l.b16 %v5753
  %v5770 = vunpack.c.h.b16 %v5753
  %v5771 = vunpack.c.l.b16 %v5754
  %v5772 = vunpack.c.h.b16 %v5754
  %v5773 = vpack.c.b16 %v5761, %v5761
  %v5774 = vpack.c.b16 %v5762, %v5762
  %v5775 = vpack.c.b16 %v5763, %v5763
  %v5776 = vpack.c.b16 %v5764, %v5764
  %v5777 = vpack.c.b16 %v5765, %v5765
  %v5778 = vpack.c.b16 %v5766, %v5766
  %v5779 = vpack.c.b16 %v5767, %v5767
  %v5780 = vpack.c.b16 %v5768, %v5768
  %v5781 = vpack.c.b16 %v5769, %v5769
  %v5782 = vpack.c.b16 %v5770, %v5770
  %v5783 = vpack.c.b16 %v5771, %v5771
  %v5784 = vpack.c.b16 %v5772, %v5772
  %v5786 = vsel %vm1032, %v5747, 0
  %v5789 = vsel %vm1036, %v5773, 0
  %v5792 = vsel %vm1036, %v5774, 0
  %v5795 = vsel %vm1036, %v5775, 0
  %v5798 = vsel %vm1036, %v5776, 0
  %v5801 = vsel %vm1036, %v5777, 0
  %v5804 = vsel %vm1036, %v5778, 0
  %v5807 = vsel %vm1036, %v5779, 0
  %v5810 = vsel %vm1036, %v5780, 0
  %v5813 = vsel %vm1036, %v5781, 0
  %v5816 = vsel %vm1036, %v5782, 0
  %v5819 = vsel %vm1036, %v5783, 0
  %v5822 = vsel %vm1036, %v5784, 0
  %5824 = vmatpush.bf16.msra.mxu0 0
  %5825 = vmatpush.bf16.msra.mxu0 0
  %5826 = vmatpush.bf16.msra.mxu0 0
  %5827 = vmatpush.bf16.msra.mxu0 0
  %5828 = vmatpush.bf16.msra.mxu0 0
  %5829 = vmatpush.bf16.msra.mxu0 0
  %5830 = vmatpush.bf16.msra.mxu0 0
  %5831 = vmatpush.bf16.msra.mxu0 %v5789
  %5832 = vmatmul.bf16.gmra.mxu0 %v5786
  %v5833 = vpop.f32.mrf.mxu0
  %v5834 = vadd.f32 0.0, %v5833
  %v5835 = vpop.f32.mrf.mxu0
  %5836 = vdwg.mxu0
  %5837 = vmatpush.bf16.msra.mxu0 0
  %5838 = vmatpush.bf16.msra.mxu0 0
  %5839 = vmatpush.bf16.msra.mxu0 0
  %5840 = vmatpush.bf16.msra.mxu0 0
  %5841 = vmatpush.bf16.msra.mxu0 0
  %5842 = vmatpush.bf16.msra.mxu0 0
  %5843 = vmatpush.bf16.msra.mxu0 0
  %5844 = vmatpush.bf16.msra.mxu0 %v5792
  %5845 = vmatmul.bf16.gmra.mxu0 %v5786
  %v5846 = vpop.f32.mrf.mxu0
  %v5847 = vadd.f32 0.0, %v5846
  %v5848 = vpop.f32.mrf.mxu0
  %5849 = vdwg.mxu0
  %5850 = vmatpush.bf16.msra.mxu0 0
  %5851 = vmatpush.bf16.msra.mxu0 0
  %5852 = vmatpush.bf16.msra.mxu0 0
  %5853 = vmatpush.bf16.msra.mxu0 0
  %5854 = vmatpush.bf16.msra.mxu0 0
  %5855 = vmatpush.bf16.msra.mxu0 0
  %5856 = vmatpush.bf16.msra.mxu0 0
  %5857 = vmatpush.bf16.msra.mxu0 %v5795
  %5858 = vmatmul.bf16.gmra.mxu0 %v5786
  %v5859 = vpop.f32.mrf.mxu0
  %v5860 = vadd.f32 0.0, %v5859
  %v5861 = vpop.f32.mrf.mxu0
  %5862 = vdwg.mxu0
  %5863 = vmatpush.bf16.msra.mxu0 0
  %5864 = vmatpush.bf16.msra.mxu0 0
  %5865 = vmatpush.bf16.msra.mxu0 0
  %5866 = vmatpush.bf16.msra.mxu0 0
  %5867 = vmatpush.bf16.msra.mxu0 0
  %5868 = vmatpush.bf16.msra.mxu0 0
  %5869 = vmatpush.bf16.msra.mxu0 0
  %5870 = vmatpush.bf16.msra.mxu0 %v5798
  %5871 = vmatmul.bf16.gmra.mxu0 %v5786
  %v5872 = vpop.f32.mrf.mxu0
  %v5873 = vadd.f32 0.0, %v5872
  %v5874 = vpop.f32.mrf.mxu0
  %5875 = vdwg.mxu0
  %5876 = vmatpush.bf16.msra.mxu0 0
  %5877 = vmatpush.bf16.msra.mxu0 0
  %5878 = vmatpush.bf16.msra.mxu0 0
  %5879 = vmatpush.bf16.msra.mxu0 0
  %5880 = vmatpush.bf16.msra.mxu0 0
  %5881 = vmatpush.bf16.msra.mxu0 0
  %5882 = vmatpush.bf16.msra.mxu0 0
  %5883 = vmatpush.bf16.msra.mxu0 %v5801
  %5884 = vmatmul.bf16.gmra.mxu0 %v5786
  %v5885 = vpop.f32.mrf.mxu0
  %v5886 = vadd.f32 0.0, %v5885
  %v5887 = vpop.f32.mrf.mxu0
  %5888 = vdwg.mxu0
  %5889 = vmatpush.bf16.msra.mxu0 0
  %5890 = vmatpush.bf16.msra.mxu0 0
  %5891 = vmatpush.bf16.msra.mxu0 0
  %5892 = vmatpush.bf16.msra.mxu0 0
  %5893 = vmatpush.bf16.msra.mxu0 0
  %5894 = vmatpush.bf16.msra.mxu0 0
  %5895 = vmatpush.bf16.msra.mxu0 0
  %5896 = vmatpush.bf16.msra.mxu0 %v5804
  %5897 = vmatmul.bf16.gmra.mxu0 %v5786
  %v5898 = vpop.f32.mrf.mxu0
  %v5899 = vadd.f32 0.0, %v5898
  %v5900 = vpop.f32.mrf.mxu0
  %5901 = vdwg.mxu0
  %5902 = vmatpush.bf16.msra.mxu0 0
  %5903 = vmatpush.bf16.msra.mxu0 0
  %5904 = vmatpush.bf16.msra.mxu0 0
  %5905 = vmatpush.bf16.msra.mxu0 0
  %5906 = vmatpush.bf16.msra.mxu0 0
  %5907 = vmatpush.bf16.msra.mxu0 0
  %5908 = vmatpush.bf16.msra.mxu0 0
  %5909 = vmatpush.bf16.msra.mxu0 %v5807
  %5910 = vmatmul.bf16.gmra.mxu0 %v5786
  %v5911 = vpop.f32.mrf.mxu0
  %v5912 = vadd.f32 0.0, %v5911
  %v5913 = vpop.f32.mrf.mxu0
  %5914 = vdwg.mxu0
  %5915 = vmatpush.bf16.msra.mxu0 0
  %5916 = vmatpush.bf16.msra.mxu0 0
  %5917 = vmatpush.bf16.msra.mxu0 0
  %5918 = vmatpush.bf16.msra.mxu0 0
  %5919 = vmatpush.bf16.msra.mxu0 0
  %5920 = vmatpush.bf16.msra.mxu0 0
  %5921 = vmatpush.bf16.msra.mxu0 0
  %5922 = vmatpush.bf16.msra.mxu0 %v5810
  %5923 = vmatmul.bf16.gmra.mxu0 %v5786
  %v5924 = vpop.f32.mrf.mxu0
  %v5925 = vadd.f32 0.0, %v5924
  %v5926 = vpop.f32.mrf.mxu0
  %5927 = vdwg.mxu0
  %5928 = vmatpush.bf16.msra.mxu0 0
  %5929 = vmatpush.bf16.msra.mxu0 0
  %5930 = vmatpush.bf16.msra.mxu0 0
  %5931 = vmatpush.bf16.msra.mxu0 0
  %5932 = vmatpush.bf16.msra.mxu0 0
  %5933 = vmatpush.bf16.msra.mxu0 0
  %5934 = vmatpush.bf16.msra.mxu0 0
  %5935 = vmatpush.bf16.msra.mxu0 %v5813
  %5936 = vmatmul.bf16.gmra.mxu0 %v5786
  %v5937 = vpop.f32.mrf.mxu0
  %v5938 = vadd.f32 0.0, %v5937
  %v5939 = vpop.f32.mrf.mxu0
  %5940 = vdwg.mxu0
  %5941 = vmatpush.bf16.msra.mxu0 0
  %5942 = vmatpush.bf16.msra.mxu0 0
  %5943 = vmatpush.bf16.msra.mxu0 0
  %5944 = vmatpush.bf16.msra.mxu0 0
  %5945 = vmatpush.bf16.msra.mxu0 0
  %5946 = vmatpush.bf16.msra.mxu0 0
  %5947 = vmatpush.bf16.msra.mxu0 0
  %5948 = vmatpush.bf16.msra.mxu0 %v5816
  %5949 = vmatmul.bf16.gmra.mxu0 %v5786
  %v5950 = vpop.f32.mrf.mxu0
  %v5951 = vadd.f32 0.0, %v5950
  %v5952 = vpop.f32.mrf.mxu0
  %5953 = vdwg.mxu0
  %5954 = vmatpush.bf16.msra.mxu0 0
  %5955 = vmatpush.bf16.msra.mxu0 0
  %5956 = vmatpush.bf16.msra.mxu0 0
  %5957 = vmatpush.bf16.msra.mxu0 0
  %5958 = vmatpush.bf16.msra.mxu0 0
  %5959 = vmatpush.bf16.msra.mxu0 0
  %5960 = vmatpush.bf16.msra.mxu0 0
  %5961 = vmatpush.bf16.msra.mxu0 %v5819
  %5962 = vmatmul.bf16.gmra.mxu0 %v5786
  %v5963 = vpop.f32.mrf.mxu0
  %v5964 = vadd.f32 0.0, %v5963
  %v5965 = vpop.f32.mrf.mxu0
  %5966 = vdwg.mxu0
  %5967 = vmatpush.bf16.msra.mxu0 0
  %5968 = vmatpush.bf16.msra.mxu0 0
  %5969 = vmatpush.bf16.msra.mxu0 0
  %5970 = vmatpush.bf16.msra.mxu0 0
  %5971 = vmatpush.bf16.msra.mxu0 0
  %5972 = vmatpush.bf16.msra.mxu0 0
  %5973 = vmatpush.bf16.msra.mxu0 0
  %5974 = vmatpush.bf16.msra.mxu0 %v5822
  %5975 = vmatmul.bf16.gmra.mxu0 %v5786
  %v5976 = vpop.f32.mrf.mxu0
  %v5977 = vadd.f32 0.0, %v5976
  %v5978 = vpop.f32.mrf.mxu0
  %5979 = vdwg.mxu0
  %v5992 = vrot.slane %v5847, 6
  %v5993 = vrot.slane %v5860, 4
  %v5994 = vrot.slane %v5873, 2
  %v5995 = vrot.slane %v5899, 6
  %v5996 = vrot.slane %v5912, 4
  %v5997 = vrot.slane %v5925, 2
  %v5998 = vrot.slane %v5951, 6
  %v5999 = vrot.slane %v5964, 4
  %v6000 = vrot.slane %v5977, 2
  %v6001 = vsel %vm1250, %v5834, %v5992
  %v6002 = vsel %vm1252, %v5993, %v5994
  %v6003 = vsel %vm1254, %v6001, %v6002
  %v6004 = vsel %vm1250, %v5886, %v5995
  %v6005 = vsel %vm1252, %v5996, %v5997
  %v6006 = vsel %vm1254, %v6004, %v6005
  %v6007 = vsel %vm1250, %v5938, %v5998
  %v6008 = vsel %vm1252, %v5999, %v6000
  %v6009 = vsel %vm1254, %v6007, %v6008
  %v6013 = vadd.f32 %v5740, %v6003
  %v6014 = vadd.f32 %v5741, %v6006
  %v6015 = vadd.f32 %v5742, %v6009
  %6016 = vst [vmem:[#allocation3] sm:$0xff] %v6013
  %6017 = vst [vmem:[#allocation3 + $0x8] sm:$0xff] %v6014
  %6018 = vst.msk [vmem:[#allocation3 + $0x10] sm:$0xff] %vm1274, %v6015
  %v6019 = vld [vmem:[#allocation3] sm:$0xff]
  %v6020 = vld [vmem:[#allocation3 + $0x8] sm:$0xff]
  %v6021 = vld [vmem:[#allocation3 + $0x10] sm:$0xff]
  %s6022 = sadd.s32 %s991, 18
  %s6023 = smul.u32 %s6022, 2
  %s6024 = scalar_lea.vmem [#allocation2], %s6023
  %v6025 = vld [vmem:[%s6024] sm:$0x3]
  %v6026 = vpack.c.bf16 %v6025, %v6025
  %s6027 = scalar_lea.vmem %s10, 864
  %v6028 = vld [vmem:[%s6027] sm:$0x77]
  %v6029 = vld [vmem:[%s6027 + $0x8] sm:$0x77]
  %v6030 = vld [vmem:[%s6027 + $0x10] sm:$0x77]
  %v6031 = vld [vmem:[%s6027 + $0x18] sm:$0x77]
  %v6032 = vld [vmem:[%s6027 + $0x20] sm:$0x77]
  %v6033 = vld [vmem:[%s6027 + $0x28] sm:$0x77]
  %v6040 = vunpack.c.l.b16 %v6028
  %v6041 = vunpack.c.h.b16 %v6028
  %v6042 = vunpack.c.l.b16 %v6029
  %v6043 = vunpack.c.h.b16 %v6029
  %v6044 = vunpack.c.l.b16 %v6030
  %v6045 = vunpack.c.h.b16 %v6030
  %v6046 = vunpack.c.l.b16 %v6031
  %v6047 = vunpack.c.h.b16 %v6031
  %v6048 = vunpack.c.l.b16 %v6032
  %v6049 = vunpack.c.h.b16 %v6032
  %v6050 = vunpack.c.l.b16 %v6033
  %v6051 = vunpack.c.h.b16 %v6033
  %v6052 = vpack.c.b16 %v6040, %v6040
  %v6053 = vpack.c.b16 %v6041, %v6041
  %v6054 = vpack.c.b16 %v6042, %v6042
  %v6055 = vpack.c.b16 %v6043, %v6043
  %v6056 = vpack.c.b16 %v6044, %v6044
  %v6057 = vpack.c.b16 %v6045, %v6045
  %v6058 = vpack.c.b16 %v6046, %v6046
  %v6059 = vpack.c.b16 %v6047, %v6047
  %v6060 = vpack.c.b16 %v6048, %v6048
  %v6061 = vpack.c.b16 %v6049, %v6049
  %v6062 = vpack.c.b16 %v6050, %v6050
  %v6063 = vpack.c.b16 %v6051, %v6051
  %v6065 = vsel %vm1032, %v6026, 0
  %v6068 = vsel %vm1036, %v6052, 0
  %v6071 = vsel %vm1036, %v6053, 0
  %v6074 = vsel %vm1036, %v6054, 0
  %v6077 = vsel %vm1036, %v6055, 0
  %v6080 = vsel %vm1036, %v6056, 0
  %v6083 = vsel %vm1036, %v6057, 0
  %v6086 = vsel %vm1036, %v6058, 0
  %v6089 = vsel %vm1036, %v6059, 0
  %v6092 = vsel %vm1036, %v6060, 0
  %v6095 = vsel %vm1036, %v6061, 0
  %v6098 = vsel %vm1036, %v6062, 0
  %v6101 = vsel %vm1036, %v6063, 0
  %6103 = vmatpush.bf16.msra.mxu0 0
  %6104 = vmatpush.bf16.msra.mxu0 0
  %6105 = vmatpush.bf16.msra.mxu0 0
  %6106 = vmatpush.bf16.msra.mxu0 0
  %6107 = vmatpush.bf16.msra.mxu0 0
  %6108 = vmatpush.bf16.msra.mxu0 0
  %6109 = vmatpush.bf16.msra.mxu0 0
  %6110 = vmatpush.bf16.msra.mxu0 %v6068
  %6111 = vmatmul.bf16.gmra.mxu0 %v6065
  %v6112 = vpop.f32.mrf.mxu0
  %v6113 = vadd.f32 0.0, %v6112
  %v6114 = vpop.f32.mrf.mxu0
  %6115 = vdwg.mxu0
  %6116 = vmatpush.bf16.msra.mxu0 0
  %6117 = vmatpush.bf16.msra.mxu0 0
  %6118 = vmatpush.bf16.msra.mxu0 0
  %6119 = vmatpush.bf16.msra.mxu0 0
  %6120 = vmatpush.bf16.msra.mxu0 0
  %6121 = vmatpush.bf16.msra.mxu0 0
  %6122 = vmatpush.bf16.msra.mxu0 0
  %6123 = vmatpush.bf16.msra.mxu0 %v6071
  %6124 = vmatmul.bf16.gmra.mxu0 %v6065
  %v6125 = vpop.f32.mrf.mxu0
  %v6126 = vadd.f32 0.0, %v6125
  %v6127 = vpop.f32.mrf.mxu0
  %6128 = vdwg.mxu0
  %6129 = vmatpush.bf16.msra.mxu0 0
  %6130 = vmatpush.bf16.msra.mxu0 0
  %6131 = vmatpush.bf16.msra.mxu0 0
  %6132 = vmatpush.bf16.msra.mxu0 0
  %6133 = vmatpush.bf16.msra.mxu0 0
  %6134 = vmatpush.bf16.msra.mxu0 0
  %6135 = vmatpush.bf16.msra.mxu0 0
  %6136 = vmatpush.bf16.msra.mxu0 %v6074
  %6137 = vmatmul.bf16.gmra.mxu0 %v6065
  %v6138 = vpop.f32.mrf.mxu0
  %v6139 = vadd.f32 0.0, %v6138
  %v6140 = vpop.f32.mrf.mxu0
  %6141 = vdwg.mxu0
  %6142 = vmatpush.bf16.msra.mxu0 0
  %6143 = vmatpush.bf16.msra.mxu0 0
  %6144 = vmatpush.bf16.msra.mxu0 0
  %6145 = vmatpush.bf16.msra.mxu0 0
  %6146 = vmatpush.bf16.msra.mxu0 0
  %6147 = vmatpush.bf16.msra.mxu0 0
  %6148 = vmatpush.bf16.msra.mxu0 0
  %6149 = vmatpush.bf16.msra.mxu0 %v6077
  %6150 = vmatmul.bf16.gmra.mxu0 %v6065
  %v6151 = vpop.f32.mrf.mxu0
  %v6152 = vadd.f32 0.0, %v6151
  %v6153 = vpop.f32.mrf.mxu0
  %6154 = vdwg.mxu0
  %6155 = vmatpush.bf16.msra.mxu0 0
  %6156 = vmatpush.bf16.msra.mxu0 0
  %6157 = vmatpush.bf16.msra.mxu0 0
  %6158 = vmatpush.bf16.msra.mxu0 0
  %6159 = vmatpush.bf16.msra.mxu0 0
  %6160 = vmatpush.bf16.msra.mxu0 0
  %6161 = vmatpush.bf16.msra.mxu0 0
  %6162 = vmatpush.bf16.msra.mxu0 %v6080
  %6163 = vmatmul.bf16.gmra.mxu0 %v6065
  %v6164 = vpop.f32.mrf.mxu0
  %v6165 = vadd.f32 0.0, %v6164
  %v6166 = vpop.f32.mrf.mxu0
  %6167 = vdwg.mxu0
  %6168 = vmatpush.bf16.msra.mxu0 0
  %6169 = vmatpush.bf16.msra.mxu0 0
  %6170 = vmatpush.bf16.msra.mxu0 0
  %6171 = vmatpush.bf16.msra.mxu0 0
  %6172 = vmatpush.bf16.msra.mxu0 0
  %6173 = vmatpush.bf16.msra.mxu0 0
  %6174 = vmatpush.bf16.msra.mxu0 0
  %6175 = vmatpush.bf16.msra.mxu0 %v6083
  %6176 = vmatmul.bf16.gmra.mxu0 %v6065
  %v6177 = vpop.f32.mrf.mxu0
  %v6178 = vadd.f32 0.0, %v6177
  %v6179 = vpop.f32.mrf.mxu0
  %6180 = vdwg.mxu0
  %6181 = vmatpush.bf16.msra.mxu0 0
  %6182 = vmatpush.bf16.msra.mxu0 0
  %6183 = vmatpush.bf16.msra.mxu0 0
  %6184 = vmatpush.bf16.msra.mxu0 0
  %6185 = vmatpush.bf16.msra.mxu0 0
  %6186 = vmatpush.bf16.msra.mxu0 0
  %6187 = vmatpush.bf16.msra.mxu0 0
  %6188 = vmatpush.bf16.msra.mxu0 %v6086
  %6189 = vmatmul.bf16.gmra.mxu0 %v6065
  %v6190 = vpop.f32.mrf.mxu0
  %v6191 = vadd.f32 0.0, %v6190
  %v6192 = vpop.f32.mrf.mxu0
  %6193 = vdwg.mxu0
  %6194 = vmatpush.bf16.msra.mxu0 0
  %6195 = vmatpush.bf16.msra.mxu0 0
  %6196 = vmatpush.bf16.msra.mxu0 0
  %6197 = vmatpush.bf16.msra.mxu0 0
  %6198 = vmatpush.bf16.msra.mxu0 0
  %6199 = vmatpush.bf16.msra.mxu0 0
  %6200 = vmatpush.bf16.msra.mxu0 0
  %6201 = vmatpush.bf16.msra.mxu0 %v6089
  %6202 = vmatmul.bf16.gmra.mxu0 %v6065
  %v6203 = vpop.f32.mrf.mxu0
  %v6204 = vadd.f32 0.0, %v6203
  %v6205 = vpop.f32.mrf.mxu0
  %6206 = vdwg.mxu0
  %6207 = vmatpush.bf16.msra.mxu0 0
  %6208 = vmatpush.bf16.msra.mxu0 0
  %6209 = vmatpush.bf16.msra.mxu0 0
  %6210 = vmatpush.bf16.msra.mxu0 0
  %6211 = vmatpush.bf16.msra.mxu0 0
  %6212 = vmatpush.bf16.msra.mxu0 0
  %6213 = vmatpush.bf16.msra.mxu0 0
  %6214 = vmatpush.bf16.msra.mxu0 %v6092
  %6215 = vmatmul.bf16.gmra.mxu0 %v6065
  %v6216 = vpop.f32.mrf.mxu0
  %v6217 = vadd.f32 0.0, %v6216
  %v6218 = vpop.f32.mrf.mxu0
  %6219 = vdwg.mxu0
  %6220 = vmatpush.bf16.msra.mxu0 0
  %6221 = vmatpush.bf16.msra.mxu0 0
  %6222 = vmatpush.bf16.msra.mxu0 0
  %6223 = vmatpush.bf16.msra.mxu0 0
  %6224 = vmatpush.bf16.msra.mxu0 0
  %6225 = vmatpush.bf16.msra.mxu0 0
  %6226 = vmatpush.bf16.msra.mxu0 0
  %6227 = vmatpush.bf16.msra.mxu0 %v6095
  %6228 = vmatmul.bf16.gmra.mxu0 %v6065
  %v6229 = vpop.f32.mrf.mxu0
  %v6230 = vadd.f32 0.0, %v6229
  %v6231 = vpop.f32.mrf.mxu0
  %6232 = vdwg.mxu0
  %6233 = vmatpush.bf16.msra.mxu0 0
  %6234 = vmatpush.bf16.msra.mxu0 0
  %6235 = vmatpush.bf16.msra.mxu0 0
  %6236 = vmatpush.bf16.msra.mxu0 0
  %6237 = vmatpush.bf16.msra.mxu0 0
  %6238 = vmatpush.bf16.msra.mxu0 0
  %6239 = vmatpush.bf16.msra.mxu0 0
  %6240 = vmatpush.bf16.msra.mxu0 %v6098
  %6241 = vmatmul.bf16.gmra.mxu0 %v6065
  %v6242 = vpop.f32.mrf.mxu0
  %v6243 = vadd.f32 0.0, %v6242
  %v6244 = vpop.f32.mrf.mxu0
  %6245 = vdwg.mxu0
  %6246 = vmatpush.bf16.msra.mxu0 0
  %6247 = vmatpush.bf16.msra.mxu0 0
  %6248 = vmatpush.bf16.msra.mxu0 0
  %6249 = vmatpush.bf16.msra.mxu0 0
  %6250 = vmatpush.bf16.msra.mxu0 0
  %6251 = vmatpush.bf16.msra.mxu0 0
  %6252 = vmatpush.bf16.msra.mxu0 0
  %6253 = vmatpush.bf16.msra.mxu0 %v6101
  %6254 = vmatmul.bf16.gmra.mxu0 %v6065
  %v6255 = vpop.f32.mrf.mxu0
  %v6256 = vadd.f32 0.0, %v6255
  %v6257 = vpop.f32.mrf.mxu0
  %6258 = vdwg.mxu0
  %v6271 = vrot.slane %v6126, 6
  %v6272 = vrot.slane %v6139, 4
  %v6273 = vrot.slane %v6152, 2
  %v6274 = vrot.slane %v6178, 6
  %v6275 = vrot.slane %v6191, 4
  %v6276 = vrot.slane %v6204, 2
  %v6277 = vrot.slane %v6230, 6
  %v6278 = vrot.slane %v6243, 4
  %v6279 = vrot.slane %v6256, 2
  %v6280 = vsel %vm1250, %v6113, %v6271
  %v6281 = vsel %vm1252, %v6272, %v6273
  %v6282 = vsel %vm1254, %v6280, %v6281
  %v6283 = vsel %vm1250, %v6165, %v6274
  %v6284 = vsel %vm1252, %v6275, %v6276
  %v6285 = vsel %vm1254, %v6283, %v6284
  %v6286 = vsel %vm1250, %v6217, %v6277
  %v6287 = vsel %vm1252, %v6278, %v6279
  %v6288 = vsel %vm1254, %v6286, %v6287
  %v6292 = vadd.f32 %v6019, %v6282
  %v6293 = vadd.f32 %v6020, %v6285
  %v6294 = vadd.f32 %v6021, %v6288
  %6295 = vst [vmem:[#allocation3] sm:$0xff] %v6292
  %6296 = vst [vmem:[#allocation3 + $0x8] sm:$0xff] %v6293
  %6297 = vst.msk [vmem:[#allocation3 + $0x10] sm:$0xff] %vm1274, %v6294
  %v6298 = vld [vmem:[#allocation3] sm:$0xff]
  %v6299 = vld [vmem:[#allocation3 + $0x8] sm:$0xff]
  %v6300 = vld [vmem:[#allocation3 + $0x10] sm:$0xff]
  %s6301 = sadd.s32 %s991, 19
  %s6302 = smul.u32 %s6301, 2
  %s6303 = scalar_lea.vmem [#allocation2], %s6302
  %v6304 = vld [vmem:[%s6303] sm:$0x3]
  %v6305 = vpack.c.bf16 %v6304, %v6304
  %s6306 = scalar_lea.vmem %s10, 912
  %v6307 = vld [vmem:[%s6306] sm:$0x77]
  %v6308 = vld [vmem:[%s6306 + $0x8] sm:$0x77]
  %v6309 = vld [vmem:[%s6306 + $0x10] sm:$0x77]
  %v6310 = vld [vmem:[%s6306 + $0x18] sm:$0x77]
  %v6311 = vld [vmem:[%s6306 + $0x20] sm:$0x77]
  %v6312 = vld [vmem:[%s6306 + $0x28] sm:$0x77]
  %v6319 = vunpack.c.l.b16 %v6307
  %v6320 = vunpack.c.h.b16 %v6307
  %v6321 = vunpack.c.l.b16 %v6308
  %v6322 = vunpack.c.h.b16 %v6308
  %v6323 = vunpack.c.l.b16 %v6309
  %v6324 = vunpack.c.h.b16 %v6309
  %v6325 = vunpack.c.l.b16 %v6310
  %v6326 = vunpack.c.h.b16 %v6310
  %v6327 = vunpack.c.l.b16 %v6311
  %v6328 = vunpack.c.h.b16 %v6311
  %v6329 = vunpack.c.l.b16 %v6312
  %v6330 = vunpack.c.h.b16 %v6312
  %v6331 = vpack.c.b16 %v6319, %v6319
  %v6332 = vpack.c.b16 %v6320, %v6320
  %v6333 = vpack.c.b16 %v6321, %v6321
  %v6334 = vpack.c.b16 %v6322, %v6322
  %v6335 = vpack.c.b16 %v6323, %v6323
  %v6336 = vpack.c.b16 %v6324, %v6324
  %v6337 = vpack.c.b16 %v6325, %v6325
  %v6338 = vpack.c.b16 %v6326, %v6326
  %v6339 = vpack.c.b16 %v6327, %v6327
  %v6340 = vpack.c.b16 %v6328, %v6328
  %v6341 = vpack.c.b16 %v6329, %v6329
  %v6342 = vpack.c.b16 %v6330, %v6330
  %v6344 = vsel %vm1032, %v6305, 0
  %v6347 = vsel %vm1036, %v6331, 0
  %v6350 = vsel %vm1036, %v6332, 0
  %v6353 = vsel %vm1036, %v6333, 0
  %v6356 = vsel %vm1036, %v6334, 0
  %v6359 = vsel %vm1036, %v6335, 0
  %v6362 = vsel %vm1036, %v6336, 0
  %v6365 = vsel %vm1036, %v6337, 0
  %v6368 = vsel %vm1036, %v6338, 0
  %v6371 = vsel %vm1036, %v6339, 0
  %v6374 = vsel %vm1036, %v6340, 0
  %v6377 = vsel %vm1036, %v6341, 0
  %v6380 = vsel %vm1036, %v6342, 0
  %6382 = vmatpush.bf16.msra.mxu0 0
  %6383 = vmatpush.bf16.msra.mxu0 0
  %6384 = vmatpush.bf16.msra.mxu0 0
  %6385 = vmatpush.bf16.msra.mxu0 0
  %6386 = vmatpush.bf16.msra.mxu0 0
  %6387 = vmatpush.bf16.msra.mxu0 0
  %6388 = vmatpush.bf16.msra.mxu0 0
  %6389 = vmatpush.bf16.msra.mxu0 %v6347
  %6390 = vmatmul.bf16.gmra.mxu0 %v6344
  %v6391 = vpop.f32.mrf.mxu0
  %v6392 = vadd.f32 0.0, %v6391
  %v6393 = vpop.f32.mrf.mxu0
  %6394 = vdwg.mxu0
  %6395 = vmatpush.bf16.msra.mxu0 0
  %6396 = vmatpush.bf16.msra.mxu0 0
  %6397 = vmatpush.bf16.msra.mxu0 0
  %6398 = vmatpush.bf16.msra.mxu0 0
  %6399 = vmatpush.bf16.msra.mxu0 0
  %6400 = vmatpush.bf16.msra.mxu0 0
  %6401 = vmatpush.bf16.msra.mxu0 0
  %6402 = vmatpush.bf16.msra.mxu0 %v6350
  %6403 = vmatmul.bf16.gmra.mxu0 %v6344
  %v6404 = vpop.f32.mrf.mxu0
  %v6405 = vadd.f32 0.0, %v6404
  %v6406 = vpop.f32.mrf.mxu0
  %6407 = vdwg.mxu0
  %6408 = vmatpush.bf16.msra.mxu0 0
  %6409 = vmatpush.bf16.msra.mxu0 0
  %6410 = vmatpush.bf16.msra.mxu0 0
  %6411 = vmatpush.bf16.msra.mxu0 0
  %6412 = vmatpush.bf16.msra.mxu0 0
  %6413 = vmatpush.bf16.msra.mxu0 0
  %6414 = vmatpush.bf16.msra.mxu0 0
  %6415 = vmatpush.bf16.msra.mxu0 %v6353
  %6416 = vmatmul.bf16.gmra.mxu0 %v6344
  %v6417 = vpop.f32.mrf.mxu0
  %v6418 = vadd.f32 0.0, %v6417
  %v6419 = vpop.f32.mrf.mxu0
  %6420 = vdwg.mxu0
  %6421 = vmatpush.bf16.msra.mxu0 0
  %6422 = vmatpush.bf16.msra.mxu0 0
  %6423 = vmatpush.bf16.msra.mxu0 0
  %6424 = vmatpush.bf16.msra.mxu0 0
  %6425 = vmatpush.bf16.msra.mxu0 0
  %6426 = vmatpush.bf16.msra.mxu0 0
  %6427 = vmatpush.bf16.msra.mxu0 0
  %6428 = vmatpush.bf16.msra.mxu0 %v6356
  %6429 = vmatmul.bf16.gmra.mxu0 %v6344
  %v6430 = vpop.f32.mrf.mxu0
  %v6431 = vadd.f32 0.0, %v6430
  %v6432 = vpop.f32.mrf.mxu0
  %6433 = vdwg.mxu0
  %6434 = vmatpush.bf16.msra.mxu0 0
  %6435 = vmatpush.bf16.msra.mxu0 0
  %6436 = vmatpush.bf16.msra.mxu0 0
  %6437 = vmatpush.bf16.msra.mxu0 0
  %6438 = vmatpush.bf16.msra.mxu0 0
  %6439 = vmatpush.bf16.msra.mxu0 0
  %6440 = vmatpush.bf16.msra.mxu0 0
  %6441 = vmatpush.bf16.msra.mxu0 %v6359
  %6442 = vmatmul.bf16.gmra.mxu0 %v6344
  %v6443 = vpop.f32.mrf.mxu0
  %v6444 = vadd.f32 0.0, %v6443
  %v6445 = vpop.f32.mrf.mxu0
  %6446 = vdwg.mxu0
  %6447 = vmatpush.bf16.msra.mxu0 0
  %6448 = vmatpush.bf16.msra.mxu0 0
  %6449 = vmatpush.bf16.msra.mxu0 0
  %6450 = vmatpush.bf16.msra.mxu0 0
  %6451 = vmatpush.bf16.msra.mxu0 0
  %6452 = vmatpush.bf16.msra.mxu0 0
  %6453 = vmatpush.bf16.msra.mxu0 0
  %6454 = vmatpush.bf16.msra.mxu0 %v6362
  %6455 = vmatmul.bf16.gmra.mxu0 %v6344
  %v6456 = vpop.f32.mrf.mxu0
  %v6457 = vadd.f32 0.0, %v6456
  %v6458 = vpop.f32.mrf.mxu0
  %6459 = vdwg.mxu0
  %6460 = vmatpush.bf16.msra.mxu0 0
  %6461 = vmatpush.bf16.msra.mxu0 0
  %6462 = vmatpush.bf16.msra.mxu0 0
  %6463 = vmatpush.bf16.msra.mxu0 0
  %6464 = vmatpush.bf16.msra.mxu0 0
  %6465 = vmatpush.bf16.msra.mxu0 0
  %6466 = vmatpush.bf16.msra.mxu0 0
  %6467 = vmatpush.bf16.msra.mxu0 %v6365
  %6468 = vmatmul.bf16.gmra.mxu0 %v6344
  %v6469 = vpop.f32.mrf.mxu0
  %v6470 = vadd.f32 0.0, %v6469
  %v6471 = vpop.f32.mrf.mxu0
  %6472 = vdwg.mxu0
  %6473 = vmatpush.bf16.msra.mxu0 0
  %6474 = vmatpush.bf16.msra.mxu0 0
  %6475 = vmatpush.bf16.msra.mxu0 0
  %6476 = vmatpush.bf16.msra.mxu0 0
  %6477 = vmatpush.bf16.msra.mxu0 0
  %6478 = vmatpush.bf16.msra.mxu0 0
  %6479 = vmatpush.bf16.msra.mxu0 0
  %6480 = vmatpush.bf16.msra.mxu0 %v6368
  %6481 = vmatmul.bf16.gmra.mxu0 %v6344
  %v6482 = vpop.f32.mrf.mxu0
  %v6483 = vadd.f32 0.0, %v6482
  %v6484 = vpop.f32.mrf.mxu0
  %6485 = vdwg.mxu0
  %6486 = vmatpush.bf16.msra.mxu0 0
  %6487 = vmatpush.bf16.msra.mxu0 0
  %6488 = vmatpush.bf16.msra.mxu0 0
  %6489 = vmatpush.bf16.msra.mxu0 0
  %6490 = vmatpush.bf16.msra.mxu0 0
  %6491 = vmatpush.bf16.msra.mxu0 0
  %6492 = vmatpush.bf16.msra.mxu0 0
  %6493 = vmatpush.bf16.msra.mxu0 %v6371
  %6494 = vmatmul.bf16.gmra.mxu0 %v6344
  %v6495 = vpop.f32.mrf.mxu0
  %v6496 = vadd.f32 0.0, %v6495
  %v6497 = vpop.f32.mrf.mxu0
  %6498 = vdwg.mxu0
  %6499 = vmatpush.bf16.msra.mxu0 0
  %6500 = vmatpush.bf16.msra.mxu0 0
  %6501 = vmatpush.bf16.msra.mxu0 0
  %6502 = vmatpush.bf16.msra.mxu0 0
  %6503 = vmatpush.bf16.msra.mxu0 0
  %6504 = vmatpush.bf16.msra.mxu0 0
  %6505 = vmatpush.bf16.msra.mxu0 0
  %6506 = vmatpush.bf16.msra.mxu0 %v6374
  %6507 = vmatmul.bf16.gmra.mxu0 %v6344
  %v6508 = vpop.f32.mrf.mxu0
  %v6509 = vadd.f32 0.0, %v6508
  %v6510 = vpop.f32.mrf.mxu0
  %6511 = vdwg.mxu0
  %6512 = vmatpush.bf16.msra.mxu0 0
  %6513 = vmatpush.bf16.msra.mxu0 0
  %6514 = vmatpush.bf16.msra.mxu0 0
  %6515 = vmatpush.bf16.msra.mxu0 0
  %6516 = vmatpush.bf16.msra.mxu0 0
  %6517 = vmatpush.bf16.msra.mxu0 0
  %6518 = vmatpush.bf16.msra.mxu0 0
  %6519 = vmatpush.bf16.msra.mxu0 %v6377
  %6520 = vmatmul.bf16.gmra.mxu0 %v6344
  %v6521 = vpop.f32.mrf.mxu0
  %v6522 = vadd.f32 0.0, %v6521
  %v6523 = vpop.f32.mrf.mxu0
  %6524 = vdwg.mxu0
  %6525 = vmatpush.bf16.msra.mxu0 0
  %6526 = vmatpush.bf16.msra.mxu0 0
  %6527 = vmatpush.bf16.msra.mxu0 0
  %6528 = vmatpush.bf16.msra.mxu0 0
  %6529 = vmatpush.bf16.msra.mxu0 0
  %6530 = vmatpush.bf16.msra.mxu0 0
  %6531 = vmatpush.bf16.msra.mxu0 0
  %6532 = vmatpush.bf16.msra.mxu0 %v6380
  %6533 = vmatmul.bf16.gmra.mxu0 %v6344
  %v6534 = vpop.f32.mrf.mxu0
  %v6535 = vadd.f32 0.0, %v6534
  %v6536 = vpop.f32.mrf.mxu0
  %6537 = vdwg.mxu0
  %v6550 = vrot.slane %v6405, 6
  %v6551 = vrot.slane %v6418, 4
  %v6552 = vrot.slane %v6431, 2
  %v6553 = vrot.slane %v6457, 6
  %v6554 = vrot.slane %v6470, 4
  %v6555 = vrot.slane %v6483, 2
  %v6556 = vrot.slane %v6509, 6
  %v6557 = vrot.slane %v6522, 4
  %v6558 = vrot.slane %v6535, 2
  %v6559 = vsel %vm1250, %v6392, %v6550
  %v6560 = vsel %vm1252, %v6551, %v6552
  %v6561 = vsel %vm1254, %v6559, %v6560
  %v6562 = vsel %vm1250, %v6444, %v6553
  %v6563 = vsel %vm1252, %v6554, %v6555
  %v6564 = vsel %vm1254, %v6562, %v6563
  %v6565 = vsel %vm1250, %v6496, %v6556
  %v6566 = vsel %vm1252, %v6557, %v6558
  %v6567 = vsel %vm1254, %v6565, %v6566
  %v6571 = vadd.f32 %v6298, %v6561
  %v6572 = vadd.f32 %v6299, %v6564
  %v6573 = vadd.f32 %v6300, %v6567
  %6574 = vst [vmem:[#allocation3] sm:$0xff] %v6571
  %6575 = vst [vmem:[#allocation3 + $0x8] sm:$0xff] %v6572
  %6576 = vst.msk [vmem:[#allocation3 + $0x10] sm:$0xff] %vm1274, %v6573
  %v6577 = vld [vmem:[#allocation3] sm:$0xff]
  %v6578 = vld [vmem:[#allocation3 + $0x8] sm:$0xff]
  %v6579 = vld [vmem:[#allocation3 + $0x10] sm:$0xff]
  %s6580 = sadd.s32 %s991, 20
  %s6581 = smul.u32 %s6580, 2
  %s6582 = scalar_lea.vmem [#allocation2], %s6581
  %v6583 = vld [vmem:[%s6582] sm:$0x3]
  %v6584 = vpack.c.bf16 %v6583, %v6583
  %s6585 = scalar_lea.vmem %s10, 960
  %v6586 = vld [vmem:[%s6585] sm:$0x77]
  %v6587 = vld [vmem:[%s6585 + $0x8] sm:$0x77]
  %v6588 = vld [vmem:[%s6585 + $0x10] sm:$0x77]
  %v6589 = vld [vmem:[%s6585 + $0x18] sm:$0x77]
  %v6590 = vld [vmem:[%s6585 + $0x20] sm:$0x77]
  %v6591 = vld [vmem:[%s6585 + $0x28] sm:$0x77]
  %v6598 = vunpack.c.l.b16 %v6586
  %v6599 = vunpack.c.h.b16 %v6586
  %v6600 = vunpack.c.l.b16 %v6587
  %v6601 = vunpack.c.h.b16 %v6587
  %v6602 = vunpack.c.l.b16 %v6588
  %v6603 = vunpack.c.h.b16 %v6588
  %v6604 = vunpack.c.l.b16 %v6589
  %v6605 = vunpack.c.h.b16 %v6589
  %v6606 = vunpack.c.l.b16 %v6590
  %v6607 = vunpack.c.h.b16 %v6590
  %v6608 = vunpack.c.l.b16 %v6591
  %v6609 = vunpack.c.h.b16 %v6591
  %v6610 = vpack.c.b16 %v6598, %v6598
  %v6611 = vpack.c.b16 %v6599, %v6599
  %v6612 = vpack.c.b16 %v6600, %v6600
  %v6613 = vpack.c.b16 %v6601, %v6601
  %v6614 = vpack.c.b16 %v6602, %v6602
  %v6615 = vpack.c.b16 %v6603, %v6603
  %v6616 = vpack.c.b16 %v6604, %v6604
  %v6617 = vpack.c.b16 %v6605, %v6605
  %v6618 = vpack.c.b16 %v6606, %v6606
  %v6619 = vpack.c.b16 %v6607, %v6607
  %v6620 = vpack.c.b16 %v6608, %v6608
  %v6621 = vpack.c.b16 %v6609, %v6609
  %v6623 = vsel %vm1032, %v6584, 0
  %v6626 = vsel %vm1036, %v6610, 0
  %v6629 = vsel %vm1036, %v6611, 0
  %v6632 = vsel %vm1036, %v6612, 0
  %v6635 = vsel %vm1036, %v6613, 0
  %v6638 = vsel %vm1036, %v6614, 0
  %v6641 = vsel %vm1036, %v6615, 0
  %v6644 = vsel %vm1036, %v6616, 0
  %v6647 = vsel %vm1036, %v6617, 0
  %v6650 = vsel %vm1036, %v6618, 0
  %v6653 = vsel %vm1036, %v6619, 0
  %v6656 = vsel %vm1036, %v6620, 0
  %v6659 = vsel %vm1036, %v6621, 0
  %6661 = vmatpush.bf16.msra.mxu0 0
  %6662 = vmatpush.bf16.msra.mxu0 0
  %6663 = vmatpush.bf16.msra.mxu0 0
  %6664 = vmatpush.bf16.msra.mxu0 0
  %6665 = vmatpush.bf16.msra.mxu0 0
  %6666 = vmatpush.bf16.msra.mxu0 0
  %6667 = vmatpush.bf16.msra.mxu0 0
  %6668 = vmatpush.bf16.msra.mxu0 %v6626
  %6669 = vmatmul.bf16.gmra.mxu0 %v6623
  %v6670 = vpop.f32.mrf.mxu0
  %v6671 = vadd.f32 0.0, %v6670
  %v6672 = vpop.f32.mrf.mxu0
  %6673 = vdwg.mxu0
  %6674 = vmatpush.bf16.msra.mxu0 0
  %6675 = vmatpush.bf16.msra.mxu0 0
  %6676 = vmatpush.bf16.msra.mxu0 0
  %6677 = vmatpush.bf16.msra.mxu0 0
  %6678 = vmatpush.bf16.msra.mxu0 0
  %6679 = vmatpush.bf16.msra.mxu0 0
  %6680 = vmatpush.bf16.msra.mxu0 0
  %6681 = vmatpush.bf16.msra.mxu0 %v6629
  %6682 = vmatmul.bf16.gmra.mxu0 %v6623
  %v6683 = vpop.f32.mrf.mxu0
  %v6684 = vadd.f32 0.0, %v6683
  %v6685 = vpop.f32.mrf.mxu0
  %6686 = vdwg.mxu0
  %6687 = vmatpush.bf16.msra.mxu0 0
  %6688 = vmatpush.bf16.msra.mxu0 0
  %6689 = vmatpush.bf16.msra.mxu0 0
  %6690 = vmatpush.bf16.msra.mxu0 0
  %6691 = vmatpush.bf16.msra.mxu0 0
  %6692 = vmatpush.bf16.msra.mxu0 0
  %6693 = vmatpush.bf16.msra.mxu0 0
  %6694 = vmatpush.bf16.msra.mxu0 %v6632
  %6695 = vmatmul.bf16.gmra.mxu0 %v6623
  %v6696 = vpop.f32.mrf.mxu0
  %v6697 = vadd.f32 0.0, %v6696
  %v6698 = vpop.f32.mrf.mxu0
  %6699 = vdwg.mxu0
  %6700 = vmatpush.bf16.msra.mxu0 0
  %6701 = vmatpush.bf16.msra.mxu0 0
  %6702 = vmatpush.bf16.msra.mxu0 0
  %6703 = vmatpush.bf16.msra.mxu0 0
  %6704 = vmatpush.bf16.msra.mxu0 0
  %6705 = vmatpush.bf16.msra.mxu0 0
  %6706 = vmatpush.bf16.msra.mxu0 0
  %6707 = vmatpush.bf16.msra.mxu0 %v6635
  %6708 = vmatmul.bf16.gmra.mxu0 %v6623
  %v6709 = vpop.f32.mrf.mxu0
  %v6710 = vadd.f32 0.0, %v6709
  %v6711 = vpop.f32.mrf.mxu0
  %6712 = vdwg.mxu0
  %6713 = vmatpush.bf16.msra.mxu0 0
  %6714 = vmatpush.bf16.msra.mxu0 0
  %6715 = vmatpush.bf16.msra.mxu0 0
  %6716 = vmatpush.bf16.msra.mxu0 0
  %6717 = vmatpush.bf16.msra.mxu0 0
  %6718 = vmatpush.bf16.msra.mxu0 0
  %6719 = vmatpush.bf16.msra.mxu0 0
  %6720 = vmatpush.bf16.msra.mxu0 %v6638
  %6721 = vmatmul.bf16.gmra.mxu0 %v6623
  %v6722 = vpop.f32.mrf.mxu0
  %v6723 = vadd.f32 0.0, %v6722
  %v6724 = vpop.f32.mrf.mxu0
  %6725 = vdwg.mxu0
  %6726 = vmatpush.bf16.msra.mxu0 0
  %6727 = vmatpush.bf16.msra.mxu0 0
  %6728 = vmatpush.bf16.msra.mxu0 0
  %6729 = vmatpush.bf16.msra.mxu0 0
  %6730 = vmatpush.bf16.msra.mxu0 0
  %6731 = vmatpush.bf16.msra.mxu0 0
  %6732 = vmatpush.bf16.msra.mxu0 0
  %6733 = vmatpush.bf16.msra.mxu0 %v6641
  %6734 = vmatmul.bf16.gmra.mxu0 %v6623
  %v6735 = vpop.f32.mrf.mxu0
  %v6736 = vadd.f32 0.0, %v6735
  %v6737 = vpop.f32.mrf.mxu0
  %6738 = vdwg.mxu0
  %6739 = vmatpush.bf16.msra.mxu0 0
  %6740 = vmatpush.bf16.msra.mxu0 0
  %6741 = vmatpush.bf16.msra.mxu0 0
  %6742 = vmatpush.bf16.msra.mxu0 0
  %6743 = vmatpush.bf16.msra.mxu0 0
  %6744 = vmatpush.bf16.msra.mxu0 0
  %6745 = vmatpush.bf16.msra.mxu0 0
  %6746 = vmatpush.bf16.msra.mxu0 %v6644
  %6747 = vmatmul.bf16.gmra.mxu0 %v6623
  %v6748 = vpop.f32.mrf.mxu0
  %v6749 = vadd.f32 0.0, %v6748
  %v6750 = vpop.f32.mrf.mxu0
  %6751 = vdwg.mxu0
  %6752 = vmatpush.bf16.msra.mxu0 0
  %6753 = vmatpush.bf16.msra.mxu0 0
  %6754 = vmatpush.bf16.msra.mxu0 0
  %6755 = vmatpush.bf16.msra.mxu0 0
  %6756 = vmatpush.bf16.msra.mxu0 0
  %6757 = vmatpush.bf16.msra.mxu0 0
  %6758 = vmatpush.bf16.msra.mxu0 0
  %6759 = vmatpush.bf16.msra.mxu0 %v6647
  %6760 = vmatmul.bf16.gmra.mxu0 %v6623
  %v6761 = vpop.f32.mrf.mxu0
  %v6762 = vadd.f32 0.0, %v6761
  %v6763 = vpop.f32.mrf.mxu0
  %6764 = vdwg.mxu0
  %6765 = vmatpush.bf16.msra.mxu0 0
  %6766 = vmatpush.bf16.msra.mxu0 0
  %6767 = vmatpush.bf16.msra.mxu0 0
  %6768 = vmatpush.bf16.msra.mxu0 0
  %6769 = vmatpush.bf16.msra.mxu0 0
  %6770 = vmatpush.bf16.msra.mxu0 0
  %6771 = vmatpush.bf16.msra.mxu0 0
  %6772 = vmatpush.bf16.msra.mxu0 %v6650
  %6773 = vmatmul.bf16.gmra.mxu0 %v6623
  %v6774 = vpop.f32.mrf.mxu0
  %v6775 = vadd.f32 0.0, %v6774
  %v6776 = vpop.f32.mrf.mxu0
  %6777 = vdwg.mxu0
  %6778 = vmatpush.bf16.msra.mxu0 0
  %6779 = vmatpush.bf16.msra.mxu0 0
  %6780 = vmatpush.bf16.msra.mxu0 0
  %6781 = vmatpush.bf16.msra.mxu0 0
  %6782 = vmatpush.bf16.msra.mxu0 0
  %6783 = vmatpush.bf16.msra.mxu0 0
  %6784 = vmatpush.bf16.msra.mxu0 0
  %6785 = vmatpush.bf16.msra.mxu0 %v6653
  %6786 = vmatmul.bf16.gmra.mxu0 %v6623
  %v6787 = vpop.f32.mrf.mxu0
  %v6788 = vadd.f32 0.0, %v6787
  %v6789 = vpop.f32.mrf.mxu0
  %6790 = vdwg.mxu0
  %6791 = vmatpush.bf16.msra.mxu0 0
  %6792 = vmatpush.bf16.msra.mxu0 0
  %6793 = vmatpush.bf16.msra.mxu0 0
  %6794 = vmatpush.bf16.msra.mxu0 0
  %6795 = vmatpush.bf16.msra.mxu0 0
  %6796 = vmatpush.bf16.msra.mxu0 0
  %6797 = vmatpush.bf16.msra.mxu0 0
  %6798 = vmatpush.bf16.msra.mxu0 %v6656
  %6799 = vmatmul.bf16.gmra.mxu0 %v6623
  %v6800 = vpop.f32.mrf.mxu0
  %v6801 = vadd.f32 0.0, %v6800
  %v6802 = vpop.f32.mrf.mxu0
  %6803 = vdwg.mxu0
  %6804 = vmatpush.bf16.msra.mxu0 0
  %6805 = vmatpush.bf16.msra.mxu0 0
  %6806 = vmatpush.bf16.msra.mxu0 0
  %6807 = vmatpush.bf16.msra.mxu0 0
  %6808 = vmatpush.bf16.msra.mxu0 0
  %6809 = vmatpush.bf16.msra.mxu0 0
  %6810 = vmatpush.bf16.msra.mxu0 0
  %6811 = vmatpush.bf16.msra.mxu0 %v6659
  %6812 = vmatmul.bf16.gmra.mxu0 %v6623
  %v6813 = vpop.f32.mrf.mxu0
  %v6814 = vadd.f32 0.0, %v6813
  %v6815 = vpop.f32.mrf.mxu0
  %6816 = vdwg.mxu0
  %v6829 = vrot.slane %v6684, 6
  %v6830 = vrot.slane %v6697, 4
  %v6831 = vrot.slane %v6710, 2
  %v6832 = vrot.slane %v6736, 6
  %v6833 = vrot.slane %v6749, 4
  %v6834 = vrot.slane %v6762, 2
  %v6835 = vrot.slane %v6788, 6
  %v6836 = vrot.slane %v6801, 4
  %v6837 = vrot.slane %v6814, 2
  %v6838 = vsel %vm1250, %v6671, %v6829
  %v6839 = vsel %vm1252, %v6830, %v6831
  %v6840 = vsel %vm1254, %v6838, %v6839
  %v6841 = vsel %vm1250, %v6723, %v6832
  %v6842 = vsel %vm1252, %v6833, %v6834
  %v6843 = vsel %vm1254, %v6841, %v6842
  %v6844 = vsel %vm1250, %v6775, %v6835
  %v6845 = vsel %vm1252, %v6836, %v6837
  %v6846 = vsel %vm1254, %v6844, %v6845
  %v6850 = vadd.f32 %v6577, %v6840
  %v6851 = vadd.f32 %v6578, %v6843
  %v6852 = vadd.f32 %v6579, %v6846
  %6853 = vst [vmem:[#allocation3] sm:$0xff] %v6850
  %6854 = vst [vmem:[#allocation3 + $0x8] sm:$0xff] %v6851
  %6855 = vst.msk [vmem:[#allocation3 + $0x10] sm:$0xff] %vm1274, %v6852
  %v6856 = vld [vmem:[#allocation3] sm:$0xff]
  %v6857 = vld [vmem:[#allocation3 + $0x8] sm:$0xff]
  %v6858 = vld [vmem:[#allocation3 + $0x10] sm:$0xff]
  %s6859 = sadd.s32 %s991, 21
  %s6860 = smul.u32 %s6859, 2
  %s6861 = scalar_lea.vmem [#allocation2], %s6860
  %v6862 = vld [vmem:[%s6861] sm:$0x3]
  %v6863 = vpack.c.bf16 %v6862, %v6862
  %s6864 = scalar_lea.vmem %s10, 1008
  %v6865 = vld [vmem:[%s6864] sm:$0x77]
  %v6866 = vld [vmem:[%s6864 + $0x8] sm:$0x77]
  %v6867 = vld [vmem:[%s6864 + $0x10] sm:$0x77]
  %v6868 = vld [vmem:[%s6864 + $0x18] sm:$0x77]
  %v6869 = vld [vmem:[%s6864 + $0x20] sm:$0x77]
  %v6870 = vld [vmem:[%s6864 + $0x28] sm:$0x77]
  %v6877 = vunpack.c.l.b16 %v6865
  %v6878 = vunpack.c.h.b16 %v6865
  %v6879 = vunpack.c.l.b16 %v6866
  %v6880 = vunpack.c.h.b16 %v6866
  %v6881 = vunpack.c.l.b16 %v6867
  %v6882 = vunpack.c.h.b16 %v6867
  %v6883 = vunpack.c.l.b16 %v6868
  %v6884 = vunpack.c.h.b16 %v6868
  %v6885 = vunpack.c.l.b16 %v6869
  %v6886 = vunpack.c.h.b16 %v6869
  %v6887 = vunpack.c.l.b16 %v6870
  %v6888 = vunpack.c.h.b16 %v6870
  %v6889 = vpack.c.b16 %v6877, %v6877
  %v6890 = vpack.c.b16 %v6878, %v6878
  %v6891 = vpack.c.b16 %v6879, %v6879
  %v6892 = vpack.c.b16 %v6880, %v6880
  %v6893 = vpack.c.b16 %v6881, %v6881
  %v6894 = vpack.c.b16 %v6882, %v6882
  %v6895 = vpack.c.b16 %v6883, %v6883
  %v6896 = vpack.c.b16 %v6884, %v6884
  %v6897 = vpack.c.b16 %v6885, %v6885
  %v6898 = vpack.c.b16 %v6886, %v6886
  %v6899 = vpack.c.b16 %v6887, %v6887
  %v6900 = vpack.c.b16 %v6888, %v6888
  %v6902 = vsel %vm1032, %v6863, 0
  %v6905 = vsel %vm1036, %v6889, 0
  %v6908 = vsel %vm1036, %v6890, 0
  %v6911 = vsel %vm1036, %v6891, 0
  %v6914 = vsel %vm1036, %v6892, 0
  %v6917 = vsel %vm1036, %v6893, 0
  %v6920 = vsel %vm1036, %v6894, 0
  %v6923 = vsel %vm1036, %v6895, 0
  %v6926 = vsel %vm1036, %v6896, 0
  %v6929 = vsel %vm1036, %v6897, 0
  %v6932 = vsel %vm1036, %v6898, 0
  %v6935 = vsel %vm1036, %v6899, 0
  %v6938 = vsel %vm1036, %v6900, 0
  %6940 = vmatpush.bf16.msra.mxu0 0
  %6941 = vmatpush.bf16.msra.mxu0 0
  %6942 = vmatpush.bf16.msra.mxu0 0
  %6943 = vmatpush.bf16.msra.mxu0 0
  %6944 = vmatpush.bf16.msra.mxu0 0
  %6945 = vmatpush.bf16.msra.mxu0 0
  %6946 = vmatpush.bf16.msra.mxu0 0
  %6947 = vmatpush.bf16.msra.mxu0 %v6905
  %6948 = vmatmul.bf16.gmra.mxu0 %v6902
  %v6949 = vpop.f32.mrf.mxu0
  %v6950 = vadd.f32 0.0, %v6949
  %v6951 = vpop.f32.mrf.mxu0
  %6952 = vdwg.mxu0
  %6953 = vmatpush.bf16.msra.mxu0 0
  %6954 = vmatpush.bf16.msra.mxu0 0
  %6955 = vmatpush.bf16.msra.mxu0 0
  %6956 = vmatpush.bf16.msra.mxu0 0
  %6957 = vmatpush.bf16.msra.mxu0 0
  %6958 = vmatpush.bf16.msra.mxu0 0
  %6959 = vmatpush.bf16.msra.mxu0 0
  %6960 = vmatpush.bf16.msra.mxu0 %v6908
  %6961 = vmatmul.bf16.gmra.mxu0 %v6902
  %v6962 = vpop.f32.mrf.mxu0
  %v6963 = vadd.f32 0.0, %v6962
  %v6964 = vpop.f32.mrf.mxu0
  %6965 = vdwg.mxu0
  %6966 = vmatpush.bf16.msra.mxu0 0
  %6967 = vmatpush.bf16.msra.mxu0 0
  %6968 = vmatpush.bf16.msra.mxu0 0
  %6969 = vmatpush.bf16.msra.mxu0 0
  %6970 = vmatpush.bf16.msra.mxu0 0
  %6971 = vmatpush.bf16.msra.mxu0 0
  %6972 = vmatpush.bf16.msra.mxu0 0
  %6973 = vmatpush.bf16.msra.mxu0 %v6911
  %6974 = vmatmul.bf16.gmra.mxu0 %v6902
  %v6975 = vpop.f32.mrf.mxu0
  %v6976 = vadd.f32 0.0, %v6975
  %v6977 = vpop.f32.mrf.mxu0
  %6978 = vdwg.mxu0
  %6979 = vmatpush.bf16.msra.mxu0 0
  %6980 = vmatpush.bf16.msra.mxu0 0
  %6981 = vmatpush.bf16.msra.mxu0 0
  %6982 = vmatpush.bf16.msra.mxu0 0
  %6983 = vmatpush.bf16.msra.mxu0 0
  %6984 = vmatpush.bf16.msra.mxu0 0
  %6985 = vmatpush.bf16.msra.mxu0 0
  %6986 = vmatpush.bf16.msra.mxu0 %v6914
  %6987 = vmatmul.bf16.gmra.mxu0 %v6902
  %v6988 = vpop.f32.mrf.mxu0
  %v6989 = vadd.f32 0.0, %v6988
  %v6990 = vpop.f32.mrf.mxu0
  %6991 = vdwg.mxu0
  %6992 = vmatpush.bf16.msra.mxu0 0
  %6993 = vmatpush.bf16.msra.mxu0 0
  %6994 = vmatpush.bf16.msra.mxu0 0
  %6995 = vmatpush.bf16.msra.mxu0 0
  %6996 = vmatpush.bf16.msra.mxu0 0
  %6997 = vmatpush.bf16.msra.mxu0 0
  %6998 = vmatpush.bf16.msra.mxu0 0
  %6999 = vmatpush.bf16.msra.mxu0 %v6917
  %7000 = vmatmul.bf16.gmra.mxu0 %v6902
  %v7001 = vpop.f32.mrf.mxu0
  %v7002 = vadd.f32 0.0, %v7001
  %v7003 = vpop.f32.mrf.mxu0
  %7004 = vdwg.mxu0
  %7005 = vmatpush.bf16.msra.mxu0 0
  %7006 = vmatpush.bf16.msra.mxu0 0
  %7007 = vmatpush.bf16.msra.mxu0 0
  %7008 = vmatpush.bf16.msra.mxu0 0
  %7009 = vmatpush.bf16.msra.mxu0 0
  %7010 = vmatpush.bf16.msra.mxu0 0
  %7011 = vmatpush.bf16.msra.mxu0 0
  %7012 = vmatpush.bf16.msra.mxu0 %v6920
  %7013 = vmatmul.bf16.gmra.mxu0 %v6902
  %v7014 = vpop.f32.mrf.mxu0
  %v7015 = vadd.f32 0.0, %v7014
  %v7016 = vpop.f32.mrf.mxu0
  %7017 = vdwg.mxu0
  %7018 = vmatpush.bf16.msra.mxu0 0
  %7019 = vmatpush.bf16.msra.mxu0 0
  %7020 = vmatpush.bf16.msra.mxu0 0
  %7021 = vmatpush.bf16.msra.mxu0 0
  %7022 = vmatpush.bf16.msra.mxu0 0
  %7023 = vmatpush.bf16.msra.mxu0 0
  %7024 = vmatpush.bf16.msra.mxu0 0
  %7025 = vmatpush.bf16.msra.mxu0 %v6923
  %7026 = vmatmul.bf16.gmra.mxu0 %v6902
  %v7027 = vpop.f32.mrf.mxu0
  %v7028 = vadd.f32 0.0, %v7027
  %v7029 = vpop.f32.mrf.mxu0
  %7030 = vdwg.mxu0
  %7031 = vmatpush.bf16.msra.mxu0 0
  %7032 = vmatpush.bf16.msra.mxu0 0
  %7033 = vmatpush.bf16.msra.mxu0 0
  %7034 = vmatpush.bf16.msra.mxu0 0
  %7035 = vmatpush.bf16.msra.mxu0 0
  %7036 = vmatpush.bf16.msra.mxu0 0
  %7037 = vmatpush.bf16.msra.mxu0 0
  %7038 = vmatpush.bf16.msra.mxu0 %v6926
  %7039 = vmatmul.bf16.gmra.mxu0 %v6902
  %v7040 = vpop.f32.mrf.mxu0
  %v7041 = vadd.f32 0.0, %v7040
  %v7042 = vpop.f32.mrf.mxu0
  %7043 = vdwg.mxu0
  %7044 = vmatpush.bf16.msra.mxu0 0
  %7045 = vmatpush.bf16.msra.mxu0 0
  %7046 = vmatpush.bf16.msra.mxu0 0
  %7047 = vmatpush.bf16.msra.mxu0 0
  %7048 = vmatpush.bf16.msra.mxu0 0
  %7049 = vmatpush.bf16.msra.mxu0 0
  %7050 = vmatpush.bf16.msra.mxu0 0
  %7051 = vmatpush.bf16.msra.mxu0 %v6929
  %7052 = vmatmul.bf16.gmra.mxu0 %v6902
  %v7053 = vpop.f32.mrf.mxu0
  %v7054 = vadd.f32 0.0, %v7053
  %v7055 = vpop.f32.mrf.mxu0
  %7056 = vdwg.mxu0
  %7057 = vmatpush.bf16.msra.mxu0 0
  %7058 = vmatpush.bf16.msra.mxu0 0
  %7059 = vmatpush.bf16.msra.mxu0 0
  %7060 = vmatpush.bf16.msra.mxu0 0
  %7061 = vmatpush.bf16.msra.mxu0 0
  %7062 = vmatpush.bf16.msra.mxu0 0
  %7063 = vmatpush.bf16.msra.mxu0 0
  %7064 = vmatpush.bf16.msra.mxu0 %v6932
  %7065 = vmatmul.bf16.gmra.mxu0 %v6902
  %v7066 = vpop.f32.mrf.mxu0
  %v7067 = vadd.f32 0.0, %v7066
  %v7068 = vpop.f32.mrf.mxu0
  %7069 = vdwg.mxu0
  %7070 = vmatpush.bf16.msra.mxu0 0
  %7071 = vmatpush.bf16.msra.mxu0 0
  %7072 = vmatpush.bf16.msra.mxu0 0
  %7073 = vmatpush.bf16.msra.mxu0 0
  %7074 = vmatpush.bf16.msra.mxu0 0
  %7075 = vmatpush.bf16.msra.mxu0 0
  %7076 = vmatpush.bf16.msra.mxu0 0
  %7077 = vmatpush.bf16.msra.mxu0 %v6935
  %7078 = vmatmul.bf16.gmra.mxu0 %v6902
  %v7079 = vpop.f32.mrf.mxu0
  %v7080 = vadd.f32 0.0, %v7079
  %v7081 = vpop.f32.mrf.mxu0
  %7082 = vdwg.mxu0
  %7083 = vmatpush.bf16.msra.mxu0 0
  %7084 = vmatpush.bf16.msra.mxu0 0
  %7085 = vmatpush.bf16.msra.mxu0 0
  %7086 = vmatpush.bf16.msra.mxu0 0
  %7087 = vmatpush.bf16.msra.mxu0 0
  %7088 = vmatpush.bf16.msra.mxu0 0
  %7089 = vmatpush.bf16.msra.mxu0 0
  %7090 = vmatpush.bf16.msra.mxu0 %v6938
  %7091 = vmatmul.bf16.gmra.mxu0 %v6902
  %v7092 = vpop.f32.mrf.mxu0
  %v7093 = vadd.f32 0.0, %v7092
  %v7094 = vpop.f32.mrf.mxu0
  %7095 = vdwg.mxu0
  %v7108 = vrot.slane %v6963, 6
  %v7109 = vrot.slane %v6976, 4
  %v7110 = vrot.slane %v6989, 2
  %v7111 = vrot.slane %v7015, 6
  %v7112 = vrot.slane %v7028, 4
  %v7113 = vrot.slane %v7041, 2
  %v7114 = vrot.slane %v7067, 6
  %v7115 = vrot.slane %v7080, 4
  %v7116 = vrot.slane %v7093, 2
  %v7117 = vsel %vm1250, %v6950, %v7108
  %v7118 = vsel %vm1252, %v7109, %v7110
  %v7119 = vsel %vm1254, %v7117, %v7118
  %v7120 = vsel %vm1250, %v7002, %v7111
  %v7121 = vsel %vm1252, %v7112, %v7113
  %v7122 = vsel %vm1254, %v7120, %v7121
  %v7123 = vsel %vm1250, %v7054, %v7114
  %v7124 = vsel %vm1252, %v7115, %v7116
  %v7125 = vsel %vm1254, %v7123, %v7124
  %v7129 = vadd.f32 %v6856, %v7119
  %v7130 = vadd.f32 %v6857, %v7122
  %v7131 = vadd.f32 %v6858, %v7125
  %7132 = vst [vmem:[#allocation3] sm:$0xff] %v7129
  %7133 = vst [vmem:[#allocation3 + $0x8] sm:$0xff] %v7130
  %7134 = vst.msk [vmem:[#allocation3 + $0x10] sm:$0xff] %vm1274, %v7131
  %v7135 = vld [vmem:[#allocation3] sm:$0xff]
  %v7136 = vld [vmem:[#allocation3 + $0x8] sm:$0xff]
  %v7137 = vld [vmem:[#allocation3 + $0x10] sm:$0xff]
  %s7138 = sadd.s32 %s991, 22
  %s7139 = smul.u32 %s7138, 2
  %s7140 = scalar_lea.vmem [#allocation2], %s7139
  %v7141 = vld [vmem:[%s7140] sm:$0x3]
  %v7142 = vpack.c.bf16 %v7141, %v7141
  %s7143 = scalar_lea.vmem %s10, 1056
  %v7144 = vld [vmem:[%s7143] sm:$0x77]
  %v7145 = vld [vmem:[%s7143 + $0x8] sm:$0x77]
  %v7146 = vld [vmem:[%s7143 + $0x10] sm:$0x77]
  %v7147 = vld [vmem:[%s7143 + $0x18] sm:$0x77]
  %v7148 = vld [vmem:[%s7143 + $0x20] sm:$0x77]
  %v7149 = vld [vmem:[%s7143 + $0x28] sm:$0x77]
  %v7156 = vunpack.c.l.b16 %v7144
  %v7157 = vunpack.c.h.b16 %v7144
  %v7158 = vunpack.c.l.b16 %v7145
  %v7159 = vunpack.c.h.b16 %v7145
  %v7160 = vunpack.c.l.b16 %v7146
  %v7161 = vunpack.c.h.b16 %v7146
  %v7162 = vunpack.c.l.b16 %v7147
  %v7163 = vunpack.c.h.b16 %v7147
  %v7164 = vunpack.c.l.b16 %v7148
  %v7165 = vunpack.c.h.b16 %v7148
  %v7166 = vunpack.c.l.b16 %v7149
  %v7167 = vunpack.c.h.b16 %v7149
  %v7168 = vpack.c.b16 %v7156, %v7156
  %v7169 = vpack.c.b16 %v7157, %v7157
  %v7170 = vpack.c.b16 %v7158, %v7158
  %v7171 = vpack.c.b16 %v7159, %v7159
  %v7172 = vpack.c.b16 %v7160, %v7160
  %v7173 = vpack.c.b16 %v7161, %v7161
  %v7174 = vpack.c.b16 %v7162, %v7162
  %v7175 = vpack.c.b16 %v7163, %v7163
  %v7176 = vpack.c.b16 %v7164, %v7164
  %v7177 = vpack.c.b16 %v7165, %v7165
  %v7178 = vpack.c.b16 %v7166, %v7166
  %v7179 = vpack.c.b16 %v7167, %v7167
  %v7181 = vsel %vm1032, %v7142, 0
  %v7184 = vsel %vm1036, %v7168, 0
  %v7187 = vsel %vm1036, %v7169, 0
  %v7190 = vsel %vm1036, %v7170, 0
  %v7193 = vsel %vm1036, %v7171, 0
  %v7196 = vsel %vm1036, %v7172, 0
  %v7199 = vsel %vm1036, %v7173, 0
  %v7202 = vsel %vm1036, %v7174, 0
  %v7205 = vsel %vm1036, %v7175, 0
  %v7208 = vsel %vm1036, %v7176, 0
  %v7211 = vsel %vm1036, %v7177, 0
  %v7214 = vsel %vm1036, %v7178, 0
  %v7217 = vsel %vm1036, %v7179, 0
  %7219 = vmatpush.bf16.msra.mxu0 0
  %7220 = vmatpush.bf16.msra.mxu0 0
  %7221 = vmatpush.bf16.msra.mxu0 0
  %7222 = vmatpush.bf16.msra.mxu0 0
  %7223 = vmatpush.bf16.msra.mxu0 0
  %7224 = vmatpush.bf16.msra.mxu0 0
  %7225 = vmatpush.bf16.msra.mxu0 0
  %7226 = vmatpush.bf16.msra.mxu0 %v7184
  %7227 = vmatmul.bf16.gmra.mxu0 %v7181
  %v7228 = vpop.f32.mrf.mxu0
  %v7229 = vadd.f32 0.0, %v7228
  %v7230 = vpop.f32.mrf.mxu0
  %7231 = vdwg.mxu0
  %7232 = vmatpush.bf16.msra.mxu0 0
  %7233 = vmatpush.bf16.msra.mxu0 0
  %7234 = vmatpush.bf16.msra.mxu0 0
  %7235 = vmatpush.bf16.msra.mxu0 0
  %7236 = vmatpush.bf16.msra.mxu0 0
  %7237 = vmatpush.bf16.msra.mxu0 0
  %7238 = vmatpush.bf16.msra.mxu0 0
  %7239 = vmatpush.bf16.msra.mxu0 %v7187
  %7240 = vmatmul.bf16.gmra.mxu0 %v7181
  %v7241 = vpop.f32.mrf.mxu0
  %v7242 = vadd.f32 0.0, %v7241
  %v7243 = vpop.f32.mrf.mxu0
  %7244 = vdwg.mxu0
  %7245 = vmatpush.bf16.msra.mxu0 0
  %7246 = vmatpush.bf16.msra.mxu0 0
  %7247 = vmatpush.bf16.msra.mxu0 0
  %7248 = vmatpush.bf16.msra.mxu0 0
  %7249 = vmatpush.bf16.msra.mxu0 0
  %7250 = vmatpush.bf16.msra.mxu0 0
  %7251 = vmatpush.bf16.msra.mxu0 0
  %7252 = vmatpush.bf16.msra.mxu0 %v7190
  %7253 = vmatmul.bf16.gmra.mxu0 %v7181
  %v7254 = vpop.f32.mrf.mxu0
  %v7255 = vadd.f32 0.0, %v7254
  %v7256 = vpop.f32.mrf.mxu0
  %7257 = vdwg.mxu0
  %7258 = vmatpush.bf16.msra.mxu0 0
  %7259 = vmatpush.bf16.msra.mxu0 0
  %7260 = vmatpush.bf16.msra.mxu0 0
  %7261 = vmatpush.bf16.msra.mxu0 0
  %7262 = vmatpush.bf16.msra.mxu0 0
  %7263 = vmatpush.bf16.msra.mxu0 0
  %7264 = vmatpush.bf16.msra.mxu0 0
  %7265 = vmatpush.bf16.msra.mxu0 %v7193
  %7266 = vmatmul.bf16.gmra.mxu0 %v7181
  %v7267 = vpop.f32.mrf.mxu0
  %v7268 = vadd.f32 0.0, %v7267
  %v7269 = vpop.f32.mrf.mxu0
  %7270 = vdwg.mxu0
  %7271 = vmatpush.bf16.msra.mxu0 0
  %7272 = vmatpush.bf16.msra.mxu0 0
  %7273 = vmatpush.bf16.msra.mxu0 0
  %7274 = vmatpush.bf16.msra.mxu0 0
  %7275 = vmatpush.bf16.msra.mxu0 0
  %7276 = vmatpush.bf16.msra.mxu0 0
  %7277 = vmatpush.bf16.msra.mxu0 0
  %7278 = vmatpush.bf16.msra.mxu0 %v7196
  %7279 = vmatmul.bf16.gmra.mxu0 %v7181
  %v7280 = vpop.f32.mrf.mxu0
  %v7281 = vadd.f32 0.0, %v7280
  %v7282 = vpop.f32.mrf.mxu0
  %7283 = vdwg.mxu0
  %7284 = vmatpush.bf16.msra.mxu0 0
  %7285 = vmatpush.bf16.msra.mxu0 0
  %7286 = vmatpush.bf16.msra.mxu0 0
  %7287 = vmatpush.bf16.msra.mxu0 0
  %7288 = vmatpush.bf16.msra.mxu0 0
  %7289 = vmatpush.bf16.msra.mxu0 0
  %7290 = vmatpush.bf16.msra.mxu0 0
  %7291 = vmatpush.bf16.msra.mxu0 %v7199
  %7292 = vmatmul.bf16.gmra.mxu0 %v7181
  %v7293 = vpop.f32.mrf.mxu0
  %v7294 = vadd.f32 0.0, %v7293
  %v7295 = vpop.f32.mrf.mxu0
  %7296 = vdwg.mxu0
  %7297 = vmatpush.bf16.msra.mxu0 0
  %7298 = vmatpush.bf16.msra.mxu0 0
  %7299 = vmatpush.bf16.msra.mxu0 0
  %7300 = vmatpush.bf16.msra.mxu0 0
  %7301 = vmatpush.bf16.msra.mxu0 0
  %7302 = vmatpush.bf16.msra.mxu0 0
  %7303 = vmatpush.bf16.msra.mxu0 0
  %7304 = vmatpush.bf16.msra.mxu0 %v7202
  %7305 = vmatmul.bf16.gmra.mxu0 %v7181
  %v7306 = vpop.f32.mrf.mxu0
  %v7307 = vadd.f32 0.0, %v7306
  %v7308 = vpop.f32.mrf.mxu0
  %7309 = vdwg.mxu0
  %7310 = vmatpush.bf16.msra.mxu0 0
  %7311 = vmatpush.bf16.msra.mxu0 0
  %7312 = vmatpush.bf16.msra.mxu0 0
  %7313 = vmatpush.bf16.msra.mxu0 0
  %7314 = vmatpush.bf16.msra.mxu0 0
  %7315 = vmatpush.bf16.msra.mxu0 0
  %7316 = vmatpush.bf16.msra.mxu0 0
  %7317 = vmatpush.bf16.msra.mxu0 %v7205
  %7318 = vmatmul.bf16.gmra.mxu0 %v7181
  %v7319 = vpop.f32.mrf.mxu0
  %v7320 = vadd.f32 0.0, %v7319
  %v7321 = vpop.f32.mrf.mxu0
  %7322 = vdwg.mxu0
  %7323 = vmatpush.bf16.msra.mxu0 0
  %7324 = vmatpush.bf16.msra.mxu0 0
  %7325 = vmatpush.bf16.msra.mxu0 0
  %7326 = vmatpush.bf16.msra.mxu0 0
  %7327 = vmatpush.bf16.msra.mxu0 0
  %7328 = vmatpush.bf16.msra.mxu0 0
  %7329 = vmatpush.bf16.msra.mxu0 0
  %7330 = vmatpush.bf16.msra.mxu0 %v7208
  %7331 = vmatmul.bf16.gmra.mxu0 %v7181
  %v7332 = vpop.f32.mrf.mxu0
  %v7333 = vadd.f32 0.0, %v7332
  %v7334 = vpop.f32.mrf.mxu0
  %7335 = vdwg.mxu0
  %7336 = vmatpush.bf16.msra.mxu0 0
  %7337 = vmatpush.bf16.msra.mxu0 0
  %7338 = vmatpush.bf16.msra.mxu0 0
  %7339 = vmatpush.bf16.msra.mxu0 0
  %7340 = vmatpush.bf16.msra.mxu0 0
  %7341 = vmatpush.bf16.msra.mxu0 0
  %7342 = vmatpush.bf16.msra.mxu0 0
  %7343 = vmatpush.bf16.msra.mxu0 %v7211
  %7344 = vmatmul.bf16.gmra.mxu0 %v7181
  %v7345 = vpop.f32.mrf.mxu0
  %v7346 = vadd.f32 0.0, %v7345
  %v7347 = vpop.f32.mrf.mxu0
  %7348 = vdwg.mxu0
  %7349 = vmatpush.bf16.msra.mxu0 0
  %7350 = vmatpush.bf16.msra.mxu0 0
  %7351 = vmatpush.bf16.msra.mxu0 0
  %7352 = vmatpush.bf16.msra.mxu0 0
  %7353 = vmatpush.bf16.msra.mxu0 0
  %7354 = vmatpush.bf16.msra.mxu0 0
  %7355 = vmatpush.bf16.msra.mxu0 0
  %7356 = vmatpush.bf16.msra.mxu0 %v7214
  %7357 = vmatmul.bf16.gmra.mxu0 %v7181
  %v7358 = vpop.f32.mrf.mxu0
  %v7359 = vadd.f32 0.0, %v7358
  %v7360 = vpop.f32.mrf.mxu0
  %7361 = vdwg.mxu0
  %7362 = vmatpush.bf16.msra.mxu0 0
  %7363 = vmatpush.bf16.msra.mxu0 0
  %7364 = vmatpush.bf16.msra.mxu0 0
  %7365 = vmatpush.bf16.msra.mxu0 0
  %7366 = vmatpush.bf16.msra.mxu0 0
  %7367 = vmatpush.bf16.msra.mxu0 0
  %7368 = vmatpush.bf16.msra.mxu0 0
  %7369 = vmatpush.bf16.msra.mxu0 %v7217
  %7370 = vmatmul.bf16.gmra.mxu0 %v7181
  %v7371 = vpop.f32.mrf.mxu0
  %v7372 = vadd.f32 0.0, %v7371
  %v7373 = vpop.f32.mrf.mxu0
  %7374 = vdwg.mxu0
  %v7387 = vrot.slane %v7242, 6
  %v7388 = vrot.slane %v7255, 4
  %v7389 = vrot.slane %v7268, 2
  %v7390 = vrot.slane %v7294, 6
  %v7391 = vrot.slane %v7307, 4
  %v7392 = vrot.slane %v7320, 2
  %v7393 = vrot.slane %v7346, 6
  %v7394 = vrot.slane %v7359, 4
  %v7395 = vrot.slane %v7372, 2
  %v7396 = vsel %vm1250, %v7229, %v7387
  %v7397 = vsel %vm1252, %v7388, %v7389
  %v7398 = vsel %vm1254, %v7396, %v7397
  %v7399 = vsel %vm1250, %v7281, %v7390
  %v7400 = vsel %vm1252, %v7391, %v7392
  %v7401 = vsel %vm1254, %v7399, %v7400
  %v7402 = vsel %vm1250, %v7333, %v7393
  %v7403 = vsel %vm1252, %v7394, %v7395
  %v7404 = vsel %vm1254, %v7402, %v7403
  %v7408 = vadd.f32 %v7135, %v7398
  %v7409 = vadd.f32 %v7136, %v7401
  %v7410 = vadd.f32 %v7137, %v7404
  %7411 = vst [vmem:[#allocation3] sm:$0xff] %v7408
  %7412 = vst [vmem:[#allocation3 + $0x8] sm:$0xff] %v7409
  %7413 = vst.msk [vmem:[#allocation3 + $0x10] sm:$0xff] %vm1274, %v7410
  %v7414 = vld [vmem:[#allocation3] sm:$0xff]
  %v7415 = vld [vmem:[#allocation3 + $0x8] sm:$0xff]
  %v7416 = vld [vmem:[#allocation3 + $0x10] sm:$0xff]
  %s7417 = sadd.s32 %s991, 23
  %s7418 = smul.u32 %s7417, 2
  %s7419 = scalar_lea.vmem [#allocation2], %s7418
  %v7420 = vld [vmem:[%s7419] sm:$0x3]
  %v7421 = vpack.c.bf16 %v7420, %v7420
  %s7422 = scalar_lea.vmem %s10, 1104
  %v7423 = vld [vmem:[%s7422] sm:$0x77]
  %v7424 = vld [vmem:[%s7422 + $0x8] sm:$0x77]
  %v7425 = vld [vmem:[%s7422 + $0x10] sm:$0x77]
  %v7426 = vld [vmem:[%s7422 + $0x18] sm:$0x77]
  %v7427 = vld [vmem:[%s7422 + $0x20] sm:$0x77]
  %v7428 = vld [vmem:[%s7422 + $0x28] sm:$0x77]
  %v7435 = vunpack.c.l.b16 %v7423
  %v7436 = vunpack.c.h.b16 %v7423
  %v7437 = vunpack.c.l.b16 %v7424
  %v7438 = vunpack.c.h.b16 %v7424
  %v7439 = vunpack.c.l.b16 %v7425
  %v7440 = vunpack.c.h.b16 %v7425
  %v7441 = vunpack.c.l.b16 %v7426
  %v7442 = vunpack.c.h.b16 %v7426
  %v7443 = vunpack.c.l.b16 %v7427
  %v7444 = vunpack.c.h.b16 %v7427
  %v7445 = vunpack.c.l.b16 %v7428
  %v7446 = vunpack.c.h.b16 %v7428
  %v7447 = vpack.c.b16 %v7435, %v7435
  %v7448 = vpack.c.b16 %v7436, %v7436
  %v7449 = vpack.c.b16 %v7437, %v7437
  %v7450 = vpack.c.b16 %v7438, %v7438
  %v7451 = vpack.c.b16 %v7439, %v7439
  %v7452 = vpack.c.b16 %v7440, %v7440
  %v7453 = vpack.c.b16 %v7441, %v7441
  %v7454 = vpack.c.b16 %v7442, %v7442
  %v7455 = vpack.c.b16 %v7443, %v7443
  %v7456 = vpack.c.b16 %v7444, %v7444
  %v7457 = vpack.c.b16 %v7445, %v7445
  %v7458 = vpack.c.b16 %v7446, %v7446
  %v7460 = vsel %vm1032, %v7421, 0
  %v7463 = vsel %vm1036, %v7447, 0
  %v7466 = vsel %vm1036, %v7448, 0
  %v7469 = vsel %vm1036, %v7449, 0
  %v7472 = vsel %vm1036, %v7450, 0
  %v7475 = vsel %vm1036, %v7451, 0
  %v7478 = vsel %vm1036, %v7452, 0
  %v7481 = vsel %vm1036, %v7453, 0
  %v7484 = vsel %vm1036, %v7454, 0
  %v7487 = vsel %vm1036, %v7455, 0
  %v7490 = vsel %vm1036, %v7456, 0
  %v7493 = vsel %vm1036, %v7457, 0
  %v7496 = vsel %vm1036, %v7458, 0
  %7498 = vmatpush.bf16.msra.mxu0 0
  %7499 = vmatpush.bf16.msra.mxu0 0
  %7500 = vmatpush.bf16.msra.mxu0 0
  %7501 = vmatpush.bf16.msra.mxu0 0
  %7502 = vmatpush.bf16.msra.mxu0 0
  %7503 = vmatpush.bf16.msra.mxu0 0
  %7504 = vmatpush.bf16.msra.mxu0 0
  %7505 = vmatpush.bf16.msra.mxu0 %v7463
  %7506 = vmatmul.bf16.gmra.mxu0 %v7460
  %v7507 = vpop.f32.mrf.mxu0
  %v7508 = vadd.f32 0.0, %v7507
  %v7509 = vpop.f32.mrf.mxu0
  %7510 = vdwg.mxu0
  %7511 = vmatpush.bf16.msra.mxu0 0
  %7512 = vmatpush.bf16.msra.mxu0 0
  %7513 = vmatpush.bf16.msra.mxu0 0
  %7514 = vmatpush.bf16.msra.mxu0 0
  %7515 = vmatpush.bf16.msra.mxu0 0
  %7516 = vmatpush.bf16.msra.mxu0 0
  %7517 = vmatpush.bf16.msra.mxu0 0
  %7518 = vmatpush.bf16.msra.mxu0 %v7466
  %7519 = vmatmul.bf16.gmra.mxu0 %v7460
  %v7520 = vpop.f32.mrf.mxu0
  %v7521 = vadd.f32 0.0, %v7520
  %v7522 = vpop.f32.mrf.mxu0
  %7523 = vdwg.mxu0
  %7524 = vmatpush.bf16.msra.mxu0 0
  %7525 = vmatpush.bf16.msra.mxu0 0
  %7526 = vmatpush.bf16.msra.mxu0 0
  %7527 = vmatpush.bf16.msra.mxu0 0
  %7528 = vmatpush.bf16.msra.mxu0 0
  %7529 = vmatpush.bf16.msra.mxu0 0
  %7530 = vmatpush.bf16.msra.mxu0 0
  %7531 = vmatpush.bf16.msra.mxu0 %v7469
  %7532 = vmatmul.bf16.gmra.mxu0 %v7460
  %v7533 = vpop.f32.mrf.mxu0
  %v7534 = vadd.f32 0.0, %v7533
  %v7535 = vpop.f32.mrf.mxu0
  %7536 = vdwg.mxu0
  %7537 = vmatpush.bf16.msra.mxu0 0
  %7538 = vmatpush.bf16.msra.mxu0 0
  %7539 = vmatpush.bf16.msra.mxu0 0
  %7540 = vmatpush.bf16.msra.mxu0 0
  %7541 = vmatpush.bf16.msra.mxu0 0
  %7542 = vmatpush.bf16.msra.mxu0 0
  %7543 = vmatpush.bf16.msra.mxu0 0
  %7544 = vmatpush.bf16.msra.mxu0 %v7472
  %7545 = vmatmul.bf16.gmra.mxu0 %v7460
  %v7546 = vpop.f32.mrf.mxu0
  %v7547 = vadd.f32 0.0, %v7546
  %v7548 = vpop.f32.mrf.mxu0
  %7549 = vdwg.mxu0
  %7550 = vmatpush.bf16.msra.mxu0 0
  %7551 = vmatpush.bf16.msra.mxu0 0
  %7552 = vmatpush.bf16.msra.mxu0 0
  %7553 = vmatpush.bf16.msra.mxu0 0
  %7554 = vmatpush.bf16.msra.mxu0 0
  %7555 = vmatpush.bf16.msra.mxu0 0
  %7556 = vmatpush.bf16.msra.mxu0 0
  %7557 = vmatpush.bf16.msra.mxu0 %v7475
  %7558 = vmatmul.bf16.gmra.mxu0 %v7460
  %v7559 = vpop.f32.mrf.mxu0
  %v7560 = vadd.f32 0.0, %v7559
  %v7561 = vpop.f32.mrf.mxu0
  %7562 = vdwg.mxu0
  %7563 = vmatpush.bf16.msra.mxu0 0
  %7564 = vmatpush.bf16.msra.mxu0 0
  %7565 = vmatpush.bf16.msra.mxu0 0
  %7566 = vmatpush.bf16.msra.mxu0 0
  %7567 = vmatpush.bf16.msra.mxu0 0
  %7568 = vmatpush.bf16.msra.mxu0 0
  %7569 = vmatpush.bf16.msra.mxu0 0
  %7570 = vmatpush.bf16.msra.mxu0 %v7478
  %7571 = vmatmul.bf16.gmra.mxu0 %v7460
  %v7572 = vpop.f32.mrf.mxu0
  %v7573 = vadd.f32 0.0, %v7572
  %v7574 = vpop.f32.mrf.mxu0
  %7575 = vdwg.mxu0
  %7576 = vmatpush.bf16.msra.mxu0 0
  %7577 = vmatpush.bf16.msra.mxu0 0
  %7578 = vmatpush.bf16.msra.mxu0 0
  %7579 = vmatpush.bf16.msra.mxu0 0
  %7580 = vmatpush.bf16.msra.mxu0 0
  %7581 = vmatpush.bf16.msra.mxu0 0
  %7582 = vmatpush.bf16.msra.mxu0 0
  %7583 = vmatpush.bf16.msra.mxu0 %v7481
  %7584 = vmatmul.bf16.gmra.mxu0 %v7460
  %v7585 = vpop.f32.mrf.mxu0
  %v7586 = vadd.f32 0.0, %v7585
  %v7587 = vpop.f32.mrf.mxu0
  %7588 = vdwg.mxu0
  %7589 = vmatpush.bf16.msra.mxu0 0
  %7590 = vmatpush.bf16.msra.mxu0 0
  %7591 = vmatpush.bf16.msra.mxu0 0
  %7592 = vmatpush.bf16.msra.mxu0 0
  %7593 = vmatpush.bf16.msra.mxu0 0
  %7594 = vmatpush.bf16.msra.mxu0 0
  %7595 = vmatpush.bf16.msra.mxu0 0
  %7596 = vmatpush.bf16.msra.mxu0 %v7484
  %7597 = vmatmul.bf16.gmra.mxu0 %v7460
  %v7598 = vpop.f32.mrf.mxu0
  %v7599 = vadd.f32 0.0, %v7598
  %v7600 = vpop.f32.mrf.mxu0
  %7601 = vdwg.mxu0
  %7602 = vmatpush.bf16.msra.mxu0 0
  %7603 = vmatpush.bf16.msra.mxu0 0
  %7604 = vmatpush.bf16.msra.mxu0 0
  %7605 = vmatpush.bf16.msra.mxu0 0
  %7606 = vmatpush.bf16.msra.mxu0 0
  %7607 = vmatpush.bf16.msra.mxu0 0
  %7608 = vmatpush.bf16.msra.mxu0 0
  %7609 = vmatpush.bf16.msra.mxu0 %v7487
  %7610 = vmatmul.bf16.gmra.mxu0 %v7460
  %v7611 = vpop.f32.mrf.mxu0
  %v7612 = vadd.f32 0.0, %v7611
  %v7613 = vpop.f32.mrf.mxu0
  %7614 = vdwg.mxu0
  %7615 = vmatpush.bf16.msra.mxu0 0
  %7616 = vmatpush.bf16.msra.mxu0 0
  %7617 = vmatpush.bf16.msra.mxu0 0
  %7618 = vmatpush.bf16.msra.mxu0 0
  %7619 = vmatpush.bf16.msra.mxu0 0
  %7620 = vmatpush.bf16.msra.mxu0 0
  %7621 = vmatpush.bf16.msra.mxu0 0
  %7622 = vmatpush.bf16.msra.mxu0 %v7490
  %7623 = vmatmul.bf16.gmra.mxu0 %v7460
  %v7624 = vpop.f32.mrf.mxu0
  %v7625 = vadd.f32 0.0, %v7624
  %v7626 = vpop.f32.mrf.mxu0
  %7627 = vdwg.mxu0
  %7628 = vmatpush.bf16.msra.mxu0 0
  %7629 = vmatpush.bf16.msra.mxu0 0
  %7630 = vmatpush.bf16.msra.mxu0 0
  %7631 = vmatpush.bf16.msra.mxu0 0
  %7632 = vmatpush.bf16.msra.mxu0 0
  %7633 = vmatpush.bf16.msra.mxu0 0
  %7634 = vmatpush.bf16.msra.mxu0 0
  %7635 = vmatpush.bf16.msra.mxu0 %v7493
  %7636 = vmatmul.bf16.gmra.mxu0 %v7460
  %v7637 = vpop.f32.mrf.mxu0
  %v7638 = vadd.f32 0.0, %v7637
  %v7639 = vpop.f32.mrf.mxu0
  %7640 = vdwg.mxu0
  %7641 = vmatpush.bf16.msra.mxu0 0
  %7642 = vmatpush.bf16.msra.mxu0 0
  %7643 = vmatpush.bf16.msra.mxu0 0
  %7644 = vmatpush.bf16.msra.mxu0 0
  %7645 = vmatpush.bf16.msra.mxu0 0
  %7646 = vmatpush.bf16.msra.mxu0 0
  %7647 = vmatpush.bf16.msra.mxu0 0
  %7648 = vmatpush.bf16.msra.mxu0 %v7496
  %7649 = vmatmul.bf16.gmra.mxu0 %v7460
  %v7650 = vpop.f32.mrf.mxu0
  %v7651 = vadd.f32 0.0, %v7650
  %v7652 = vpop.f32.mrf.mxu0
  %7653 = vdwg.mxu0
  %v7666 = vrot.slane %v7521, 6
  %v7667 = vrot.slane %v7534, 4
  %v7668 = vrot.slane %v7547, 2
  %v7669 = vrot.slane %v7573, 6
  %v7670 = vrot.slane %v7586, 4
  %v7671 = vrot.slane %v7599, 2
  %v7672 = vrot.slane %v7625, 6
  %v7673 = vrot.slane %v7638, 4
  %v7674 = vrot.slane %v7651, 2
  %v7675 = vsel %vm1250, %v7508, %v7666
  %v7676 = vsel %vm1252, %v7667, %v7668
  %v7677 = vsel %vm1254, %v7675, %v7676
  %v7678 = vsel %vm1250, %v7560, %v7669
  %v7679 = vsel %vm1252, %v7670, %v7671
  %v7680 = vsel %vm1254, %v7678, %v7679
  %v7681 = vsel %vm1250, %v7612, %v7672
  %v7682 = vsel %vm1252, %v7673, %v7674
  %v7683 = vsel %vm1254, %v7681, %v7682
  %v7687 = vadd.f32 %v7414, %v7677
  %v7688 = vadd.f32 %v7415, %v7680
  %v7689 = vadd.f32 %v7416, %v7683
  %7690 = vst [vmem:[#allocation3] sm:$0xff] %v7687
  %7691 = vst [vmem:[#allocation3 + $0x8] sm:$0xff] %v7688
  %7692 = vst.msk [vmem:[#allocation3 + $0x10] sm:$0xff] %vm1274, %v7689
  %v7693 = vld [vmem:[#allocation3] sm:$0xff]
  %v7694 = vld [vmem:[#allocation3 + $0x8] sm:$0xff]
  %v7695 = vld [vmem:[#allocation3 + $0x10] sm:$0xff]
  %s7696 = sadd.s32 %s991, 24
  %s7697 = smul.u32 %s7696, 2
  %s7698 = scalar_lea.vmem [#allocation2], %s7697
  %v7699 = vld [vmem:[%s7698] sm:$0x3]
  %v7700 = vpack.c.bf16 %v7699, %v7699
  %s7701 = scalar_lea.vmem %s10, 1152
  %v7702 = vld [vmem:[%s7701] sm:$0x77]
  %v7703 = vld [vmem:[%s7701 + $0x8] sm:$0x77]
  %v7704 = vld [vmem:[%s7701 + $0x10] sm:$0x77]
  %v7705 = vld [vmem:[%s7701 + $0x18] sm:$0x77]
  %v7706 = vld [vmem:[%s7701 + $0x20] sm:$0x77]
  %v7707 = vld [vmem:[%s7701 + $0x28] sm:$0x77]
  %v7714 = vunpack.c.l.b16 %v7702
  %v7715 = vunpack.c.h.b16 %v7702
  %v7716 = vunpack.c.l.b16 %v7703
  %v7717 = vunpack.c.h.b16 %v7703
  %v7718 = vunpack.c.l.b16 %v7704
  %v7719 = vunpack.c.h.b16 %v7704
  %v7720 = vunpack.c.l.b16 %v7705
  %v7721 = vunpack.c.h.b16 %v7705
  %v7722 = vunpack.c.l.b16 %v7706
  %v7723 = vunpack.c.h.b16 %v7706
  %v7724 = vunpack.c.l.b16 %v7707
  %v7725 = vunpack.c.h.b16 %v7707
  %v7726 = vpack.c.b16 %v7714, %v7714
  %v7727 = vpack.c.b16 %v7715, %v7715
  %v7728 = vpack.c.b16 %v7716, %v7716
  %v7729 = vpack.c.b16 %v7717, %v7717
  %v7730 = vpack.c.b16 %v7718, %v7718
  %v7731 = vpack.c.b16 %v7719, %v7719
  %v7732 = vpack.c.b16 %v7720, %v7720
  %v7733 = vpack.c.b16 %v7721, %v7721
  %v7734 = vpack.c.b16 %v7722, %v7722
  %v7735 = vpack.c.b16 %v7723, %v7723
  %v7736 = vpack.c.b16 %v7724, %v7724
  %v7737 = vpack.c.b16 %v7725, %v7725
  %v7739 = vsel %vm1032, %v7700, 0
  %v7742 = vsel %vm1036, %v7726, 0
  %v7745 = vsel %vm1036, %v7727, 0
  %v7748 = vsel %vm1036, %v7728, 0
  %v7751 = vsel %vm1036, %v7729, 0
  %v7754 = vsel %vm1036, %v7730, 0
  %v7757 = vsel %vm1036, %v7731, 0
  %v7760 = vsel %vm1036, %v7732, 0
  %v7763 = vsel %vm1036, %v7733, 0
  %v7766 = vsel %vm1036, %v7734, 0
  %v7769 = vsel %vm1036, %v7735, 0
  %v7772 = vsel %vm1036, %v7736, 0
  %v7775 = vsel %vm1036, %v7737, 0
  %7777 = vmatpush.bf16.msra.mxu0 0
  %7778 = vmatpush.bf16.msra.mxu0 0
  %7779 = vmatpush.bf16.msra.mxu0 0
  %7780 = vmatpush.bf16.msra.mxu0 0
  %7781 = vmatpush.bf16.msra.mxu0 0
  %7782 = vmatpush.bf16.msra.mxu0 0
  %7783 = vmatpush.bf16.msra.mxu0 0
  %7784 = vmatpush.bf16.msra.mxu0 %v7742
  %7785 = vmatmul.bf16.gmra.mxu0 %v7739
  %v7786 = vpop.f32.mrf.mxu0
  %v7787 = vadd.f32 0.0, %v7786
  %v7788 = vpop.f32.mrf.mxu0
  %7789 = vdwg.mxu0
  %7790 = vmatpush.bf16.msra.mxu0 0
  %7791 = vmatpush.bf16.msra.mxu0 0
  %7792 = vmatpush.bf16.msra.mxu0 0
  %7793 = vmatpush.bf16.msra.mxu0 0
  %7794 = vmatpush.bf16.msra.mxu0 0
  %7795 = vmatpush.bf16.msra.mxu0 0
  %7796 = vmatpush.bf16.msra.mxu0 0
  %7797 = vmatpush.bf16.msra.mxu0 %v7745
  %7798 = vmatmul.bf16.gmra.mxu0 %v7739
  %v7799 = vpop.f32.mrf.mxu0
  %v7800 = vadd.f32 0.0, %v7799
  %v7801 = vpop.f32.mrf.mxu0
  %7802 = vdwg.mxu0
  %7803 = vmatpush.bf16.msra.mxu0 0
  %7804 = vmatpush.bf16.msra.mxu0 0
  %7805 = vmatpush.bf16.msra.mxu0 0
  %7806 = vmatpush.bf16.msra.mxu0 0
  %7807 = vmatpush.bf16.msra.mxu0 0
  %7808 = vmatpush.bf16.msra.mxu0 0
  %7809 = vmatpush.bf16.msra.mxu0 0
  %7810 = vmatpush.bf16.msra.mxu0 %v7748
  %7811 = vmatmul.bf16.gmra.mxu0 %v7739
  %v7812 = vpop.f32.mrf.mxu0
  %v7813 = vadd.f32 0.0, %v7812
  %v7814 = vpop.f32.mrf.mxu0
  %7815 = vdwg.mxu0
  %7816 = vmatpush.bf16.msra.mxu0 0
  %7817 = vmatpush.bf16.msra.mxu0 0
  %7818 = vmatpush.bf16.msra.mxu0 0
  %7819 = vmatpush.bf16.msra.mxu0 0
  %7820 = vmatpush.bf16.msra.mxu0 0
  %7821 = vmatpush.bf16.msra.mxu0 0
  %7822 = vmatpush.bf16.msra.mxu0 0
  %7823 = vmatpush.bf16.msra.mxu0 %v7751
  %7824 = vmatmul.bf16.gmra.mxu0 %v7739
  %v7825 = vpop.f32.mrf.mxu0
  %v7826 = vadd.f32 0.0, %v7825
  %v7827 = vpop.f32.mrf.mxu0
  %7828 = vdwg.mxu0
  %7829 = vmatpush.bf16.msra.mxu0 0
  %7830 = vmatpush.bf16.msra.mxu0 0
  %7831 = vmatpush.bf16.msra.mxu0 0
  %7832 = vmatpush.bf16.msra.mxu0 0
  %7833 = vmatpush.bf16.msra.mxu0 0
  %7834 = vmatpush.bf16.msra.mxu0 0
  %7835 = vmatpush.bf16.msra.mxu0 0
  %7836 = vmatpush.bf16.msra.mxu0 %v7754
  %7837 = vmatmul.bf16.gmra.mxu0 %v7739
  %v7838 = vpop.f32.mrf.mxu0
  %v7839 = vadd.f32 0.0, %v7838
  %v7840 = vpop.f32.mrf.mxu0
  %7841 = vdwg.mxu0
  %7842 = vmatpush.bf16.msra.mxu0 0
  %7843 = vmatpush.bf16.msra.mxu0 0
  %7844 = vmatpush.bf16.msra.mxu0 0
  %7845 = vmatpush.bf16.msra.mxu0 0
  %7846 = vmatpush.bf16.msra.mxu0 0
  %7847 = vmatpush.bf16.msra.mxu0 0
  %7848 = vmatpush.bf16.msra.mxu0 0
  %7849 = vmatpush.bf16.msra.mxu0 %v7757
  %7850 = vmatmul.bf16.gmra.mxu0 %v7739
  %v7851 = vpop.f32.mrf.mxu0
  %v7852 = vadd.f32 0.0, %v7851
  %v7853 = vpop.f32.mrf.mxu0
  %7854 = vdwg.mxu0
  %7855 = vmatpush.bf16.msra.mxu0 0
  %7856 = vmatpush.bf16.msra.mxu0 0
  %7857 = vmatpush.bf16.msra.mxu0 0
  %7858 = vmatpush.bf16.msra.mxu0 0
  %7859 = vmatpush.bf16.msra.mxu0 0
  %7860 = vmatpush.bf16.msra.mxu0 0
  %7861 = vmatpush.bf16.msra.mxu0 0
  %7862 = vmatpush.bf16.msra.mxu0 %v7760
  %7863 = vmatmul.bf16.gmra.mxu0 %v7739
  %v7864 = vpop.f32.mrf.mxu0
  %v7865 = vadd.f32 0.0, %v7864
  %v7866 = vpop.f32.mrf.mxu0
  %7867 = vdwg.mxu0
  %7868 = vmatpush.bf16.msra.mxu0 0
  %7869 = vmatpush.bf16.msra.mxu0 0
  %7870 = vmatpush.bf16.msra.mxu0 0
  %7871 = vmatpush.bf16.msra.mxu0 0
  %7872 = vmatpush.bf16.msra.mxu0 0
  %7873 = vmatpush.bf16.msra.mxu0 0
  %7874 = vmatpush.bf16.msra.mxu0 0
  %7875 = vmatpush.bf16.msra.mxu0 %v7763
  %7876 = vmatmul.bf16.gmra.mxu0 %v7739
  %v7877 = vpop.f32.mrf.mxu0
  %v7878 = vadd.f32 0.0, %v7877
  %v7879 = vpop.f32.mrf.mxu0
  %7880 = vdwg.mxu0
  %7881 = vmatpush.bf16.msra.mxu0 0
  %7882 = vmatpush.bf16.msra.mxu0 0
  %7883 = vmatpush.bf16.msra.mxu0 0
  %7884 = vmatpush.bf16.msra.mxu0 0
  %7885 = vmatpush.bf16.msra.mxu0 0
  %7886 = vmatpush.bf16.msra.mxu0 0
  %7887 = vmatpush.bf16.msra.mxu0 0
  %7888 = vmatpush.bf16.msra.mxu0 %v7766
  %7889 = vmatmul.bf16.gmra.mxu0 %v7739
  %v7890 = vpop.f32.mrf.mxu0
  %v7891 = vadd.f32 0.0, %v7890
  %v7892 = vpop.f32.mrf.mxu0
  %7893 = vdwg.mxu0
  %7894 = vmatpush.bf16.msra.mxu0 0
  %7895 = vmatpush.bf16.msra.mxu0 0
  %7896 = vmatpush.bf16.msra.mxu0 0
  %7897 = vmatpush.bf16.msra.mxu0 0
  %7898 = vmatpush.bf16.msra.mxu0 0
  %7899 = vmatpush.bf16.msra.mxu0 0
  %7900 = vmatpush.bf16.msra.mxu0 0
  %7901 = vmatpush.bf16.msra.mxu0 %v7769
  %7902 = vmatmul.bf16.gmra.mxu0 %v7739
  %v7903 = vpop.f32.mrf.mxu0
  %v7904 = vadd.f32 0.0, %v7903
  %v7905 = vpop.f32.mrf.mxu0
  %7906 = vdwg.mxu0
  %7907 = vmatpush.bf16.msra.mxu0 0
  %7908 = vmatpush.bf16.msra.mxu0 0
  %7909 = vmatpush.bf16.msra.mxu0 0
  %7910 = vmatpush.bf16.msra.mxu0 0
  %7911 = vmatpush.bf16.msra.mxu0 0
  %7912 = vmatpush.bf16.msra.mxu0 0
  %7913 = vmatpush.bf16.msra.mxu0 0
  %7914 = vmatpush.bf16.msra.mxu0 %v7772
  %7915 = vmatmul.bf16.gmra.mxu0 %v7739
  %v7916 = vpop.f32.mrf.mxu0
  %v7917 = vadd.f32 0.0, %v7916
  %v7918 = vpop.f32.mrf.mxu0
  %7919 = vdwg.mxu0
  %7920 = vmatpush.bf16.msra.mxu0 0
  %7921 = vmatpush.bf16.msra.mxu0 0
  %7922 = vmatpush.bf16.msra.mxu0 0
  %7923 = vmatpush.bf16.msra.mxu0 0
  %7924 = vmatpush.bf16.msra.mxu0 0
  %7925 = vmatpush.bf16.msra.mxu0 0
  %7926 = vmatpush.bf16.msra.mxu0 0
  %7927 = vmatpush.bf16.msra.mxu0 %v7775
  %7928 = vmatmul.bf16.gmra.mxu0 %v7739
  %v7929 = vpop.f32.mrf.mxu0
  %v7930 = vadd.f32 0.0, %v7929
  %v7931 = vpop.f32.mrf.mxu0
  %7932 = vdwg.mxu0
  %v7945 = vrot.slane %v7800, 6
  %v7946 = vrot.slane %v7813, 4
  %v7947 = vrot.slane %v7826, 2
  %v7948 = vrot.slane %v7852, 6
  %v7949 = vrot.slane %v7865, 4
  %v7950 = vrot.slane %v7878, 2
  %v7951 = vrot.slane %v7904, 6
  %v7952 = vrot.slane %v7917, 4
  %v7953 = vrot.slane %v7930, 2
  %v7954 = vsel %vm1250, %v7787, %v7945
  %v7955 = vsel %vm1252, %v7946, %v7947
  %v7956 = vsel %vm1254, %v7954, %v7955
  %v7957 = vsel %vm1250, %v7839, %v7948
  %v7958 = vsel %vm1252, %v7949, %v7950
  %v7959 = vsel %vm1254, %v7957, %v7958
  %v7960 = vsel %vm1250, %v7891, %v7951
  %v7961 = vsel %vm1252, %v7952, %v7953
  %v7962 = vsel %vm1254, %v7960, %v7961
  %v7966 = vadd.f32 %v7693, %v7956
  %v7967 = vadd.f32 %v7694, %v7959
  %v7968 = vadd.f32 %v7695, %v7962
  %7969 = vst [vmem:[#allocation3] sm:$0xff] %v7966
  %7970 = vst [vmem:[#allocation3 + $0x8] sm:$0xff] %v7967
  %7971 = vst.msk [vmem:[#allocation3 + $0x10] sm:$0xff] %vm1274, %v7968
  %v7972 = vld [vmem:[#allocation3] sm:$0xff]
  %v7973 = vld [vmem:[#allocation3 + $0x8] sm:$0xff]
  %v7974 = vld [vmem:[#allocation3 + $0x10] sm:$0xff]
  %s7975 = sadd.s32 %s991, 25
  %s7976 = smul.u32 %s7975, 2
  %s7977 = scalar_lea.vmem [#allocation2], %s7976
  %v7978 = vld [vmem:[%s7977] sm:$0x3]
  %v7979 = vpack.c.bf16 %v7978, %v7978
  %s7980 = scalar_lea.vmem %s10, 1200
  %v7981 = vld [vmem:[%s7980] sm:$0x77]
  %v7982 = vld [vmem:[%s7980 + $0x8] sm:$0x77]
  %v7983 = vld [vmem:[%s7980 + $0x10] sm:$0x77]
  %v7984 = vld [vmem:[%s7980 + $0x18] sm:$0x77]
  %v7985 = vld [vmem:[%s7980 + $0x20] sm:$0x77]
  %v7986 = vld [vmem:[%s7980 + $0x28] sm:$0x77]
  %v7993 = vunpack.c.l.b16 %v7981
  %v7994 = vunpack.c.h.b16 %v7981
  %v7995 = vunpack.c.l.b16 %v7982
  %v7996 = vunpack.c.h.b16 %v7982
  %v7997 = vunpack.c.l.b16 %v7983
  %v7998 = vunpack.c.h.b16 %v7983
  %v7999 = vunpack.c.l.b16 %v7984
  %v8000 = vunpack.c.h.b16 %v7984
  %v8001 = vunpack.c.l.b16 %v7985
  %v8002 = vunpack.c.h.b16 %v7985
  %v8003 = vunpack.c.l.b16 %v7986
  %v8004 = vunpack.c.h.b16 %v7986
  %v8005 = vpack.c.b16 %v7993, %v7993
  %v8006 = vpack.c.b16 %v7994, %v7994
  %v8007 = vpack.c.b16 %v7995, %v7995
  %v8008 = vpack.c.b16 %v7996, %v7996
  %v8009 = vpack.c.b16 %v7997, %v7997
  %v8010 = vpack.c.b16 %v7998, %v7998
  %v8011 = vpack.c.b16 %v7999, %v7999
  %v8012 = vpack.c.b16 %v8000, %v8000
  %v8013 = vpack.c.b16 %v8001, %v8001
  %v8014 = vpack.c.b16 %v8002, %v8002
  %v8015 = vpack.c.b16 %v8003, %v8003
  %v8016 = vpack.c.b16 %v8004, %v8004
  %v8018 = vsel %vm1032, %v7979, 0
  %v8021 = vsel %vm1036, %v8005, 0
  %v8024 = vsel %vm1036, %v8006, 0
  %v8027 = vsel %vm1036, %v8007, 0
  %v8030 = vsel %vm1036, %v8008, 0
  %v8033 = vsel %vm1036, %v8009, 0
  %v8036 = vsel %vm1036, %v8010, 0
  %v8039 = vsel %vm1036, %v8011, 0
  %v8042 = vsel %vm1036, %v8012, 0
  %v8045 = vsel %vm1036, %v8013, 0
  %v8048 = vsel %vm1036, %v8014, 0
  %v8051 = vsel %vm1036, %v8015, 0
  %v8054 = vsel %vm1036, %v8016, 0
  %8056 = vmatpush.bf16.msra.mxu0 0
  %8057 = vmatpush.bf16.msra.mxu0 0
  %8058 = vmatpush.bf16.msra.mxu0 0
  %8059 = vmatpush.bf16.msra.mxu0 0
  %8060 = vmatpush.bf16.msra.mxu0 0
  %8061 = vmatpush.bf16.msra.mxu0 0
  %8062 = vmatpush.bf16.msra.mxu0 0
  %8063 = vmatpush.bf16.msra.mxu0 %v8021
  %8064 = vmatmul.bf16.gmra.mxu0 %v8018
  %v8065 = vpop.f32.mrf.mxu0
  %v8066 = vadd.f32 0.0, %v8065
  %v8067 = vpop.f32.mrf.mxu0
  %8068 = vdwg.mxu0
  %8069 = vmatpush.bf16.msra.mxu0 0
  %8070 = vmatpush.bf16.msra.mxu0 0
  %8071 = vmatpush.bf16.msra.mxu0 0
  %8072 = vmatpush.bf16.msra.mxu0 0
  %8073 = vmatpush.bf16.msra.mxu0 0
  %8074 = vmatpush.bf16.msra.mxu0 0
  %8075 = vmatpush.bf16.msra.mxu0 0
  %8076 = vmatpush.bf16.msra.mxu0 %v8024
  %8077 = vmatmul.bf16.gmra.mxu0 %v8018
  %v8078 = vpop.f32.mrf.mxu0
  %v8079 = vadd.f32 0.0, %v8078
  %v8080 = vpop.f32.mrf.mxu0
  %8081 = vdwg.mxu0
  %8082 = vmatpush.bf16.msra.mxu0 0
  %8083 = vmatpush.bf16.msra.mxu0 0
  %8084 = vmatpush.bf16.msra.mxu0 0
  %8085 = vmatpush.bf16.msra.mxu0 0
  %8086 = vmatpush.bf16.msra.mxu0 0
  %8087 = vmatpush.bf16.msra.mxu0 0
  %8088 = vmatpush.bf16.msra.mxu0 0
  %8089 = vmatpush.bf16.msra.mxu0 %v8027
  %8090 = vmatmul.bf16.gmra.mxu0 %v8018
  %v8091 = vpop.f32.mrf.mxu0
  %v8092 = vadd.f32 0.0, %v8091
  %v8093 = vpop.f32.mrf.mxu0
  %8094 = vdwg.mxu0
  %8095 = vmatpush.bf16.msra.mxu0 0
  %8096 = vmatpush.bf16.msra.mxu0 0
  %8097 = vmatpush.bf16.msra.mxu0 0
  %8098 = vmatpush.bf16.msra.mxu0 0
  %8099 = vmatpush.bf16.msra.mxu0 0
  %8100 = vmatpush.bf16.msra.mxu0 0
  %8101 = vmatpush.bf16.msra.mxu0 0
  %8102 = vmatpush.bf16.msra.mxu0 %v8030
  %8103 = vmatmul.bf16.gmra.mxu0 %v8018
  %v8104 = vpop.f32.mrf.mxu0
  %v8105 = vadd.f32 0.0, %v8104
  %v8106 = vpop.f32.mrf.mxu0
  %8107 = vdwg.mxu0
  %8108 = vmatpush.bf16.msra.mxu0 0
  %8109 = vmatpush.bf16.msra.mxu0 0
  %8110 = vmatpush.bf16.msra.mxu0 0
  %8111 = vmatpush.bf16.msra.mxu0 0
  %8112 = vmatpush.bf16.msra.mxu0 0
  %8113 = vmatpush.bf16.msra.mxu0 0
  %8114 = vmatpush.bf16.msra.mxu0 0
  %8115 = vmatpush.bf16.msra.mxu0 %v8033
  %8116 = vmatmul.bf16.gmra.mxu0 %v8018
  %v8117 = vpop.f32.mrf.mxu0
  %v8118 = vadd.f32 0.0, %v8117
  %v8119 = vpop.f32.mrf.mxu0
  %8120 = vdwg.mxu0
  %8121 = vmatpush.bf16.msra.mxu0 0
  %8122 = vmatpush.bf16.msra.mxu0 0
  %8123 = vmatpush.bf16.msra.mxu0 0
  %8124 = vmatpush.bf16.msra.mxu0 0
  %8125 = vmatpush.bf16.msra.mxu0 0
  %8126 = vmatpush.bf16.msra.mxu0 0
  %8127 = vmatpush.bf16.msra.mxu0 0
  %8128 = vmatpush.bf16.msra.mxu0 %v8036
  %8129 = vmatmul.bf16.gmra.mxu0 %v8018
  %v8130 = vpop.f32.mrf.mxu0
  %v8131 = vadd.f32 0.0, %v8130
  %v8132 = vpop.f32.mrf.mxu0
  %8133 = vdwg.mxu0
  %8134 = vmatpush.bf16.msra.mxu0 0
  %8135 = vmatpush.bf16.msra.mxu0 0
  %8136 = vmatpush.bf16.msra.mxu0 0
  %8137 = vmatpush.bf16.msra.mxu0 0
  %8138 = vmatpush.bf16.msra.mxu0 0
  %8139 = vmatpush.bf16.msra.mxu0 0
  %8140 = vmatpush.bf16.msra.mxu0 0
  %8141 = vmatpush.bf16.msra.mxu0 %v8039
  %8142 = vmatmul.bf16.gmra.mxu0 %v8018
  %v8143 = vpop.f32.mrf.mxu0
  %v8144 = vadd.f32 0.0, %v8143
  %v8145 = vpop.f32.mrf.mxu0
  %8146 = vdwg.mxu0
  %8147 = vmatpush.bf16.msra.mxu0 0
  %8148 = vmatpush.bf16.msra.mxu0 0
  %8149 = vmatpush.bf16.msra.mxu0 0
  %8150 = vmatpush.bf16.msra.mxu0 0
  %8151 = vmatpush.bf16.msra.mxu0 0
  %8152 = vmatpush.bf16.msra.mxu0 0
  %8153 = vmatpush.bf16.msra.mxu0 0
  %8154 = vmatpush.bf16.msra.mxu0 %v8042
  %8155 = vmatmul.bf16.gmra.mxu0 %v8018
  %v8156 = vpop.f32.mrf.mxu0
  %v8157 = vadd.f32 0.0, %v8156
  %v8158 = vpop.f32.mrf.mxu0
  %8159 = vdwg.mxu0
  %8160 = vmatpush.bf16.msra.mxu0 0
  %8161 = vmatpush.bf16.msra.mxu0 0
  %8162 = vmatpush.bf16.msra.mxu0 0
  %8163 = vmatpush.bf16.msra.mxu0 0
  %8164 = vmatpush.bf16.msra.mxu0 0
  %8165 = vmatpush.bf16.msra.mxu0 0
  %8166 = vmatpush.bf16.msra.mxu0 0
  %8167 = vmatpush.bf16.msra.mxu0 %v8045
  %8168 = vmatmul.bf16.gmra.mxu0 %v8018
  %v8169 = vpop.f32.mrf.mxu0
  %v8170 = vadd.f32 0.0, %v8169
  %v8171 = vpop.f32.mrf.mxu0
  %8172 = vdwg.mxu0
  %8173 = vmatpush.bf16.msra.mxu0 0
  %8174 = vmatpush.bf16.msra.mxu0 0
  %8175 = vmatpush.bf16.msra.mxu0 0
  %8176 = vmatpush.bf16.msra.mxu0 0
  %8177 = vmatpush.bf16.msra.mxu0 0
  %8178 = vmatpush.bf16.msra.mxu0 0
  %8179 = vmatpush.bf16.msra.mxu0 0
  %8180 = vmatpush.bf16.msra.mxu0 %v8048
  %8181 = vmatmul.bf16.gmra.mxu0 %v8018
  %v8182 = vpop.f32.mrf.mxu0
  %v8183 = vadd.f32 0.0, %v8182
  %v8184 = vpop.f32.mrf.mxu0
  %8185 = vdwg.mxu0
  %8186 = vmatpush.bf16.msra.mxu0 0
  %8187 = vmatpush.bf16.msra.mxu0 0
  %8188 = vmatpush.bf16.msra.mxu0 0
  %8189 = vmatpush.bf16.msra.mxu0 0
  %8190 = vmatpush.bf16.msra.mxu0 0
  %8191 = vmatpush.bf16.msra.mxu0 0
  %8192 = vmatpush.bf16.msra.mxu0 0
  %8193 = vmatpush.bf16.msra.mxu0 %v8051
  %8194 = vmatmul.bf16.gmra.mxu0 %v8018
  %v8195 = vpop.f32.mrf.mxu0
  %v8196 = vadd.f32 0.0, %v8195
  %v8197 = vpop.f32.mrf.mxu0
  %8198 = vdwg.mxu0
  %8199 = vmatpush.bf16.msra.mxu0 0
  %8200 = vmatpush.bf16.msra.mxu0 0
  %8201 = vmatpush.bf16.msra.mxu0 0
  %8202 = vmatpush.bf16.msra.mxu0 0
  %8203 = vmatpush.bf16.msra.mxu0 0
  %8204 = vmatpush.bf16.msra.mxu0 0
  %8205 = vmatpush.bf16.msra.mxu0 0
  %8206 = vmatpush.bf16.msra.mxu0 %v8054
  %8207 = vmatmul.bf16.gmra.mxu0 %v8018
  %v8208 = vpop.f32.mrf.mxu0
  %v8209 = vadd.f32 0.0, %v8208
  %v8210 = vpop.f32.mrf.mxu0
  %8211 = vdwg.mxu0
  %v8224 = vrot.slane %v8079, 6
  %v8225 = vrot.slane %v8092, 4
  %v8226 = vrot.slane %v8105, 2
  %v8227 = vrot.slane %v8131, 6
  %v8228 = vrot.slane %v8144, 4
  %v8229 = vrot.slane %v8157, 2
  %v8230 = vrot.slane %v8183, 6
  %v8231 = vrot.slane %v8196, 4
  %v8232 = vrot.slane %v8209, 2
  %v8233 = vsel %vm1250, %v8066, %v8224
  %v8234 = vsel %vm1252, %v8225, %v8226
  %v8235 = vsel %vm1254, %v8233, %v8234
  %v8236 = vsel %vm1250, %v8118, %v8227
  %v8237 = vsel %vm1252, %v8228, %v8229
  %v8238 = vsel %vm1254, %v8236, %v8237
  %v8239 = vsel %vm1250, %v8170, %v8230
  %v8240 = vsel %vm1252, %v8231, %v8232
  %v8241 = vsel %vm1254, %v8239, %v8240
  %v8245 = vadd.f32 %v7972, %v8235
  %v8246 = vadd.f32 %v7973, %v8238
  %v8247 = vadd.f32 %v7974, %v8241
  %8248 = vst [vmem:[#allocation3] sm:$0xff] %v8245
  %8249 = vst [vmem:[#allocation3 + $0x8] sm:$0xff] %v8246
  %8250 = vst.msk [vmem:[#allocation3 + $0x10] sm:$0xff] %vm1274, %v8247
  %v8251 = vld [vmem:[#allocation3] sm:$0xff]
  %v8252 = vld [vmem:[#allocation3 + $0x8] sm:$0xff]
  %v8253 = vld [vmem:[#allocation3 + $0x10] sm:$0xff]
  %s8254 = sadd.s32 %s991, 26
  %s8255 = smul.u32 %s8254, 2
  %s8256 = scalar_lea.vmem [#allocation2], %s8255
  %v8257 = vld [vmem:[%s8256] sm:$0x3]
  %v8258 = vpack.c.bf16 %v8257, %v8257
  %s8259 = scalar_lea.vmem %s10, 1248
  %v8260 = vld [vmem:[%s8259] sm:$0x77]
  %v8261 = vld [vmem:[%s8259 + $0x8] sm:$0x77]
  %v8262 = vld [vmem:[%s8259 + $0x10] sm:$0x77]
  %v8263 = vld [vmem:[%s8259 + $0x18] sm:$0x77]
  %v8264 = vld [vmem:[%s8259 + $0x20] sm:$0x77]
  %v8265 = vld [vmem:[%s8259 + $0x28] sm:$0x77]
  %v8272 = vunpack.c.l.b16 %v8260
  %v8273 = vunpack.c.h.b16 %v8260
  %v8274 = vunpack.c.l.b16 %v8261
  %v8275 = vunpack.c.h.b16 %v8261
  %v8276 = vunpack.c.l.b16 %v8262
  %v8277 = vunpack.c.h.b16 %v8262
  %v8278 = vunpack.c.l.b16 %v8263
  %v8279 = vunpack.c.h.b16 %v8263
  %v8280 = vunpack.c.l.b16 %v8264
  %v8281 = vunpack.c.h.b16 %v8264
  %v8282 = vunpack.c.l.b16 %v8265
  %v8283 = vunpack.c.h.b16 %v8265
  %v8284 = vpack.c.b16 %v8272, %v8272
  %v8285 = vpack.c.b16 %v8273, %v8273
  %v8286 = vpack.c.b16 %v8274, %v8274
  %v8287 = vpack.c.b16 %v8275, %v8275
  %v8288 = vpack.c.b16 %v8276, %v8276
  %v8289 = vpack.c.b16 %v8277, %v8277
  %v8290 = vpack.c.b16 %v8278, %v8278
  %v8291 = vpack.c.b16 %v8279, %v8279
  %v8292 = vpack.c.b16 %v8280, %v8280
  %v8293 = vpack.c.b16 %v8281, %v8281
  %v8294 = vpack.c.b16 %v8282, %v8282
  %v8295 = vpack.c.b16 %v8283, %v8283
  %v8297 = vsel %vm1032, %v8258, 0
  %v8300 = vsel %vm1036, %v8284, 0
  %v8303 = vsel %vm1036, %v8285, 0
  %v8306 = vsel %vm1036, %v8286, 0
  %v8309 = vsel %vm1036, %v8287, 0
  %v8312 = vsel %vm1036, %v8288, 0
  %v8315 = vsel %vm1036, %v8289, 0
  %v8318 = vsel %vm1036, %v8290, 0
  %v8321 = vsel %vm1036, %v8291, 0
  %v8324 = vsel %vm1036, %v8292, 0
  %v8327 = vsel %vm1036, %v8293, 0
  %v8330 = vsel %vm1036, %v8294, 0
  %v8333 = vsel %vm1036, %v8295, 0
  %8335 = vmatpush.bf16.msra.mxu0 0
  %8336 = vmatpush.bf16.msra.mxu0 0
  %8337 = vmatpush.bf16.msra.mxu0 0
  %8338 = vmatpush.bf16.msra.mxu0 0
  %8339 = vmatpush.bf16.msra.mxu0 0
  %8340 = vmatpush.bf16.msra.mxu0 0
  %8341 = vmatpush.bf16.msra.mxu0 0
  %8342 = vmatpush.bf16.msra.mxu0 %v8300
  %8343 = vmatmul.bf16.gmra.mxu0 %v8297
  %v8344 = vpop.f32.mrf.mxu0
  %v8345 = vadd.f32 0.0, %v8344
  %v8346 = vpop.f32.mrf.mxu0
  %8347 = vdwg.mxu0
  %8348 = vmatpush.bf16.msra.mxu0 0
  %8349 = vmatpush.bf16.msra.mxu0 0
  %8350 = vmatpush.bf16.msra.mxu0 0
  %8351 = vmatpush.bf16.msra.mxu0 0
  %8352 = vmatpush.bf16.msra.mxu0 0
  %8353 = vmatpush.bf16.msra.mxu0 0
  %8354 = vmatpush.bf16.msra.mxu0 0
  %8355 = vmatpush.bf16.msra.mxu0 %v8303
  %8356 = vmatmul.bf16.gmra.mxu0 %v8297
  %v8357 = vpop.f32.mrf.mxu0
  %v8358 = vadd.f32 0.0, %v8357
  %v8359 = vpop.f32.mrf.mxu0
  %8360 = vdwg.mxu0
  %8361 = vmatpush.bf16.msra.mxu0 0
  %8362 = vmatpush.bf16.msra.mxu0 0
  %8363 = vmatpush.bf16.msra.mxu0 0
  %8364 = vmatpush.bf16.msra.mxu0 0
  %8365 = vmatpush.bf16.msra.mxu0 0
  %8366 = vmatpush.bf16.msra.mxu0 0
  %8367 = vmatpush.bf16.msra.mxu0 0
  %8368 = vmatpush.bf16.msra.mxu0 %v8306
  %8369 = vmatmul.bf16.gmra.mxu0 %v8297
  %v8370 = vpop.f32.mrf.mxu0
  %v8371 = vadd.f32 0.0, %v8370
  %v8372 = vpop.f32.mrf.mxu0
  %8373 = vdwg.mxu0
  %8374 = vmatpush.bf16.msra.mxu0 0
  %8375 = vmatpush.bf16.msra.mxu0 0
  %8376 = vmatpush.bf16.msra.mxu0 0
  %8377 = vmatpush.bf16.msra.mxu0 0
  %8378 = vmatpush.bf16.msra.mxu0 0
  %8379 = vmatpush.bf16.msra.mxu0 0
  %8380 = vmatpush.bf16.msra.mxu0 0
  %8381 = vmatpush.bf16.msra.mxu0 %v8309
  %8382 = vmatmul.bf16.gmra.mxu0 %v8297
  %v8383 = vpop.f32.mrf.mxu0
  %v8384 = vadd.f32 0.0, %v8383
  %v8385 = vpop.f32.mrf.mxu0
  %8386 = vdwg.mxu0
  %8387 = vmatpush.bf16.msra.mxu0 0
  %8388 = vmatpush.bf16.msra.mxu0 0
  %8389 = vmatpush.bf16.msra.mxu0 0
  %8390 = vmatpush.bf16.msra.mxu0 0
  %8391 = vmatpush.bf16.msra.mxu0 0
  %8392 = vmatpush.bf16.msra.mxu0 0
  %8393 = vmatpush.bf16.msra.mxu0 0
  %8394 = vmatpush.bf16.msra.mxu0 %v8312
  %8395 = vmatmul.bf16.gmra.mxu0 %v8297
  %v8396 = vpop.f32.mrf.mxu0
  %v8397 = vadd.f32 0.0, %v8396
  %v8398 = vpop.f32.mrf.mxu0
  %8399 = vdwg.mxu0
  %8400 = vmatpush.bf16.msra.mxu0 0
  %8401 = vmatpush.bf16.msra.mxu0 0
  %8402 = vmatpush.bf16.msra.mxu0 0
  %8403 = vmatpush.bf16.msra.mxu0 0
  %8404 = vmatpush.bf16.msra.mxu0 0
  %8405 = vmatpush.bf16.msra.mxu0 0
  %8406 = vmatpush.bf16.msra.mxu0 0
  %8407 = vmatpush.bf16.msra.mxu0 %v8315
  %8408 = vmatmul.bf16.gmra.mxu0 %v8297
  %v8409 = vpop.f32.mrf.mxu0
  %v8410 = vadd.f32 0.0, %v8409
  %v8411 = vpop.f32.mrf.mxu0
  %8412 = vdwg.mxu0
  %8413 = vmatpush.bf16.msra.mxu0 0
  %8414 = vmatpush.bf16.msra.mxu0 0
  %8415 = vmatpush.bf16.msra.mxu0 0
  %8416 = vmatpush.bf16.msra.mxu0 0
  %8417 = vmatpush.bf16.msra.mxu0 0
  %8418 = vmatpush.bf16.msra.mxu0 0
  %8419 = vmatpush.bf16.msra.mxu0 0
  %8420 = vmatpush.bf16.msra.mxu0 %v8318
  %8421 = vmatmul.bf16.gmra.mxu0 %v8297
  %v8422 = vpop.f32.mrf.mxu0
  %v8423 = vadd.f32 0.0, %v8422
  %v8424 = vpop.f32.mrf.mxu0
  %8425 = vdwg.mxu0
  %8426 = vmatpush.bf16.msra.mxu0 0
  %8427 = vmatpush.bf16.msra.mxu0 0
  %8428 = vmatpush.bf16.msra.mxu0 0
  %8429 = vmatpush.bf16.msra.mxu0 0
  %8430 = vmatpush.bf16.msra.mxu0 0
  %8431 = vmatpush.bf16.msra.mxu0 0
  %8432 = vmatpush.bf16.msra.mxu0 0
  %8433 = vmatpush.bf16.msra.mxu0 %v8321
  %8434 = vmatmul.bf16.gmra.mxu0 %v8297
  %v8435 = vpop.f32.mrf.mxu0
  %v8436 = vadd.f32 0.0, %v8435
  %v8437 = vpop.f32.mrf.mxu0
  %8438 = vdwg.mxu0
  %8439 = vmatpush.bf16.msra.mxu0 0
  %8440 = vmatpush.bf16.msra.mxu0 0
  %8441 = vmatpush.bf16.msra.mxu0 0
  %8442 = vmatpush.bf16.msra.mxu0 0
  %8443 = vmatpush.bf16.msra.mxu0 0
  %8444 = vmatpush.bf16.msra.mxu0 0
  %8445 = vmatpush.bf16.msra.mxu0 0
  %8446 = vmatpush.bf16.msra.mxu0 %v8324
  %8447 = vmatmul.bf16.gmra.mxu0 %v8297
  %v8448 = vpop.f32.mrf.mxu0
  %v8449 = vadd.f32 0.0, %v8448
  %v8450 = vpop.f32.mrf.mxu0
  %8451 = vdwg.mxu0
  %8452 = vmatpush.bf16.msra.mxu0 0
  %8453 = vmatpush.bf16.msra.mxu0 0
  %8454 = vmatpush.bf16.msra.mxu0 0
  %8455 = vmatpush.bf16.msra.mxu0 0
  %8456 = vmatpush.bf16.msra.mxu0 0
  %8457 = vmatpush.bf16.msra.mxu0 0
  %8458 = vmatpush.bf16.msra.mxu0 0
  %8459 = vmatpush.bf16.msra.mxu0 %v8327
  %8460 = vmatmul.bf16.gmra.mxu0 %v8297
  %v8461 = vpop.f32.mrf.mxu0
  %v8462 = vadd.f32 0.0, %v8461
  %v8463 = vpop.f32.mrf.mxu0
  %8464 = vdwg.mxu0
  %8465 = vmatpush.bf16.msra.mxu0 0
  %8466 = vmatpush.bf16.msra.mxu0 0
  %8467 = vmatpush.bf16.msra.mxu0 0
  %8468 = vmatpush.bf16.msra.mxu0 0
  %8469 = vmatpush.bf16.msra.mxu0 0
  %8470 = vmatpush.bf16.msra.mxu0 0
  %8471 = vmatpush.bf16.msra.mxu0 0
  %8472 = vmatpush.bf16.msra.mxu0 %v8330
  %8473 = vmatmul.bf16.gmra.mxu0 %v8297
  %v8474 = vpop.f32.mrf.mxu0
  %v8475 = vadd.f32 0.0, %v8474
  %v8476 = vpop.f32.mrf.mxu0
  %8477 = vdwg.mxu0
  %8478 = vmatpush.bf16.msra.mxu0 0
  %8479 = vmatpush.bf16.msra.mxu0 0
  %8480 = vmatpush.bf16.msra.mxu0 0
  %8481 = vmatpush.bf16.msra.mxu0 0
  %8482 = vmatpush.bf16.msra.mxu0 0
  %8483 = vmatpush.bf16.msra.mxu0 0
  %8484 = vmatpush.bf16.msra.mxu0 0
  %8485 = vmatpush.bf16.msra.mxu0 %v8333
  %8486 = vmatmul.bf16.gmra.mxu0 %v8297
  %v8487 = vpop.f32.mrf.mxu0
  %v8488 = vadd.f32 0.0, %v8487
  %v8489 = vpop.f32.mrf.mxu0
  %8490 = vdwg.mxu0
  %v8503 = vrot.slane %v8358, 6
  %v8504 = vrot.slane %v8371, 4
  %v8505 = vrot.slane %v8384, 2
  %v8506 = vrot.slane %v8410, 6
  %v8507 = vrot.slane %v8423, 4
  %v8508 = vrot.slane %v8436, 2
  %v8509 = vrot.slane %v8462, 6
  %v8510 = vrot.slane %v8475, 4
  %v8511 = vrot.slane %v8488, 2
  %v8512 = vsel %vm1250, %v8345, %v8503
  %v8513 = vsel %vm1252, %v8504, %v8505
  %v8514 = vsel %vm1254, %v8512, %v8513
  %v8515 = vsel %vm1250, %v8397, %v8506
  %v8516 = vsel %vm1252, %v8507, %v8508
  %v8517 = vsel %vm1254, %v8515, %v8516
  %v8518 = vsel %vm1250, %v8449, %v8509
  %v8519 = vsel %vm1252, %v8510, %v8511
  %v8520 = vsel %vm1254, %v8518, %v8519
  %v8524 = vadd.f32 %v8251, %v8514
  %v8525 = vadd.f32 %v8252, %v8517
  %v8526 = vadd.f32 %v8253, %v8520
  %8527 = vst [vmem:[#allocation3] sm:$0xff] %v8524
  %8528 = vst [vmem:[#allocation3 + $0x8] sm:$0xff] %v8525
  %8529 = vst.msk [vmem:[#allocation3 + $0x10] sm:$0xff] %vm1274, %v8526
  %v8530 = vld [vmem:[#allocation3] sm:$0xff]
  %v8531 = vld [vmem:[#allocation3 + $0x8] sm:$0xff]
  %v8532 = vld [vmem:[#allocation3 + $0x10] sm:$0xff]
  %s8533 = sadd.s32 %s991, 27
  %s8534 = smul.u32 %s8533, 2
  %s8535 = scalar_lea.vmem [#allocation2], %s8534
  %v8536 = vld [vmem:[%s8535] sm:$0x3]
  %v8537 = vpack.c.bf16 %v8536, %v8536
  %s8538 = scalar_lea.vmem %s10, 1296
  %v8539 = vld [vmem:[%s8538] sm:$0x77]
  %v8540 = vld [vmem:[%s8538 + $0x8] sm:$0x77]
  %v8541 = vld [vmem:[%s8538 + $0x10] sm:$0x77]
  %v8542 = vld [vmem:[%s8538 + $0x18] sm:$0x77]
  %v8543 = vld [vmem:[%s8538 + $0x20] sm:$0x77]
  %v8544 = vld [vmem:[%s8538 + $0x28] sm:$0x77]
  %v8551 = vunpack.c.l.b16 %v8539
  %v8552 = vunpack.c.h.b16 %v8539
  %v8553 = vunpack.c.l.b16 %v8540
  %v8554 = vunpack.c.h.b16 %v8540
  %v8555 = vunpack.c.l.b16 %v8541
  %v8556 = vunpack.c.h.b16 %v8541
  %v8557 = vunpack.c.l.b16 %v8542
  %v8558 = vunpack.c.h.b16 %v8542
  %v8559 = vunpack.c.l.b16 %v8543
  %v8560 = vunpack.c.h.b16 %v8543
  %v8561 = vunpack.c.l.b16 %v8544
  %v8562 = vunpack.c.h.b16 %v8544
  %v8563 = vpack.c.b16 %v8551, %v8551
  %v8564 = vpack.c.b16 %v8552, %v8552
  %v8565 = vpack.c.b16 %v8553, %v8553
  %v8566 = vpack.c.b16 %v8554, %v8554
  %v8567 = vpack.c.b16 %v8555, %v8555
  %v8568 = vpack.c.b16 %v8556, %v8556
  %v8569 = vpack.c.b16 %v8557, %v8557
  %v8570 = vpack.c.b16 %v8558, %v8558
  %v8571 = vpack.c.b16 %v8559, %v8559
  %v8572 = vpack.c.b16 %v8560, %v8560
  %v8573 = vpack.c.b16 %v8561, %v8561
  %v8574 = vpack.c.b16 %v8562, %v8562
  %v8576 = vsel %vm1032, %v8537, 0
  %v8579 = vsel %vm1036, %v8563, 0
  %v8582 = vsel %vm1036, %v8564, 0
  %v8585 = vsel %vm1036, %v8565, 0
  %v8588 = vsel %vm1036, %v8566, 0
  %v8591 = vsel %vm1036, %v8567, 0
  %v8594 = vsel %vm1036, %v8568, 0
  %v8597 = vsel %vm1036, %v8569, 0
  %v8600 = vsel %vm1036, %v8570, 0
  %v8603 = vsel %vm1036, %v8571, 0
  %v8606 = vsel %vm1036, %v8572, 0
  %v8609 = vsel %vm1036, %v8573, 0
  %v8612 = vsel %vm1036, %v8574, 0
  %8614 = vmatpush.bf16.msra.mxu0 0
  %8615 = vmatpush.bf16.msra.mxu0 0
  %8616 = vmatpush.bf16.msra.mxu0 0
  %8617 = vmatpush.bf16.msra.mxu0 0
  %8618 = vmatpush.bf16.msra.mxu0 0
  %8619 = vmatpush.bf16.msra.mxu0 0
  %8620 = vmatpush.bf16.msra.mxu0 0
  %8621 = vmatpush.bf16.msra.mxu0 %v8579
  %8622 = vmatmul.bf16.gmra.mxu0 %v8576
  %v8623 = vpop.f32.mrf.mxu0
  %v8624 = vadd.f32 0.0, %v8623
  %v8625 = vpop.f32.mrf.mxu0
  %8626 = vdwg.mxu0
  %8627 = vmatpush.bf16.msra.mxu0 0
  %8628 = vmatpush.bf16.msra.mxu0 0
  %8629 = vmatpush.bf16.msra.mxu0 0
  %8630 = vmatpush.bf16.msra.mxu0 0
  %8631 = vmatpush.bf16.msra.mxu0 0
  %8632 = vmatpush.bf16.msra.mxu0 0
  %8633 = vmatpush.bf16.msra.mxu0 0
  %8634 = vmatpush.bf16.msra.mxu0 %v8582
  %8635 = vmatmul.bf16.gmra.mxu0 %v8576
  %v8636 = vpop.f32.mrf.mxu0
  %v8637 = vadd.f32 0.0, %v8636
  %v8638 = vpop.f32.mrf.mxu0
  %8639 = vdwg.mxu0
  %8640 = vmatpush.bf16.msra.mxu0 0
  %8641 = vmatpush.bf16.msra.mxu0 0
  %8642 = vmatpush.bf16.msra.mxu0 0
  %8643 = vmatpush.bf16.msra.mxu0 0
  %8644 = vmatpush.bf16.msra.mxu0 0
  %8645 = vmatpush.bf16.msra.mxu0 0
  %8646 = vmatpush.bf16.msra.mxu0 0
  %8647 = vmatpush.bf16.msra.mxu0 %v8585
  %8648 = vmatmul.bf16.gmra.mxu0 %v8576
  %v8649 = vpop.f32.mrf.mxu0
  %v8650 = vadd.f32 0.0, %v8649
  %v8651 = vpop.f32.mrf.mxu0
  %8652 = vdwg.mxu0
  %8653 = vmatpush.bf16.msra.mxu0 0
  %8654 = vmatpush.bf16.msra.mxu0 0
  %8655 = vmatpush.bf16.msra.mxu0 0
  %8656 = vmatpush.bf16.msra.mxu0 0
  %8657 = vmatpush.bf16.msra.mxu0 0
  %8658 = vmatpush.bf16.msra.mxu0 0
  %8659 = vmatpush.bf16.msra.mxu0 0
  %8660 = vmatpush.bf16.msra.mxu0 %v8588
  %8661 = vmatmul.bf16.gmra.mxu0 %v8576
  %v8662 = vpop.f32.mrf.mxu0
  %v8663 = vadd.f32 0.0, %v8662
  %v8664 = vpop.f32.mrf.mxu0
  %8665 = vdwg.mxu0
  %8666 = vmatpush.bf16.msra.mxu0 0
  %8667 = vmatpush.bf16.msra.mxu0 0
  %8668 = vmatpush.bf16.msra.mxu0 0
  %8669 = vmatpush.bf16.msra.mxu0 0
  %8670 = vmatpush.bf16.msra.mxu0 0
  %8671 = vmatpush.bf16.msra.mxu0 0
  %8672 = vmatpush.bf16.msra.mxu0 0
  %8673 = vmatpush.bf16.msra.mxu0 %v8591
  %8674 = vmatmul.bf16.gmra.mxu0 %v8576
  %v8675 = vpop.f32.mrf.mxu0
  %v8676 = vadd.f32 0.0, %v8675
  %v8677 = vpop.f32.mrf.mxu0
  %8678 = vdwg.mxu0
  %8679 = vmatpush.bf16.msra.mxu0 0
  %8680 = vmatpush.bf16.msra.mxu0 0
  %8681 = vmatpush.bf16.msra.mxu0 0
  %8682 = vmatpush.bf16.msra.mxu0 0
  %8683 = vmatpush.bf16.msra.mxu0 0
  %8684 = vmatpush.bf16.msra.mxu0 0
  %8685 = vmatpush.bf16.msra.mxu0 0
  %8686 = vmatpush.bf16.msra.mxu0 %v8594
  %8687 = vmatmul.bf16.gmra.mxu0 %v8576
  %v8688 = vpop.f32.mrf.mxu0
  %v8689 = vadd.f32 0.0, %v8688
  %v8690 = vpop.f32.mrf.mxu0
  %8691 = vdwg.mxu0
  %8692 = vmatpush.bf16.msra.mxu0 0
  %8693 = vmatpush.bf16.msra.mxu0 0
  %8694 = vmatpush.bf16.msra.mxu0 0
  %8695 = vmatpush.bf16.msra.mxu0 0
  %8696 = vmatpush.bf16.msra.mxu0 0
  %8697 = vmatpush.bf16.msra.mxu0 0
  %8698 = vmatpush.bf16.msra.mxu0 0
  %8699 = vmatpush.bf16.msra.mxu0 %v8597
  %8700 = vmatmul.bf16.gmra.mxu0 %v8576
  %v8701 = vpop.f32.mrf.mxu0
  %v8702 = vadd.f32 0.0, %v8701
  %v8703 = vpop.f32.mrf.mxu0
  %8704 = vdwg.mxu0
  %8705 = vmatpush.bf16.msra.mxu0 0
  %8706 = vmatpush.bf16.msra.mxu0 0
  %8707 = vmatpush.bf16.msra.mxu0 0
  %8708 = vmatpush.bf16.msra.mxu0 0
  %8709 = vmatpush.bf16.msra.mxu0 0
  %8710 = vmatpush.bf16.msra.mxu0 0
  %8711 = vmatpush.bf16.msra.mxu0 0
  %8712 = vmatpush.bf16.msra.mxu0 %v8600
  %8713 = vmatmul.bf16.gmra.mxu0 %v8576
  %v8714 = vpop.f32.mrf.mxu0
  %v8715 = vadd.f32 0.0, %v8714
  %v8716 = vpop.f32.mrf.mxu0
  %8717 = vdwg.mxu0
  %8718 = vmatpush.bf16.msra.mxu0 0
  %8719 = vmatpush.bf16.msra.mxu0 0
  %8720 = vmatpush.bf16.msra.mxu0 0
  %8721 = vmatpush.bf16.msra.mxu0 0
  %8722 = vmatpush.bf16.msra.mxu0 0
  %8723 = vmatpush.bf16.msra.mxu0 0
  %8724 = vmatpush.bf16.msra.mxu0 0
  %8725 = vmatpush.bf16.msra.mxu0 %v8603
  %8726 = vmatmul.bf16.gmra.mxu0 %v8576
  %v8727 = vpop.f32.mrf.mxu0
  %v8728 = vadd.f32 0.0, %v8727
  %v8729 = vpop.f32.mrf.mxu0
  %8730 = vdwg.mxu0
  %8731 = vmatpush.bf16.msra.mxu0 0
  %8732 = vmatpush.bf16.msra.mxu0 0
  %8733 = vmatpush.bf16.msra.mxu0 0
  %8734 = vmatpush.bf16.msra.mxu0 0
  %8735 = vmatpush.bf16.msra.mxu0 0
  %8736 = vmatpush.bf16.msra.mxu0 0
  %8737 = vmatpush.bf16.msra.mxu0 0
  %8738 = vmatpush.bf16.msra.mxu0 %v8606
  %8739 = vmatmul.bf16.gmra.mxu0 %v8576
  %v8740 = vpop.f32.mrf.mxu0
  %v8741 = vadd.f32 0.0, %v8740
  %v8742 = vpop.f32.mrf.mxu0
  %8743 = vdwg.mxu0
  %8744 = vmatpush.bf16.msra.mxu0 0
  %8745 = vmatpush.bf16.msra.mxu0 0
  %8746 = vmatpush.bf16.msra.mxu0 0
  %8747 = vmatpush.bf16.msra.mxu0 0
  %8748 = vmatpush.bf16.msra.mxu0 0
  %8749 = vmatpush.bf16.msra.mxu0 0
  %8750 = vmatpush.bf16.msra.mxu0 0
  %8751 = vmatpush.bf16.msra.mxu0 %v8609
  %8752 = vmatmul.bf16.gmra.mxu0 %v8576
  %v8753 = vpop.f32.mrf.mxu0
  %v8754 = vadd.f32 0.0, %v8753
  %v8755 = vpop.f32.mrf.mxu0
  %8756 = vdwg.mxu0
  %8757 = vmatpush.bf16.msra.mxu0 0
  %8758 = vmatpush.bf16.msra.mxu0 0
  %8759 = vmatpush.bf16.msra.mxu0 0
  %8760 = vmatpush.bf16.msra.mxu0 0
  %8761 = vmatpush.bf16.msra.mxu0 0
  %8762 = vmatpush.bf16.msra.mxu0 0
  %8763 = vmatpush.bf16.msra.mxu0 0
  %8764 = vmatpush.bf16.msra.mxu0 %v8612
  %8765 = vmatmul.bf16.gmra.mxu0 %v8576
  %v8766 = vpop.f32.mrf.mxu0
  %v8767 = vadd.f32 0.0, %v8766
  %v8768 = vpop.f32.mrf.mxu0
  %8769 = vdwg.mxu0
  %v8782 = vrot.slane %v8637, 6
  %v8783 = vrot.slane %v8650, 4
  %v8784 = vrot.slane %v8663, 2
  %v8785 = vrot.slane %v8689, 6
  %v8786 = vrot.slane %v8702, 4
  %v8787 = vrot.slane %v8715, 2
  %v8788 = vrot.slane %v8741, 6
  %v8789 = vrot.slane %v8754, 4
  %v8790 = vrot.slane %v8767, 2
  %v8791 = vsel %vm1250, %v8624, %v8782
  %v8792 = vsel %vm1252, %v8783, %v8784
  %v8793 = vsel %vm1254, %v8791, %v8792
  %v8794 = vsel %vm1250, %v8676, %v8785
  %v8795 = vsel %vm1252, %v8786, %v8787
  %v8796 = vsel %vm1254, %v8794, %v8795
  %v8797 = vsel %vm1250, %v8728, %v8788
  %v8798 = vsel %vm1252, %v8789, %v8790
  %v8799 = vsel %vm1254, %v8797, %v8798
  %v8803 = vadd.f32 %v8530, %v8793
  %v8804 = vadd.f32 %v8531, %v8796
  %v8805 = vadd.f32 %v8532, %v8799
  %8806 = vst [vmem:[#allocation3] sm:$0xff] %v8803
  %8807 = vst [vmem:[#allocation3 + $0x8] sm:$0xff] %v8804
  %8808 = vst.msk [vmem:[#allocation3 + $0x10] sm:$0xff] %vm1274, %v8805
  %v8809 = vld [vmem:[#allocation3] sm:$0xff]
  %v8810 = vld [vmem:[#allocation3 + $0x8] sm:$0xff]
  %v8811 = vld [vmem:[#allocation3 + $0x10] sm:$0xff]
  %s8812 = sadd.s32 %s991, 28
  %s8813 = smul.u32 %s8812, 2
  %s8814 = scalar_lea.vmem [#allocation2], %s8813
  %v8815 = vld [vmem:[%s8814] sm:$0x3]
  %v8816 = vpack.c.bf16 %v8815, %v8815
  %s8817 = scalar_lea.vmem %s10, 1344
  %v8818 = vld [vmem:[%s8817] sm:$0x77]
  %v8819 = vld [vmem:[%s8817 + $0x8] sm:$0x77]
  %v8820 = vld [vmem:[%s8817 + $0x10] sm:$0x77]
  %v8821 = vld [vmem:[%s8817 + $0x18] sm:$0x77]
  %v8822 = vld [vmem:[%s8817 + $0x20] sm:$0x77]
  %v8823 = vld [vmem:[%s8817 + $0x28] sm:$0x77]
  %v8830 = vunpack.c.l.b16 %v8818
  %v8831 = vunpack.c.h.b16 %v8818
  %v8832 = vunpack.c.l.b16 %v8819
  %v8833 = vunpack.c.h.b16 %v8819
  %v8834 = vunpack.c.l.b16 %v8820
  %v8835 = vunpack.c.h.b16 %v8820
  %v8836 = vunpack.c.l.b16 %v8821
  %v8837 = vunpack.c.h.b16 %v8821
  %v8838 = vunpack.c.l.b16 %v8822
  %v8839 = vunpack.c.h.b16 %v8822
  %v8840 = vunpack.c.l.b16 %v8823
  %v8841 = vunpack.c.h.b16 %v8823
  %v8842 = vpack.c.b16 %v8830, %v8830
  %v8843 = vpack.c.b16 %v8831, %v8831
  %v8844 = vpack.c.b16 %v8832, %v8832
  %v8845 = vpack.c.b16 %v8833, %v8833
  %v8846 = vpack.c.b16 %v8834, %v8834
  %v8847 = vpack.c.b16 %v8835, %v8835
  %v8848 = vpack.c.b16 %v8836, %v8836
  %v8849 = vpack.c.b16 %v8837, %v8837
  %v8850 = vpack.c.b16 %v8838, %v8838
  %v8851 = vpack.c.b16 %v8839, %v8839
  %v8852 = vpack.c.b16 %v8840, %v8840
  %v8853 = vpack.c.b16 %v8841, %v8841
  %v8855 = vsel %vm1032, %v8816, 0
  %v8858 = vsel %vm1036, %v8842, 0
  %v8861 = vsel %vm1036, %v8843, 0
  %v8864 = vsel %vm1036, %v8844, 0
  %v8867 = vsel %vm1036, %v8845, 0
  %v8870 = vsel %vm1036, %v8846, 0
  %v8873 = vsel %vm1036, %v8847, 0
  %v8876 = vsel %vm1036, %v8848, 0
  %v8879 = vsel %vm1036, %v8849, 0
  %v8882 = vsel %vm1036, %v8850, 0
  %v8885 = vsel %vm1036, %v8851, 0
  %v8888 = vsel %vm1036, %v8852, 0
  %v8891 = vsel %vm1036, %v8853, 0
  %8893 = vmatpush.bf16.msra.mxu0 0
  %8894 = vmatpush.bf16.msra.mxu0 0
  %8895 = vmatpush.bf16.msra.mxu0 0
  %8896 = vmatpush.bf16.msra.mxu0 0
  %8897 = vmatpush.bf16.msra.mxu0 0
  %8898 = vmatpush.bf16.msra.mxu0 0
  %8899 = vmatpush.bf16.msra.mxu0 0
  %8900 = vmatpush.bf16.msra.mxu0 %v8858
  %8901 = vmatmul.bf16.gmra.mxu0 %v8855
  %v8902 = vpop.f32.mrf.mxu0
  %v8903 = vadd.f32 0.0, %v8902
  %v8904 = vpop.f32.mrf.mxu0
  %8905 = vdwg.mxu0
  %8906 = vmatpush.bf16.msra.mxu0 0
  %8907 = vmatpush.bf16.msra.mxu0 0
  %8908 = vmatpush.bf16.msra.mxu0 0
  %8909 = vmatpush.bf16.msra.mxu0 0
  %8910 = vmatpush.bf16.msra.mxu0 0
  %8911 = vmatpush.bf16.msra.mxu0 0
  %8912 = vmatpush.bf16.msra.mxu0 0
  %8913 = vmatpush.bf16.msra.mxu0 %v8861
  %8914 = vmatmul.bf16.gmra.mxu0 %v8855
  %v8915 = vpop.f32.mrf.mxu0
  %v8916 = vadd.f32 0.0, %v8915
  %v8917 = vpop.f32.mrf.mxu0
  %8918 = vdwg.mxu0
  %8919 = vmatpush.bf16.msra.mxu0 0
  %8920 = vmatpush.bf16.msra.mxu0 0
  %8921 = vmatpush.bf16.msra.mxu0 0
  %8922 = vmatpush.bf16.msra.mxu0 0
  %8923 = vmatpush.bf16.msra.mxu0 0
  %8924 = vmatpush.bf16.msra.mxu0 0
  %8925 = vmatpush.bf16.msra.mxu0 0
  %8926 = vmatpush.bf16.msra.mxu0 %v8864
  %8927 = vmatmul.bf16.gmra.mxu0 %v8855
  %v8928 = vpop.f32.mrf.mxu0
  %v8929 = vadd.f32 0.0, %v8928
  %v8930 = vpop.f32.mrf.mxu0
  %8931 = vdwg.mxu0
  %8932 = vmatpush.bf16.msra.mxu0 0
  %8933 = vmatpush.bf16.msra.mxu0 0
  %8934 = vmatpush.bf16.msra.mxu0 0
  %8935 = vmatpush.bf16.msra.mxu0 0
  %8936 = vmatpush.bf16.msra.mxu0 0
  %8937 = vmatpush.bf16.msra.mxu0 0
  %8938 = vmatpush.bf16.msra.mxu0 0
  %8939 = vmatpush.bf16.msra.mxu0 %v8867
  %8940 = vmatmul.bf16.gmra.mxu0 %v8855
  %v8941 = vpop.f32.mrf.mxu0
  %v8942 = vadd.f32 0.0, %v8941
  %v8943 = vpop.f32.mrf.mxu0
  %8944 = vdwg.mxu0
  %8945 = vmatpush.bf16.msra.mxu0 0
  %8946 = vmatpush.bf16.msra.mxu0 0
  %8947 = vmatpush.bf16.msra.mxu0 0
  %8948 = vmatpush.bf16.msra.mxu0 0
  %8949 = vmatpush.bf16.msra.mxu0 0
  %8950 = vmatpush.bf16.msra.mxu0 0
  %8951 = vmatpush.bf16.msra.mxu0 0
  %8952 = vmatpush.bf16.msra.mxu0 %v8870
  %8953 = vmatmul.bf16.gmra.mxu0 %v8855
  %v8954 = vpop.f32.mrf.mxu0
  %v8955 = vadd.f32 0.0, %v8954
  %v8956 = vpop.f32.mrf.mxu0
  %8957 = vdwg.mxu0
  %8958 = vmatpush.bf16.msra.mxu0 0
  %8959 = vmatpush.bf16.msra.mxu0 0
  %8960 = vmatpush.bf16.msra.mxu0 0
  %8961 = vmatpush.bf16.msra.mxu0 0
  %8962 = vmatpush.bf16.msra.mxu0 0
  %8963 = vmatpush.bf16.msra.mxu0 0
  %8964 = vmatpush.bf16.msra.mxu0 0
  %8965 = vmatpush.bf16.msra.mxu0 %v8873
  %8966 = vmatmul.bf16.gmra.mxu0 %v8855
  %v8967 = vpop.f32.mrf.mxu0
  %v8968 = vadd.f32 0.0, %v8967
  %v8969 = vpop.f32.mrf.mxu0
  %8970 = vdwg.mxu0
  %8971 = vmatpush.bf16.msra.mxu0 0
  %8972 = vmatpush.bf16.msra.mxu0 0
  %8973 = vmatpush.bf16.msra.mxu0 0
  %8974 = vmatpush.bf16.msra.mxu0 0
  %8975 = vmatpush.bf16.msra.mxu0 0
  %8976 = vmatpush.bf16.msra.mxu0 0
  %8977 = vmatpush.bf16.msra.mxu0 0
  %8978 = vmatpush.bf16.msra.mxu0 %v8876
  %8979 = vmatmul.bf16.gmra.mxu0 %v8855
  %v8980 = vpop.f32.mrf.mxu0
  %v8981 = vadd.f32 0.0, %v8980
  %v8982 = vpop.f32.mrf.mxu0
  %8983 = vdwg.mxu0
  %8984 = vmatpush.bf16.msra.mxu0 0
  %8985 = vmatpush.bf16.msra.mxu0 0
  %8986 = vmatpush.bf16.msra.mxu0 0
  %8987 = vmatpush.bf16.msra.mxu0 0
  %8988 = vmatpush.bf16.msra.mxu0 0
  %8989 = vmatpush.bf16.msra.mxu0 0
  %8990 = vmatpush.bf16.msra.mxu0 0
  %8991 = vmatpush.bf16.msra.mxu0 %v8879
  %8992 = vmatmul.bf16.gmra.mxu0 %v8855
  %v8993 = vpop.f32.mrf.mxu0
  %v8994 = vadd.f32 0.0, %v8993
  %v8995 = vpop.f32.mrf.mxu0
  %8996 = vdwg.mxu0
  %8997 = vmatpush.bf16.msra.mxu0 0
  %8998 = vmatpush.bf16.msra.mxu0 0
  %8999 = vmatpush.bf16.msra.mxu0 0
  %9000 = vmatpush.bf16.msra.mxu0 0
  %9001 = vmatpush.bf16.msra.mxu0 0
  %9002 = vmatpush.bf16.msra.mxu0 0
  %9003 = vmatpush.bf16.msra.mxu0 0
  %9004 = vmatpush.bf16.msra.mxu0 %v8882
  %9005 = vmatmul.bf16.gmra.mxu0 %v8855
  %v9006 = vpop.f32.mrf.mxu0
  %v9007 = vadd.f32 0.0, %v9006
  %v9008 = vpop.f32.mrf.mxu0
  %9009 = vdwg.mxu0
  %9010 = vmatpush.bf16.msra.mxu0 0
  %9011 = vmatpush.bf16.msra.mxu0 0
  %9012 = vmatpush.bf16.msra.mxu0 0
  %9013 = vmatpush.bf16.msra.mxu0 0
  %9014 = vmatpush.bf16.msra.mxu0 0
  %9015 = vmatpush.bf16.msra.mxu0 0
  %9016 = vmatpush.bf16.msra.mxu0 0
  %9017 = vmatpush.bf16.msra.mxu0 %v8885
  %9018 = vmatmul.bf16.gmra.mxu0 %v8855
  %v9019 = vpop.f32.mrf.mxu0
  %v9020 = vadd.f32 0.0, %v9019
  %v9021 = vpop.f32.mrf.mxu0
  %9022 = vdwg.mxu0
  %9023 = vmatpush.bf16.msra.mxu0 0
  %9024 = vmatpush.bf16.msra.mxu0 0
  %9025 = vmatpush.bf16.msra.mxu0 0
  %9026 = vmatpush.bf16.msra.mxu0 0
  %9027 = vmatpush.bf16.msra.mxu0 0
  %9028 = vmatpush.bf16.msra.mxu0 0
  %9029 = vmatpush.bf16.msra.mxu0 0
  %9030 = vmatpush.bf16.msra.mxu0 %v8888
  %9031 = vmatmul.bf16.gmra.mxu0 %v8855
  %v9032 = vpop.f32.mrf.mxu0
  %v9033 = vadd.f32 0.0, %v9032
  %v9034 = vpop.f32.mrf.mxu0
  %9035 = vdwg.mxu0
  %9036 = vmatpush.bf16.msra.mxu0 0
  %9037 = vmatpush.bf16.msra.mxu0 0
  %9038 = vmatpush.bf16.msra.mxu0 0
  %9039 = vmatpush.bf16.msra.mxu0 0
  %9040 = vmatpush.bf16.msra.mxu0 0
  %9041 = vmatpush.bf16.msra.mxu0 0
  %9042 = vmatpush.bf16.msra.mxu0 0
  %9043 = vmatpush.bf16.msra.mxu0 %v8891
  %9044 = vmatmul.bf16.gmra.mxu0 %v8855
  %v9045 = vpop.f32.mrf.mxu0
  %v9046 = vadd.f32 0.0, %v9045
  %v9047 = vpop.f32.mrf.mxu0
  %9048 = vdwg.mxu0
  %v9061 = vrot.slane %v8916, 6
  %v9062 = vrot.slane %v8929, 4
  %v9063 = vrot.slane %v8942, 2
  %v9064 = vrot.slane %v8968, 6
  %v9065 = vrot.slane %v8981, 4
  %v9066 = vrot.slane %v8994, 2
  %v9067 = vrot.slane %v9020, 6
  %v9068 = vrot.slane %v9033, 4
  %v9069 = vrot.slane %v9046, 2
  %v9070 = vsel %vm1250, %v8903, %v9061
  %v9071 = vsel %vm1252, %v9062, %v9063
  %v9072 = vsel %vm1254, %v9070, %v9071
  %v9073 = vsel %vm1250, %v8955, %v9064
  %v9074 = vsel %vm1252, %v9065, %v9066
  %v9075 = vsel %vm1254, %v9073, %v9074
  %v9076 = vsel %vm1250, %v9007, %v9067
  %v9077 = vsel %vm1252, %v9068, %v9069
  %v9078 = vsel %vm1254, %v9076, %v9077
  %v9082 = vadd.f32 %v8809, %v9072
  %v9083 = vadd.f32 %v8810, %v9075
  %v9084 = vadd.f32 %v8811, %v9078
  %9085 = vst [vmem:[#allocation3] sm:$0xff] %v9082
  %9086 = vst [vmem:[#allocation3 + $0x8] sm:$0xff] %v9083
  %9087 = vst.msk [vmem:[#allocation3 + $0x10] sm:$0xff] %vm1274, %v9084
  %v9088 = vld [vmem:[#allocation3] sm:$0xff]
  %v9089 = vld [vmem:[#allocation3 + $0x8] sm:$0xff]
  %v9090 = vld [vmem:[#allocation3 + $0x10] sm:$0xff]
  %s9091 = sadd.s32 %s991, 29
  %s9092 = smul.u32 %s9091, 2
  %s9093 = scalar_lea.vmem [#allocation2], %s9092
  %v9094 = vld [vmem:[%s9093] sm:$0x3]
  %v9095 = vpack.c.bf16 %v9094, %v9094
  %s9096 = scalar_lea.vmem %s10, 1392
  %v9097 = vld [vmem:[%s9096] sm:$0x77]
  %v9098 = vld [vmem:[%s9096 + $0x8] sm:$0x77]
  %v9099 = vld [vmem:[%s9096 + $0x10] sm:$0x77]
  %v9100 = vld [vmem:[%s9096 + $0x18] sm:$0x77]
  %v9101 = vld [vmem:[%s9096 + $0x20] sm:$0x77]
  %v9102 = vld [vmem:[%s9096 + $0x28] sm:$0x77]
  %v9109 = vunpack.c.l.b16 %v9097
  %v9110 = vunpack.c.h.b16 %v9097
  %v9111 = vunpack.c.l.b16 %v9098
  %v9112 = vunpack.c.h.b16 %v9098
  %v9113 = vunpack.c.l.b16 %v9099
  %v9114 = vunpack.c.h.b16 %v9099
  %v9115 = vunpack.c.l.b16 %v9100
  %v9116 = vunpack.c.h.b16 %v9100
  %v9117 = vunpack.c.l.b16 %v9101
  %v9118 = vunpack.c.h.b16 %v9101
  %v9119 = vunpack.c.l.b16 %v9102
  %v9120 = vunpack.c.h.b16 %v9102
  %v9121 = vpack.c.b16 %v9109, %v9109
  %v9122 = vpack.c.b16 %v9110, %v9110
  %v9123 = vpack.c.b16 %v9111, %v9111
  %v9124 = vpack.c.b16 %v9112, %v9112
  %v9125 = vpack.c.b16 %v9113, %v9113
  %v9126 = vpack.c.b16 %v9114, %v9114
  %v9127 = vpack.c.b16 %v9115, %v9115
  %v9128 = vpack.c.b16 %v9116, %v9116
  %v9129 = vpack.c.b16 %v9117, %v9117
  %v9130 = vpack.c.b16 %v9118, %v9118
  %v9131 = vpack.c.b16 %v9119, %v9119
  %v9132 = vpack.c.b16 %v9120, %v9120
  %v9134 = vsel %vm1032, %v9095, 0
  %v9137 = vsel %vm1036, %v9121, 0
  %v9140 = vsel %vm1036, %v9122, 0
  %v9143 = vsel %vm1036, %v9123, 0
  %v9146 = vsel %vm1036, %v9124, 0
  %v9149 = vsel %vm1036, %v9125, 0
  %v9152 = vsel %vm1036, %v9126, 0
  %v9155 = vsel %vm1036, %v9127, 0
  %v9158 = vsel %vm1036, %v9128, 0
  %v9161 = vsel %vm1036, %v9129, 0
  %v9164 = vsel %vm1036, %v9130, 0
  %v9167 = vsel %vm1036, %v9131, 0
  %v9170 = vsel %vm1036, %v9132, 0
  %9172 = vmatpush.bf16.msra.mxu0 0
  %9173 = vmatpush.bf16.msra.mxu0 0
  %9174 = vmatpush.bf16.msra.mxu0 0
  %9175 = vmatpush.bf16.msra.mxu0 0
  %9176 = vmatpush.bf16.msra.mxu0 0
  %9177 = vmatpush.bf16.msra.mxu0 0
  %9178 = vmatpush.bf16.msra.mxu0 0
  %9179 = vmatpush.bf16.msra.mxu0 %v9137
  %9180 = vmatmul.bf16.gmra.mxu0 %v9134
  %v9181 = vpop.f32.mrf.mxu0
  %v9182 = vadd.f32 0.0, %v9181
  %v9183 = vpop.f32.mrf.mxu0
  %9184 = vdwg.mxu0
  %9185 = vmatpush.bf16.msra.mxu0 0
  %9186 = vmatpush.bf16.msra.mxu0 0
  %9187 = vmatpush.bf16.msra.mxu0 0
  %9188 = vmatpush.bf16.msra.mxu0 0
  %9189 = vmatpush.bf16.msra.mxu0 0
  %9190 = vmatpush.bf16.msra.mxu0 0
  %9191 = vmatpush.bf16.msra.mxu0 0
  %9192 = vmatpush.bf16.msra.mxu0 %v9140
  %9193 = vmatmul.bf16.gmra.mxu0 %v9134
  %v9194 = vpop.f32.mrf.mxu0
  %v9195 = vadd.f32 0.0, %v9194
  %v9196 = vpop.f32.mrf.mxu0
  %9197 = vdwg.mxu0
  %9198 = vmatpush.bf16.msra.mxu0 0
  %9199 = vmatpush.bf16.msra.mxu0 0
  %9200 = vmatpush.bf16.msra.mxu0 0
  %9201 = vmatpush.bf16.msra.mxu0 0
  %9202 = vmatpush.bf16.msra.mxu0 0
  %9203 = vmatpush.bf16.msra.mxu0 0
  %9204 = vmatpush.bf16.msra.mxu0 0
  %9205 = vmatpush.bf16.msra.mxu0 %v9143
  %9206 = vmatmul.bf16.gmra.mxu0 %v9134
  %v9207 = vpop.f32.mrf.mxu0
  %v9208 = vadd.f32 0.0, %v9207
  %v9209 = vpop.f32.mrf.mxu0
  %9210 = vdwg.mxu0
  %9211 = vmatpush.bf16.msra.mxu0 0
  %9212 = vmatpush.bf16.msra.mxu0 0
  %9213 = vmatpush.bf16.msra.mxu0 0
  %9214 = vmatpush.bf16.msra.mxu0 0
  %9215 = vmatpush.bf16.msra.mxu0 0
  %9216 = vmatpush.bf16.msra.mxu0 0
  %9217 = vmatpush.bf16.msra.mxu0 0
  %9218 = vmatpush.bf16.msra.mxu0 %v9146
  %9219 = vmatmul.bf16.gmra.mxu0 %v9134
  %v9220 = vpop.f32.mrf.mxu0
  %v9221 = vadd.f32 0.0, %v9220
  %v9222 = vpop.f32.mrf.mxu0
  %9223 = vdwg.mxu0
  %9224 = vmatpush.bf16.msra.mxu0 0
  %9225 = vmatpush.bf16.msra.mxu0 0
  %9226 = vmatpush.bf16.msra.mxu0 0
  %9227 = vmatpush.bf16.msra.mxu0 0
  %9228 = vmatpush.bf16.msra.mxu0 0
  %9229 = vmatpush.bf16.msra.mxu0 0
  %9230 = vmatpush.bf16.msra.mxu0 0
  %9231 = vmatpush.bf16.msra.mxu0 %v9149
  %9232 = vmatmul.bf16.gmra.mxu0 %v9134
  %v9233 = vpop.f32.mrf.mxu0
  %v9234 = vadd.f32 0.0, %v9233
  %v9235 = vpop.f32.mrf.mxu0
  %9236 = vdwg.mxu0
  %9237 = vmatpush.bf16.msra.mxu0 0
  %9238 = vmatpush.bf16.msra.mxu0 0
  %9239 = vmatpush.bf16.msra.mxu0 0
  %9240 = vmatpush.bf16.msra.mxu0 0
  %9241 = vmatpush.bf16.msra.mxu0 0
  %9242 = vmatpush.bf16.msra.mxu0 0
  %9243 = vmatpush.bf16.msra.mxu0 0
  %9244 = vmatpush.bf16.msra.mxu0 %v9152
  %9245 = vmatmul.bf16.gmra.mxu0 %v9134
  %v9246 = vpop.f32.mrf.mxu0
  %v9247 = vadd.f32 0.0, %v9246
  %v9248 = vpop.f32.mrf.mxu0
  %9249 = vdwg.mxu0
  %9250 = vmatpush.bf16.msra.mxu0 0
  %9251 = vmatpush.bf16.msra.mxu0 0
  %9252 = vmatpush.bf16.msra.mxu0 0
  %9253 = vmatpush.bf16.msra.mxu0 0
  %9254 = vmatpush.bf16.msra.mxu0 0
  %9255 = vmatpush.bf16.msra.mxu0 0
  %9256 = vmatpush.bf16.msra.mxu0 0
  %9257 = vmatpush.bf16.msra.mxu0 %v9155
  %9258 = vmatmul.bf16.gmra.mxu0 %v9134
  %v9259 = vpop.f32.mrf.mxu0
  %v9260 = vadd.f32 0.0, %v9259
  %v9261 = vpop.f32.mrf.mxu0
  %9262 = vdwg.mxu0
  %9263 = vmatpush.bf16.msra.mxu0 0
  %9264 = vmatpush.bf16.msra.mxu0 0
  %9265 = vmatpush.bf16.msra.mxu0 0
  %9266 = vmatpush.bf16.msra.mxu0 0
  %9267 = vmatpush.bf16.msra.mxu0 0
  %9268 = vmatpush.bf16.msra.mxu0 0
  %9269 = vmatpush.bf16.msra.mxu0 0
  %9270 = vmatpush.bf16.msra.mxu0 %v9158
  %9271 = vmatmul.bf16.gmra.mxu0 %v9134
  %v9272 = vpop.f32.mrf.mxu0
  %v9273 = vadd.f32 0.0, %v9272
  %v9274 = vpop.f32.mrf.mxu0
  %9275 = vdwg.mxu0
  %9276 = vmatpush.bf16.msra.mxu0 0
  %9277 = vmatpush.bf16.msra.mxu0 0
  %9278 = vmatpush.bf16.msra.mxu0 0
  %9279 = vmatpush.bf16.msra.mxu0 0
  %9280 = vmatpush.bf16.msra.mxu0 0
  %9281 = vmatpush.bf16.msra.mxu0 0
  %9282 = vmatpush.bf16.msra.mxu0 0
  %9283 = vmatpush.bf16.msra.mxu0 %v9161
  %9284 = vmatmul.bf16.gmra.mxu0 %v9134
  %v9285 = vpop.f32.mrf.mxu0
  %v9286 = vadd.f32 0.0, %v9285
  %v9287 = vpop.f32.mrf.mxu0
  %9288 = vdwg.mxu0
  %9289 = vmatpush.bf16.msra.mxu0 0
  %9290 = vmatpush.bf16.msra.mxu0 0
  %9291 = vmatpush.bf16.msra.mxu0 0
  %9292 = vmatpush.bf16.msra.mxu0 0
  %9293 = vmatpush.bf16.msra.mxu0 0
  %9294 = vmatpush.bf16.msra.mxu0 0
  %9295 = vmatpush.bf16.msra.mxu0 0
  %9296 = vmatpush.bf16.msra.mxu0 %v9164
  %9297 = vmatmul.bf16.gmra.mxu0 %v9134
  %v9298 = vpop.f32.mrf.mxu0
  %v9299 = vadd.f32 0.0, %v9298
  %v9300 = vpop.f32.mrf.mxu0
  %9301 = vdwg.mxu0
  %9302 = vmatpush.bf16.msra.mxu0 0
  %9303 = vmatpush.bf16.msra.mxu0 0
  %9304 = vmatpush.bf16.msra.mxu0 0
  %9305 = vmatpush.bf16.msra.mxu0 0
  %9306 = vmatpush.bf16.msra.mxu0 0
  %9307 = vmatpush.bf16.msra.mxu0 0
  %9308 = vmatpush.bf16.msra.mxu0 0
  %9309 = vmatpush.bf16.msra.mxu0 %v9167
  %9310 = vmatmul.bf16.gmra.mxu0 %v9134
  %v9311 = vpop.f32.mrf.mxu0
  %v9312 = vadd.f32 0.0, %v9311
  %v9313 = vpop.f32.mrf.mxu0
  %9314 = vdwg.mxu0
  %9315 = vmatpush.bf16.msra.mxu0 0
  %9316 = vmatpush.bf16.msra.mxu0 0
  %9317 = vmatpush.bf16.msra.mxu0 0
  %9318 = vmatpush.bf16.msra.mxu0 0
  %9319 = vmatpush.bf16.msra.mxu0 0
  %9320 = vmatpush.bf16.msra.mxu0 0
  %9321 = vmatpush.bf16.msra.mxu0 0
  %9322 = vmatpush.bf16.msra.mxu0 %v9170
  %9323 = vmatmul.bf16.gmra.mxu0 %v9134
  %v9324 = vpop.f32.mrf.mxu0
  %v9325 = vadd.f32 0.0, %v9324
  %v9326 = vpop.f32.mrf.mxu0
  %9327 = vdwg.mxu0
  %v9340 = vrot.slane %v9195, 6
  %v9341 = vrot.slane %v9208, 4
  %v9342 = vrot.slane %v9221, 2
  %v9343 = vrot.slane %v9247, 6
  %v9344 = vrot.slane %v9260, 4
  %v9345 = vrot.slane %v9273, 2
  %v9346 = vrot.slane %v9299, 6
  %v9347 = vrot.slane %v9312, 4
  %v9348 = vrot.slane %v9325, 2
  %v9349 = vsel %vm1250, %v9182, %v9340
  %v9350 = vsel %vm1252, %v9341, %v9342
  %v9351 = vsel %vm1254, %v9349, %v9350
  %v9352 = vsel %vm1250, %v9234, %v9343
  %v9353 = vsel %vm1252, %v9344, %v9345
  %v9354 = vsel %vm1254, %v9352, %v9353
  %v9355 = vsel %vm1250, %v9286, %v9346
  %v9356 = vsel %vm1252, %v9347, %v9348
  %v9357 = vsel %vm1254, %v9355, %v9356
  %v9361 = vadd.f32 %v9088, %v9351
  %v9362 = vadd.f32 %v9089, %v9354
  %v9363 = vadd.f32 %v9090, %v9357
  %9364 = vst [vmem:[#allocation3] sm:$0xff] %v9361
  %9365 = vst [vmem:[#allocation3 + $0x8] sm:$0xff] %v9362
  %9366 = vst.msk [vmem:[#allocation3 + $0x10] sm:$0xff] %vm1274, %v9363
  %v9367 = vld [vmem:[#allocation3] sm:$0xff]
  %v9368 = vld [vmem:[#allocation3 + $0x8] sm:$0xff]
  %v9369 = vld [vmem:[#allocation3 + $0x10] sm:$0xff]
  %s9370 = sadd.s32 %s991, 30
  %s9371 = smul.u32 %s9370, 2
  %s9372 = scalar_lea.vmem [#allocation2], %s9371
  %v9373 = vld [vmem:[%s9372] sm:$0x3]
  %v9374 = vpack.c.bf16 %v9373, %v9373
  %s9375 = scalar_lea.vmem %s10, 1440
  %v9376 = vld [vmem:[%s9375] sm:$0x77]
  %v9377 = vld [vmem:[%s9375 + $0x8] sm:$0x77]
  %v9378 = vld [vmem:[%s9375 + $0x10] sm:$0x77]
  %v9379 = vld [vmem:[%s9375 + $0x18] sm:$0x77]
  %v9380 = vld [vmem:[%s9375 + $0x20] sm:$0x77]
  %v9381 = vld [vmem:[%s9375 + $0x28] sm:$0x77]
  %v9388 = vunpack.c.l.b16 %v9376
  %v9389 = vunpack.c.h.b16 %v9376
  %v9390 = vunpack.c.l.b16 %v9377
  %v9391 = vunpack.c.h.b16 %v9377
  %v9392 = vunpack.c.l.b16 %v9378
  %v9393 = vunpack.c.h.b16 %v9378
  %v9394 = vunpack.c.l.b16 %v9379
  %v9395 = vunpack.c.h.b16 %v9379
  %v9396 = vunpack.c.l.b16 %v9380
  %v9397 = vunpack.c.h.b16 %v9380
  %v9398 = vunpack.c.l.b16 %v9381
  %v9399 = vunpack.c.h.b16 %v9381
  %v9400 = vpack.c.b16 %v9388, %v9388
  %v9401 = vpack.c.b16 %v9389, %v9389
  %v9402 = vpack.c.b16 %v9390, %v9390
  %v9403 = vpack.c.b16 %v9391, %v9391
  %v9404 = vpack.c.b16 %v9392, %v9392
  %v9405 = vpack.c.b16 %v9393, %v9393
  %v9406 = vpack.c.b16 %v9394, %v9394
  %v9407 = vpack.c.b16 %v9395, %v9395
  %v9408 = vpack.c.b16 %v9396, %v9396
  %v9409 = vpack.c.b16 %v9397, %v9397
  %v9410 = vpack.c.b16 %v9398, %v9398
  %v9411 = vpack.c.b16 %v9399, %v9399
  %v9413 = vsel %vm1032, %v9374, 0
  %v9416 = vsel %vm1036, %v9400, 0
  %v9419 = vsel %vm1036, %v9401, 0
  %v9422 = vsel %vm1036, %v9402, 0
  %v9425 = vsel %vm1036, %v9403, 0
  %v9428 = vsel %vm1036, %v9404, 0
  %v9431 = vsel %vm1036, %v9405, 0
  %v9434 = vsel %vm1036, %v9406, 0
  %v9437 = vsel %vm1036, %v9407, 0
  %v9440 = vsel %vm1036, %v9408, 0
  %v9443 = vsel %vm1036, %v9409, 0
  %v9446 = vsel %vm1036, %v9410, 0
  %v9449 = vsel %vm1036, %v9411, 0
  %9451 = vmatpush.bf16.msra.mxu0 0
  %9452 = vmatpush.bf16.msra.mxu0 0
  %9453 = vmatpush.bf16.msra.mxu0 0
  %9454 = vmatpush.bf16.msra.mxu0 0
  %9455 = vmatpush.bf16.msra.mxu0 0
  %9456 = vmatpush.bf16.msra.mxu0 0
  %9457 = vmatpush.bf16.msra.mxu0 0
  %9458 = vmatpush.bf16.msra.mxu0 %v9416
  %9459 = vmatmul.bf16.gmra.mxu0 %v9413
  %v9460 = vpop.f32.mrf.mxu0
  %v9461 = vadd.f32 0.0, %v9460
  %v9462 = vpop.f32.mrf.mxu0
  %9463 = vdwg.mxu0
  %9464 = vmatpush.bf16.msra.mxu0 0
  %9465 = vmatpush.bf16.msra.mxu0 0
  %9466 = vmatpush.bf16.msra.mxu0 0
  %9467 = vmatpush.bf16.msra.mxu0 0
  %9468 = vmatpush.bf16.msra.mxu0 0
  %9469 = vmatpush.bf16.msra.mxu0 0
  %9470 = vmatpush.bf16.msra.mxu0 0
  %9471 = vmatpush.bf16.msra.mxu0 %v9419
  %9472 = vmatmul.bf16.gmra.mxu0 %v9413
  %v9473 = vpop.f32.mrf.mxu0
  %v9474 = vadd.f32 0.0, %v9473
  %v9475 = vpop.f32.mrf.mxu0
  %9476 = vdwg.mxu0
  %9477 = vmatpush.bf16.msra.mxu0 0
  %9478 = vmatpush.bf16.msra.mxu0 0
  %9479 = vmatpush.bf16.msra.mxu0 0
  %9480 = vmatpush.bf16.msra.mxu0 0
  %9481 = vmatpush.bf16.msra.mxu0 0
  %9482 = vmatpush.bf16.msra.mxu0 0
  %9483 = vmatpush.bf16.msra.mxu0 0
  %9484 = vmatpush.bf16.msra.mxu0 %v9422
  %9485 = vmatmul.bf16.gmra.mxu0 %v9413
  %v9486 = vpop.f32.mrf.mxu0
  %v9487 = vadd.f32 0.0, %v9486
  %v9488 = vpop.f32.mrf.mxu0
  %9489 = vdwg.mxu0
  %9490 = vmatpush.bf16.msra.mxu0 0
  %9491 = vmatpush.bf16.msra.mxu0 0
  %9492 = vmatpush.bf16.msra.mxu0 0
  %9493 = vmatpush.bf16.msra.mxu0 0
  %9494 = vmatpush.bf16.msra.mxu0 0
  %9495 = vmatpush.bf16.msra.mxu0 0
  %9496 = vmatpush.bf16.msra.mxu0 0
  %9497 = vmatpush.bf16.msra.mxu0 %v9425
  %9498 = vmatmul.bf16.gmra.mxu0 %v9413
  %v9499 = vpop.f32.mrf.mxu0
  %v9500 = vadd.f32 0.0, %v9499
  %v9501 = vpop.f32.mrf.mxu0
  %9502 = vdwg.mxu0
  %9503 = vmatpush.bf16.msra.mxu0 0
  %9504 = vmatpush.bf16.msra.mxu0 0
  %9505 = vmatpush.bf16.msra.mxu0 0
  %9506 = vmatpush.bf16.msra.mxu0 0
  %9507 = vmatpush.bf16.msra.mxu0 0
  %9508 = vmatpush.bf16.msra.mxu0 0
  %9509 = vmatpush.bf16.msra.mxu0 0
  %9510 = vmatpush.bf16.msra.mxu0 %v9428
  %9511 = vmatmul.bf16.gmra.mxu0 %v9413
  %v9512 = vpop.f32.mrf.mxu0
  %v9513 = vadd.f32 0.0, %v9512
  %v9514 = vpop.f32.mrf.mxu0
  %9515 = vdwg.mxu0
  %9516 = vmatpush.bf16.msra.mxu0 0
  %9517 = vmatpush.bf16.msra.mxu0 0
  %9518 = vmatpush.bf16.msra.mxu0 0
  %9519 = vmatpush.bf16.msra.mxu0 0
  %9520 = vmatpush.bf16.msra.mxu0 0
  %9521 = vmatpush.bf16.msra.mxu0 0
  %9522 = vmatpush.bf16.msra.mxu0 0
  %9523 = vmatpush.bf16.msra.mxu0 %v9431
  %9524 = vmatmul.bf16.gmra.mxu0 %v9413
  %v9525 = vpop.f32.mrf.mxu0
  %v9526 = vadd.f32 0.0, %v9525
  %v9527 = vpop.f32.mrf.mxu0
  %9528 = vdwg.mxu0
  %9529 = vmatpush.bf16.msra.mxu0 0
  %9530 = vmatpush.bf16.msra.mxu0 0
  %9531 = vmatpush.bf16.msra.mxu0 0
  %9532 = vmatpush.bf16.msra.mxu0 0
  %9533 = vmatpush.bf16.msra.mxu0 0
  %9534 = vmatpush.bf16.msra.mxu0 0
  %9535 = vmatpush.bf16.msra.mxu0 0
  %9536 = vmatpush.bf16.msra.mxu0 %v9434
  %9537 = vmatmul.bf16.gmra.mxu0 %v9413
  %v9538 = vpop.f32.mrf.mxu0
  %v9539 = vadd.f32 0.0, %v9538
  %v9540 = vpop.f32.mrf.mxu0
  %9541 = vdwg.mxu0
  %9542 = vmatpush.bf16.msra.mxu0 0
  %9543 = vmatpush.bf16.msra.mxu0 0
  %9544 = vmatpush.bf16.msra.mxu0 0
  %9545 = vmatpush.bf16.msra.mxu0 0
  %9546 = vmatpush.bf16.msra.mxu0 0
  %9547 = vmatpush.bf16.msra.mxu0 0
  %9548 = vmatpush.bf16.msra.mxu0 0
  %9549 = vmatpush.bf16.msra.mxu0 %v9437
  %9550 = vmatmul.bf16.gmra.mxu0 %v9413
  %v9551 = vpop.f32.mrf.mxu0
  %v9552 = vadd.f32 0.0, %v9551
  %v9553 = vpop.f32.mrf.mxu0
  %9554 = vdwg.mxu0
  %9555 = vmatpush.bf16.msra.mxu0 0
  %9556 = vmatpush.bf16.msra.mxu0 0
  %9557 = vmatpush.bf16.msra.mxu0 0
  %9558 = vmatpush.bf16.msra.mxu0 0
  %9559 = vmatpush.bf16.msra.mxu0 0
  %9560 = vmatpush.bf16.msra.mxu0 0
  %9561 = vmatpush.bf16.msra.mxu0 0
  %9562 = vmatpush.bf16.msra.mxu0 %v9440
  %9563 = vmatmul.bf16.gmra.mxu0 %v9413
  %v9564 = vpop.f32.mrf.mxu0
  %v9565 = vadd.f32 0.0, %v9564
  %v9566 = vpop.f32.mrf.mxu0
  %9567 = vdwg.mxu0
  %9568 = vmatpush.bf16.msra.mxu0 0
  %9569 = vmatpush.bf16.msra.mxu0 0
  %9570 = vmatpush.bf16.msra.mxu0 0
  %9571 = vmatpush.bf16.msra.mxu0 0
  %9572 = vmatpush.bf16.msra.mxu0 0
  %9573 = vmatpush.bf16.msra.mxu0 0
  %9574 = vmatpush.bf16.msra.mxu0 0
  %9575 = vmatpush.bf16.msra.mxu0 %v9443
  %9576 = vmatmul.bf16.gmra.mxu0 %v9413
  %v9577 = vpop.f32.mrf.mxu0
  %v9578 = vadd.f32 0.0, %v9577
  %v9579 = vpop.f32.mrf.mxu0
  %9580 = vdwg.mxu0
  %9581 = vmatpush.bf16.msra.mxu0 0
  %9582 = vmatpush.bf16.msra.mxu0 0
  %9583 = vmatpush.bf16.msra.mxu0 0
  %9584 = vmatpush.bf16.msra.mxu0 0
  %9585 = vmatpush.bf16.msra.mxu0 0
  %9586 = vmatpush.bf16.msra.mxu0 0
  %9587 = vmatpush.bf16.msra.mxu0 0
  %9588 = vmatpush.bf16.msra.mxu0 %v9446
  %9589 = vmatmul.bf16.gmra.mxu0 %v9413
  %v9590 = vpop.f32.mrf.mxu0
  %v9591 = vadd.f32 0.0, %v9590
  %v9592 = vpop.f32.mrf.mxu0
  %9593 = vdwg.mxu0
  %9594 = vmatpush.bf16.msra.mxu0 0
  %9595 = vmatpush.bf16.msra.mxu0 0
  %9596 = vmatpush.bf16.msra.mxu0 0
  %9597 = vmatpush.bf16.msra.mxu0 0
  %9598 = vmatpush.bf16.msra.mxu0 0
  %9599 = vmatpush.bf16.msra.mxu0 0
  %9600 = vmatpush.bf16.msra.mxu0 0
  %9601 = vmatpush.bf16.msra.mxu0 %v9449
  %9602 = vmatmul.bf16.gmra.mxu0 %v9413
  %v9603 = vpop.f32.mrf.mxu0
  %v9604 = vadd.f32 0.0, %v9603
  %v9605 = vpop.f32.mrf.mxu0
  %9606 = vdwg.mxu0
  %v9619 = vrot.slane %v9474, 6
  %v9620 = vrot.slane %v9487, 4
  %v9621 = vrot.slane %v9500, 2
  %v9622 = vrot.slane %v9526, 6
  %v9623 = vrot.slane %v9539, 4
  %v9624 = vrot.slane %v9552, 2
  %v9625 = vrot.slane %v9578, 6
  %v9626 = vrot.slane %v9591, 4
  %v9627 = vrot.slane %v9604, 2
  %v9628 = vsel %vm1250, %v9461, %v9619
  %v9629 = vsel %vm1252, %v9620, %v9621
  %v9630 = vsel %vm1254, %v9628, %v9629
  %v9631 = vsel %vm1250, %v9513, %v9622
  %v9632 = vsel %vm1252, %v9623, %v9624
  %v9633 = vsel %vm1254, %v9631, %v9632
  %v9634 = vsel %vm1250, %v9565, %v9625
  %v9635 = vsel %vm1252, %v9626, %v9627
  %v9636 = vsel %vm1254, %v9634, %v9635
  %v9640 = vadd.f32 %v9367, %v9630
  %v9641 = vadd.f32 %v9368, %v9633
  %v9642 = vadd.f32 %v9369, %v9636
  %9643 = vst [vmem:[#allocation3] sm:$0xff] %v9640
  %9644 = vst [vmem:[#allocation3 + $0x8] sm:$0xff] %v9641
  %9645 = vst.msk [vmem:[#allocation3 + $0x10] sm:$0xff] %vm1274, %v9642
  %v9646 = vld [vmem:[#allocation3] sm:$0xff]
  %v9647 = vld [vmem:[#allocation3 + $0x8] sm:$0xff]
  %v9648 = vld [vmem:[#allocation3 + $0x10] sm:$0xff]
  %s9649 = sadd.s32 %s991, 31
  %s9650 = smul.u32 %s9649, 2
  %s9651 = scalar_lea.vmem [#allocation2], %s9650
  %v9652 = vld [vmem:[%s9651] sm:$0x3]
  %v9653 = vpack.c.bf16 %v9652, %v9652
  %s9654 = scalar_lea.vmem %s10, 1488
  %v9655 = vld [vmem:[%s9654] sm:$0x77]
  %v9656 = vld [vmem:[%s9654 + $0x8] sm:$0x77]
  %v9657 = vld [vmem:[%s9654 + $0x10] sm:$0x77]
  %v9658 = vld [vmem:[%s9654 + $0x18] sm:$0x77]
  %v9659 = vld [vmem:[%s9654 + $0x20] sm:$0x77]
  %v9660 = vld [vmem:[%s9654 + $0x28] sm:$0x77]
  %v9667 = vunpack.c.l.b16 %v9655
  %v9668 = vunpack.c.h.b16 %v9655
  %v9669 = vunpack.c.l.b16 %v9656
  %v9670 = vunpack.c.h.b16 %v9656
  %v9671 = vunpack.c.l.b16 %v9657
  %v9672 = vunpack.c.h.b16 %v9657
  %v9673 = vunpack.c.l.b16 %v9658
  %v9674 = vunpack.c.h.b16 %v9658
  %v9675 = vunpack.c.l.b16 %v9659
  %v9676 = vunpack.c.h.b16 %v9659
  %v9677 = vunpack.c.l.b16 %v9660
  %v9678 = vunpack.c.h.b16 %v9660
  %v9679 = vpack.c.b16 %v9667, %v9667
  %v9680 = vpack.c.b16 %v9668, %v9668
  %v9681 = vpack.c.b16 %v9669, %v9669
  %v9682 = vpack.c.b16 %v9670, %v9670
  %v9683 = vpack.c.b16 %v9671, %v9671
  %v9684 = vpack.c.b16 %v9672, %v9672
  %v9685 = vpack.c.b16 %v9673, %v9673
  %v9686 = vpack.c.b16 %v9674, %v9674
  %v9687 = vpack.c.b16 %v9675, %v9675
  %v9688 = vpack.c.b16 %v9676, %v9676
  %v9689 = vpack.c.b16 %v9677, %v9677
  %v9690 = vpack.c.b16 %v9678, %v9678
  %v9692 = vsel %vm1032, %v9653, 0
  %v9695 = vsel %vm1036, %v9679, 0
  %v9698 = vsel %vm1036, %v9680, 0
  %v9701 = vsel %vm1036, %v9681, 0
  %v9704 = vsel %vm1036, %v9682, 0
  %v9707 = vsel %vm1036, %v9683, 0
  %v9710 = vsel %vm1036, %v9684, 0
  %v9713 = vsel %vm1036, %v9685, 0
  %v9716 = vsel %vm1036, %v9686, 0
  %v9719 = vsel %vm1036, %v9687, 0
  %v9722 = vsel %vm1036, %v9688, 0
  %v9725 = vsel %vm1036, %v9689, 0
  %v9728 = vsel %vm1036, %v9690, 0
  %9730 = vmatpush.bf16.msra.mxu0 0
  %9731 = vmatpush.bf16.msra.mxu0 0
  %9732 = vmatpush.bf16.msra.mxu0 0
  %9733 = vmatpush.bf16.msra.mxu0 0
  %9734 = vmatpush.bf16.msra.mxu0 0
  %9735 = vmatpush.bf16.msra.mxu0 0
  %9736 = vmatpush.bf16.msra.mxu0 0
  %9737 = vmatpush.bf16.msra.mxu0 %v9695
  %9738 = vmatmul.bf16.gmra.mxu0 %v9692
  %v9739 = vpop.f32.mrf.mxu0
  %v9740 = vadd.f32 0.0, %v9739
  %v9741 = vpop.f32.mrf.mxu0
  %9742 = vdwg.mxu0
  %9743 = vmatpush.bf16.msra.mxu0 0
  %9744 = vmatpush.bf16.msra.mxu0 0
  %9745 = vmatpush.bf16.msra.mxu0 0
  %9746 = vmatpush.bf16.msra.mxu0 0
  %9747 = vmatpush.bf16.msra.mxu0 0
  %9748 = vmatpush.bf16.msra.mxu0 0
  %9749 = vmatpush.bf16.msra.mxu0 0
  %9750 = vmatpush.bf16.msra.mxu0 %v9698
  %9751 = vmatmul.bf16.gmra.mxu0 %v9692
  %v9752 = vpop.f32.mrf.mxu0
  %v9753 = vadd.f32 0.0, %v9752
  %v9754 = vpop.f32.mrf.mxu0
  %9755 = vdwg.mxu0
  %9756 = vmatpush.bf16.msra.mxu0 0
  %9757 = vmatpush.bf16.msra.mxu0 0
  %9758 = vmatpush.bf16.msra.mxu0 0
  %9759 = vmatpush.bf16.msra.mxu0 0
  %9760 = vmatpush.bf16.msra.mxu0 0
  %9761 = vmatpush.bf16.msra.mxu0 0
  %9762 = vmatpush.bf16.msra.mxu0 0
  %9763 = vmatpush.bf16.msra.mxu0 %v9701
  %9764 = vmatmul.bf16.gmra.mxu0 %v9692
  %v9765 = vpop.f32.mrf.mxu0
  %v9766 = vadd.f32 0.0, %v9765
  %v9767 = vpop.f32.mrf.mxu0
  %9768 = vdwg.mxu0
  %9769 = vmatpush.bf16.msra.mxu0 0
  %9770 = vmatpush.bf16.msra.mxu0 0
  %9771 = vmatpush.bf16.msra.mxu0 0
  %9772 = vmatpush.bf16.msra.mxu0 0
  %9773 = vmatpush.bf16.msra.mxu0 0
  %9774 = vmatpush.bf16.msra.mxu0 0
  %9775 = vmatpush.bf16.msra.mxu0 0
  %9776 = vmatpush.bf16.msra.mxu0 %v9704
  %9777 = vmatmul.bf16.gmra.mxu0 %v9692
  %v9778 = vpop.f32.mrf.mxu0
  %v9779 = vadd.f32 0.0, %v9778
  %v9780 = vpop.f32.mrf.mxu0
  %9781 = vdwg.mxu0
  %9782 = vmatpush.bf16.msra.mxu0 0
  %9783 = vmatpush.bf16.msra.mxu0 0
  %9784 = vmatpush.bf16.msra.mxu0 0
  %9785 = vmatpush.bf16.msra.mxu0 0
  %9786 = vmatpush.bf16.msra.mxu0 0
  %9787 = vmatpush.bf16.msra.mxu0 0
  %9788 = vmatpush.bf16.msra.mxu0 0
  %9789 = vmatpush.bf16.msra.mxu0 %v9707
  %9790 = vmatmul.bf16.gmra.mxu0 %v9692
  %v9791 = vpop.f32.mrf.mxu0
  %v9792 = vadd.f32 0.0, %v9791
  %v9793 = vpop.f32.mrf.mxu0
  %9794 = vdwg.mxu0
  %9795 = vmatpush.bf16.msra.mxu0 0
  %9796 = vmatpush.bf16.msra.mxu0 0
  %9797 = vmatpush.bf16.msra.mxu0 0
  %9798 = vmatpush.bf16.msra.mxu0 0
  %9799 = vmatpush.bf16.msra.mxu0 0
  %9800 = vmatpush.bf16.msra.mxu0 0
  %9801 = vmatpush.bf16.msra.mxu0 0
  %9802 = vmatpush.bf16.msra.mxu0 %v9710
  %9803 = vmatmul.bf16.gmra.mxu0 %v9692
  %v9804 = vpop.f32.mrf.mxu0
  %v9805 = vadd.f32 0.0, %v9804
  %v9806 = vpop.f32.mrf.mxu0
  %9807 = vdwg.mxu0
  %9808 = vmatpush.bf16.msra.mxu0 0
  %9809 = vmatpush.bf16.msra.mxu0 0
  %9810 = vmatpush.bf16.msra.mxu0 0
  %9811 = vmatpush.bf16.msra.mxu0 0
  %9812 = vmatpush.bf16.msra.mxu0 0
  %9813 = vmatpush.bf16.msra.mxu0 0
  %9814 = vmatpush.bf16.msra.mxu0 0
  %9815 = vmatpush.bf16.msra.mxu0 %v9713
  %9816 = vmatmul.bf16.gmra.mxu0 %v9692
  %v9817 = vpop.f32.mrf.mxu0
  %v9818 = vadd.f32 0.0, %v9817
  %v9819 = vpop.f32.mrf.mxu0
  %9820 = vdwg.mxu0
  %9821 = vmatpush.bf16.msra.mxu0 0
  %9822 = vmatpush.bf16.msra.mxu0 0
  %9823 = vmatpush.bf16.msra.mxu0 0
  %9824 = vmatpush.bf16.msra.mxu0 0
  %9825 = vmatpush.bf16.msra.mxu0 0
  %9826 = vmatpush.bf16.msra.mxu0 0
  %9827 = vmatpush.bf16.msra.mxu0 0
  %9828 = vmatpush.bf16.msra.mxu0 %v9716
  %9829 = vmatmul.bf16.gmra.mxu0 %v9692
  %v9830 = vpop.f32.mrf.mxu0
  %v9831 = vadd.f32 0.0, %v9830
  %v9832 = vpop.f32.mrf.mxu0
  %9833 = vdwg.mxu0
  %9834 = vmatpush.bf16.msra.mxu0 0
  %9835 = vmatpush.bf16.msra.mxu0 0
  %9836 = vmatpush.bf16.msra.mxu0 0
  %9837 = vmatpush.bf16.msra.mxu0 0
  %9838 = vmatpush.bf16.msra.mxu0 0
  %9839 = vmatpush.bf16.msra.mxu0 0
  %9840 = vmatpush.bf16.msra.mxu0 0
  %9841 = vmatpush.bf16.msra.mxu0 %v9719
  %9842 = vmatmul.bf16.gmra.mxu0 %v9692
  %v9843 = vpop.f32.mrf.mxu0
  %v9844 = vadd.f32 0.0, %v9843
  %v9845 = vpop.f32.mrf.mxu0
  %9846 = vdwg.mxu0
  %9847 = vmatpush.bf16.msra.mxu0 0
  %9848 = vmatpush.bf16.msra.mxu0 0
  %9849 = vmatpush.bf16.msra.mxu0 0
  %9850 = vmatpush.bf16.msra.mxu0 0
  %9851 = vmatpush.bf16.msra.mxu0 0
  %9852 = vmatpush.bf16.msra.mxu0 0
  %9853 = vmatpush.bf16.msra.mxu0 0
  %9854 = vmatpush.bf16.msra.mxu0 %v9722
  %9855 = vmatmul.bf16.gmra.mxu0 %v9692
  %v9856 = vpop.f32.mrf.mxu0
  %v9857 = vadd.f32 0.0, %v9856
  %v9858 = vpop.f32.mrf.mxu0
  %9859 = vdwg.mxu0
  %9860 = vmatpush.bf16.msra.mxu0 0
  %9861 = vmatpush.bf16.msra.mxu0 0
  %9862 = vmatpush.bf16.msra.mxu0 0
  %9863 = vmatpush.bf16.msra.mxu0 0
  %9864 = vmatpush.bf16.msra.mxu0 0
  %9865 = vmatpush.bf16.msra.mxu0 0
  %9866 = vmatpush.bf16.msra.mxu0 0
  %9867 = vmatpush.bf16.msra.mxu0 %v9725
  %9868 = vmatmul.bf16.gmra.mxu0 %v9692
  %v9869 = vpop.f32.mrf.mxu0
  %v9870 = vadd.f32 0.0, %v9869
  %v9871 = vpop.f32.mrf.mxu0
  %9872 = vdwg.mxu0
  %9873 = vmatpush.bf16.msra.mxu0 0
  %9874 = vmatpush.bf16.msra.mxu0 0
  %9875 = vmatpush.bf16.msra.mxu0 0
  %9876 = vmatpush.bf16.msra.mxu0 0
  %9877 = vmatpush.bf16.msra.mxu0 0
  %9878 = vmatpush.bf16.msra.mxu0 0
  %9879 = vmatpush.bf16.msra.mxu0 0
  %9880 = vmatpush.bf16.msra.mxu0 %v9728
  %9881 = vmatmul.bf16.gmra.mxu0 %v9692
  %v9882 = vpop.f32.mrf.mxu0
  %v9883 = vadd.f32 0.0, %v9882
  %v9884 = vpop.f32.mrf.mxu0
  %9885 = vdwg.mxu0
  %v9898 = vrot.slane %v9753, 6
  %v9899 = vrot.slane %v9766, 4
  %v9900 = vrot.slane %v9779, 2
  %v9901 = vrot.slane %v9805, 6
  %v9902 = vrot.slane %v9818, 4
  %v9903 = vrot.slane %v9831, 2
  %v9904 = vrot.slane %v9857, 6
  %v9905 = vrot.slane %v9870, 4
  %v9906 = vrot.slane %v9883, 2
  %v9907 = vsel %vm1250, %v9740, %v9898
  %v9908 = vsel %vm1252, %v9899, %v9900
  %v9909 = vsel %vm1254, %v9907, %v9908
  %v9910 = vsel %vm1250, %v9792, %v9901
  %v9911 = vsel %vm1252, %v9902, %v9903
  %v9912 = vsel %vm1254, %v9910, %v9911
  %v9913 = vsel %vm1250, %v9844, %v9904
  %v9914 = vsel %vm1252, %v9905, %v9906
  %v9915 = vsel %vm1254, %v9913, %v9914
  %v9919 = vadd.f32 %v9646, %v9909
  %v9920 = vadd.f32 %v9647, %v9912
  %v9921 = vadd.f32 %v9648, %v9915
  %9922 = vst [vmem:[#allocation3] sm:$0xff] %v9919
  %9923 = vst [vmem:[#allocation3 + $0x8] sm:$0xff] %v9920
  %9924 = vst.msk [vmem:[#allocation3 + $0x10] sm:$0xff] %vm1274, %v9921
  // Predicated region
  $region70: #{tpu_custom_call.1} parent=0 // pred_check
    %p9925 = pneg %p56
  $region71: #{tpu_custom_call.1} parent=0 // pred_check_branch
    %9927 = sbr.rel (%p9925) target = $region73
  $region72: #{tpu_custom_call.1} parent=0 // pred_region
    %v9928 = vld [vmem:[#allocation3] sm:$0xff]
    %v9929 = vld [vmem:[#allocation3 + $0x8] sm:$0xff]
    %v9930 = vld [vmem:[#allocation3 + $0x10] sm:$0xff]
    %v9931 = vld [vmem:[%s11] sm:$0xff]
    %v9932 = vld [vmem:[%s11 + $0x8] sm:$0xf]
    %v9935 = vperm.slane %v9931, 0
    %v9936 = vperm.slane %v9931, 1
    %v9937 = vperm.slane %v9931, 2
    %v9938 = vperm.slane %v9931, 3
    %v9939 = vperm.slane %v9931, 4
    %v9940 = vperm.slane %v9931, 5
    %v9941 = vperm.slane %v9931, 6
    %v9942 = vperm.slane %v9931, 7
    %v9943 = vperm.slane %v9932, 0
    %v9944 = vperm.slane %v9932, 1
    %v9945 = vperm.slane %v9932, 2
    %v9946 = vperm.slane %v9932, 3
    %v9947 = vrot.slane %v9936, 6
    %v9948 = vrot.slane %v9937, 4
    %v9949 = vrot.slane %v9938, 2
    %v9950 = vrot.slane %v9940, 6
    %v9951 = vrot.slane %v9941, 4
    %v9952 = vrot.slane %v9942, 2
    %v9953 = vrot.slane %v9944, 6
    %v9954 = vrot.slane %v9945, 4
    %v9955 = vrot.slane %v9946, 2
    %v9956 = vsel %vm1250, %v9935, %v9947
    %v9957 = vsel %vm1252, %v9948, %v9949
    %v9958 = vsel %vm1254, %v9956, %v9957
    %v9959 = vsel %vm1250, %v9939, %v9950
    %v9960 = vsel %vm1252, %v9951, %v9952
    %v9961 = vsel %vm1254, %v9959, %v9960
    %v9962 = vsel %vm1250, %v9943, %v9953
    %v9963 = vsel %vm1252, %v9954, %v9955
    %v9964 = vsel %vm1254, %v9962, %v9963
    %v9968 = vadd.f32 %v9928, %v9958
    %v9969 = vadd.f32 %v9929, %v9961
    %v9970 = vadd.f32 %v9930, %v9964
    %v9971 = vmax.f32 %v9968, 0.0
    %v9972 = vmax.f32 %v9969, 0.0
    %v9973 = vmax.f32 %v9970, 0.0
    %v9974 = vld [vmem:[%s12] sm:$0xff]
    %v9975 = vld [vmem:[%s12 + $0x8] sm:$0xff]
    %v9976 = vld [vmem:[%s12 + $0x10] sm:$0xff]
    %v9977 = vld [vmem:[%s12 + $0x18] sm:$0xff]
    %v9978 = vld [vmem:[%s12 + $0x20] sm:$0xff]
    %v9979 = vld [vmem:[%s12 + $0x28] sm:$0xff]
    %v9980 = vld [vmem:[%s12 + $0x30] sm:$0xff]
    %v9981 = vld [vmem:[%s12 + $0x38] sm:$0xff]
    %v9982 = vld [vmem:[%s12 + $0x40] sm:$0xff]
    %v9983 = vld [vmem:[%s12 + $0x48] sm:$0xff]
    %v9984 = vld [vmem:[%s12 + $0x50] sm:$0xff]
    %v9985 = vld [vmem:[%s12 + $0x58] sm:$0xff]
    %v9986 = vld [vmem:[%s12 + $0x60] sm:$0xff]
    %v9987 = vld [vmem:[%s12 + $0x68] sm:$0xff]
    %v9988 = vld [vmem:[%s12 + $0x70] sm:$0xff]
    %v9989 = vld [vmem:[%s12 + $0x78] sm:$0xff]
    %v9990 = vld [vmem:[%s12 + $0x80] sm:$0xff]
    %v9991 = vld [vmem:[%s12 + $0x88] sm:$0xff]
    %v9992 = vld [vmem:[%s12 + $0x90] sm:$0xff]
    %v9993 = vld [vmem:[%s12 + $0x98] sm:$0xff]
    %v9994 = vld [vmem:[%s12 + $0xa0] sm:$0xff]
    %v9995 = vld [vmem:[%s12 + $0xa8] sm:$0xff]
    %v9996 = vld [vmem:[%s12 + $0xb0] sm:$0xff]
    %v9997 = vld [vmem:[%s12 + $0xb8] sm:$0xff]
    %v9998 = vld [vmem:[%s12 + $0xc0] sm:$0xff]
    %v9999 = vld [vmem:[%s12 + $0xc8] sm:$0xff]
    %v10000 = vld [vmem:[%s12 + $0xd0] sm:$0xff]
    %v10001 = vld [vmem:[%s12 + $0xd8] sm:$0xff]
    %v10002 = vld [vmem:[%s12 + $0xe0] sm:$0xff]
    %v10003 = vld [vmem:[%s12 + $0xe8] sm:$0xff]
    %v10004 = vld [vmem:[%s12 + $0xf0] sm:$0xff]
    %v10005 = vld [vmem:[%s12 + $0xf8] sm:$0xff]
    %v10006 = vld [vmem:[%s12 + $0x100] sm:$0xff]
    %v10007 = vld [vmem:[%s12 + $0x108] sm:$0xff]
    %v10008 = vld [vmem:[%s12 + $0x110] sm:$0xff]
    %v10009 = vld [vmem:[%s12 + $0x118] sm:$0xff]
    %v10010 = vld [vmem:[%s12 + $0x120] sm:$0xff]
    %v10011 = vld [vmem:[%s12 + $0x128] sm:$0xff]
    %v10012 = vld [vmem:[%s12 + $0x130] sm:$0xff]
    %v10013 = vld [vmem:[%s12 + $0x138] sm:$0xff]
    %v10014 = vld [vmem:[%s12 + $0x140] sm:$0xff]
    %v10015 = vld [vmem:[%s12 + $0x148] sm:$0xff]
    %v10016 = vld [vmem:[%s12 + $0x150] sm:$0xff]
    %v10017 = vld [vmem:[%s12 + $0x158] sm:$0xff]
    %v10018 = vld [vmem:[%s12 + $0x160] sm:$0xff]
    %v10019 = vld [vmem:[%s12 + $0x168] sm:$0xff]
    %v10020 = vld [vmem:[%s12 + $0x170] sm:$0xff]
    %v10021 = vld [vmem:[%s12 + $0x178] sm:$0xff]
    %v10022 = vld [vmem:[%s12 + $0x180] sm:$0xff]
    %v10023 = vld [vmem:[%s12 + $0x188] sm:$0xff]
    %v10024 = vld [vmem:[%s12 + $0x190] sm:$0xff]
    %v10025 = vld [vmem:[%s12 + $0x198] sm:$0xff]
    %v10026 = vld [vmem:[%s12 + $0x1a0] sm:$0xff]
    %v10027 = vld [vmem:[%s12 + $0x1a8] sm:$0xff]
    %v10028 = vld [vmem:[%s12 + $0x1b0] sm:$0xff]
    %v10029 = vld [vmem:[%s12 + $0x1b8] sm:$0xff]
    %v10030 = vld [vmem:[%s12 + $0x1c0] sm:$0xff]
    %v10031 = vld [vmem:[%s12 + $0x1c8] sm:$0xff]
    %v10032 = vld [vmem:[%s12 + $0x1d0] sm:$0xff]
    %v10033 = vld [vmem:[%s12 + $0x1d8] sm:$0xff]
    %v10034 = vld [vmem:[%s12 + $0x1e0] sm:$0xff]
    %v10035 = vld [vmem:[%s12 + $0x1e8] sm:$0xff]
    %v10036 = vld [vmem:[%s12 + $0x1f0] sm:$0xff]
    %v10037 = vld [vmem:[%s12 + $0x1f8] sm:$0xff]
    %v10038 = vld [vmem:[%s12 + $0x200] sm:$0xff]
    %v10039 = vld [vmem:[%s12 + $0x208] sm:$0xff]
    %v10040 = vld [vmem:[%s12 + $0x210] sm:$0xff]
    %v10041 = vld [vmem:[%s12 + $0x218] sm:$0xff]
    %v10042 = vld [vmem:[%s12 + $0x220] sm:$0xff]
    %v10043 = vld [vmem:[%s12 + $0x228] sm:$0xff]
    %v10044 = vld [vmem:[%s12 + $0x230] sm:$0xff]
    %v10045 = vld [vmem:[%s12 + $0x238] sm:$0xff]
    %v10046 = vld [vmem:[%s12 + $0x240] sm:$0xff]
    %v10047 = vld [vmem:[%s12 + $0x248] sm:$0xff]
    %v10048 = vld [vmem:[%s12 + $0x250] sm:$0xff]
    %v10049 = vld [vmem:[%s12 + $0x258] sm:$0xff]
    %v10050 = vld [vmem:[%s12 + $0x260] sm:$0xff]
    %v10051 = vld [vmem:[%s12 + $0x268] sm:$0xff]
    %v10052 = vld [vmem:[%s12 + $0x270] sm:$0xff]
    %v10053 = vld [vmem:[%s12 + $0x278] sm:$0xff]
    %v10054 = vld [vmem:[%s12 + $0x280] sm:$0xff]
    %v10055 = vld [vmem:[%s12 + $0x288] sm:$0xff]
    %v10056 = vld [vmem:[%s12 + $0x290] sm:$0xff]
    %v10057 = vld [vmem:[%s12 + $0x298] sm:$0xff]
    %v10058 = vld [vmem:[%s12 + $0x2a0] sm:$0xff]
    %v10059 = vld [vmem:[%s12 + $0x2a8] sm:$0xff]
    %v10060 = vld [vmem:[%s12 + $0x2b0] sm:$0xff]
    %v10061 = vld [vmem:[%s12 + $0x2b8] sm:$0xff]
    %v10062 = vld [vmem:[%s12 + $0x2c0] sm:$0xff]
    %v10063 = vld [vmem:[%s12 + $0x2c8] sm:$0xff]
    %v10064 = vld [vmem:[%s12 + $0x2d0] sm:$0xff]
    %v10065 = vld [vmem:[%s12 + $0x2d8] sm:$0xff]
    %v10066 = vld [vmem:[%s12 + $0x2e0] sm:$0xff]
    %v10067 = vld [vmem:[%s12 + $0x2e8] sm:$0xff]
    %v10068 = vld [vmem:[%s12 + $0x2f0] sm:$0xff]
    %v10069 = vld [vmem:[%s12 + $0x2f8] sm:$0xff]
    %v10070 = vld [vmem:[%s12 + $0x300] sm:$0xff]
    %v10071 = vld [vmem:[%s12 + $0x308] sm:$0xff]
    %v10072 = vld [vmem:[%s12 + $0x310] sm:$0xff]
    %v10073 = vld [vmem:[%s12 + $0x318] sm:$0xff]
    %v10074 = vld [vmem:[%s12 + $0x320] sm:$0xff]
    %v10075 = vld [vmem:[%s12 + $0x328] sm:$0xff]
    %v10076 = vld [vmem:[%s12 + $0x330] sm:$0xff]
    %v10077 = vld [vmem:[%s12 + $0x338] sm:$0xff]
    %v10078 = vld [vmem:[%s12 + $0x340] sm:$0xff]
    %v10079 = vld [vmem:[%s12 + $0x348] sm:$0xff]
    %v10080 = vld [vmem:[%s12 + $0x350] sm:$0xff]
    %v10081 = vld [vmem:[%s12 + $0x358] sm:$0xff]
    %v10082 = vld [vmem:[%s12 + $0x360] sm:$0xff]
    %v10083 = vld [vmem:[%s12 + $0x368] sm:$0xff]
    %v10084 = vld [vmem:[%s12 + $0x370] sm:$0xff]
    %v10085 = vld [vmem:[%s12 + $0x378] sm:$0xff]
    %v10086 = vld [vmem:[%s12 + $0x380] sm:$0xff]
    %v10087 = vld [vmem:[%s12 + $0x388] sm:$0xff]
    %v10088 = vld [vmem:[%s12 + $0x390] sm:$0xff]
    %v10089 = vld [vmem:[%s12 + $0x398] sm:$0xff]
    %v10090 = vld [vmem:[%s12 + $0x3a0] sm:$0xff]
    %v10091 = vld [vmem:[%s12 + $0x3a8] sm:$0xff]
    %v10092 = vld [vmem:[%s12 + $0x3b0] sm:$0xff]
    %v10093 = vld [vmem:[%s12 + $0x3b8] sm:$0xff]
    %v10094 = vld [vmem:[%s12 + $0x3c0] sm:$0xff]
    %v10095 = vld [vmem:[%s12 + $0x3c8] sm:$0xff]
    %v10096 = vld [vmem:[%s12 + $0x3d0] sm:$0xff]
    %v10097 = vld [vmem:[%s12 + $0x3d8] sm:$0xff]
    %v10098 = vld [vmem:[%s12 + $0x3e0] sm:$0xff]
    %v10099 = vld [vmem:[%s12 + $0x3e8] sm:$0xff]
    %v10100 = vld [vmem:[%s12 + $0x3f0] sm:$0xff]
    %v10101 = vld [vmem:[%s12 + $0x3f8] sm:$0xff]
    %v10102 = vld [vmem:[%s12 + $0x400] sm:$0xff]
    %v10103 = vld [vmem:[%s12 + $0x408] sm:$0xff]
    %v10104 = vld [vmem:[%s12 + $0x410] sm:$0xff]
    %v10105 = vld [vmem:[%s12 + $0x418] sm:$0xff]
    %v10106 = vld [vmem:[%s12 + $0x420] sm:$0xff]
    %v10107 = vld [vmem:[%s12 + $0x428] sm:$0xff]
    %v10108 = vld [vmem:[%s12 + $0x430] sm:$0xff]
    %v10109 = vld [vmem:[%s12 + $0x438] sm:$0xff]
    %v10110 = vld [vmem:[%s12 + $0x440] sm:$0xff]
    %v10111 = vld [vmem:[%s12 + $0x448] sm:$0xff]
    %v10112 = vld [vmem:[%s12 + $0x450] sm:$0xff]
    %v10113 = vld [vmem:[%s12 + $0x458] sm:$0xff]
    %v10114 = vld [vmem:[%s12 + $0x460] sm:$0xff]
    %v10115 = vld [vmem:[%s12 + $0x468] sm:$0xff]
    %v10116 = vld [vmem:[%s12 + $0x470] sm:$0xff]
    %v10117 = vld [vmem:[%s12 + $0x478] sm:$0xff]
    %v10118 = vld [vmem:[%s12 + $0x480] sm:$0xff]
    %v10119 = vld [vmem:[%s12 + $0x488] sm:$0xff]
    %v10120 = vld [vmem:[%s12 + $0x490] sm:$0xff]
    %v10121 = vld [vmem:[%s12 + $0x498] sm:$0xff]
    %v10122 = vld [vmem:[%s12 + $0x4a0] sm:$0xff]
    %v10123 = vld [vmem:[%s12 + $0x4a8] sm:$0xff]
    %v10124 = vld [vmem:[%s12 + $0x4b0] sm:$0xff]
    %v10125 = vld [vmem:[%s12 + $0x4b8] sm:$0xff]
    %v10126 = vld [vmem:[%s12 + $0x4c0] sm:$0xff]
    %v10127 = vld [vmem:[%s12 + $0x4c8] sm:$0xff]
    %v10128 = vld [vmem:[%s12 + $0x4d0] sm:$0xff]
    %v10129 = vld [vmem:[%s12 + $0x4d8] sm:$0xff]
    %v10130 = vld [vmem:[%s12 + $0x4e0] sm:$0xff]
    %v10131 = vld [vmem:[%s12 + $0x4e8] sm:$0xff]
    %v10132 = vld [vmem:[%s12 + $0x4f0] sm:$0xff]
    %v10133 = vld [vmem:[%s12 + $0x4f8] sm:$0xff]
    %v10134 = vld [vmem:[%s12 + $0x500] sm:$0xff]
    %v10135 = vld [vmem:[%s12 + $0x508] sm:$0xff]
    %v10136 = vld [vmem:[%s12 + $0x510] sm:$0xff]
    %v10137 = vld [vmem:[%s12 + $0x518] sm:$0xff]
    %v10138 = vld [vmem:[%s12 + $0x520] sm:$0xff]
    %v10139 = vld [vmem:[%s12 + $0x528] sm:$0xff]
    %v10140 = vld [vmem:[%s12 + $0x530] sm:$0xff]
    %v10141 = vld [vmem:[%s12 + $0x538] sm:$0xff]
    %v10142 = vld [vmem:[%s12 + $0x540] sm:$0xff]
    %v10143 = vld [vmem:[%s12 + $0x548] sm:$0xff]
    %v10144 = vld [vmem:[%s12 + $0x550] sm:$0xff]
    %v10145 = vld [vmem:[%s12 + $0x558] sm:$0xff]
    %v10146 = vld [vmem:[%s12 + $0x560] sm:$0xff]
    %v10147 = vld [vmem:[%s12 + $0x568] sm:$0xff]
    %v10148 = vld [vmem:[%s12 + $0x570] sm:$0xff]
    %v10149 = vld [vmem:[%s12 + $0x578] sm:$0xff]
    %v10150 = vld [vmem:[%s12 + $0x580] sm:$0xff]
    %v10151 = vld [vmem:[%s12 + $0x588] sm:$0xff]
    %v10152 = vld [vmem:[%s12 + $0x590] sm:$0xff]
    %v10153 = vld [vmem:[%s12 + $0x598] sm:$0xff]
    %v10154 = vld [vmem:[%s12 + $0x5a0] sm:$0xff]
    %v10155 = vld [vmem:[%s12 + $0x5a8] sm:$0xff]
    %v10156 = vld [vmem:[%s12 + $0x5b0] sm:$0xff]
    %v10157 = vld [vmem:[%s12 + $0x5b8] sm:$0xff]
    %v10158 = vld [vmem:[%s12 + $0x5c0] sm:$0xff]
    %v10159 = vld [vmem:[%s12 + $0x5c8] sm:$0xff]
    %v10160 = vld [vmem:[%s12 + $0x5d0] sm:$0xff]
    %v10161 = vld [vmem:[%s12 + $0x5d8] sm:$0xf]
    %v10162 = vld [vmem:[%s13] sm:$0x1]
    %v10164 = vperm.slane %v10162, 0
    %10169 = vst [vmem:[#allocation1] ss:$4 sm:$0xff] %v9971
    %s10170 = scalar_lea.vmem [#allocation1], 32
    %10171 = vst [vmem:[%s10170] ss:$4 sm:$0xff] %v9972
    %v10172 = vld.sshfl [vmem:[#allocation1] sm:$0xff pattern:$0x73625140]
    %v10173 = vld.sshfl [vmem:[#allocation1 + $0x8] sm:$0xff pattern:$0x73625140]
    %v10174 = vld.sshfl [vmem:[#allocation1 + $0x10] sm:$0xff pattern:$0x73625140]
    %v10175 = vld.sshfl [vmem:[#allocation1 + $0x18] sm:$0xff pattern:$0x73625140]
    %v10176 = vld.sshfl [vmem:[#allocation1 + $0x20] sm:$0xff pattern:$0x73625140]
    %v10177 = vld.sshfl [vmem:[#allocation1 + $0x28] sm:$0xff pattern:$0x73625140]
    %v10178 = vld.sshfl [vmem:[#allocation1 + $0x30] sm:$0xff pattern:$0x73625140]
    %v10179 = vld.sshfl [vmem:[#allocation1 + $0x38] sm:$0xff pattern:$0x73625140]
    %10180 = vst [vmem:[#allocation1] ss:$4 sm:$0xff] %v9973
    %v10181 = vld.sshfl [vmem:[#allocation1] sm:$0xff pattern:$0x73625140]
    %v10182 = vld.sshfl [vmem:[#allocation1 + $0x8] sm:$0xff pattern:$0x73625140]
    %v10183 = vld.sshfl [vmem:[#allocation1 + $0x10] sm:$0xff pattern:$0x73625140]
    %v10184 = vld.sshfl [vmem:[#allocation1 + $0x18] sm:$0xff pattern:$0x73625140]
    %vm10196 = vcmask 752640
    %v10197 = vsel %vm10196, %v10184, 0
    %v10200 = vsel %vm1254, %v10161, 0
    %10202 = vmatpush.msra.mxu0 %v9989
    %10203 = vmatpush.msra.mxu0 %v9988
    %10204 = vmatpush.msra.mxu0 %v9987
    %10205 = vmatpush.msra.mxu0 %v9986
    %10206 = vmatpush.msra.mxu0 %v9985
    %10207 = vmatpush.msra.mxu0 %v9984
    %10208 = vmatpush.msra.mxu0 %v9983
    %10209 = vmatpush.msra.mxu0 %v9982
    %10210 = vmatpush.msra.mxu0 %v9981
    %10211 = vmatpush.msra.mxu0 %v9980
    %10212 = vmatpush.msra.mxu0 %v9979
    %10213 = vmatpush.msra.mxu0 %v9978
    %10214 = vmatpush.msra.mxu0 %v9977
    %10215 = vmatpush.msra.mxu0 %v9976
    %10216 = vmatpush.msra.mxu0 %v9975
    %10217 = vmatpush.msra.mxu0 %v9974
    %10218 = vmatmul.f32.gmra.mxu0 %v10172
    %v10219 = vpop.f32.mrf.mxu0
    %v10220 = vadd.f32 %v10164, %v10219
    %10221 = vdwg.mxu0
    %10222 = vmatpush.msra.mxu0 %v10005
    %10223 = vmatpush.msra.mxu0 %v10004
    %10224 = vmatpush.msra.mxu0 %v10003
    %10225 = vmatpush.msra.mxu0 %v10002
    %10226 = vmatpush.msra.mxu0 %v10001
    %10227 = vmatpush.msra.mxu0 %v10000
    %10228 = vmatpush.msra.mxu0 %v9999
    %10229 = vmatpush.msra.mxu0 %v9998
    %10230 = vmatpush.msra.mxu0 %v9997
    %10231 = vmatpush.msra.mxu0 %v9996
    %10232 = vmatpush.msra.mxu0 %v9995
    %10233 = vmatpush.msra.mxu0 %v9994
    %10234 = vmatpush.msra.mxu0 %v9993
    %10235 = vmatpush.msra.mxu0 %v9992
    %10236 = vmatpush.msra.mxu0 %v9991
    %10237 = vmatpush.msra.mxu0 %v9990
    %10238 = vmatmul.f32.gmra.mxu0 %v10173
    %v10239 = vpop.f32.mrf.mxu0
    %v10240 = vadd.f32 %v10220, %v10239
    %10241 = vdwg.mxu0
    %10242 = vmatpush.msra.mxu0 %v10021
    %10243 = vmatpush.msra.mxu0 %v10020
    %10244 = vmatpush.msra.mxu0 %v10019
    %10245 = vmatpush.msra.mxu0 %v10018
    %10246 = vmatpush.msra.mxu0 %v10017
    %10247 = vmatpush.msra.mxu0 %v10016
    %10248 = vmatpush.msra.mxu0 %v10015
    %10249 = vmatpush.msra.mxu0 %v10014
    %10250 = vmatpush.msra.mxu0 %v10013
    %10251 = vmatpush.msra.mxu0 %v10012
    %10252 = vmatpush.msra.mxu0 %v10011
    %10253 = vmatpush.msra.mxu0 %v10010
    %10254 = vmatpush.msra.mxu0 %v10009
    %10255 = vmatpush.msra.mxu0 %v10008
    %10256 = vmatpush.msra.mxu0 %v10007
    %10257 = vmatpush.msra.mxu0 %v10006
    %10258 = vmatmul.f32.gmra.mxu0 %v10174
    %v10259 = vpop.f32.mrf.mxu0
    %v10260 = vadd.f32 %v10240, %v10259
    %10261 = vdwg.mxu0
    %10262 = vmatpush.msra.mxu0 %v10037
    %10263 = vmatpush.msra.mxu0 %v10036
    %10264 = vmatpush.msra.mxu0 %v10035
    %10265 = vmatpush.msra.mxu0 %v10034
    %10266 = vmatpush.msra.mxu0 %v10033
    %10267 = vmatpush.msra.mxu0 %v10032
    %10268 = vmatpush.msra.mxu0 %v10031
    %10269 = vmatpush.msra.mxu0 %v10030
    %10270 = vmatpush.msra.mxu0 %v10029
    %10271 = vmatpush.msra.mxu0 %v10028
    %10272 = vmatpush.msra.mxu0 %v10027
    %10273 = vmatpush.msra.mxu0 %v10026
    %10274 = vmatpush.msra.mxu0 %v10025
    %10275 = vmatpush.msra.mxu0 %v10024
    %10276 = vmatpush.msra.mxu0 %v10023
    %10277 = vmatpush.msra.mxu0 %v10022
    %10278 = vmatmul.f32.gmra.mxu0 %v10175
    %v10279 = vpop.f32.mrf.mxu0
    %v10280 = vadd.f32 %v10260, %v10279
    %10281 = vdwg.mxu0
    %10282 = vmatpush.msra.mxu0 %v10053
    %10283 = vmatpush.msra.mxu0 %v10052
    %10284 = vmatpush.msra.mxu0 %v10051
    %10285 = vmatpush.msra.mxu0 %v10050
    %10286 = vmatpush.msra.mxu0 %v10049
    %10287 = vmatpush.msra.mxu0 %v10048
    %10288 = vmatpush.msra.mxu0 %v10047
    %10289 = vmatpush.msra.mxu0 %v10046
    %10290 = vmatpush.msra.mxu0 %v10045
    %10291 = vmatpush.msra.mxu0 %v10044
    %10292 = vmatpush.msra.mxu0 %v10043
    %10293 = vmatpush.msra.mxu0 %v10042
    %10294 = vmatpush.msra.mxu0 %v10041
    %10295 = vmatpush.msra.mxu0 %v10040
    %10296 = vmatpush.msra.mxu0 %v10039
    %10297 = vmatpush.msra.mxu0 %v10038
    %10298 = vmatmul.f32.gmra.mxu0 %v10176
    %v10299 = vpop.f32.mrf.mxu0
    %v10300 = vadd.f32 %v10280, %v10299
    %10301 = vdwg.mxu0
    %10302 = vmatpush.msra.mxu0 %v10069
    %10303 = vmatpush.msra.mxu0 %v10068
    %10304 = vmatpush.msra.mxu0 %v10067
    %10305 = vmatpush.msra.mxu0 %v10066
    %10306 = vmatpush.msra.mxu0 %v10065
    %10307 = vmatpush.msra.mxu0 %v10064
    %10308 = vmatpush.msra.mxu0 %v10063
    %10309 = vmatpush.msra.mxu0 %v10062
    %10310 = vmatpush.msra.mxu0 %v10061
    %10311 = vmatpush.msra.mxu0 %v10060
    %10312 = vmatpush.msra.mxu0 %v10059
    %10313 = vmatpush.msra.mxu0 %v10058
    %10314 = vmatpush.msra.mxu0 %v10057
    %10315 = vmatpush.msra.mxu0 %v10056
    %10316 = vmatpush.msra.mxu0 %v10055
    %10317 = vmatpush.msra.mxu0 %v10054
    %10318 = vmatmul.f32.gmra.mxu0 %v10177
    %v10319 = vpop.f32.mrf.mxu0
    %v10320 = vadd.f32 %v10300, %v10319
    %10321 = vdwg.mxu0
    %10322 = vmatpush.msra.mxu0 %v10085
    %10323 = vmatpush.msra.mxu0 %v10084
    %10324 = vmatpush.msra.mxu0 %v10083
    %10325 = vmatpush.msra.mxu0 %v10082
    %10326 = vmatpush.msra.mxu0 %v10081
    %10327 = vmatpush.msra.mxu0 %v10080
    %10328 = vmatpush.msra.mxu0 %v10079
    %10329 = vmatpush.msra.mxu0 %v10078
    %10330 = vmatpush.msra.mxu0 %v10077
    %10331 = vmatpush.msra.mxu0 %v10076
    %10332 = vmatpush.msra.mxu0 %v10075
    %10333 = vmatpush.msra.mxu0 %v10074
    %10334 = vmatpush.msra.mxu0 %v10073
    %10335 = vmatpush.msra.mxu0 %v10072
    %10336 = vmatpush.msra.mxu0 %v10071
    %10337 = vmatpush.msra.mxu0 %v10070
    %10338 = vmatmul.f32.gmra.mxu0 %v10178
    %v10339 = vpop.f32.mrf.mxu0
    %v10340 = vadd.f32 %v10320, %v10339
    %10341 = vdwg.mxu0
    %10342 = vmatpush.msra.mxu0 %v10101
    %10343 = vmatpush.msra.mxu0 %v10100
    %10344 = vmatpush.msra.mxu0 %v10099
    %10345 = vmatpush.msra.mxu0 %v10098
    %10346 = vmatpush.msra.mxu0 %v10097
    %10347 = vmatpush.msra.mxu0 %v10096
    %10348 = vmatpush.msra.mxu0 %v10095
    %10349 = vmatpush.msra.mxu0 %v10094
    %10350 = vmatpush.msra.mxu0 %v10093
    %10351 = vmatpush.msra.mxu0 %v10092
    %10352 = vmatpush.msra.mxu0 %v10091
    %10353 = vmatpush.msra.mxu0 %v10090
    %10354 = vmatpush.msra.mxu0 %v10089
    %10355 = vmatpush.msra.mxu0 %v10088
    %10356 = vmatpush.msra.mxu0 %v10087
    %10357 = vmatpush.msra.mxu0 %v10086
    %10358 = vmatmul.f32.gmra.mxu0 %v10179
    %v10359 = vpop.f32.mrf.mxu0
    %v10360 = vadd.f32 %v10340, %v10359
    %10361 = vdwg.mxu0
    %10362 = vmatpush.msra.mxu0 %v10117
    %10363 = vmatpush.msra.mxu0 %v10116
    %10364 = vmatpush.msra.mxu0 %v10115
    %10365 = vmatpush.msra.mxu0 %v10114
    %10366 = vmatpush.msra.mxu0 %v10113
    %10367 = vmatpush.msra.mxu0 %v10112
    %10368 = vmatpush.msra.mxu0 %v10111
    %10369 = vmatpush.msra.mxu0 %v10110
    %10370 = vmatpush.msra.mxu0 %v10109
    %10371 = vmatpush.msra.mxu0 %v10108
    %10372 = vmatpush.msra.mxu0 %v10107
    %10373 = vmatpush.msra.mxu0 %v10106
    %10374 = vmatpush.msra.mxu0 %v10105
    %10375 = vmatpush.msra.mxu0 %v10104
    %10376 = vmatpush.msra.mxu0 %v10103
    %10377 = vmatpush.msra.mxu0 %v10102
    %10378 = vmatmul.f32.gmra.mxu0 %v10181
    %v10379 = vpop.f32.mrf.mxu0
    %v10380 = vadd.f32 %v10360, %v10379
    %10381 = vdwg.mxu0
    %10382 = vmatpush.msra.mxu0 %v10133
    %10383 = vmatpush.msra.mxu0 %v10132
    %10384 = vmatpush.msra.mxu0 %v10131
    %10385 = vmatpush.msra.mxu0 %v10130
    %10386 = vmatpush.msra.mxu0 %v10129
    %10387 = vmatpush.msra.mxu0 %v10128
    %10388 = vmatpush.msra.mxu0 %v10127
    %10389 = vmatpush.msra.mxu0 %v10126
    %10390 = vmatpush.msra.mxu0 %v10125
    %10391 = vmatpush.msra.mxu0 %v10124
    %10392 = vmatpush.msra.mxu0 %v10123
    %10393 = vmatpush.msra.mxu0 %v10122
    %10394 = vmatpush.msra.mxu0 %v10121
    %10395 = vmatpush.msra.mxu0 %v10120
    %10396 = vmatpush.msra.mxu0 %v10119
    %10397 = vmatpush.msra.mxu0 %v10118
    %10398 = vmatmul.f32.gmra.mxu0 %v10182
    %v10399 = vpop.f32.mrf.mxu0
    %v10400 = vadd.f32 %v10380, %v10399
    %10401 = vdwg.mxu0
    %10402 = vmatpush.msra.mxu0 %v10149
    %10403 = vmatpush.msra.mxu0 %v10148
    %10404 = vmatpush.msra.mxu0 %v10147
    %10405 = vmatpush.msra.mxu0 %v10146
    %10406 = vmatpush.msra.mxu0 %v10145
    %10407 = vmatpush.msra.mxu0 %v10144
    %10408 = vmatpush.msra.mxu0 %v10143
    %10409 = vmatpush.msra.mxu0 %v10142
    %10410 = vmatpush.msra.mxu0 %v10141
    %10411 = vmatpush.msra.mxu0 %v10140
    %10412 = vmatpush.msra.mxu0 %v10139
    %10413 = vmatpush.msra.mxu0 %v10138
    %10414 = vmatpush.msra.mxu0 %v10137
    %10415 = vmatpush.msra.mxu0 %v10136
    %10416 = vmatpush.msra.mxu0 %v10135
    %10417 = vmatpush.msra.mxu0 %v10134
    %10418 = vmatmul.f32.gmra.mxu0 %v10183
    %v10419 = vpop.f32.mrf.mxu0
    %v10420 = vadd.f32 %v10400, %v10419
    %10421 = vdwg.mxu0
    %10422 = vmatpush.msra.mxu0 0.0
    %10423 = vmatpush.msra.mxu0 0.0
    %10424 = vmatpush.msra.mxu0 0.0
    %10425 = vmatpush.msra.mxu0 0.0
    %10426 = vmatpush.msra.mxu0 %v10200
    %10427 = vmatpush.msra.mxu0 %v10160
    %10428 = vmatpush.msra.mxu0 %v10159
    %10429 = vmatpush.msra.mxu0 %v10158
    %10430 = vmatpush.msra.mxu0 %v10157
    %10431 = vmatpush.msra.mxu0 %v10156
    %10432 = vmatpush.msra.mxu0 %v10155
    %10433 = vmatpush.msra.mxu0 %v10154
    %10434 = vmatpush.msra.mxu0 %v10153
    %10435 = vmatpush.msra.mxu0 %v10152
    %10436 = vmatpush.msra.mxu0 %v10151
    %10437 = vmatpush.msra.mxu0 %v10150
    %10438 = vmatmul.f32.gmra.mxu0 %v10197
    %v10439 = vpop.f32.mrf.mxu0
    %v10440 = vadd.f32 %v10420, %v10439
    %10441 = vdwg.mxu0
    %v10442 = vmax.f32 %v10440, 0.0
    %v10443 = vld [vmem:[%s14] sm:$0x1]
    %v10445 = vperm.slane %v10443, 0
    %v10447 = vmul.f32 %v10442, %v10445
    %vm10448 = vcmask 812032
    %v10449 = vsel %vm10448, %v10447, 0.0
    %10450 = vadd.xlane.f32.xlu0 %v10449
    %v10451 = vpop.xlane.xlu0 %10450
    %v10452 = vld [vmem:[#allocation4] sm:$0x1]
    %v10454 = vperm.slane %v10452, 0
    %v10456 = vadd.f32 %v10451, %v10454
    %v10457 = vand.u32 2147483647, %v10456
    %v10458 = vsub.f32 0.0, %v10457
    %v10459 = vmul.f32 %v10458, 1.442695
    %v10460 = vpow.pop %v10459
    %v10461 = vadd.f32 %v10460, 1.0
    %v10462 = vrcp.pop %v10461
    %v10463 = vmul.f32 %v10461, %v10462
    %v10464 = vsub.f32 1.0, %v10463
    %v10465 = vmul.f32 %v10462, %v10464
    %v10466 = vadd.f32 %v10462, %v10465
    %vm10467 = vweird.f32 %v10461
    %vm10468 = vweird.f32 %v10462
    %vm10469 = vmor %vm10467, %vm10468
    %v10470 = vsel %vm10469, %v10462, %v10466
    %v10471 = vand.u32 2147483647, %v10461
    %vm10472 = vcmp.eq.f32.partialorder %v10471, 8.507059e+37
    %v10473 = vand.u32 %v10461, 2147483648
    %v10474 = vor.u32 1.1754944e-38, %v10473
    %v10475 = vsel %vm10472, %v10474, %v10470
    %v10476 = vmul.f32 1.0, %v10475
    %vm10477 = vcmp.ge.f32.partialorder %v10456, 0.0
    %v10478 = vsub.f32 1.0, %v10476
    %v10479 = vsel %vm10477, %v10476, %v10478
    %vm10480 = vcmask 1024
    %10481 = vst.msk [vmem:[%s16] sm:$0x3] %vm10480, %v10479
  $region73: #{tpu_custom_call.1} parent=0 // pred_fallthru
    _
  // Predicated region
  $region74: #{tpu_custom_call.1} parent=0 // pred_check
    _
  $region75: #{tpu_custom_call.1} parent=0 // pred_check_branch
    %10483 = sbr.rel (0) target = $region77
  $region76: #{tpu_custom_call.1} parent=0 // pred_region
    _
  $region77: #{tpu_custom_call.1} parent=0 // pred_fallthru
    _
  // Predicated region
  $region78: #{tpu_custom_call.1} parent=0 // pred_check
    _
  $region79: #{tpu_custom_call.1} parent=0 // pred_check_branch
    %10485 = sbr.rel (0) target = $region81
  $region80: #{tpu_custom_call.1} parent=0 // pred_region
    _
  $region81: #{tpu_custom_call.1} parent=0 // pred_fallthru
    _

</llo_original>
